<compile_context>
chip_gen: v7x
topology: tpu7x:2x2x1
jax: 0.10.0
libtpu: 0.0.40
codegen_flags: <defaults>
</compile_context>

<pallas_src>
import functools

import jax
import jax.numpy as jnp
from jax.experimental import pallas as pl
from jax.experimental.pallas import tpu as pltpu


def _double_conv_kernel(x_ref, w1_ref, b1_ref, w2_ref, b2_ref, o_ref, pad_ref,
                        *, Wp, W, M, lead):
    """One batch element per grid step.

    x_ref   : (x_rows, Cin)   zero-padded input, flattened (row pitch = Wp), compact channels
    w1_ref  : (9, Cin, Cmid)  per-tap conv1 weights (tap k = dy*3+dx), BN1 scale folded in
    b1_ref  : (1, Cmid)       folded BN1 shift (includes conv1 bias)
    w2_ref  : (9, Cmid, Cout) per-tap conv2 weights, BN2 scale folded in
    b2_ref  : (1, Cout)       folded BN2 shift (includes conv2 bias)
    o_ref   : (M, Cout)       flat output (junk columns dropped in the wrapper)
    pad_ref : (pad_rows, Cmid) VMEM scratch holding the zero-padded conv1 result for conv2
    """
    Cmid = pad_ref.shape[-1]

    def conv3x3(src_ref, w_ref, base):
        # 9 shifted flat taps; each tap is one contiguous (M, C) slice feeding one matmul.
        acc = None
        for k in range(9):
            dy, dx = divmod(k, 3)
            lhs = src_ref[pl.ds(base + dy * Wp + dx, M), :]
            d = jnp.dot(lhs, w_ref[k], preferred_element_type=jnp.float32)
            acc = d if acc is None else acc + d
        return acc

    # conv1 (BN1 scale folded into weights) -> shift -> ReLU.
    y1 = jnp.maximum(conv3x3(x_ref, w1_ref, 0) + b1_ref[...], 0.0)

    # Zero the junk flat columns (flat-row mod Wp >= W) in-kernel.  The quotient r // Wp is
    # computed as trunc(r * (1/Wp) + 0.5/Wp): the 0.5/Wp offset gives a >=1/(2*Wp) margin to the
    # nearest integer boundary, far larger than the f32 multiply rounding error, so the result
    # is exact (no vector integer division required).
    r_i = jax.lax.broadcasted_iota(jnp.int32, y1.shape, 0)
    q = (r_i.astype(jnp.float32) * (1.0 / Wp) + 0.5 / Wp).astype(jnp.int32)  # == r // Wp
    col = r_i - q * Wp                                                        # == r %  Wp
    y1 = jnp.where(col < W, y1, 0.0)

    # Zero only the top/bottom halo rows of the padded intermediate (interior fully overwritten
    # below).  Done every step (2 small stores) so the kernel stays correct when the batch grid
    # axis is partitioned across TensorCores (megacore / v7x).  Do NOT hoist behind pl.when.
    top = lead + Wp + 1                       # multiple of 8 by construction of `lead`
    bot = pad_ref.shape[0] - (top + M)
    pad_ref[pl.ds(0, top), :] = jnp.zeros((top, Cmid), jnp.float32)
    pad_ref[pl.ds(top + M, bot), :] = jnp.zeros((bot, Cmid), jnp.float32)
    pad_ref[pl.ds(top, M), :] = y1            # 8-sublane-aligned interior store

    # conv2 (BN2 scale folded) -> shift -> ReLU.
    y2 = jnp.maximum(conv3x3(pad_ref, w2_ref, lead) + b2_ref[...], 0.0)
    o_ref[...] = y2.astype(o_ref.dtype)


def _round_up(x, m):
    return (x + m - 1) // m * m


def inconv_forward(x_nchw, w1, s1, b1, w2, s2, b2):
    """x_nchw: (N, Cin, H, W) f32. w* in HWIO layout, s*/b* folded BN scale/shift.
    Returns (N, Cout, H, W) f32."""
    N, Cin, H, W = x_nchw.shape
    Cmid = w1.shape[-1]           # conv1 out channels (= double_conv out_ch)
    Cout = w2.shape[-1]

    Hp, Wp = H + 2, W + 2
    M = H * Wp                                  # flat output rows (incl. 2 junk cols per image row)
    lead = (-(Wp + 1)) % 8                      # makes the pad-scratch interior start 8-aligned
    x_rows = _round_up(Hp * Wp + 2, 8)          # +2 so tap (dy=2, dx=2) stays in bounds
    pad_rows = _round_up(lead + Hp * Wp + 2, 8)

    f32 = jnp.float32
    x = jnp.transpose(x_nchw, (0, 2, 3, 1)).astype(f32)       # NCHW -> NHWC (compact channels)
    x = jnp.pad(x, ((0, 0), (1, 1), (1, 1), (0, 0)))          # spatial halo only; no channel pad
    x_flat = x.reshape(N, Hp * Wp, Cin)
    x_flat = jnp.pad(x_flat, ((0, 0), (0, x_rows - Hp * Wp), (0, 0)))

    def prep_w(w, s):            # (3,3,Ci,Co) HWIO -> (9, Ci, Co), BN scale folded into Co
        return (w.astype(f32) * s.astype(f32).reshape(-1)).reshape(9, w.shape[2], w.shape[3])

    def prep_b(b):               # (Co,)-ish -> (1, Co)
        return b.astype(f32).reshape(1, -1)

    w1p, w2p = prep_w(w1, s1), prep_w(w2, s2)
    b1p, b2p = prep_b(b1), prep_b(b2)

    kernel = functools.partial(_double_conv_kernel, Wp=Wp, W=W, M=M, lead=lead)

    out_flat = pl.pallas_call(
        kernel,
        out_shape=jax.ShapeDtypeStruct((N, M, Cout), f32),
        grid_spec=pltpu.PrefetchScalarGridSpec(
            num_scalar_prefetch=0,
            grid=(N,),
            in_specs=[
                pl.BlockSpec((None, x_rows, Cin), lambda n: (n, 0, 0)),   # compact flat input
                # Grid-invariant constants: now compact (few KiB each), so default double
                # buffering is harmless; pl.Buffered(1) intentionally not needed.
                pl.BlockSpec((9, Cin, Cmid), lambda n: (0, 0, 0)),        # w1 (scale folded)
                pl.BlockSpec((1, Cmid), lambda n: (0, 0)),                # b1 shift
                pl.BlockSpec((9, Cmid, Cout), lambda n: (0, 0, 0)),       # w2 (scale folded)
                pl.BlockSpec((1, Cout), lambda n: (0, 0)),                # b2 shift
            ],
            out_specs=pl.BlockSpec((None, M, Cout), lambda n: (n, 0, 0)),
            scratch_shapes=[pltpu.VMEM((pad_rows, Cmid), f32)],
        ),
        compiler_params=pltpu.CompilerParams(
            dimension_semantics=("parallel",),
            vmem_limit_bytes=64 * 1024 * 1024,
        ),
    )(x_flat, w1p, b1p, w2p, b2p)

    out = out_flat.reshape(N, H, Wp, Cout)[:, :, :W, :]        # drop junk flat columns
    return jnp.transpose(out, (0, 3, 1, 2))                    # NHWC -> NCHW


def _fold_bn(conv_bias, gamma, beta, mean, var, eps):
    scale = gamma / jnp.sqrt(var + eps)
    shift = (conv_bias - mean) * scale + beta
    return scale.reshape(1, -1).astype(jnp.float32), shift.reshape(1, -1).astype(jnp.float32)


def _reference(x_nchw, w1, cb1, bn1, w2, cb2, bn2, eps):
    g1, be1, m1, v1 = bn1
    g2, be2, m2, v2 = bn2
    x = jnp.transpose(x_nchw, (0, 2, 3, 1))

    def conv(x, w, b):
        return jax.lax.conv_general_dilated(
            x, w, window_strides=(1, 1), padding="SAME",
            dimension_numbers=("NHWC", "HWIO", "NHWC"),
            precision=jax.lax.Precision.HIGHEST) + b

    y = conv(x, w1, cb1)
    y = jnp.maximum((y - m1) / jnp.sqrt(v1 + eps) * g1 + be1, 0.0)
    y = conv(y, w2, cb2)
    y = jnp.maximum((y - m2) / jnp.sqrt(v2 + eps) * g2 + be2, 0.0)
    return jnp.transpose(y, (0, 3, 1, 2))


if __name__ == "__main__":
    # Small shapes consistent with inconv(in_ch=4, out_ch=8) on a 2x4x16x16 input.
    N, Cin, Cout, H, W = 2, 4, 8, 16, 16
    eps = 1e-5

    key = jax.random.PRNGKey(0)
    ks = jax.random.split(key, 12)

    x = jax.random.normal(ks[0], (N, Cin, H, W), jnp.float32)

    # Conv weights in HWIO layout (equivalent to PyTorch OIHW transposed), deterministic init.
    w1 = 0.2 * jax.random.normal(ks[1], (3, 3, Cin, Cout), jnp.float32)
    cb1 = 0.1 * jax.random.normal(ks[2], (Cout,), jnp.float32)
    w2 = 0.2 * jax.random.normal(ks[3], (3, 3, Cout, Cout), jnp.float32)
    cb2 = 0.1 * jax.random.normal(ks[4], (Cout,), jnp.float32)

    # BatchNorm (eval-mode) parameters, deterministic.
    bn1 = (1.0 + 0.1 * jax.random.normal(ks[5], (Cout,), jnp.float32),   # gamma
           0.1 * jax.random.normal(ks[6], (Cout,), jnp.float32),         # beta
           0.05 * jax.random.normal(ks[7], (Cout,), jnp.float32),        # running mean
           1.0 + 0.1 * jax.nn.softplus(jax.random.normal(ks[8], (Cout,), jnp.float32)))  # running var
    bn2 = (1.0 + 0.1 * jax.random.normal(ks[9], (Cout,), jnp.float32),
           0.1 * jax.random.normal(ks[10], (Cout,), jnp.float32),
           0.05 * jax.random.normal(ks[11], (Cout,), jnp.float32),
           1.0 + 0.1 * jax.nn.softplus(jax.random.normal(ks[0], (Cout,), jnp.float32)))

    s1, b1 = _fold_bn(cb1, *bn1, eps)
    s2, b2 = _fold_bn(cb2, *bn2, eps)

    out = inconv_forward(x, w1, s1, b1, w2, s2, b2)
    out = jax.block_until_ready(out)

    ref = _reference(x, w1, cb1, bn1, w2, cb2, bn2, eps)
    assert out.shape == (N, Cout, H, W), out.shape
    assert jnp.allclose(out, ref, atol=1e-4, rtol=1e-4), float(jnp.max(jnp.abs(out - ref)))

    print("KERNEL_OK")
</pallas_src>

<mosaic_0001>
module attributes {stable_mosaic.version = 11 : i64} {
  func.func @_double_conv_kernel(%arg0: i32, %arg1: memref<1x328x4xf32, #tpu.memory_space<vmem>>, %arg2: memref<9x4x8xf32, #tpu.memory_space<vmem>>, %arg3: memref<1x8xf32, #tpu.memory_space<vmem>>, %arg4: memref<9x8x8xf32, #tpu.memory_space<vmem>>, %arg5: memref<1x8xf32, #tpu.memory_space<vmem>>, %arg6: memref<1x288x8xf32, #tpu.memory_space<vmem>>, %arg7: memref<336x8xf32, #tpu.memory_space<vmem>>) attributes {dimension_semantics = [#tpu.dimension_semantics<parallel>], iteration_bounds = array<i64: 2>, scalar_prefetch = 0 : i64, scratch_operands = 1 : i64, tpu.core_type = #tpu.core_type<tc>, window_params = [{transform_indices = @transform_0, window_bounds = array<i64: 1, 328, 4>}, {pipeline_mode = #tpu.pipeline_mode<synchronous>, transform_indices = @transform_1, window_bounds = array<i64: 9, 4, 8>}, {pipeline_mode = #tpu.pipeline_mode<synchronous>, transform_indices = @transform_2, window_bounds = array<i64: 1, 8>}, {pipeline_mode = #tpu.pipeline_mode<synchronous>, transform_indices = @transform_3, window_bounds = array<i64: 9, 8, 8>}, {pipeline_mode = #tpu.pipeline_mode<synchronous>, transform_indices = @transform_4, window_bounds = array<i64: 1, 8>}, {transform_indices = @transform_5, window_bounds = array<i64: 1, 288, 8>}]} {
    %c0 = arith.constant 0 : index
    %c0_0 = arith.constant 0 : index
    %c0_1 = arith.constant 0 : index
    %0 = vector.load %arg1[%c0, %c0_0, %c0_1] : memref<1x328x4xf32, #tpu.memory_space<vmem>>, vector<1x288x4xf32>
    %1 = vector.shape_cast %0 : vector<1x288x4xf32> to vector<288x4xf32>
    %c0_2 = arith.constant 0 : index
    %c0_3 = arith.constant 0 : index
    %c0_4 = arith.constant 0 : index
    %2 = vector.load %arg2[%c0_2, %c0_3, %c0_4] : memref<9x4x8xf32, #tpu.memory_space<vmem>>, vector<1x4x8xf32>
    %3 = vector.shape_cast %2 : vector<1x4x8xf32> to vector<4x8xf32>
    %cst = arith.constant dense<0.000000e+00> : vector<288x8xf32>
    %4 = tpu.matmul %1, %3, %cst {dimension_numbers = #tpu.dot_dimension_numbers<[1], [0], [0], [1], [0, 0, 1, 1], [], []>} : vector<288x4xf32>, vector<4x8xf32>, vector<288x8xf32> -> vector<288x8xf32>
    %c0_5 = arith.constant 0 : index
    %c1 = arith.constant 1 : index
    %c0_6 = arith.constant 0 : index
    %5 = vector.load %arg1[%c0_5, %c1, %c0_6] : memref<1x328x4xf32, #tpu.memory_space<vmem>>, vector<1x288x4xf32>
    %6 = vector.shape_cast %5 : vector<1x288x4xf32> to vector<288x4xf32>
    %c1_7 = arith.constant 1 : index
    %c0_8 = arith.constant 0 : index
    %c0_9 = arith.constant 0 : index
    %7 = vector.load %arg2[%c1_7, %c0_8, %c0_9] : memref<9x4x8xf32, #tpu.memory_space<vmem>>, vector<1x4x8xf32>
    %8 = vector.shape_cast %7 : vector<1x4x8xf32> to vector<4x8xf32>
    %cst_10 = arith.constant dense<0.000000e+00> : vector<288x8xf32>
    %9 = tpu.matmul %6, %8, %cst_10 {dimension_numbers = #tpu.dot_dimension_numbers<[1], [0], [0], [1], [0, 0, 1, 1], [], []>} : vector<288x4xf32>, vector<4x8xf32>, vector<288x8xf32> -> vector<288x8xf32>
    %10 = arith.addf %4, %9 : vector<288x8xf32>
    %c0_11 = arith.constant 0 : index
    %c2 = arith.constant 2 : index
    %c0_12 = arith.constant 0 : index
    %11 = vector.load %arg1[%c0_11, %c2, %c0_12] : memref<1x328x4xf32, #tpu.memory_space<vmem>>, vector<1x288x4xf32>
    %12 = vector.shape_cast %11 : vector<1x288x4xf32> to vector<288x4xf32>
    %c2_13 = arith.constant 2 : index
    %c0_14 = arith.constant 0 : index
    %c0_15 = arith.constant 0 : index
    %13 = vector.load %arg2[%c2_13, %c0_14, %c0_15] : memref<9x4x8xf32, #tpu.memory_space<vmem>>, vector<1x4x8xf32>
    %14 = vector.shape_cast %13 : vector<1x4x8xf32> to vector<4x8xf32>
    %cst_16 = arith.constant dense<0.000000e+00> : vector<288x8xf32>
    %15 = tpu.matmul %12, %14, %cst_16 {dimension_numbers = #tpu.dot_dimension_numbers<[1], [0], [0], [1], [0, 0, 1, 1], [], []>} : vector<288x4xf32>, vector<4x8xf32>, vector<288x8xf32> -> vector<288x8xf32>
    %16 = arith.addf %10, %15 : vector<288x8xf32>
    %c0_17 = arith.constant 0 : index
    %c18 = arith.constant 18 : index
    %c0_18 = arith.constant 0 : index
    %17 = vector.load %arg1[%c0_17, %c18, %c0_18] : memref<1x328x4xf32, #tpu.memory_space<vmem>>, vector<1x288x4xf32>
    %18 = vector.shape_cast %17 : vector<1x288x4xf32> to vector<288x4xf32>
    %c3 = arith.constant 3 : index
    %c0_19 = arith.constant 0 : index
    %c0_20 = arith.constant 0 : index
    %19 = vector.load %arg2[%c3, %c0_19, %c0_20] : memref<9x4x8xf32, #tpu.memory_space<vmem>>, vector<1x4x8xf32>
    %20 = vector.shape_cast %19 : vector<1x4x8xf32> to vector<4x8xf32>
    %cst_21 = arith.constant dense<0.000000e+00> : vector<288x8xf32>
    %21 = tpu.matmul %18, %20, %cst_21 {dimension_numbers = #tpu.dot_dimension_numbers<[1], [0], [0], [1], [0, 0, 1, 1], [], []>} : vector<288x4xf32>, vector<4x8xf32>, vector<288x8xf32> -> vector<288x8xf32>
    %22 = arith.addf %16, %21 : vector<288x8xf32>
    %c0_22 = arith.constant 0 : index
    %c19 = arith.constant 19 : index
    %c0_23 = arith.constant 0 : index
    %23 = vector.load %arg1[%c0_22, %c19, %c0_23] : memref<1x328x4xf32, #tpu.memory_space<vmem>>, vector<1x288x4xf32>
    %24 = vector.shape_cast %23 : vector<1x288x4xf32> to vector<288x4xf32>
    %c4 = arith.constant 4 : index
    %c0_24 = arith.constant 0 : index
    %c0_25 = arith.constant 0 : index
    %25 = vector.load %arg2[%c4, %c0_24, %c0_25] : memref<9x4x8xf32, #tpu.memory_space<vmem>>, vector<1x4x8xf32>
    %26 = vector.shape_cast %25 : vector<1x4x8xf32> to vector<4x8xf32>
    %cst_26 = arith.constant dense<0.000000e+00> : vector<288x8xf32>
    %27 = tpu.matmul %24, %26, %cst_26 {dimension_numbers = #tpu.dot_dimension_numbers<[1], [0], [0], [1], [0, 0, 1, 1], [], []>} : vector<288x4xf32>, vector<4x8xf32>, vector<288x8xf32> -> vector<288x8xf32>
    %28 = arith.addf %22, %27 : vector<288x8xf32>
    %c0_27 = arith.constant 0 : index
    %c20 = arith.constant 20 : index
    %c0_28 = arith.constant 0 : index
    %29 = vector.load %arg1[%c0_27, %c20, %c0_28] : memref<1x328x4xf32, #tpu.memory_space<vmem>>, vector<1x288x4xf32>
    %30 = vector.shape_cast %29 : vector<1x288x4xf32> to vector<288x4xf32>
    %c5 = arith.constant 5 : index
    %c0_29 = arith.constant 0 : index
    %c0_30 = arith.constant 0 : index
    %31 = vector.load %arg2[%c5, %c0_29, %c0_30] : memref<9x4x8xf32, #tpu.memory_space<vmem>>, vector<1x4x8xf32>
    %32 = vector.shape_cast %31 : vector<1x4x8xf32> to vector<4x8xf32>
    %cst_31 = arith.constant dense<0.000000e+00> : vector<288x8xf32>
    %33 = tpu.matmul %30, %32, %cst_31 {dimension_numbers = #tpu.dot_dimension_numbers<[1], [0], [0], [1], [0, 0, 1, 1], [], []>} : vector<288x4xf32>, vector<4x8xf32>, vector<288x8xf32> -> vector<288x8xf32>
    %34 = arith.addf %28, %33 : vector<288x8xf32>
    %c0_32 = arith.constant 0 : index
    %c36 = arith.constant 36 : index
    %c0_33 = arith.constant 0 : index
    %35 = vector.load %arg1[%c0_32, %c36, %c0_33] : memref<1x328x4xf32, #tpu.memory_space<vmem>>, vector<1x288x4xf32>
    %36 = vector.shape_cast %35 : vector<1x288x4xf32> to vector<288x4xf32>
    %c6 = arith.constant 6 : index
    %c0_34 = arith.constant 0 : index
    %c0_35 = arith.constant 0 : index
    %37 = vector.load %arg2[%c6, %c0_34, %c0_35] : memref<9x4x8xf32, #tpu.memory_space<vmem>>, vector<1x4x8xf32>
    %38 = vector.shape_cast %37 : vector<1x4x8xf32> to vector<4x8xf32>
    %cst_36 = arith.constant dense<0.000000e+00> : vector<288x8xf32>
    %39 = tpu.matmul %36, %38, %cst_36 {dimension_numbers = #tpu.dot_dimension_numbers<[1], [0], [0], [1], [0, 0, 1, 1], [], []>} : vector<288x4xf32>, vector<4x8xf32>, vector<288x8xf32> -> vector<288x8xf32>
    %40 = arith.addf %34, %39 : vector<288x8xf32>
    %c0_37 = arith.constant 0 : index
    %c37 = arith.constant 37 : index
    %c0_38 = arith.constant 0 : index
    %41 = vector.load %arg1[%c0_37, %c37, %c0_38] : memref<1x328x4xf32, #tpu.memory_space<vmem>>, vector<1x288x4xf32>
    %42 = vector.shape_cast %41 : vector<1x288x4xf32> to vector<288x4xf32>
    %c7 = arith.constant 7 : index
    %c0_39 = arith.constant 0 : index
    %c0_40 = arith.constant 0 : index
    %43 = vector.load %arg2[%c7, %c0_39, %c0_40] : memref<9x4x8xf32, #tpu.memory_space<vmem>>, vector<1x4x8xf32>
    %44 = vector.shape_cast %43 : vector<1x4x8xf32> to vector<4x8xf32>
    %cst_41 = arith.constant dense<0.000000e+00> : vector<288x8xf32>
    %45 = tpu.matmul %42, %44, %cst_41 {dimension_numbers = #tpu.dot_dimension_numbers<[1], [0], [0], [1], [0, 0, 1, 1], [], []>} : vector<288x4xf32>, vector<4x8xf32>, vector<288x8xf32> -> vector<288x8xf32>
    %46 = arith.addf %40, %45 : vector<288x8xf32>
    %c0_42 = arith.constant 0 : index
    %c38 = arith.constant 38 : index
    %c0_43 = arith.constant 0 : index
    %47 = vector.load %arg1[%c0_42, %c38, %c0_43] : memref<1x328x4xf32, #tpu.memory_space<vmem>>, vector<1x288x4xf32>
    %48 = vector.shape_cast %47 : vector<1x288x4xf32> to vector<288x4xf32>
    %c8 = arith.constant 8 : index
    %c0_44 = arith.constant 0 : index
    %c0_45 = arith.constant 0 : index
    %49 = vector.load %arg2[%c8, %c0_44, %c0_45] : memref<9x4x8xf32, #tpu.memory_space<vmem>>, vector<1x4x8xf32>
    %50 = vector.shape_cast %49 : vector<1x4x8xf32> to vector<4x8xf32>
    %cst_46 = arith.constant dense<0.000000e+00> : vector<288x8xf32>
    %51 = tpu.matmul %48, %50, %cst_46 {dimension_numbers = #tpu.dot_dimension_numbers<[1], [0], [0], [1], [0, 0, 1, 1], [], []>} : vector<288x4xf32>, vector<4x8xf32>, vector<288x8xf32> -> vector<288x8xf32>
    %52 = arith.addf %46, %51 : vector<288x8xf32>
    %c0_47 = arith.constant 0 : index
    %c0_48 = arith.constant 0 : index
    %53 = vector.load %arg3[%c0_47, %c0_48] : memref<1x8xf32, #tpu.memory_space<vmem>>, vector<1x8xf32>
    %54 = vector.broadcast %53 : vector<1x8xf32> to vector<288x8xf32>
    %55 = arith.addf %52, %54 : vector<288x8xf32>
    %cst_49 = arith.constant 0.000000e+00 : f32
    %56 = vector.broadcast %cst_49 : f32 to vector<288x8xf32>
    %57 = arith.maximumf %55, %56 : vector<288x8xf32>
    %58 = tpu.iota {dimensions = array<i32: 0>} : vector<288x8xi32>
    %59 = arith.sitofp %58 : vector<288x8xi32> to vector<288x8xf32>
    %cst_50 = arith.constant 0.055555556 : f32
    %60 = vector.broadcast %cst_50 : f32 to vector<288x8xf32>
    %61 = arith.mulf %59, %60 : vector<288x8xf32>
    %cst_51 = arith.constant 0.027777778 : f32
    %62 = vector.broadcast %cst_51 : f32 to vector<288x8xf32>
    %63 = arith.addf %61, %62 : vector<288x8xf32>
    %64 = arith.fptosi %63 : vector<288x8xf32> to vector<288x8xi32>
    %c18_i32 = arith.constant 18 : i32
    %65 = vector.broadcast %c18_i32 : i32 to vector<288x8xi32>
    %66 = arith.muli %64, %65 : vector<288x8xi32>
    %67 = arith.subi %58, %66 : vector<288x8xi32>
    %c16_i32 = arith.constant 16 : i32
    %68 = vector.broadcast %c16_i32 : i32 to vector<288x8xi32>
    %69 = arith.cmpi slt, %67, %68 : vector<288x8xi32>
    %cst_52 = arith.constant 0.000000e+00 : f32
    %70 = vector.broadcast %cst_52 : f32 to vector<288x8xf32>
    %71 = arith.select %69, %57, %70 : vector<288x8xi1>, vector<288x8xf32>
    %cst_53 = arith.constant 0.000000e+00 : f32
    %72 = vector.broadcast %cst_53 : f32 to vector<24x8xf32>
    %c0_54 = arith.constant 0 : index
    %c0_55 = arith.constant 0 : index
    %73 = vector.load %arg7[%c0_54, %c0_55] : memref<336x8xf32, #tpu.memory_space<vmem>>, vector<24x8xf32>
    tpu.vector_store %arg7[%c0_54, %c0_55], %72 {strides = array<i32>} : memref<336x8xf32, #tpu.memory_space<vmem>>, vector<24x8xf32>,
    %cst_56 = arith.constant 0.000000e+00 : f32
    %74 = vector.broadcast %cst_56 : f32 to vector<24x8xf32>
    %c312 = arith.constant 312 : index
    %c0_57 = arith.constant 0 : index
    %75 = vector.load %arg7[%c312, %c0_57] : memref<336x8xf32, #tpu.memory_space<vmem>>, vector<24x8xf32>
    tpu.vector_store %arg7[%c312, %c0_57], %74 {strides = array<i32>} : memref<336x8xf32, #tpu.memory_space<vmem>>, vector<24x8xf32>,
    %c24 = arith.constant 24 : index
    %c0_58 = arith.constant 0 : index
    %76 = vector.load %arg7[%c24, %c0_58] : memref<336x8xf32, #tpu.memory_space<vmem>>, vector<288x8xf32>
    tpu.vector_store %arg7[%c24, %c0_58], %71 {strides = array<i32>} : memref<336x8xf32, #tpu.memory_space<vmem>>, vector<288x8xf32>,
    %c5_59 = arith.constant 5 : index
    %c0_60 = arith.constant 0 : index
    %77 = vector.load %arg7[%c5_59, %c0_60] : memref<336x8xf32, #tpu.memory_space<vmem>>, vector<288x8xf32>
    %c0_61 = arith.constant 0 : index
    %c0_62 = arith.constant 0 : index
    %c0_63 = arith.constant 0 : index
    %78 = vector.load %arg4[%c0_61, %c0_62, %c0_63] : memref<9x8x8xf32, #tpu.memory_space<vmem>>, vector<1x8x8xf32>
    %79 = vector.shape_cast %78 : vector<1x8x8xf32> to vector<8x8xf32>
    %cst_64 = arith.constant dense<0.000000e+00> : vector<288x8xf32>
    %80 = tpu.matmul %77, %79, %cst_64 {dimension_numbers = #tpu.dot_dimension_numbers<[1], [0], [0], [1], [0, 0, 1, 1], [], []>} : vector<288x8xf32>, vector<8x8xf32>, vector<288x8xf32> -> vector<288x8xf32>
    %c6_65 = arith.constant 6 : index
    %c0_66 = arith.constant 0 : index
    %81 = vector.load %arg7[%c6_65, %c0_66] : memref<336x8xf32, #tpu.memory_space<vmem>>, vector<288x8xf32>
    %c1_67 = arith.constant 1 : index
    %c0_68 = arith.constant 0 : index
    %c0_69 = arith.constant 0 : index
    %82 = vector.load %arg4[%c1_67, %c0_68, %c0_69] : memref<9x8x8xf32, #tpu.memory_space<vmem>>, vector<1x8x8xf32>
    %83 = vector.shape_cast %82 : vector<1x8x8xf32> to vector<8x8xf32>
    %cst_70 = arith.constant dense<0.000000e+00> : vector<288x8xf32>
    %84 = tpu.matmul %81, %83, %cst_70 {dimension_numbers = #tpu.dot_dimension_numbers<[1], [0], [0], [1], [0, 0, 1, 1], [], []>} : vector<288x8xf32>, vector<8x8xf32>, vector<288x8xf32> -> vector<288x8xf32>
    %85 = arith.addf %80, %84 : vector<288x8xf32>
    %c7_71 = arith.constant 7 : index
    %c0_72 = arith.constant 0 : index
    %86 = vector.load %arg7[%c7_71, %c0_72] : memref<336x8xf32, #tpu.memory_space<vmem>>, vector<288x8xf32>
    %c2_73 = arith.constant 2 : index
    %c0_74 = arith.constant 0 : index
    %c0_75 = arith.constant 0 : index
    %87 = vector.load %arg4[%c2_73, %c0_74, %c0_75] : memref<9x8x8xf32, #tpu.memory_space<vmem>>, vector<1x8x8xf32>
    %88 = vector.shape_cast %87 : vector<1x8x8xf32> to vector<8x8xf32>
    %cst_76 = arith.constant dense<0.000000e+00> : vector<288x8xf32>
    %89 = tpu.matmul %86, %88, %cst_76 {dimension_numbers = #tpu.dot_dimension_numbers<[1], [0], [0], [1], [0, 0, 1, 1], [], []>} : vector<288x8xf32>, vector<8x8xf32>, vector<288x8xf32> -> vector<288x8xf32>
    %90 = arith.addf %85, %89 : vector<288x8xf32>
    %c23 = arith.constant 23 : index
    %c0_77 = arith.constant 0 : index
    %91 = vector.load %arg7[%c23, %c0_77] : memref<336x8xf32, #tpu.memory_space<vmem>>, vector<288x8xf32>
    %c3_78 = arith.constant 3 : index
    %c0_79 = arith.constant 0 : index
    %c0_80 = arith.constant 0 : index
    %92 = vector.load %arg4[%c3_78, %c0_79, %c0_80] : memref<9x8x8xf32, #tpu.memory_space<vmem>>, vector<1x8x8xf32>
    %93 = vector.shape_cast %92 : vector<1x8x8xf32> to vector<8x8xf32>
    %cst_81 = arith.constant dense<0.000000e+00> : vector<288x8xf32>
    %94 = tpu.matmul %91, %93, %cst_81 {dimension_numbers = #tpu.dot_dimension_numbers<[1], [0], [0], [1], [0, 0, 1, 1], [], []>} : vector<288x8xf32>, vector<8x8xf32>, vector<288x8xf32> -> vector<288x8xf32>
    %95 = arith.addf %90, %94 : vector<288x8xf32>
    %c24_82 = arith.constant 24 : index
    %c0_83 = arith.constant 0 : index
    %96 = vector.load %arg7[%c24_82, %c0_83] : memref<336x8xf32, #tpu.memory_space<vmem>>, vector<288x8xf32>
    %c4_84 = arith.constant 4 : index
    %c0_85 = arith.constant 0 : index
    %c0_86 = arith.constant 0 : index
    %97 = vector.load %arg4[%c4_84, %c0_85, %c0_86] : memref<9x8x8xf32, #tpu.memory_space<vmem>>, vector<1x8x8xf32>
    %98 = vector.shape_cast %97 : vector<1x8x8xf32> to vector<8x8xf32>
    %cst_87 = arith.constant dense<0.000000e+00> : vector<288x8xf32>
    %99 = tpu.matmul %96, %98, %cst_87 {dimension_numbers = #tpu.dot_dimension_numbers<[1], [0], [0], [1], [0, 0, 1, 1], [], []>} : vector<288x8xf32>, vector<8x8xf32>, vector<288x8xf32> -> vector<288x8xf32>
    %100 = arith.addf %95, %99 : vector<288x8xf32>
    %c25 = arith.constant 25 : index
    %c0_88 = arith.constant 0 : index
    %101 = vector.load %arg7[%c25, %c0_88] : memref<336x8xf32, #tpu.memory_space<vmem>>, vector<288x8xf32>
    %c5_89 = arith.constant 5 : index
    %c0_90 = arith.constant 0 : index
    %c0_91 = arith.constant 0 : index
    %102 = vector.load %arg4[%c5_89, %c0_90, %c0_91] : memref<9x8x8xf32, #tpu.memory_space<vmem>>, vector<1x8x8xf32>
    %103 = vector.shape_cast %102 : vector<1x8x8xf32> to vector<8x8xf32>
    %cst_92 = arith.constant dense<0.000000e+00> : vector<288x8xf32>
    %104 = tpu.matmul %101, %103, %cst_92 {dimension_numbers = #tpu.dot_dimension_numbers<[1], [0], [0], [1], [0, 0, 1, 1], [], []>} : vector<288x8xf32>, vector<8x8xf32>, vector<288x8xf32> -> vector<288x8xf32>
    %105 = arith.addf %100, %104 : vector<288x8xf32>
    %c41 = arith.constant 41 : index
    %c0_93 = arith.constant 0 : index
    %106 = vector.load %arg7[%c41, %c0_93] : memref<336x8xf32, #tpu.memory_space<vmem>>, vector<288x8xf32>
    %c6_94 = arith.constant 6 : index
    %c0_95 = arith.constant 0 : index
    %c0_96 = arith.constant 0 : index
    %107 = vector.load %arg4[%c6_94, %c0_95, %c0_96] : memref<9x8x8xf32, #tpu.memory_space<vmem>>, vector<1x8x8xf32>
    %108 = vector.shape_cast %107 : vector<1x8x8xf32> to vector<8x8xf32>
    %cst_97 = arith.constant dense<0.000000e+00> : vector<288x8xf32>
    %109 = tpu.matmul %106, %108, %cst_97 {dimension_numbers = #tpu.dot_dimension_numbers<[1], [0], [0], [1], [0, 0, 1, 1], [], []>} : vector<288x8xf32>, vector<8x8xf32>, vector<288x8xf32> -> vector<288x8xf32>
    %110 = arith.addf %105, %109 : vector<288x8xf32>
    %c42 = arith.constant 42 : index
    %c0_98 = arith.constant 0 : index
    %111 = vector.load %arg7[%c42, %c0_98] : memref<336x8xf32, #tpu.memory_space<vmem>>, vector<288x8xf32>
    %c7_99 = arith.constant 7 : index
    %c0_100 = arith.constant 0 : index
    %c0_101 = arith.constant 0 : index
    %112 = vector.load %arg4[%c7_99, %c0_100, %c0_101] : memref<9x8x8xf32, #tpu.memory_space<vmem>>, vector<1x8x8xf32>
    %113 = vector.shape_cast %112 : vector<1x8x8xf32> to vector<8x8xf32>
    %cst_102 = arith.constant dense<0.000000e+00> : vector<288x8xf32>
    %114 = tpu.matmul %111, %113, %cst_102 {dimension_numbers = #tpu.dot_dimension_numbers<[1], [0], [0], [1], [0, 0, 1, 1], [], []>} : vector<288x8xf32>, vector<8x8xf32>, vector<288x8xf32> -> vector<288x8xf32>
    %115 = arith.addf %110, %114 : vector<288x8xf32>
    %c43 = arith.constant 43 : index
    %c0_103 = arith.constant 0 : index
    %116 = vector.load %arg7[%c43, %c0_103] : memref<336x8xf32, #tpu.memory_space<vmem>>, vector<288x8xf32>
    %c8_104 = arith.constant 8 : index
    %c0_105 = arith.constant 0 : index
    %c0_106 = arith.constant 0 : index
    %117 = vector.load %arg4[%c8_104, %c0_105, %c0_106] : memref<9x8x8xf32, #tpu.memory_space<vmem>>, vector<1x8x8xf32>
    %118 = vector.shape_cast %117 : vector<1x8x8xf32> to vector<8x8xf32>
    %cst_107 = arith.constant dense<0.000000e+00> : vector<288x8xf32>
    %119 = tpu.matmul %116, %118, %cst_107 {dimension_numbers = #tpu.dot_dimension_numbers<[1], [0], [0], [1], [0, 0, 1, 1], [], []>} : vector<288x8xf32>, vector<8x8xf32>, vector<288x8xf32> -> vector<288x8xf32>
    %120 = arith.addf %115, %119 : vector<288x8xf32>
    %c0_108 = arith.constant 0 : index
    %c0_109 = arith.constant 0 : index
    %121 = vector.load %arg5[%c0_108, %c0_109] : memref<1x8xf32, #tpu.memory_space<vmem>>, vector<1x8xf32>
    %122 = vector.broadcast %121 : vector<1x8xf32> to vector<288x8xf32>
    %123 = arith.addf %120, %122 : vector<288x8xf32>
    %cst_110 = arith.constant 0.000000e+00 : f32
    %124 = vector.broadcast %cst_110 : f32 to vector<288x8xf32>
    %125 = arith.maximumf %123, %124 : vector<288x8xf32>
    %c0_111 = arith.constant 0 : index
    %c0_112 = arith.constant 0 : index
    %c0_113 = arith.constant 0 : index
    %126 = vector.load %arg6[%c0_111, %c0_112, %c0_113] : memref<1x288x8xf32, #tpu.memory_space<vmem>>, vector<1x288x8xf32>
    %127 = vector.shape_cast %126 : vector<1x288x8xf32> to vector<288x8xf32>
    %128 = vector.shape_cast %125 : vector<288x8xf32> to vector<1x288x8xf32>
    tpu.vector_store %arg6[%c0_111, %c0_112, %c0_113], %128 {strides = array<i32>} : memref<1x288x8xf32, #tpu.memory_space<vmem>>, vector<1x288x8xf32>,
    return
  }
  func.func @transform_0(%arg0: i32) -> (i32, i32, i32) {
    %c0_i32 = arith.constant 0 : i32
    %c0_i32_0 = arith.constant 0 : i32
    %c0_i32_1 = arith.constant 0 : i32
    return %arg0, %c0_i32, %c0_i32_0 : i32, i32, i32
  }
  func.func @transform_1(%arg0: i32) -> (i32, i32, i32) {
    %c0_i32 = arith.constant 0 : i32
    %c0_i32_0 = arith.constant 0 : i32
    %c0_i32_1 = arith.constant 0 : i32
    %c0_i32_2 = arith.constant 0 : i32
    return %c0_i32, %c0_i32_0, %c0_i32_1 : i32, i32, i32
  }
  func.func @transform_2(%arg0: i32) -> (i32, i32) {
    %c0_i32 = arith.constant 0 : i32
    %c0_i32_0 = arith.constant 0 : i32
    %c0_i32_1 = arith.constant 0 : i32
    return %c0_i32, %c0_i32_0 : i32, i32
  }
  func.func @transform_3(%arg0: i32) -> (i32, i32, i32) {
    %c0_i32 = arith.constant 0 : i32
    %c0_i32_0 = arith.constant 0 : i32
    %c0_i32_1 = arith.constant 0 : i32
    %c0_i32_2 = arith.constant 0 : i32
    return %c0_i32, %c0_i32_0, %c0_i32_1 : i32, i32, i32
  }
  func.func @transform_4(%arg0: i32) -> (i32, i32) {
    %c0_i32 = arith.constant 0 : i32
    %c0_i32_0 = arith.constant 0 : i32
    %c0_i32_1 = arith.constant 0 : i32
    return %c0_i32, %c0_i32_0 : i32, i32
  }
  func.func @transform_5(%arg0: i32) -> (i32, i32, i32) {
    %c0_i32 = arith.constant 0 : i32
    %c0_i32_0 = arith.constant 0 : i32
    %c0_i32_1 = arith.constant 0 : i32
    return %arg0, %c0_i32, %c0_i32_0 : i32, i32, i32
  }
}

</mosaic_0001>

<llo_original>
// kernel: tpu_custom_call.1
$region0: #{tpu_custom_call.1}
  #allocation0 [shape = 'u32[]', space=smem, size = 0x4, offset = 0x4, fixed_abs, tag = 'smem constant byte address 0x4 - core index']
  #allocation1 [shape = 'u32[144,128]{1,0:T(1,128)}', space=vmem, size = 0x12000, scoped, tag = 'internal scratch']
  #allocation2 [shape = 'f32[336,8]{1,0:T(8,128)}', space=vmem, size = 0x2a000, scoped, tag = 'scratch operand']
  %s0 = inlined_call_operand.hbm [shape: f32[2,328,4], index: 0, kind: input, shape index: {}]
  %s1 = inlined_call_operand.hbm [shape: f32[9,4,8], index: 1, kind: input, shape index: {}]
  %s2 = inlined_call_operand.hbm [shape: f32[1,8], index: 2, kind: input, shape index: {}]
  %s3 = inlined_call_operand.hbm [shape: f32[9,8,8], index: 3, kind: input, shape index: {}]
  %s4 = inlined_call_operand.hbm [shape: f32[1,8], index: 4, kind: input, shape index: {}]
  %s5 = inlined_call_operand.hbm [shape: f32[2,288,8], index: 5, kind: output, shape index: {}]
  %s6 = sld [smem:[#allocation0]]
  $region73: #{tpu_custom_call.1} parent=0
    _
  %s8 = ssub.s32 1, %s6
  %s9 = scalar_select 0, %s8, %s6
  $region1: #{tpu_custom_call.1} parent=0
    #allocation3 [shape = 'u8[335872]{0}', space=vmem, size = 0x52000, scoped, tag = 'input window, operand 0']
    #allocation4 [shape = 's32[2]{0}', space=sflag, size = 0x8, scoped, tag = 'scoped memory for tpu_custom_call.1']
    #allocation5 [shape = 's32[2]{0}', space=sflag, size = 0x8, scoped, tag = 'scoped memory for tpu_custom_call.1']
    #allocation6 [shape = 'u8[18432]{0}', space=vmem, size = 0x4800, scoped, tag = 'input window, operand 1, single buffered']
    #allocation7 [shape = 's32[1]{0}', space=sflag, size = 0x4, scoped, tag = 'scoped memory for tpu_custom_call.1']
    #allocation8 [shape = 'u8[512]{0}', space=vmem, size = 0x400, scoped, tag = 'input window, operand 2, single buffered']
    #allocation9 [shape = 'u8[36864]{0}', space=vmem, size = 0x9000, scoped, tag = 'input window, operand 3, single buffered']
    #allocation10 [shape = 's32[1]{0}', space=sflag, size = 0x4, scoped, tag = 'scoped memory for tpu_custom_call.1']
    #allocation11 [shape = 'u8[512]{0}', space=vmem, size = 0x400, scoped, tag = 'input window, operand 4, single buffered']
    #allocation12 [shape = 'u8[294912]{0}', space=vmem, size = 0x48000, scoped, tag = 'output window, operand 0']
    %10 = vsyncpa [#allocation4], 0
    %s11 = scalar_lea.sflag [#allocation4], 1
    %12 = vsyncpa %s11, 0
    %13 = vsyncpa [#allocation7], 0
    %14 = vsyncpa [#allocation10], 0
    %15 = vsyncpa [#allocation5], 0
    %s16 = scalar_lea.sflag [#allocation5], 1
    %17 = vsyncpa %s16, 0
    loop: start=0, step=1, limit=4
    $region2: #{tpu_custom_call.1} parent=1 // loop_pre_header
      _
    $region3: #{tpu_custom_call.1} parent=1 // loop_header
      %s19 = sphi 0, %s23
      %p20 = scmp.ge.s32.totalorder %s19, 4
      %s29 = sphi 0, %s31
      %s32 = sphi 0, %s29
      %s33 = sphi 0, %s32
      %s49 = sphi 0, %s33
      %s53 = sphi 0, %s53
      %s55 = sphi 0, %s53
      %s56 = sphi 0, %s55
      %s70 = sphi 0, %s56
      %s74 = sphi 0, %s74
      %s76 = sphi 0, %s74
      %s77 = sphi 0, %s76
      %s91 = sphi 0, %s77
      %s95 = sphi 0, %s95
      %s97 = sphi 0, %s95
      %s98 = sphi 0, %s97
      %s112 = sphi 0, %s98
      %s116 = sphi 0, %s116
      %s118 = sphi 0, %s116
      %s119 = sphi 0, %s118
      %s133 = sphi 0, %s119
      %s139 = sphi 0, %s141
      %s142 = sphi 0, %s139
      %s143 = sphi 0, %s142
      %s159 = sphi 0, %s143
    $region4: #{tpu_custom_call.1} parent=1 // loop_header_branch
      %22 = sbr.rel (%p20) target = $region8
    $region5: #{tpu_custom_call.1} parent=1 // loop_body
      %s24 = ssub.s32 %s19, 1
      %s25 = ssub.s32 %s19, 2
      %s26 = sadd.s32 %s19, 1
      %s27 = ssub.s32 %s19, %s26
      %p28 = scmp.eq.s32.totalorder %s27, 0
      %s30 = sadd.s32 %s29, 1
      %s31 = scalar_select %p28, %s29, %s30
      %p34 = pneg %p28
      %p35 = scmp.eq.s32.totalorder %s19, 1
      %p36 = por %p34, %p35
      %p37 = scmp.ne.s32.totalorder %s29, %s32
      %p38 = scmp.eq.s32.totalorder %s19, 0
      %p39 = por %p37, %p38
      %p40 = scmp.ne.s32.totalorder %s29, %s32
      %p41 = scmp.eq.s32.totalorder %s24, 1
      %p42 = por %p40, %p41
      %p43 = scmp.ne.s32.totalorder %s32, %s33
      %p44 = scmp.eq.s32.totalorder %s24, 0
      %p45 = por %p43, %p44
      %p46 = scmp.ne.s32.totalorder %s32, %s33
      %p47 = scmp.eq.s32.totalorder %s25, 1
      %p48 = por %p46, %p47
      %p50 = scmp.ne.s32.totalorder %s33, %s49
      %p51 = scmp.eq.s32.totalorder %s25, 0
      %p52 = por %p50, %p51
      %s54 = sadd.s32 %s53, 1
      %p57 = scmp.eq.s32.totalorder %s19, 1
      %p58 = scmp.ne.s32.totalorder %s53, %s55
      %p59 = scmp.eq.s32.totalorder %s19, 0
      %p60 = por %p58, %p59
      %p61 = scmp.ne.s32.totalorder %s53, %s55
      %p62 = scmp.eq.s32.totalorder %s24, 1
      %p63 = por %p61, %p62
      %p64 = scmp.ne.s32.totalorder %s55, %s56
      %p65 = scmp.eq.s32.totalorder %s24, 0
      %p66 = por %p64, %p65
      %p67 = scmp.ne.s32.totalorder %s55, %s56
      %p68 = scmp.eq.s32.totalorder %s25, 1
      %p69 = por %p67, %p68
      %p71 = scmp.ne.s32.totalorder %s56, %s70
      %p72 = scmp.eq.s32.totalorder %s25, 0
      %p73 = por %p71, %p72
      %s75 = sadd.s32 %s74, 1
      %p78 = scmp.eq.s32.totalorder %s19, 1
      %p79 = scmp.ne.s32.totalorder %s74, %s76
      %p80 = scmp.eq.s32.totalorder %s19, 0
      %p81 = por %p79, %p80
      %p82 = scmp.ne.s32.totalorder %s74, %s76
      %p83 = scmp.eq.s32.totalorder %s24, 1
      %p84 = por %p82, %p83
      %p85 = scmp.ne.s32.totalorder %s76, %s77
      %p86 = scmp.eq.s32.totalorder %s24, 0
      %p87 = por %p85, %p86
      %p88 = scmp.ne.s32.totalorder %s76, %s77
      %p89 = scmp.eq.s32.totalorder %s25, 1
      %p90 = por %p88, %p89
      %p92 = scmp.ne.s32.totalorder %s77, %s91
      %p93 = scmp.eq.s32.totalorder %s25, 0
      %p94 = por %p92, %p93
      %s96 = sadd.s32 %s95, 1
      %p99 = scmp.eq.s32.totalorder %s19, 1
      %p100 = scmp.ne.s32.totalorder %s95, %s97
      %p101 = scmp.eq.s32.totalorder %s19, 0
      %p102 = por %p100, %p101
      %p103 = scmp.ne.s32.totalorder %s95, %s97
      %p104 = scmp.eq.s32.totalorder %s24, 1
      %p105 = por %p103, %p104
      %p106 = scmp.ne.s32.totalorder %s97, %s98
      %p107 = scmp.eq.s32.totalorder %s24, 0
      %p108 = por %p106, %p107
      %p109 = scmp.ne.s32.totalorder %s97, %s98
      %p110 = scmp.eq.s32.totalorder %s25, 1
      %p111 = por %p109, %p110
      %p113 = scmp.ne.s32.totalorder %s98, %s112
      %p114 = scmp.eq.s32.totalorder %s25, 0
      %p115 = por %p113, %p114
      %s117 = sadd.s32 %s116, 1
      %p120 = scmp.eq.s32.totalorder %s19, 1
      %p121 = scmp.ne.s32.totalorder %s116, %s118
      %p122 = scmp.eq.s32.totalorder %s19, 0
      %p123 = por %p121, %p122
      %p124 = scmp.ne.s32.totalorder %s116, %s118
      %p125 = scmp.eq.s32.totalorder %s24, 1
      %p126 = por %p124, %p125
      %p127 = scmp.ne.s32.totalorder %s118, %s119
      %p128 = scmp.eq.s32.totalorder %s24, 0
      %p129 = por %p127, %p128
      %p130 = scmp.ne.s32.totalorder %s118, %s119
      %p131 = scmp.eq.s32.totalorder %s25, 1
      %p132 = por %p130, %p131
      %p134 = scmp.ne.s32.totalorder %s119, %s133
      %p135 = scmp.eq.s32.totalorder %s25, 0
      %p136 = por %p134, %p135
      %s137 = ssub.s32 %s19, %s26
      %p138 = scmp.eq.s32.totalorder %s137, 0
      %s140 = sadd.s32 %s139, 1
      %s141 = scalar_select %p138, %s139, %s140
      %p144 = pneg %p138
      %p145 = scmp.eq.s32.totalorder %s19, 1
      %p146 = por %p144, %p145
      %p147 = scmp.ne.s32.totalorder %s139, %s142
      %p148 = scmp.eq.s32.totalorder %s19, 0
      %p149 = por %p147, %p148
      %p150 = scmp.ne.s32.totalorder %s139, %s142
      %p151 = scmp.eq.s32.totalorder %s24, 1
      %p152 = por %p150, %p151
      %p153 = scmp.ne.s32.totalorder %s142, %s143
      %p154 = scmp.eq.s32.totalorder %s24, 0
      %p155 = por %p153, %p154
      %p156 = scmp.ne.s32.totalorder %s142, %s143
      %p157 = scmp.eq.s32.totalorder %s25, 1
      %p158 = por %p156, %p157
      %p160 = scmp.ne.s32.totalorder %s143, %s159
      %p161 = scmp.eq.s32.totalorder %s25, 0
      %p162 = por %p160, %p161
      %p163 = scmp.le.s32.totalorder 1, %s19
      %p164 = scmp.lt.s32.totalorder %s19, 3
      %p165 = pnand %p163, %p164
      %p166 = pneg %p165
      // Predicated region
      $region9: #{tpu_custom_call.1} parent=5 // pred_check
        _
      $region10: #{tpu_custom_call.1} parent=5 // pred_check_branch
        %168 = sbr.rel (%p165) target = $region12
      $region11: #{tpu_custom_call.1} parent=5 // pred_region
        %s169 = ssub.s32 %s19, 1
        // Predicated region
        $region13: #{tpu_custom_call.1} parent=11 // pred_check
          %p170 = pneg %p66
        $region14: #{tpu_custom_call.1} parent=11 // pred_check_branch
          %172 = sbr.rel (%p170) target = $region16
        $region15: #{tpu_custom_call.1} parent=11 // pred_region
          %s174 = ssub.s32 576, 576
          %175 = vsyncadd [#allocation7], %s174
          %s176 = sshll.u32 [#allocation6], 4
          %s177 = int_to_ptr.vmem [resolvable:$true] %s176
          %182 = dma.hbm_to_vmem [thread:$0]  %s1, 576, %s177, [#allocation7], 64, 64, 4
        $region16: #{tpu_custom_call.1} parent=11 // pred_fallthru
          _
        // Predicated region
        $region17: #{tpu_custom_call.1} parent=11 // pred_check
          %p183 = pneg %p87
        $region18: #{tpu_custom_call.1} parent=11 // pred_check_branch
          %185 = sbr.rel (%p183) target = $region20
        $region19: #{tpu_custom_call.1} parent=11 // pred_region
          %s187 = ssub.s32 16, 16
          %188 = vsyncadd [#allocation7], %s187
          %s190 = sshll.u32 [#allocation8], 4
          %s191 = int_to_ptr.vmem [resolvable:$true] %s190
          %193 = dma.hbm_to_vmem [thread:$0]  %s2, 16, %s191, [#allocation7]
        $region20: #{tpu_custom_call.1} parent=11 // pred_fallthru
          _
        // Predicated region
        $region21: #{tpu_custom_call.1} parent=11 // pred_check
          %p194 = pneg %p108
        $region22: #{tpu_custom_call.1} parent=11 // pred_check_branch
          %196 = sbr.rel (%p194) target = $region24
        $region23: #{tpu_custom_call.1} parent=11 // pred_region
          %s198 = ssub.s32 1152, 1152
          %199 = vsyncadd [#allocation10], %s198
          %s200 = sshll.u32 [#allocation9], 4
          %s201 = int_to_ptr.vmem [resolvable:$true] %s200
          %206 = dma.hbm_to_vmem [thread:$0]  %s3, 1152, %s201, [#allocation10], 128, 128, 8
        $region24: #{tpu_custom_call.1} parent=11 // pred_fallthru
          _
        // Predicated region
        $region25: #{tpu_custom_call.1} parent=11 // pred_check
          %p207 = pneg %p129
        $region26: #{tpu_custom_call.1} parent=11 // pred_check_branch
          %209 = sbr.rel (%p207) target = $region28
        $region27: #{tpu_custom_call.1} parent=11 // pred_region
          %s211 = ssub.s32 16, 16
          %212 = vsyncadd [#allocation10], %s211
          %s214 = sshll.u32 [#allocation11], 4
          %s215 = int_to_ptr.vmem [resolvable:$true] %s214
          %217 = dma.hbm_to_vmem [thread:$0]  %s4, 16, %s215, [#allocation10]
        $region28: #{tpu_custom_call.1} parent=11 // pred_fallthru
          _
      $region12: #{tpu_custom_call.1} parent=5 // pred_fallthru
        _
      %p218 = scmp.lt.s32.totalorder %s19, 2
      // Predicated region
      $region29: #{tpu_custom_call.1} parent=5 // pred_check
        %p219 = pneg %p218
      $region30: #{tpu_custom_call.1} parent=5 // pred_check_branch
        %221 = sbr.rel (%p219) target = $region32
      $region31: #{tpu_custom_call.1} parent=5 // pred_region
        // Predicated region
        $region33: #{tpu_custom_call.1} parent=31 // pred_check
          %p222 = pneg %p39
        $region34: #{tpu_custom_call.1} parent=31 // pred_check_branch
          %224 = sbr.rel (%p222) target = $region36
        $region35: #{tpu_custom_call.1} parent=31 // pred_region
          %s225 = sand.u32 %s29, 1
          %s226 = scalar_lea.sflag [#allocation4], %s225
          %s227 = sand.u32 %s29, 1
          %s228 = smul.addr %s227, 328
          %s229 = scalar_lea.vmem [#allocation3], %s228
          %s231 = ssub.s32 5248, 5248
          %232 = vsyncadd %s226, %s231
          %s233 = smul.addr %s19, 41
          %s234 = smul.addr %s233, 128
          %s235 = scalar_lea.hbm %s0, %s234
          %s236 = sshll.u32 %s229, 4
          %s237 = int_to_ptr.vmem [resolvable:$true] %s236
          %242 = dma.hbm_to_vmem [thread:$0]  %s235, 5248, %s237, %s226, 128, 128, 8
        $region36: #{tpu_custom_call.1} parent=31 // pred_fallthru
          _
      $region32: #{tpu_custom_call.1} parent=5 // pred_fallthru
        _
      %p243 = scmp.le.s32.totalorder 1, %s19
      %p244 = scmp.lt.s32.totalorder %s19, 3
      %p245 = pnand %p243, %p244
      %p246 = pneg %p245
      // Predicated region
      $region37: #{tpu_custom_call.1} parent=5 // pred_check
        _
      $region38: #{tpu_custom_call.1} parent=5 // pred_check_branch
        %248 = sbr.rel (%p245) target = $region40
      $region39: #{tpu_custom_call.1} parent=5 // pred_region
        %s249 = ssub.s32 %s19, 1
        %s250 = sand.u32 %s32, 1
        %s251 = scalar_lea.sflag [#allocation4], %s250
        %s252 = sand.u32 %s32, 1
        %s253 = smul.addr %s252, 328
        %s254 = scalar_lea.vmem [#allocation3], %s253
        // Predicated region
        $region41: #{tpu_custom_call.1} parent=39 // pred_check
          %p255 = pneg %p45
        $region42: #{tpu_custom_call.1} parent=39 // pred_check_branch
          %257 = sbr.rel (%p255) target = $region44
        $region43: #{tpu_custom_call.1} parent=39 // pred_region
          %258 = dma.done %s251, 5248
        $region44: #{tpu_custom_call.1} parent=39 // pred_fallthru
          _
        // Predicated region
        $region45: #{tpu_custom_call.1} parent=39 // pred_check
          %p259 = pneg %p66
        $region46: #{tpu_custom_call.1} parent=39 // pred_check_branch
          %261 = sbr.rel (%p259) target = $region48
        $region47: #{tpu_custom_call.1} parent=39 // pred_region
          %262 = dma.done [#allocation7], 576
        $region48: #{tpu_custom_call.1} parent=39 // pred_fallthru
          _
        // Predicated region
        $region49: #{tpu_custom_call.1} parent=39 // pred_check
          %p263 = pneg %p87
        $region50: #{tpu_custom_call.1} parent=39 // pred_check_branch
          %265 = sbr.rel (%p263) target = $region52
        $region51: #{tpu_custom_call.1} parent=39 // pred_region
          %266 = dma.done [#allocation7], 16
        $region52: #{tpu_custom_call.1} parent=39 // pred_fallthru
          _
        // Predicated region
        $region53: #{tpu_custom_call.1} parent=39 // pred_check
          %p267 = pneg %p108
        $region54: #{tpu_custom_call.1} parent=39 // pred_check_branch
          %269 = sbr.rel (%p267) target = $region56
        $region55: #{tpu_custom_call.1} parent=39 // pred_region
          %270 = dma.done [#allocation10], 1152
        $region56: #{tpu_custom_call.1} parent=39 // pred_fallthru
          _
        // Predicated region
        $region57: #{tpu_custom_call.1} parent=39 // pred_check
          %p271 = pneg %p129
        $region58: #{tpu_custom_call.1} parent=39 // pred_check_branch
          %273 = sbr.rel (%p271) target = $region60
        $region59: #{tpu_custom_call.1} parent=39 // pred_region
          %274 = dma.done [#allocation10], 16
        $region60: #{tpu_custom_call.1} parent=39 // pred_fallthru
          _
        %s275 = sand.u32 %s32, 1
        %s276 = scalar_lea.sflag [#allocation4], %s275
        %s277 = sand.u32 %s32, 1
        %s278 = smul.addr %s277, 328
        %s279 = scalar_lea.vmem [#allocation3], %s278
        %p280 = pneg %p45
        %p281 = pneg %p42
        %p282 = pneg %p66
        %p283 = pneg %p63
        %p284 = pneg %p87
        %p285 = pneg %p84
        %p286 = pneg %p108
        %p287 = pneg %p105
        %p288 = pneg %p129
        %p289 = pneg %p126
        %p290 = pneg %p155
        %p291 = pneg %p152
        %s292 = sand.u32 %s142, 1
        %s293 = scalar_lea.sflag [#allocation5], %s292
        %s294 = sand.u32 %s142, 1
        %s295 = smul.addr %s294, 288
        %s296 = scalar_lea.vmem [#allocation12], %s295
        %v297 = vld [vmem:[%s254] sm:$0xff]
        %v298 = vld [vmem:[%s254 + $0x8] sm:$0xff]
        %v299 = vld [vmem:[%s254 + $0x10] sm:$0xff]
        %v300 = vld [vmem:[%s254 + $0x18] sm:$0xff]
        %v301 = vld [vmem:[%s254 + $0x20] sm:$0xff]
        %v302 = vld [vmem:[%s254 + $0x28] sm:$0xff]
        %v303 = vld [vmem:[%s254 + $0x30] sm:$0xff]
        %v304 = vld [vmem:[%s254 + $0x38] sm:$0xff]
        %v305 = vld [vmem:[%s254 + $0x40] sm:$0xff]
        %v306 = vld [vmem:[%s254 + $0x48] sm:$0xff]
        %v307 = vld [vmem:[%s254 + $0x50] sm:$0xff]
        %v308 = vld [vmem:[%s254 + $0x58] sm:$0xff]
        %v309 = vld [vmem:[%s254 + $0x60] sm:$0xff]
        %v310 = vld [vmem:[%s254 + $0x68] sm:$0xff]
        %v311 = vld [vmem:[%s254 + $0x70] sm:$0xff]
        %v312 = vld [vmem:[%s254 + $0x78] sm:$0xff]
        %v313 = vld [vmem:[%s254 + $0x80] sm:$0xff]
        %v314 = vld [vmem:[%s254 + $0x88] sm:$0xff]
        %v315 = vld [vmem:[%s254 + $0x90] sm:$0xff]
        %v316 = vld [vmem:[%s254 + $0x98] sm:$0xff]
        %v317 = vld [vmem:[%s254 + $0xa0] sm:$0xff]
        %v318 = vld [vmem:[%s254 + $0xa8] sm:$0xff]
        %v319 = vld [vmem:[%s254 + $0xb0] sm:$0xff]
        %v320 = vld [vmem:[%s254 + $0xb8] sm:$0xff]
        %v321 = vld [vmem:[%s254 + $0xc0] sm:$0xff]
        %v322 = vld [vmem:[%s254 + $0xc8] sm:$0xff]
        %v323 = vld [vmem:[%s254 + $0xd0] sm:$0xff]
        %v324 = vld [vmem:[%s254 + $0xd8] sm:$0xff]
        %v325 = vld [vmem:[%s254 + $0xe0] sm:$0xff]
        %v326 = vld [vmem:[%s254 + $0xe8] sm:$0xff]
        %v327 = vld [vmem:[%s254 + $0xf0] sm:$0xff]
        %v328 = vld [vmem:[%s254 + $0xf8] sm:$0xff]
        %v329 = vld [vmem:[%s254 + $0x100] sm:$0xff]
        %v330 = vld [vmem:[%s254 + $0x108] sm:$0xff]
        %v331 = vld [vmem:[%s254 + $0x110] sm:$0xff]
        %v332 = vld [vmem:[%s254 + $0x118] sm:$0xff]
        %v333 = vld [vmem:[#allocation6] sm:$0xf]
        %v334 = vld [vmem:[%s254 + $0x1] sm:$0xff]
        %v335 = vld [vmem:[%s254 + $0x9] sm:$0xff]
        %v336 = vld [vmem:[%s254 + $0x11] sm:$0xff]
        %v337 = vld [vmem:[%s254 + $0x19] sm:$0xff]
        %v338 = vld [vmem:[%s254 + $0x21] sm:$0xff]
        %v339 = vld [vmem:[%s254 + $0x29] sm:$0xff]
        %v340 = vld [vmem:[%s254 + $0x31] sm:$0xff]
        %v341 = vld [vmem:[%s254 + $0x39] sm:$0xff]
        %v342 = vld [vmem:[%s254 + $0x41] sm:$0xff]
        %v343 = vld [vmem:[%s254 + $0x49] sm:$0xff]
        %v344 = vld [vmem:[%s254 + $0x51] sm:$0xff]
        %v345 = vld [vmem:[%s254 + $0x59] sm:$0xff]
        %v346 = vld [vmem:[%s254 + $0x61] sm:$0xff]
        %v347 = vld [vmem:[%s254 + $0x69] sm:$0xff]
        %v348 = vld [vmem:[%s254 + $0x71] sm:$0xff]
        %v349 = vld [vmem:[%s254 + $0x79] sm:$0xff]
        %v350 = vld [vmem:[%s254 + $0x81] sm:$0xff]
        %v351 = vld [vmem:[%s254 + $0x89] sm:$0xff]
        %v352 = vld [vmem:[%s254 + $0x91] sm:$0xff]
        %v353 = vld [vmem:[%s254 + $0x99] sm:$0xff]
        %v354 = vld [vmem:[%s254 + $0xa1] sm:$0xff]
        %v355 = vld [vmem:[%s254 + $0xa9] sm:$0xff]
        %v356 = vld [vmem:[%s254 + $0xb1] sm:$0xff]
        %v357 = vld [vmem:[%s254 + $0xb9] sm:$0xff]
        %v358 = vld [vmem:[%s254 + $0xc1] sm:$0xff]
        %v359 = vld [vmem:[%s254 + $0xc9] sm:$0xff]
        %v360 = vld [vmem:[%s254 + $0xd1] sm:$0xff]
        %v361 = vld [vmem:[%s254 + $0xd9] sm:$0xff]
        %v362 = vld [vmem:[%s254 + $0xe1] sm:$0xff]
        %v363 = vld [vmem:[%s254 + $0xe9] sm:$0xff]
        %v364 = vld [vmem:[%s254 + $0xf1] sm:$0xff]
        %v365 = vld [vmem:[%s254 + $0xf9] sm:$0xff]
        %v366 = vld [vmem:[%s254 + $0x101] sm:$0xff]
        %v367 = vld [vmem:[%s254 + $0x109] sm:$0xff]
        %v368 = vld [vmem:[%s254 + $0x111] sm:$0xff]
        %v369 = vld [vmem:[%s254 + $0x119] sm:$0xff]
        %s370 = scalar_lea.vmem [#allocation6], 4
        %v371 = vld [vmem:[%s370] sm:$0xf]
        %vm372 = vcmask 31744
        %v374 = vsel %vm372, %v334, 0
        %v377 = vsel %vm372, %v335, 0
        %v380 = vsel %vm372, %v336, 0
        %v383 = vsel %vm372, %v337, 0
        %v386 = vsel %vm372, %v338, 0
        %v389 = vsel %vm372, %v339, 0
        %v392 = vsel %vm372, %v340, 0
        %v395 = vsel %vm372, %v341, 0
        %v398 = vsel %vm372, %v342, 0
        %v401 = vsel %vm372, %v343, 0
        %v404 = vsel %vm372, %v344, 0
        %v407 = vsel %vm372, %v345, 0
        %v410 = vsel %vm372, %v346, 0
        %v413 = vsel %vm372, %v347, 0
        %v416 = vsel %vm372, %v348, 0
        %v419 = vsel %vm372, %v349, 0
        %v422 = vsel %vm372, %v350, 0
        %v425 = vsel %vm372, %v351, 0
        %v428 = vsel %vm372, %v352, 0
        %v431 = vsel %vm372, %v353, 0
        %v434 = vsel %vm372, %v354, 0
        %v437 = vsel %vm372, %v355, 0
        %v440 = vsel %vm372, %v356, 0
        %v443 = vsel %vm372, %v357, 0
        %v446 = vsel %vm372, %v358, 0
        %v449 = vsel %vm372, %v359, 0
        %v452 = vsel %vm372, %v360, 0
        %v455 = vsel %vm372, %v361, 0
        %v458 = vsel %vm372, %v362, 0
        %v461 = vsel %vm372, %v363, 0
        %v464 = vsel %vm372, %v364, 0
        %v467 = vsel %vm372, %v365, 0
        %v470 = vsel %vm372, %v366, 0
        %v473 = vsel %vm372, %v367, 0
        %v476 = vsel %vm372, %v368, 0
        %v479 = vsel %vm372, %v369, 0
        %vm481 = vcmask 1043456
        %v483 = vsel %vm481, %v371, 0
        %485 = vmatprep.subr.mxu0 0.0
        %486 = vmatpush1.msra.mxu0 %v483
        %487 = vmatprep.subr.mxu0 0.0
        %488 = vmatpush1.msra.mxu0 0.0
        %489 = vmatprep.subr.mxu0 0.0
        %490 = vmatpush1.msra.mxu0 0.0
        %491 = vmatprep.subr.mxu0 0.0
        %492 = vmatpush1.msra.mxu0 0.0
        %493 = vmatprep.subr.mxu0 0.0
        %494 = vmatpush1.msra.mxu0 0.0
        %495 = vmatprep.subr.mxu0 0.0
        %496 = vmatpush1.msra.mxu0 0.0
        %497 = vmatprep.subr.mxu0 0.0
        %498 = vmatpush1.msra.mxu0 0.0
        %499 = vmatprep.subr.mxu0 0.0
        %500 = vmatpush1.msra.mxu0 0.0
        %501 = vmatprep.subr.mxu0 0.0
        %502 = vmatpush1.msra.mxu0 0.0
        %503 = vmatprep.subr.mxu0 0.0
        %504 = vmatpush1.msra.mxu0 0.0
        %505 = vmatprep.subr.mxu0 0.0
        %506 = vmatpush1.msra.mxu0 0.0
        %507 = vmatprep.subr.mxu0 0.0
        %508 = vmatpush1.msra.mxu0 0.0
        %509 = vmatprep.subr.mxu0 0.0
        %510 = vmatpush1.msra.mxu0 0.0
        %511 = vmatprep.subr.mxu0 0.0
        %512 = vmatpush1.msra.mxu0 0.0
        %513 = vmatprep.subr.mxu0 0.0
        %514 = vmatpush1.msra.mxu0 0.0
        %515 = vmatprep.subr.mxu0 0.0
        %516 = vmatpush1.msra.mxu0 0.0
        %517 = vmatprep.subr.mxu0 0.0
        %518 = vmatpush1.msra.mxu0 0.0
        %519 = vmatprep.subr.mxu0 0.0
        %520 = vmatpush1.msra.mxu0 0.0
        %521 = vmatprep.subr.mxu0 0.0
        %522 = vmatpush1.msra.mxu0 0.0
        %523 = vmatprep.subr.mxu0 0.0
        %524 = vmatpush1.msra.mxu0 0.0
        %525 = vmatprep.subr.mxu0 0.0
        %526 = vmatpush1.msra.mxu0 0.0
        %527 = vmatprep.subr.mxu0 0.0
        %528 = vmatpush1.msra.mxu0 0.0
        %529 = vmatprep.subr.mxu0 0.0
        %530 = vmatpush1.msra.mxu0 0.0
        %531 = vmatprep.subr.mxu0 0.0
        %532 = vmatpush1.msra.mxu0 0.0
        %533 = vmatprep.subr.mxu0 0.0
        %534 = vmatpush1.msra.mxu0 0.0
        %535 = vmatprep.subr.mxu0 0.0
        %536 = vmatpush1.msra.mxu0 0.0
        %537 = vmatprep.subr.mxu0 0.0
        %538 = vmatpush1.msra.mxu0 0.0
        %539 = vmatprep.subr.mxu0 0.0
        %540 = vmatpush1.msra.mxu0 0.0
        %541 = vmatprep.subr.mxu0 0.0
        %542 = vmatpush1.msra.mxu0 0.0
        %543 = vmatprep.subr.mxu0 0.0
        %544 = vmatpush1.msra.mxu0 0.0
        %545 = vmatprep.subr.mxu0 0.0
        %546 = vmatpush1.msra.mxu0 0.0
        %547 = vmatprep.subr.mxu0 0.0
        %548 = vmatpush1.msra.mxu0 0.0
        %549 = vmatprep.mubr.f32.mxu0 0.0
        %550 = vmatmul.mubr.f32.gmra.mrb[0].mxu0 %v374
        %v551 = vpop.f32.mrb[0].mxu0
        %v552 = vadd.f32 0.0, %v551
        %v553 = vpop.f32.mrb[0].mxu0
        %554 = vmatprep.mubr.f32.mxu0 0.0
        %555 = vmatmul.mubr.f32.gmra.mrb[0].mxu0 %v377
        %v556 = vpop.f32.mrb[0].mxu0
        %v557 = vadd.f32 0.0, %v556
        %v558 = vpop.f32.mrb[0].mxu0
        %559 = vmatprep.mubr.f32.mxu0 0.0
        %560 = vmatmul.mubr.f32.gmra.mrb[0].mxu0 %v380
        %v561 = vpop.f32.mrb[0].mxu0
        %v562 = vadd.f32 0.0, %v561
        %v563 = vpop.f32.mrb[0].mxu0
        %564 = vmatprep.mubr.f32.mxu0 0.0
        %565 = vmatmul.mubr.f32.gmra.mrb[0].mxu0 %v383
        %v566 = vpop.f32.mrb[0].mxu0
        %v567 = vadd.f32 0.0, %v566
        %v568 = vpop.f32.mrb[0].mxu0
        %569 = vmatprep.mubr.f32.mxu0 0.0
        %570 = vmatmul.mubr.f32.gmra.mrb[0].mxu0 %v386
        %v571 = vpop.f32.mrb[0].mxu0
        %v572 = vadd.f32 0.0, %v571
        %v573 = vpop.f32.mrb[0].mxu0
        %574 = vmatprep.mubr.f32.mxu0 0.0
        %575 = vmatmul.mubr.f32.gmra.mrb[0].mxu0 %v389
        %v576 = vpop.f32.mrb[0].mxu0
        %v577 = vadd.f32 0.0, %v576
        %v578 = vpop.f32.mrb[0].mxu0
        %579 = vmatprep.mubr.f32.mxu0 0.0
        %580 = vmatmul.mubr.f32.gmra.mrb[0].mxu0 %v392
        %v581 = vpop.f32.mrb[0].mxu0
        %v582 = vadd.f32 0.0, %v581
        %v583 = vpop.f32.mrb[0].mxu0
        %584 = vmatprep.mubr.f32.mxu0 0.0
        %585 = vmatmul.mubr.f32.gmra.mrb[0].mxu0 %v395
        %v586 = vpop.f32.mrb[0].mxu0
        %v587 = vadd.f32 0.0, %v586
        %v588 = vpop.f32.mrb[0].mxu0
        %589 = vmatprep.mubr.f32.mxu0 0.0
        %590 = vmatmul.mubr.f32.gmra.mrb[0].mxu0 %v398
        %v591 = vpop.f32.mrb[0].mxu0
        %v592 = vadd.f32 0.0, %v591
        %v593 = vpop.f32.mrb[0].mxu0
        %594 = vmatprep.mubr.f32.mxu0 0.0
        %595 = vmatmul.mubr.f32.gmra.mrb[0].mxu0 %v401
        %v596 = vpop.f32.mrb[0].mxu0
        %v597 = vadd.f32 0.0, %v596
        %v598 = vpop.f32.mrb[0].mxu0
        %599 = vmatprep.mubr.f32.mxu0 0.0
        %600 = vmatmul.mubr.f32.gmra.mrb[0].mxu0 %v404
        %v601 = vpop.f32.mrb[0].mxu0
        %v602 = vadd.f32 0.0, %v601
        %v603 = vpop.f32.mrb[0].mxu0
        %604 = vmatprep.mubr.f32.mxu0 0.0
        %605 = vmatmul.mubr.f32.gmra.mrb[0].mxu0 %v407
        %v606 = vpop.f32.mrb[0].mxu0
        %v607 = vadd.f32 0.0, %v606
        %v608 = vpop.f32.mrb[0].mxu0
        %609 = vmatprep.mubr.f32.mxu0 0.0
        %610 = vmatmul.mubr.f32.gmra.mrb[0].mxu0 %v410
        %v611 = vpop.f32.mrb[0].mxu0
        %v612 = vadd.f32 0.0, %v611
        %v613 = vpop.f32.mrb[0].mxu0
        %614 = vmatprep.mubr.f32.mxu0 0.0
        %615 = vmatmul.mubr.f32.gmra.mrb[0].mxu0 %v413
        %v616 = vpop.f32.mrb[0].mxu0
        %v617 = vadd.f32 0.0, %v616
        %v618 = vpop.f32.mrb[0].mxu0
        %619 = vmatprep.mubr.f32.mxu0 0.0
        %620 = vmatmul.mubr.f32.gmra.mrb[0].mxu0 %v416
        %v621 = vpop.f32.mrb[0].mxu0
        %v622 = vadd.f32 0.0, %v621
        %v623 = vpop.f32.mrb[0].mxu0
        %624 = vmatprep.mubr.f32.mxu0 0.0
        %625 = vmatmul.mubr.f32.gmra.mrb[0].mxu0 %v419
        %v626 = vpop.f32.mrb[0].mxu0
        %v627 = vadd.f32 0.0, %v626
        %v628 = vpop.f32.mrb[0].mxu0
        %629 = vmatprep.mubr.f32.mxu0 0.0
        %630 = vmatmul.mubr.f32.gmra.mrb[0].mxu0 %v422
        %v631 = vpop.f32.mrb[0].mxu0
        %v632 = vadd.f32 0.0, %v631
        %v633 = vpop.f32.mrb[0].mxu0
        %634 = vmatprep.mubr.f32.mxu0 0.0
        %635 = vmatmul.mubr.f32.gmra.mrb[0].mxu0 %v425
        %v636 = vpop.f32.mrb[0].mxu0
        %v637 = vadd.f32 0.0, %v636
        %v638 = vpop.f32.mrb[0].mxu0
        %639 = vmatprep.mubr.f32.mxu0 0.0
        %640 = vmatmul.mubr.f32.gmra.mrb[0].mxu0 %v428
        %v641 = vpop.f32.mrb[0].mxu0
        %v642 = vadd.f32 0.0, %v641
        %v643 = vpop.f32.mrb[0].mxu0
        %644 = vmatprep.mubr.f32.mxu0 0.0
        %645 = vmatmul.mubr.f32.gmra.mrb[0].mxu0 %v431
        %v646 = vpop.f32.mrb[0].mxu0
        %v647 = vadd.f32 0.0, %v646
        %v648 = vpop.f32.mrb[0].mxu0
        %649 = vmatprep.mubr.f32.mxu0 0.0
        %650 = vmatmul.mubr.f32.gmra.mrb[0].mxu0 %v434
        %v651 = vpop.f32.mrb[0].mxu0
        %v652 = vadd.f32 0.0, %v651
        %v653 = vpop.f32.mrb[0].mxu0
        %654 = vmatprep.mubr.f32.mxu0 0.0
        %655 = vmatmul.mubr.f32.gmra.mrb[0].mxu0 %v437
        %v656 = vpop.f32.mrb[0].mxu0
        %v657 = vadd.f32 0.0, %v656
        %v658 = vpop.f32.mrb[0].mxu0
        %659 = vmatprep.mubr.f32.mxu0 0.0
        %660 = vmatmul.mubr.f32.gmra.mrb[0].mxu0 %v440
        %v661 = vpop.f32.mrb[0].mxu0
        %v662 = vadd.f32 0.0, %v661
        %v663 = vpop.f32.mrb[0].mxu0
        %664 = vmatprep.mubr.f32.mxu0 0.0
        %665 = vmatmul.mubr.f32.gmra.mrb[0].mxu0 %v443
        %v666 = vpop.f32.mrb[0].mxu0
        %v667 = vadd.f32 0.0, %v666
        %v668 = vpop.f32.mrb[0].mxu0
        %669 = vmatprep.mubr.f32.mxu0 0.0
        %670 = vmatmul.mubr.f32.gmra.mrb[0].mxu0 %v446
        %v671 = vpop.f32.mrb[0].mxu0
        %v672 = vadd.f32 0.0, %v671
        %v673 = vpop.f32.mrb[0].mxu0
        %674 = vmatprep.mubr.f32.mxu0 0.0
        %675 = vmatmul.mubr.f32.gmra.mrb[0].mxu0 %v449
        %v676 = vpop.f32.mrb[0].mxu0
        %v677 = vadd.f32 0.0, %v676
        %v678 = vpop.f32.mrb[0].mxu0
        %679 = vmatprep.mubr.f32.mxu0 0.0
        %680 = vmatmul.mubr.f32.gmra.mrb[0].mxu0 %v452
        %v681 = vpop.f32.mrb[0].mxu0
        %v682 = vadd.f32 0.0, %v681
        %v683 = vpop.f32.mrb[0].mxu0
        %684 = vmatprep.mubr.f32.mxu0 0.0
        %685 = vmatmul.mubr.f32.gmra.mrb[0].mxu0 %v455
        %v686 = vpop.f32.mrb[0].mxu0
        %v687 = vadd.f32 0.0, %v686
        %v688 = vpop.f32.mrb[0].mxu0
        %689 = vmatprep.mubr.f32.mxu0 0.0
        %690 = vmatmul.mubr.f32.gmra.mrb[0].mxu0 %v458
        %v691 = vpop.f32.mrb[0].mxu0
        %v692 = vadd.f32 0.0, %v691
        %v693 = vpop.f32.mrb[0].mxu0
        %694 = vmatprep.mubr.f32.mxu0 0.0
        %695 = vmatmul.mubr.f32.gmra.mrb[0].mxu0 %v461
        %v696 = vpop.f32.mrb[0].mxu0
        %v697 = vadd.f32 0.0, %v696
        %v698 = vpop.f32.mrb[0].mxu0
        %699 = vmatprep.mubr.f32.mxu0 0.0
        %700 = vmatmul.mubr.f32.gmra.mrb[0].mxu0 %v464
        %v701 = vpop.f32.mrb[0].mxu0
        %v702 = vadd.f32 0.0, %v701
        %v703 = vpop.f32.mrb[0].mxu0
        %704 = vmatprep.mubr.f32.mxu0 0.0
        %705 = vmatmul.mubr.f32.gmra.mrb[0].mxu0 %v467
        %v706 = vpop.f32.mrb[0].mxu0
        %v707 = vadd.f32 0.0, %v706
        %v708 = vpop.f32.mrb[0].mxu0
        %709 = vmatprep.mubr.f32.mxu0 0.0
        %710 = vmatmul.mubr.f32.gmra.mrb[0].mxu0 %v470
        %v711 = vpop.f32.mrb[0].mxu0
        %v712 = vadd.f32 0.0, %v711
        %v713 = vpop.f32.mrb[0].mxu0
        %714 = vmatprep.mubr.f32.mxu0 0.0
        %715 = vmatmul.mubr.f32.gmra.mrb[0].mxu0 %v473
        %v716 = vpop.f32.mrb[0].mxu0
        %v717 = vadd.f32 0.0, %v716
        %v718 = vpop.f32.mrb[0].mxu0
        %719 = vmatprep.mubr.f32.mxu0 0.0
        %720 = vmatmul.mubr.f32.gmra.mrb[0].mxu0 %v476
        %v721 = vpop.f32.mrb[0].mxu0
        %v722 = vadd.f32 0.0, %v721
        %v723 = vpop.f32.mrb[0].mxu0
        %724 = vmatprep.mubr.f32.mxu0 0.0
        %725 = vmatmul.mubr.f32.gmra.mrb[0].mxu0 %v479
        %v726 = vpop.f32.mrb[0].mxu0
        %v727 = vadd.f32 0.0, %v726
        %v728 = vpop.f32.mrb[0].mxu0
        %729 = vdwg.mxu0
        %v731 = vsel %vm372, %v297, 0
        %v734 = vsel %vm372, %v298, 0
        %v737 = vsel %vm372, %v299, 0
        %v740 = vsel %vm372, %v300, 0
        %v743 = vsel %vm372, %v301, 0
        %v746 = vsel %vm372, %v302, 0
        %v749 = vsel %vm372, %v303, 0
        %v752 = vsel %vm372, %v304, 0
        %v755 = vsel %vm372, %v305, 0
        %v758 = vsel %vm372, %v306, 0
        %v761 = vsel %vm372, %v307, 0
        %v764 = vsel %vm372, %v308, 0
        %v767 = vsel %vm372, %v309, 0
        %v770 = vsel %vm372, %v310, 0
        %v773 = vsel %vm372, %v311, 0
        %v776 = vsel %vm372, %v312, 0
        %v779 = vsel %vm372, %v313, 0
        %v782 = vsel %vm372, %v314, 0
        %v785 = vsel %vm372, %v315, 0
        %v788 = vsel %vm372, %v316, 0
        %v791 = vsel %vm372, %v317, 0
        %v794 = vsel %vm372, %v318, 0
        %v797 = vsel %vm372, %v319, 0
        %v800 = vsel %vm372, %v320, 0
        %v803 = vsel %vm372, %v321, 0
        %v806 = vsel %vm372, %v322, 0
        %v809 = vsel %vm372, %v323, 0
        %v812 = vsel %vm372, %v324, 0
        %v815 = vsel %vm372, %v325, 0
        %v818 = vsel %vm372, %v326, 0
        %v821 = vsel %vm372, %v327, 0
        %v824 = vsel %vm372, %v328, 0
        %v827 = vsel %vm372, %v329, 0
        %v830 = vsel %vm372, %v330, 0
        %v833 = vsel %vm372, %v331, 0
        %v836 = vsel %vm372, %v332, 0
        %v839 = vsel %vm481, %v333, 0
        %841 = vmatprep.subr.mxu0 0.0
        %842 = vmatpush1.msra.mxu0 %v839
        %843 = vmatprep.subr.mxu0 0.0
        %844 = vmatpush1.msra.mxu0 0.0
        %845 = vmatprep.subr.mxu0 0.0
        %846 = vmatpush1.msra.mxu0 0.0
        %847 = vmatprep.subr.mxu0 0.0
        %848 = vmatpush1.msra.mxu0 0.0
        %849 = vmatprep.subr.mxu0 0.0
        %850 = vmatpush1.msra.mxu0 0.0
        %851 = vmatprep.subr.mxu0 0.0
        %852 = vmatpush1.msra.mxu0 0.0
        %853 = vmatprep.subr.mxu0 0.0
        %854 = vmatpush1.msra.mxu0 0.0
        %855 = vmatprep.subr.mxu0 0.0
        %856 = vmatpush1.msra.mxu0 0.0
        %857 = vmatprep.subr.mxu0 0.0
        %858 = vmatpush1.msra.mxu0 0.0
        %859 = vmatprep.subr.mxu0 0.0
        %860 = vmatpush1.msra.mxu0 0.0
        %861 = vmatprep.subr.mxu0 0.0
        %862 = vmatpush1.msra.mxu0 0.0
        %863 = vmatprep.subr.mxu0 0.0
        %864 = vmatpush1.msra.mxu0 0.0
        %865 = vmatprep.subr.mxu0 0.0
        %866 = vmatpush1.msra.mxu0 0.0
        %867 = vmatprep.subr.mxu0 0.0
        %868 = vmatpush1.msra.mxu0 0.0
        %869 = vmatprep.subr.mxu0 0.0
        %870 = vmatpush1.msra.mxu0 0.0
        %871 = vmatprep.subr.mxu0 0.0
        %872 = vmatpush1.msra.mxu0 0.0
        %873 = vmatprep.subr.mxu0 0.0
        %874 = vmatpush1.msra.mxu0 0.0
        %875 = vmatprep.subr.mxu0 0.0
        %876 = vmatpush1.msra.mxu0 0.0
        %877 = vmatprep.subr.mxu0 0.0
        %878 = vmatpush1.msra.mxu0 0.0
        %879 = vmatprep.subr.mxu0 0.0
        %880 = vmatpush1.msra.mxu0 0.0
        %881 = vmatprep.subr.mxu0 0.0
        %882 = vmatpush1.msra.mxu0 0.0
        %883 = vmatprep.subr.mxu0 0.0
        %884 = vmatpush1.msra.mxu0 0.0
        %885 = vmatprep.subr.mxu0 0.0
        %886 = vmatpush1.msra.mxu0 0.0
        %887 = vmatprep.subr.mxu0 0.0
        %888 = vmatpush1.msra.mxu0 0.0
        %889 = vmatprep.subr.mxu0 0.0
        %890 = vmatpush1.msra.mxu0 0.0
        %891 = vmatprep.subr.mxu0 0.0
        %892 = vmatpush1.msra.mxu0 0.0
        %893 = vmatprep.subr.mxu0 0.0
        %894 = vmatpush1.msra.mxu0 0.0
        %895 = vmatprep.subr.mxu0 0.0
        %896 = vmatpush1.msra.mxu0 0.0
        %897 = vmatprep.subr.mxu0 0.0
        %898 = vmatpush1.msra.mxu0 0.0
        %899 = vmatprep.subr.mxu0 0.0
        %900 = vmatpush1.msra.mxu0 0.0
        %901 = vmatprep.subr.mxu0 0.0
        %902 = vmatpush1.msra.mxu0 0.0
        %903 = vmatprep.subr.mxu0 0.0
        %904 = vmatpush1.msra.mxu0 0.0
        %905 = vmatprep.mubr.f32.mxu0 0.0
        %906 = vmatmul.mubr.f32.gmra.mrb[0].mxu0 %v731
        %v907 = vpop.f32.mrb[0].mxu0
        %v908 = vadd.f32 %v552, %v907
        %v909 = vpop.f32.mrb[0].mxu0
        %910 = vmatprep.mubr.f32.mxu0 0.0
        %911 = vmatmul.mubr.f32.gmra.mrb[0].mxu0 %v734
        %v912 = vpop.f32.mrb[0].mxu0
        %v913 = vadd.f32 %v557, %v912
        %v914 = vpop.f32.mrb[0].mxu0
        %915 = vmatprep.mubr.f32.mxu0 0.0
        %916 = vmatmul.mubr.f32.gmra.mrb[0].mxu0 %v737
        %v917 = vpop.f32.mrb[0].mxu0
        %v918 = vadd.f32 %v562, %v917
        %v919 = vpop.f32.mrb[0].mxu0
        %920 = vmatprep.mubr.f32.mxu0 0.0
        %921 = vmatmul.mubr.f32.gmra.mrb[0].mxu0 %v740
        %v922 = vpop.f32.mrb[0].mxu0
        %v923 = vadd.f32 %v567, %v922
        %v924 = vpop.f32.mrb[0].mxu0
        %925 = vmatprep.mubr.f32.mxu0 0.0
        %926 = vmatmul.mubr.f32.gmra.mrb[0].mxu0 %v743
        %v927 = vpop.f32.mrb[0].mxu0
        %v928 = vadd.f32 %v572, %v927
        %v929 = vpop.f32.mrb[0].mxu0
        %930 = vmatprep.mubr.f32.mxu0 0.0
        %931 = vmatmul.mubr.f32.gmra.mrb[0].mxu0 %v746
        %v932 = vpop.f32.mrb[0].mxu0
        %v933 = vadd.f32 %v577, %v932
        %v934 = vpop.f32.mrb[0].mxu0
        %935 = vmatprep.mubr.f32.mxu0 0.0
        %936 = vmatmul.mubr.f32.gmra.mrb[0].mxu0 %v749
        %v937 = vpop.f32.mrb[0].mxu0
        %v938 = vadd.f32 %v582, %v937
        %v939 = vpop.f32.mrb[0].mxu0
        %940 = vmatprep.mubr.f32.mxu0 0.0
        %941 = vmatmul.mubr.f32.gmra.mrb[0].mxu0 %v752
        %v942 = vpop.f32.mrb[0].mxu0
        %v943 = vadd.f32 %v587, %v942
        %v944 = vpop.f32.mrb[0].mxu0
        %945 = vmatprep.mubr.f32.mxu0 0.0
        %946 = vmatmul.mubr.f32.gmra.mrb[0].mxu0 %v755
        %v947 = vpop.f32.mrb[0].mxu0
        %v948 = vadd.f32 %v592, %v947
        %v949 = vpop.f32.mrb[0].mxu0
        %950 = vmatprep.mubr.f32.mxu0 0.0
        %951 = vmatmul.mubr.f32.gmra.mrb[0].mxu0 %v758
        %v952 = vpop.f32.mrb[0].mxu0
        %v953 = vadd.f32 %v597, %v952
        %v954 = vpop.f32.mrb[0].mxu0
        %955 = vmatprep.mubr.f32.mxu0 0.0
        %956 = vmatmul.mubr.f32.gmra.mrb[0].mxu0 %v761
        %v957 = vpop.f32.mrb[0].mxu0
        %v958 = vadd.f32 %v602, %v957
        %v959 = vpop.f32.mrb[0].mxu0
        %960 = vmatprep.mubr.f32.mxu0 0.0
        %961 = vmatmul.mubr.f32.gmra.mrb[0].mxu0 %v764
        %v962 = vpop.f32.mrb[0].mxu0
        %v963 = vadd.f32 %v607, %v962
        %v964 = vpop.f32.mrb[0].mxu0
        %965 = vmatprep.mubr.f32.mxu0 0.0
        %966 = vmatmul.mubr.f32.gmra.mrb[0].mxu0 %v767
        %v967 = vpop.f32.mrb[0].mxu0
        %v968 = vadd.f32 %v612, %v967
        %v969 = vpop.f32.mrb[0].mxu0
        %970 = vmatprep.mubr.f32.mxu0 0.0
        %971 = vmatmul.mubr.f32.gmra.mrb[0].mxu0 %v770
        %v972 = vpop.f32.mrb[0].mxu0
        %v973 = vadd.f32 %v617, %v972
        %v974 = vpop.f32.mrb[0].mxu0
        %975 = vmatprep.mubr.f32.mxu0 0.0
        %976 = vmatmul.mubr.f32.gmra.mrb[0].mxu0 %v773
        %v977 = vpop.f32.mrb[0].mxu0
        %v978 = vadd.f32 %v622, %v977
        %v979 = vpop.f32.mrb[0].mxu0
        %980 = vmatprep.mubr.f32.mxu0 0.0
        %981 = vmatmul.mubr.f32.gmra.mrb[0].mxu0 %v776
        %v982 = vpop.f32.mrb[0].mxu0
        %v983 = vadd.f32 %v627, %v982
        %v984 = vpop.f32.mrb[0].mxu0
        %985 = vmatprep.mubr.f32.mxu0 0.0
        %986 = vmatmul.mubr.f32.gmra.mrb[0].mxu0 %v779
        %v987 = vpop.f32.mrb[0].mxu0
        %v988 = vadd.f32 %v632, %v987
        %v989 = vpop.f32.mrb[0].mxu0
        %990 = vmatprep.mubr.f32.mxu0 0.0
        %991 = vmatmul.mubr.f32.gmra.mrb[0].mxu0 %v782
        %v992 = vpop.f32.mrb[0].mxu0
        %v993 = vadd.f32 %v637, %v992
        %v994 = vpop.f32.mrb[0].mxu0
        %995 = vmatprep.mubr.f32.mxu0 0.0
        %996 = vmatmul.mubr.f32.gmra.mrb[0].mxu0 %v785
        %v997 = vpop.f32.mrb[0].mxu0
        %v998 = vadd.f32 %v642, %v997
        %v999 = vpop.f32.mrb[0].mxu0
        %1000 = vmatprep.mubr.f32.mxu0 0.0
        %1001 = vmatmul.mubr.f32.gmra.mrb[0].mxu0 %v788
        %v1002 = vpop.f32.mrb[0].mxu0
        %v1003 = vadd.f32 %v647, %v1002
        %v1004 = vpop.f32.mrb[0].mxu0
        %1005 = vmatprep.mubr.f32.mxu0 0.0
        %1006 = vmatmul.mubr.f32.gmra.mrb[0].mxu0 %v791
        %v1007 = vpop.f32.mrb[0].mxu0
        %v1008 = vadd.f32 %v652, %v1007
        %v1009 = vpop.f32.mrb[0].mxu0
        %1010 = vmatprep.mubr.f32.mxu0 0.0
        %1011 = vmatmul.mubr.f32.gmra.mrb[0].mxu0 %v794
        %v1012 = vpop.f32.mrb[0].mxu0
        %v1013 = vadd.f32 %v657, %v1012
        %v1014 = vpop.f32.mrb[0].mxu0
        %1015 = vmatprep.mubr.f32.mxu0 0.0
        %1016 = vmatmul.mubr.f32.gmra.mrb[0].mxu0 %v797
        %v1017 = vpop.f32.mrb[0].mxu0
        %v1018 = vadd.f32 %v662, %v1017
        %v1019 = vpop.f32.mrb[0].mxu0
        %1020 = vmatprep.mubr.f32.mxu0 0.0
        %1021 = vmatmul.mubr.f32.gmra.mrb[0].mxu0 %v800
        %v1022 = vpop.f32.mrb[0].mxu0
        %v1023 = vadd.f32 %v667, %v1022
        %v1024 = vpop.f32.mrb[0].mxu0
        %1025 = vmatprep.mubr.f32.mxu0 0.0
        %1026 = vmatmul.mubr.f32.gmra.mrb[0].mxu0 %v803
        %v1027 = vpop.f32.mrb[0].mxu0
        %v1028 = vadd.f32 %v672, %v1027
        %v1029 = vpop.f32.mrb[0].mxu0
        %1030 = vmatprep.mubr.f32.mxu0 0.0
        %1031 = vmatmul.mubr.f32.gmra.mrb[0].mxu0 %v806
        %v1032 = vpop.f32.mrb[0].mxu0
        %v1033 = vadd.f32 %v677, %v1032
        %v1034 = vpop.f32.mrb[0].mxu0
        %1035 = vmatprep.mubr.f32.mxu0 0.0
        %1036 = vmatmul.mubr.f32.gmra.mrb[0].mxu0 %v809
        %v1037 = vpop.f32.mrb[0].mxu0
        %v1038 = vadd.f32 %v682, %v1037
        %v1039 = vpop.f32.mrb[0].mxu0
        %1040 = vmatprep.mubr.f32.mxu0 0.0
        %1041 = vmatmul.mubr.f32.gmra.mrb[0].mxu0 %v812
        %v1042 = vpop.f32.mrb[0].mxu0
        %v1043 = vadd.f32 %v687, %v1042
        %v1044 = vpop.f32.mrb[0].mxu0
        %1045 = vmatprep.mubr.f32.mxu0 0.0
        %1046 = vmatmul.mubr.f32.gmra.mrb[0].mxu0 %v815
        %v1047 = vpop.f32.mrb[0].mxu0
        %v1048 = vadd.f32 %v692, %v1047
        %v1049 = vpop.f32.mrb[0].mxu0
        %1050 = vmatprep.mubr.f32.mxu0 0.0
        %1051 = vmatmul.mubr.f32.gmra.mrb[0].mxu0 %v818
        %v1052 = vpop.f32.mrb[0].mxu0
        %v1053 = vadd.f32 %v697, %v1052
        %v1054 = vpop.f32.mrb[0].mxu0
        %1055 = vmatprep.mubr.f32.mxu0 0.0
        %1056 = vmatmul.mubr.f32.gmra.mrb[0].mxu0 %v821
        %v1057 = vpop.f32.mrb[0].mxu0
        %v1058 = vadd.f32 %v702, %v1057
        %v1059 = vpop.f32.mrb[0].mxu0
        %1060 = vmatprep.mubr.f32.mxu0 0.0
        %1061 = vmatmul.mubr.f32.gmra.mrb[0].mxu0 %v824
        %v1062 = vpop.f32.mrb[0].mxu0
        %v1063 = vadd.f32 %v707, %v1062
        %v1064 = vpop.f32.mrb[0].mxu0
        %1065 = vmatprep.mubr.f32.mxu0 0.0
        %1066 = vmatmul.mubr.f32.gmra.mrb[0].mxu0 %v827
        %v1067 = vpop.f32.mrb[0].mxu0
        %v1068 = vadd.f32 %v712, %v1067
        %v1069 = vpop.f32.mrb[0].mxu0
        %1070 = vmatprep.mubr.f32.mxu0 0.0
        %1071 = vmatmul.mubr.f32.gmra.mrb[0].mxu0 %v830
        %v1072 = vpop.f32.mrb[0].mxu0
        %v1073 = vadd.f32 %v717, %v1072
        %v1074 = vpop.f32.mrb[0].mxu0
        %1075 = vmatprep.mubr.f32.mxu0 0.0
        %1076 = vmatmul.mubr.f32.gmra.mrb[0].mxu0 %v833
        %v1077 = vpop.f32.mrb[0].mxu0
        %v1078 = vadd.f32 %v722, %v1077
        %v1079 = vpop.f32.mrb[0].mxu0
        %1080 = vmatprep.mubr.f32.mxu0 0.0
        %1081 = vmatmul.mubr.f32.gmra.mrb[0].mxu0 %v836
        %v1082 = vpop.f32.mrb[0].mxu0
        %v1083 = vadd.f32 %v727, %v1082
        %v1084 = vpop.f32.mrb[0].mxu0
        %1085 = vdwg.mxu0
        %v1086 = vld [vmem:[%s254 + $0x2] sm:$0xff]
        %v1087 = vld [vmem:[%s254 + $0xa] sm:$0xff]
        %v1088 = vld [vmem:[%s254 + $0x12] sm:$0xff]
        %v1089 = vld [vmem:[%s254 + $0x1a] sm:$0xff]
        %v1090 = vld [vmem:[%s254 + $0x22] sm:$0xff]
        %v1091 = vld [vmem:[%s254 + $0x2a] sm:$0xff]
        %v1092 = vld [vmem:[%s254 + $0x32] sm:$0xff]
        %v1093 = vld [vmem:[%s254 + $0x3a] sm:$0xff]
        %v1094 = vld [vmem:[%s254 + $0x42] sm:$0xff]
        %v1095 = vld [vmem:[%s254 + $0x4a] sm:$0xff]
        %v1096 = vld [vmem:[%s254 + $0x52] sm:$0xff]
        %v1097 = vld [vmem:[%s254 + $0x5a] sm:$0xff]
        %v1098 = vld [vmem:[%s254 + $0x62] sm:$0xff]
        %v1099 = vld [vmem:[%s254 + $0x6a] sm:$0xff]
        %v1100 = vld [vmem:[%s254 + $0x72] sm:$0xff]
        %v1101 = vld [vmem:[%s254 + $0x7a] sm:$0xff]
        %v1102 = vld [vmem:[%s254 + $0x82] sm:$0xff]
        %v1103 = vld [vmem:[%s254 + $0x8a] sm:$0xff]
        %v1104 = vld [vmem:[%s254 + $0x92] sm:$0xff]
        %v1105 = vld [vmem:[%s254 + $0x9a] sm:$0xff]
        %v1106 = vld [vmem:[%s254 + $0xa2] sm:$0xff]
        %v1107 = vld [vmem:[%s254 + $0xaa] sm:$0xff]
        %v1108 = vld [vmem:[%s254 + $0xb2] sm:$0xff]
        %v1109 = vld [vmem:[%s254 + $0xba] sm:$0xff]
        %v1110 = vld [vmem:[%s254 + $0xc2] sm:$0xff]
        %v1111 = vld [vmem:[%s254 + $0xca] sm:$0xff]
        %v1112 = vld [vmem:[%s254 + $0xd2] sm:$0xff]
        %v1113 = vld [vmem:[%s254 + $0xda] sm:$0xff]
        %v1114 = vld [vmem:[%s254 + $0xe2] sm:$0xff]
        %v1115 = vld [vmem:[%s254 + $0xea] sm:$0xff]
        %v1116 = vld [vmem:[%s254 + $0xf2] sm:$0xff]
        %v1117 = vld [vmem:[%s254 + $0xfa] sm:$0xff]
        %v1118 = vld [vmem:[%s254 + $0x102] sm:$0xff]
        %v1119 = vld [vmem:[%s254 + $0x10a] sm:$0xff]
        %v1120 = vld [vmem:[%s254 + $0x112] sm:$0xff]
        %v1121 = vld [vmem:[%s254 + $0x11a] sm:$0xff]
        %s1122 = scalar_lea.vmem [#allocation6], 8
        %v1123 = vld [vmem:[%s1122] sm:$0xf]
        %v1125 = vsel %vm372, %v1086, 0
        %v1128 = vsel %vm372, %v1087, 0
        %v1131 = vsel %vm372, %v1088, 0
        %v1134 = vsel %vm372, %v1089, 0
        %v1137 = vsel %vm372, %v1090, 0
        %v1140 = vsel %vm372, %v1091, 0
        %v1143 = vsel %vm372, %v1092, 0
        %v1146 = vsel %vm372, %v1093, 0
        %v1149 = vsel %vm372, %v1094, 0
        %v1152 = vsel %vm372, %v1095, 0
        %v1155 = vsel %vm372, %v1096, 0
        %v1158 = vsel %vm372, %v1097, 0
        %v1161 = vsel %vm372, %v1098, 0
        %v1164 = vsel %vm372, %v1099, 0
        %v1167 = vsel %vm372, %v1100, 0
        %v1170 = vsel %vm372, %v1101, 0
        %v1173 = vsel %vm372, %v1102, 0
        %v1176 = vsel %vm372, %v1103, 0
        %v1179 = vsel %vm372, %v1104, 0
        %v1182 = vsel %vm372, %v1105, 0
        %v1185 = vsel %vm372, %v1106, 0
        %v1188 = vsel %vm372, %v1107, 0
        %v1191 = vsel %vm372, %v1108, 0
        %v1194 = vsel %vm372, %v1109, 0
        %v1197 = vsel %vm372, %v1110, 0
        %v1200 = vsel %vm372, %v1111, 0
        %v1203 = vsel %vm372, %v1112, 0
        %v1206 = vsel %vm372, %v1113, 0
        %v1209 = vsel %vm372, %v1114, 0
        %v1212 = vsel %vm372, %v1115, 0
        %v1215 = vsel %vm372, %v1116, 0
        %v1218 = vsel %vm372, %v1117, 0
        %v1221 = vsel %vm372, %v1118, 0
        %v1224 = vsel %vm372, %v1119, 0
        %v1227 = vsel %vm372, %v1120, 0
        %v1230 = vsel %vm372, %v1121, 0
        %v1233 = vsel %vm481, %v1123, 0
        %1235 = vmatprep.subr.mxu0 0.0
        %1236 = vmatpush1.msra.mxu0 %v1233
        %1237 = vmatprep.subr.mxu0 0.0
        %1238 = vmatpush1.msra.mxu0 0.0
        %1239 = vmatprep.subr.mxu0 0.0
        %1240 = vmatpush1.msra.mxu0 0.0
        %1241 = vmatprep.subr.mxu0 0.0
        %1242 = vmatpush1.msra.mxu0 0.0
        %1243 = vmatprep.subr.mxu0 0.0
        %1244 = vmatpush1.msra.mxu0 0.0
        %1245 = vmatprep.subr.mxu0 0.0
        %1246 = vmatpush1.msra.mxu0 0.0
        %1247 = vmatprep.subr.mxu0 0.0
        %1248 = vmatpush1.msra.mxu0 0.0
        %1249 = vmatprep.subr.mxu0 0.0
        %1250 = vmatpush1.msra.mxu0 0.0
        %1251 = vmatprep.subr.mxu0 0.0
        %1252 = vmatpush1.msra.mxu0 0.0
        %1253 = vmatprep.subr.mxu0 0.0
        %1254 = vmatpush1.msra.mxu0 0.0
        %1255 = vmatprep.subr.mxu0 0.0
        %1256 = vmatpush1.msra.mxu0 0.0
        %1257 = vmatprep.subr.mxu0 0.0
        %1258 = vmatpush1.msra.mxu0 0.0
        %1259 = vmatprep.subr.mxu0 0.0
        %1260 = vmatpush1.msra.mxu0 0.0
        %1261 = vmatprep.subr.mxu0 0.0
        %1262 = vmatpush1.msra.mxu0 0.0
        %1263 = vmatprep.subr.mxu0 0.0
        %1264 = vmatpush1.msra.mxu0 0.0
        %1265 = vmatprep.subr.mxu0 0.0
        %1266 = vmatpush1.msra.mxu0 0.0
        %1267 = vmatprep.subr.mxu0 0.0
        %1268 = vmatpush1.msra.mxu0 0.0
        %1269 = vmatprep.subr.mxu0 0.0
        %1270 = vmatpush1.msra.mxu0 0.0
        %1271 = vmatprep.subr.mxu0 0.0
        %1272 = vmatpush1.msra.mxu0 0.0
        %1273 = vmatprep.subr.mxu0 0.0
        %1274 = vmatpush1.msra.mxu0 0.0
        %1275 = vmatprep.subr.mxu0 0.0
        %1276 = vmatpush1.msra.mxu0 0.0
        %1277 = vmatprep.subr.mxu0 0.0
        %1278 = vmatpush1.msra.mxu0 0.0
        %1279 = vmatprep.subr.mxu0 0.0
        %1280 = vmatpush1.msra.mxu0 0.0
        %1281 = vmatprep.subr.mxu0 0.0
        %1282 = vmatpush1.msra.mxu0 0.0
        %1283 = vmatprep.subr.mxu0 0.0
        %1284 = vmatpush1.msra.mxu0 0.0
        %1285 = vmatprep.subr.mxu0 0.0
        %1286 = vmatpush1.msra.mxu0 0.0
        %1287 = vmatprep.subr.mxu0 0.0
        %1288 = vmatpush1.msra.mxu0 0.0
        %1289 = vmatprep.subr.mxu0 0.0
        %1290 = vmatpush1.msra.mxu0 0.0
        %1291 = vmatprep.subr.mxu0 0.0
        %1292 = vmatpush1.msra.mxu0 0.0
        %1293 = vmatprep.subr.mxu0 0.0
        %1294 = vmatpush1.msra.mxu0 0.0
        %1295 = vmatprep.subr.mxu0 0.0
        %1296 = vmatpush1.msra.mxu0 0.0
        %1297 = vmatprep.subr.mxu0 0.0
        %1298 = vmatpush1.msra.mxu0 0.0
        %1299 = vmatprep.mubr.f32.mxu0 0.0
        %1300 = vmatmul.mubr.f32.gmra.mrb[0].mxu0 %v1125
        %v1301 = vpop.f32.mrb[0].mxu0
        %v1302 = vadd.f32 0.0, %v1301
        %v1303 = vpop.f32.mrb[0].mxu0
        %1304 = vmatprep.mubr.f32.mxu0 0.0
        %1305 = vmatmul.mubr.f32.gmra.mrb[0].mxu0 %v1128
        %v1306 = vpop.f32.mrb[0].mxu0
        %v1307 = vadd.f32 0.0, %v1306
        %v1308 = vpop.f32.mrb[0].mxu0
        %1309 = vmatprep.mubr.f32.mxu0 0.0
        %1310 = vmatmul.mubr.f32.gmra.mrb[0].mxu0 %v1131
        %v1311 = vpop.f32.mrb[0].mxu0
        %v1312 = vadd.f32 0.0, %v1311
        %v1313 = vpop.f32.mrb[0].mxu0
        %1314 = vmatprep.mubr.f32.mxu0 0.0
        %1315 = vmatmul.mubr.f32.gmra.mrb[0].mxu0 %v1134
        %v1316 = vpop.f32.mrb[0].mxu0
        %v1317 = vadd.f32 0.0, %v1316
        %v1318 = vpop.f32.mrb[0].mxu0
        %1319 = vmatprep.mubr.f32.mxu0 0.0
        %1320 = vmatmul.mubr.f32.gmra.mrb[0].mxu0 %v1137
        %v1321 = vpop.f32.mrb[0].mxu0
        %v1322 = vadd.f32 0.0, %v1321
        %v1323 = vpop.f32.mrb[0].mxu0
        %1324 = vmatprep.mubr.f32.mxu0 0.0
        %1325 = vmatmul.mubr.f32.gmra.mrb[0].mxu0 %v1140
        %v1326 = vpop.f32.mrb[0].mxu0
        %v1327 = vadd.f32 0.0, %v1326
        %v1328 = vpop.f32.mrb[0].mxu0
        %1329 = vmatprep.mubr.f32.mxu0 0.0
        %1330 = vmatmul.mubr.f32.gmra.mrb[0].mxu0 %v1143
        %v1331 = vpop.f32.mrb[0].mxu0
        %v1332 = vadd.f32 0.0, %v1331
        %v1333 = vpop.f32.mrb[0].mxu0
        %1334 = vmatprep.mubr.f32.mxu0 0.0
        %1335 = vmatmul.mubr.f32.gmra.mrb[0].mxu0 %v1146
        %v1336 = vpop.f32.mrb[0].mxu0
        %v1337 = vadd.f32 0.0, %v1336
        %v1338 = vpop.f32.mrb[0].mxu0
        %1339 = vmatprep.mubr.f32.mxu0 0.0
        %1340 = vmatmul.mubr.f32.gmra.mrb[0].mxu0 %v1149
        %v1341 = vpop.f32.mrb[0].mxu0
        %v1342 = vadd.f32 0.0, %v1341
        %v1343 = vpop.f32.mrb[0].mxu0
        %1344 = vmatprep.mubr.f32.mxu0 0.0
        %1345 = vmatmul.mubr.f32.gmra.mrb[0].mxu0 %v1152
        %v1346 = vpop.f32.mrb[0].mxu0
        %v1347 = vadd.f32 0.0, %v1346
        %v1348 = vpop.f32.mrb[0].mxu0
        %1349 = vmatprep.mubr.f32.mxu0 0.0
        %1350 = vmatmul.mubr.f32.gmra.mrb[0].mxu0 %v1155
        %v1351 = vpop.f32.mrb[0].mxu0
        %v1352 = vadd.f32 0.0, %v1351
        %v1353 = vpop.f32.mrb[0].mxu0
        %1354 = vmatprep.mubr.f32.mxu0 0.0
        %1355 = vmatmul.mubr.f32.gmra.mrb[0].mxu0 %v1158
        %v1356 = vpop.f32.mrb[0].mxu0
        %v1357 = vadd.f32 0.0, %v1356
        %v1358 = vpop.f32.mrb[0].mxu0
        %1359 = vmatprep.mubr.f32.mxu0 0.0
        %1360 = vmatmul.mubr.f32.gmra.mrb[0].mxu0 %v1161
        %v1361 = vpop.f32.mrb[0].mxu0
        %v1362 = vadd.f32 0.0, %v1361
        %v1363 = vpop.f32.mrb[0].mxu0
        %1364 = vmatprep.mubr.f32.mxu0 0.0
        %1365 = vmatmul.mubr.f32.gmra.mrb[0].mxu0 %v1164
        %v1366 = vpop.f32.mrb[0].mxu0
        %v1367 = vadd.f32 0.0, %v1366
        %v1368 = vpop.f32.mrb[0].mxu0
        %1369 = vmatprep.mubr.f32.mxu0 0.0
        %1370 = vmatmul.mubr.f32.gmra.mrb[0].mxu0 %v1167
        %v1371 = vpop.f32.mrb[0].mxu0
        %v1372 = vadd.f32 0.0, %v1371
        %v1373 = vpop.f32.mrb[0].mxu0
        %1374 = vmatprep.mubr.f32.mxu0 0.0
        %1375 = vmatmul.mubr.f32.gmra.mrb[0].mxu0 %v1170
        %v1376 = vpop.f32.mrb[0].mxu0
        %v1377 = vadd.f32 0.0, %v1376
        %v1378 = vpop.f32.mrb[0].mxu0
        %1379 = vmatprep.mubr.f32.mxu0 0.0
        %1380 = vmatmul.mubr.f32.gmra.mrb[0].mxu0 %v1173
        %v1381 = vpop.f32.mrb[0].mxu0
        %v1382 = vadd.f32 0.0, %v1381
        %v1383 = vpop.f32.mrb[0].mxu0
        %1384 = vmatprep.mubr.f32.mxu0 0.0
        %1385 = vmatmul.mubr.f32.gmra.mrb[0].mxu0 %v1176
        %v1386 = vpop.f32.mrb[0].mxu0
        %v1387 = vadd.f32 0.0, %v1386
        %v1388 = vpop.f32.mrb[0].mxu0
        %1389 = vmatprep.mubr.f32.mxu0 0.0
        %1390 = vmatmul.mubr.f32.gmra.mrb[0].mxu0 %v1179
        %v1391 = vpop.f32.mrb[0].mxu0
        %v1392 = vadd.f32 0.0, %v1391
        %v1393 = vpop.f32.mrb[0].mxu0
        %1394 = vmatprep.mubr.f32.mxu0 0.0
        %1395 = vmatmul.mubr.f32.gmra.mrb[0].mxu0 %v1182
        %v1396 = vpop.f32.mrb[0].mxu0
        %v1397 = vadd.f32 0.0, %v1396
        %v1398 = vpop.f32.mrb[0].mxu0
        %1399 = vmatprep.mubr.f32.mxu0 0.0
        %1400 = vmatmul.mubr.f32.gmra.mrb[0].mxu0 %v1185
        %v1401 = vpop.f32.mrb[0].mxu0
        %v1402 = vadd.f32 0.0, %v1401
        %v1403 = vpop.f32.mrb[0].mxu0
        %1404 = vmatprep.mubr.f32.mxu0 0.0
        %1405 = vmatmul.mubr.f32.gmra.mrb[0].mxu0 %v1188
        %v1406 = vpop.f32.mrb[0].mxu0
        %v1407 = vadd.f32 0.0, %v1406
        %v1408 = vpop.f32.mrb[0].mxu0
        %1409 = vmatprep.mubr.f32.mxu0 0.0
        %1410 = vmatmul.mubr.f32.gmra.mrb[0].mxu0 %v1191
        %v1411 = vpop.f32.mrb[0].mxu0
        %v1412 = vadd.f32 0.0, %v1411
        %v1413 = vpop.f32.mrb[0].mxu0
        %1414 = vmatprep.mubr.f32.mxu0 0.0
        %1415 = vmatmul.mubr.f32.gmra.mrb[0].mxu0 %v1194
        %v1416 = vpop.f32.mrb[0].mxu0
        %v1417 = vadd.f32 0.0, %v1416
        %v1418 = vpop.f32.mrb[0].mxu0
        %1419 = vmatprep.mubr.f32.mxu0 0.0
        %1420 = vmatmul.mubr.f32.gmra.mrb[0].mxu0 %v1197
        %v1421 = vpop.f32.mrb[0].mxu0
        %v1422 = vadd.f32 0.0, %v1421
        %v1423 = vpop.f32.mrb[0].mxu0
        %1424 = vmatprep.mubr.f32.mxu0 0.0
        %1425 = vmatmul.mubr.f32.gmra.mrb[0].mxu0 %v1200
        %v1426 = vpop.f32.mrb[0].mxu0
        %v1427 = vadd.f32 0.0, %v1426
        %v1428 = vpop.f32.mrb[0].mxu0
        %1429 = vmatprep.mubr.f32.mxu0 0.0
        %1430 = vmatmul.mubr.f32.gmra.mrb[0].mxu0 %v1203
        %v1431 = vpop.f32.mrb[0].mxu0
        %v1432 = vadd.f32 0.0, %v1431
        %v1433 = vpop.f32.mrb[0].mxu0
        %1434 = vmatprep.mubr.f32.mxu0 0.0
        %1435 = vmatmul.mubr.f32.gmra.mrb[0].mxu0 %v1206
        %v1436 = vpop.f32.mrb[0].mxu0
        %v1437 = vadd.f32 0.0, %v1436
        %v1438 = vpop.f32.mrb[0].mxu0
        %1439 = vmatprep.mubr.f32.mxu0 0.0
        %1440 = vmatmul.mubr.f32.gmra.mrb[0].mxu0 %v1209
        %v1441 = vpop.f32.mrb[0].mxu0
        %v1442 = vadd.f32 0.0, %v1441
        %v1443 = vpop.f32.mrb[0].mxu0
        %1444 = vmatprep.mubr.f32.mxu0 0.0
        %1445 = vmatmul.mubr.f32.gmra.mrb[0].mxu0 %v1212
        %v1446 = vpop.f32.mrb[0].mxu0
        %v1447 = vadd.f32 0.0, %v1446
        %v1448 = vpop.f32.mrb[0].mxu0
        %1449 = vmatprep.mubr.f32.mxu0 0.0
        %1450 = vmatmul.mubr.f32.gmra.mrb[0].mxu0 %v1215
        %v1451 = vpop.f32.mrb[0].mxu0
        %v1452 = vadd.f32 0.0, %v1451
        %v1453 = vpop.f32.mrb[0].mxu0
        %1454 = vmatprep.mubr.f32.mxu0 0.0
        %1455 = vmatmul.mubr.f32.gmra.mrb[0].mxu0 %v1218
        %v1456 = vpop.f32.mrb[0].mxu0
        %v1457 = vadd.f32 0.0, %v1456
        %v1458 = vpop.f32.mrb[0].mxu0
        %1459 = vmatprep.mubr.f32.mxu0 0.0
        %1460 = vmatmul.mubr.f32.gmra.mrb[0].mxu0 %v1221
        %v1461 = vpop.f32.mrb[0].mxu0
        %v1462 = vadd.f32 0.0, %v1461
        %v1463 = vpop.f32.mrb[0].mxu0
        %1464 = vmatprep.mubr.f32.mxu0 0.0
        %1465 = vmatmul.mubr.f32.gmra.mrb[0].mxu0 %v1224
        %v1466 = vpop.f32.mrb[0].mxu0
        %v1467 = vadd.f32 0.0, %v1466
        %v1468 = vpop.f32.mrb[0].mxu0
        %1469 = vmatprep.mubr.f32.mxu0 0.0
        %1470 = vmatmul.mubr.f32.gmra.mrb[0].mxu0 %v1227
        %v1471 = vpop.f32.mrb[0].mxu0
        %v1472 = vadd.f32 0.0, %v1471
        %v1473 = vpop.f32.mrb[0].mxu0
        %1474 = vmatprep.mubr.f32.mxu0 0.0
        %1475 = vmatmul.mubr.f32.gmra.mrb[0].mxu0 %v1230
        %v1476 = vpop.f32.mrb[0].mxu0
        %v1477 = vadd.f32 0.0, %v1476
        %v1478 = vpop.f32.mrb[0].mxu0
        %1479 = vdwg.mxu0
        %v1480 = vadd.f32 %v908, %v1302
        %v1481 = vadd.f32 %v913, %v1307
        %v1482 = vadd.f32 %v918, %v1312
        %v1483 = vadd.f32 %v923, %v1317
        %v1484 = vadd.f32 %v928, %v1322
        %v1485 = vadd.f32 %v933, %v1327
        %v1486 = vadd.f32 %v938, %v1332
        %v1487 = vadd.f32 %v943, %v1337
        %v1488 = vadd.f32 %v948, %v1342
        %v1489 = vadd.f32 %v953, %v1347
        %v1490 = vadd.f32 %v958, %v1352
        %v1491 = vadd.f32 %v963, %v1357
        %v1492 = vadd.f32 %v968, %v1362
        %v1493 = vadd.f32 %v973, %v1367
        %v1494 = vadd.f32 %v978, %v1372
        %v1495 = vadd.f32 %v983, %v1377
        %v1496 = vadd.f32 %v988, %v1382
        %v1497 = vadd.f32 %v993, %v1387
        %v1498 = vadd.f32 %v998, %v1392
        %v1499 = vadd.f32 %v1003, %v1397
        %v1500 = vadd.f32 %v1008, %v1402
        %v1501 = vadd.f32 %v1013, %v1407
        %v1502 = vadd.f32 %v1018, %v1412
        %v1503 = vadd.f32 %v1023, %v1417
        %v1504 = vadd.f32 %v1028, %v1422
        %v1505 = vadd.f32 %v1033, %v1427
        %v1506 = vadd.f32 %v1038, %v1432
        %v1507 = vadd.f32 %v1043, %v1437
        %v1508 = vadd.f32 %v1048, %v1442
        %v1509 = vadd.f32 %v1053, %v1447
        %v1510 = vadd.f32 %v1058, %v1452
        %v1511 = vadd.f32 %v1063, %v1457
        %v1512 = vadd.f32 %v1068, %v1462
        %v1513 = vadd.f32 %v1073, %v1467
        %v1514 = vadd.f32 %v1078, %v1472
        %v1515 = vadd.f32 %v1083, %v1477
        %v1516 = vld [vmem:[%s254 + $0x12] sm:$0xff]
        %v1517 = vld [vmem:[%s254 + $0x1a] sm:$0xff]
        %v1518 = vld [vmem:[%s254 + $0x22] sm:$0xff]
        %v1519 = vld [vmem:[%s254 + $0x2a] sm:$0xff]
        %v1520 = vld [vmem:[%s254 + $0x32] sm:$0xff]
        %v1521 = vld [vmem:[%s254 + $0x3a] sm:$0xff]
        %v1522 = vld [vmem:[%s254 + $0x42] sm:$0xff]
        %v1523 = vld [vmem:[%s254 + $0x4a] sm:$0xff]
        %v1524 = vld [vmem:[%s254 + $0x52] sm:$0xff]
        %v1525 = vld [vmem:[%s254 + $0x5a] sm:$0xff]
        %v1526 = vld [vmem:[%s254 + $0x62] sm:$0xff]
        %v1527 = vld [vmem:[%s254 + $0x6a] sm:$0xff]
        %v1528 = vld [vmem:[%s254 + $0x72] sm:$0xff]
        %v1529 = vld [vmem:[%s254 + $0x7a] sm:$0xff]
        %v1530 = vld [vmem:[%s254 + $0x82] sm:$0xff]
        %v1531 = vld [vmem:[%s254 + $0x8a] sm:$0xff]
        %v1532 = vld [vmem:[%s254 + $0x92] sm:$0xff]
        %v1533 = vld [vmem:[%s254 + $0x9a] sm:$0xff]
        %v1534 = vld [vmem:[%s254 + $0xa2] sm:$0xff]
        %v1535 = vld [vmem:[%s254 + $0xaa] sm:$0xff]
        %v1536 = vld [vmem:[%s254 + $0xb2] sm:$0xff]
        %v1537 = vld [vmem:[%s254 + $0xba] sm:$0xff]
        %v1538 = vld [vmem:[%s254 + $0xc2] sm:$0xff]
        %v1539 = vld [vmem:[%s254 + $0xca] sm:$0xff]
        %v1540 = vld [vmem:[%s254 + $0xd2] sm:$0xff]
        %v1541 = vld [vmem:[%s254 + $0xda] sm:$0xff]
        %v1542 = vld [vmem:[%s254 + $0xe2] sm:$0xff]
        %v1543 = vld [vmem:[%s254 + $0xea] sm:$0xff]
        %v1544 = vld [vmem:[%s254 + $0xf2] sm:$0xff]
        %v1545 = vld [vmem:[%s254 + $0xfa] sm:$0xff]
        %v1546 = vld [vmem:[%s254 + $0x102] sm:$0xff]
        %v1547 = vld [vmem:[%s254 + $0x10a] sm:$0xff]
        %v1548 = vld [vmem:[%s254 + $0x112] sm:$0xff]
        %v1549 = vld [vmem:[%s254 + $0x11a] sm:$0xff]
        %v1550 = vld [vmem:[%s254 + $0x122] sm:$0xff]
        %v1551 = vld [vmem:[%s254 + $0x12a] sm:$0xff]
        %s1552 = scalar_lea.vmem [#allocation6], 12
        %v1553 = vld [vmem:[%s1552] sm:$0xf]
        %v1555 = vsel %vm372, %v1516, 0
        %v1558 = vsel %vm372, %v1517, 0
        %v1561 = vsel %vm372, %v1518, 0
        %v1564 = vsel %vm372, %v1519, 0
        %v1567 = vsel %vm372, %v1520, 0
        %v1570 = vsel %vm372, %v1521, 0
        %v1573 = vsel %vm372, %v1522, 0
        %v1576 = vsel %vm372, %v1523, 0
        %v1579 = vsel %vm372, %v1524, 0
        %v1582 = vsel %vm372, %v1525, 0
        %v1585 = vsel %vm372, %v1526, 0
        %v1588 = vsel %vm372, %v1527, 0
        %v1591 = vsel %vm372, %v1528, 0
        %v1594 = vsel %vm372, %v1529, 0
        %v1597 = vsel %vm372, %v1530, 0
        %v1600 = vsel %vm372, %v1531, 0
        %v1603 = vsel %vm372, %v1532, 0
        %v1606 = vsel %vm372, %v1533, 0
        %v1609 = vsel %vm372, %v1534, 0
        %v1612 = vsel %vm372, %v1535, 0
        %v1615 = vsel %vm372, %v1536, 0
        %v1618 = vsel %vm372, %v1537, 0
        %v1621 = vsel %vm372, %v1538, 0
        %v1624 = vsel %vm372, %v1539, 0
        %v1627 = vsel %vm372, %v1540, 0
        %v1630 = vsel %vm372, %v1541, 0
        %v1633 = vsel %vm372, %v1542, 0
        %v1636 = vsel %vm372, %v1543, 0
        %v1639 = vsel %vm372, %v1544, 0
        %v1642 = vsel %vm372, %v1545, 0
        %v1645 = vsel %vm372, %v1546, 0
        %v1648 = vsel %vm372, %v1547, 0
        %v1651 = vsel %vm372, %v1548, 0
        %v1654 = vsel %vm372, %v1549, 0
        %v1657 = vsel %vm372, %v1550, 0
        %v1660 = vsel %vm372, %v1551, 0
        %v1663 = vsel %vm481, %v1553, 0
        %1665 = vmatprep.subr.mxu0 0.0
        %1666 = vmatpush1.msra.mxu0 %v1663
        %1667 = vmatprep.subr.mxu0 0.0
        %1668 = vmatpush1.msra.mxu0 0.0
        %1669 = vmatprep.subr.mxu0 0.0
        %1670 = vmatpush1.msra.mxu0 0.0
        %1671 = vmatprep.subr.mxu0 0.0
        %1672 = vmatpush1.msra.mxu0 0.0
        %1673 = vmatprep.subr.mxu0 0.0
        %1674 = vmatpush1.msra.mxu0 0.0
        %1675 = vmatprep.subr.mxu0 0.0
        %1676 = vmatpush1.msra.mxu0 0.0
        %1677 = vmatprep.subr.mxu0 0.0
        %1678 = vmatpush1.msra.mxu0 0.0
        %1679 = vmatprep.subr.mxu0 0.0
        %1680 = vmatpush1.msra.mxu0 0.0
        %1681 = vmatprep.subr.mxu0 0.0
        %1682 = vmatpush1.msra.mxu0 0.0
        %1683 = vmatprep.subr.mxu0 0.0
        %1684 = vmatpush1.msra.mxu0 0.0
        %1685 = vmatprep.subr.mxu0 0.0
        %1686 = vmatpush1.msra.mxu0 0.0
        %1687 = vmatprep.subr.mxu0 0.0
        %1688 = vmatpush1.msra.mxu0 0.0
        %1689 = vmatprep.subr.mxu0 0.0
        %1690 = vmatpush1.msra.mxu0 0.0
        %1691 = vmatprep.subr.mxu0 0.0
        %1692 = vmatpush1.msra.mxu0 0.0
        %1693 = vmatprep.subr.mxu0 0.0
        %1694 = vmatpush1.msra.mxu0 0.0
        %1695 = vmatprep.subr.mxu0 0.0
        %1696 = vmatpush1.msra.mxu0 0.0
        %1697 = vmatprep.subr.mxu0 0.0
        %1698 = vmatpush1.msra.mxu0 0.0
        %1699 = vmatprep.subr.mxu0 0.0
        %1700 = vmatpush1.msra.mxu0 0.0
        %1701 = vmatprep.subr.mxu0 0.0
        %1702 = vmatpush1.msra.mxu0 0.0
        %1703 = vmatprep.subr.mxu0 0.0
        %1704 = vmatpush1.msra.mxu0 0.0
        %1705 = vmatprep.subr.mxu0 0.0
        %1706 = vmatpush1.msra.mxu0 0.0
        %1707 = vmatprep.subr.mxu0 0.0
        %1708 = vmatpush1.msra.mxu0 0.0
        %1709 = vmatprep.subr.mxu0 0.0
        %1710 = vmatpush1.msra.mxu0 0.0
        %1711 = vmatprep.subr.mxu0 0.0
        %1712 = vmatpush1.msra.mxu0 0.0
        %1713 = vmatprep.subr.mxu0 0.0
        %1714 = vmatpush1.msra.mxu0 0.0
        %1715 = vmatprep.subr.mxu0 0.0
        %1716 = vmatpush1.msra.mxu0 0.0
        %1717 = vmatprep.subr.mxu0 0.0
        %1718 = vmatpush1.msra.mxu0 0.0
        %1719 = vmatprep.subr.mxu0 0.0
        %1720 = vmatpush1.msra.mxu0 0.0
        %1721 = vmatprep.subr.mxu0 0.0
        %1722 = vmatpush1.msra.mxu0 0.0
        %1723 = vmatprep.subr.mxu0 0.0
        %1724 = vmatpush1.msra.mxu0 0.0
        %1725 = vmatprep.subr.mxu0 0.0
        %1726 = vmatpush1.msra.mxu0 0.0
        %1727 = vmatprep.subr.mxu0 0.0
        %1728 = vmatpush1.msra.mxu0 0.0
        %1729 = vmatprep.mubr.f32.mxu0 0.0
        %1730 = vmatmul.mubr.f32.gmra.mrb[0].mxu0 %v1555
        %v1731 = vpop.f32.mrb[0].mxu0
        %v1732 = vadd.f32 0.0, %v1731
        %v1733 = vpop.f32.mrb[0].mxu0
        %1734 = vmatprep.mubr.f32.mxu0 0.0
        %1735 = vmatmul.mubr.f32.gmra.mrb[0].mxu0 %v1558
        %v1736 = vpop.f32.mrb[0].mxu0
        %v1737 = vadd.f32 0.0, %v1736
        %v1738 = vpop.f32.mrb[0].mxu0
        %1739 = vmatprep.mubr.f32.mxu0 0.0
        %1740 = vmatmul.mubr.f32.gmra.mrb[0].mxu0 %v1561
        %v1741 = vpop.f32.mrb[0].mxu0
        %v1742 = vadd.f32 0.0, %v1741
        %v1743 = vpop.f32.mrb[0].mxu0
        %1744 = vmatprep.mubr.f32.mxu0 0.0
        %1745 = vmatmul.mubr.f32.gmra.mrb[0].mxu0 %v1564
        %v1746 = vpop.f32.mrb[0].mxu0
        %v1747 = vadd.f32 0.0, %v1746
        %v1748 = vpop.f32.mrb[0].mxu0
        %1749 = vmatprep.mubr.f32.mxu0 0.0
        %1750 = vmatmul.mubr.f32.gmra.mrb[0].mxu0 %v1567
        %v1751 = vpop.f32.mrb[0].mxu0
        %v1752 = vadd.f32 0.0, %v1751
        %v1753 = vpop.f32.mrb[0].mxu0
        %1754 = vmatprep.mubr.f32.mxu0 0.0
        %1755 = vmatmul.mubr.f32.gmra.mrb[0].mxu0 %v1570
        %v1756 = vpop.f32.mrb[0].mxu0
        %v1757 = vadd.f32 0.0, %v1756
        %v1758 = vpop.f32.mrb[0].mxu0
        %1759 = vmatprep.mubr.f32.mxu0 0.0
        %1760 = vmatmul.mubr.f32.gmra.mrb[0].mxu0 %v1573
        %v1761 = vpop.f32.mrb[0].mxu0
        %v1762 = vadd.f32 0.0, %v1761
        %v1763 = vpop.f32.mrb[0].mxu0
        %1764 = vmatprep.mubr.f32.mxu0 0.0
        %1765 = vmatmul.mubr.f32.gmra.mrb[0].mxu0 %v1576
        %v1766 = vpop.f32.mrb[0].mxu0
        %v1767 = vadd.f32 0.0, %v1766
        %v1768 = vpop.f32.mrb[0].mxu0
        %1769 = vmatprep.mubr.f32.mxu0 0.0
        %1770 = vmatmul.mubr.f32.gmra.mrb[0].mxu0 %v1579
        %v1771 = vpop.f32.mrb[0].mxu0
        %v1772 = vadd.f32 0.0, %v1771
        %v1773 = vpop.f32.mrb[0].mxu0
        %1774 = vmatprep.mubr.f32.mxu0 0.0
        %1775 = vmatmul.mubr.f32.gmra.mrb[0].mxu0 %v1582
        %v1776 = vpop.f32.mrb[0].mxu0
        %v1777 = vadd.f32 0.0, %v1776
        %v1778 = vpop.f32.mrb[0].mxu0
        %1779 = vmatprep.mubr.f32.mxu0 0.0
        %1780 = vmatmul.mubr.f32.gmra.mrb[0].mxu0 %v1585
        %v1781 = vpop.f32.mrb[0].mxu0
        %v1782 = vadd.f32 0.0, %v1781
        %v1783 = vpop.f32.mrb[0].mxu0
        %1784 = vmatprep.mubr.f32.mxu0 0.0
        %1785 = vmatmul.mubr.f32.gmra.mrb[0].mxu0 %v1588
        %v1786 = vpop.f32.mrb[0].mxu0
        %v1787 = vadd.f32 0.0, %v1786
        %v1788 = vpop.f32.mrb[0].mxu0
        %1789 = vmatprep.mubr.f32.mxu0 0.0
        %1790 = vmatmul.mubr.f32.gmra.mrb[0].mxu0 %v1591
        %v1791 = vpop.f32.mrb[0].mxu0
        %v1792 = vadd.f32 0.0, %v1791
        %v1793 = vpop.f32.mrb[0].mxu0
        %1794 = vmatprep.mubr.f32.mxu0 0.0
        %1795 = vmatmul.mubr.f32.gmra.mrb[0].mxu0 %v1594
        %v1796 = vpop.f32.mrb[0].mxu0
        %v1797 = vadd.f32 0.0, %v1796
        %v1798 = vpop.f32.mrb[0].mxu0
        %1799 = vmatprep.mubr.f32.mxu0 0.0
        %1800 = vmatmul.mubr.f32.gmra.mrb[0].mxu0 %v1597
        %v1801 = vpop.f32.mrb[0].mxu0
        %v1802 = vadd.f32 0.0, %v1801
        %v1803 = vpop.f32.mrb[0].mxu0
        %1804 = vmatprep.mubr.f32.mxu0 0.0
        %1805 = vmatmul.mubr.f32.gmra.mrb[0].mxu0 %v1600
        %v1806 = vpop.f32.mrb[0].mxu0
        %v1807 = vadd.f32 0.0, %v1806
        %v1808 = vpop.f32.mrb[0].mxu0
        %1809 = vmatprep.mubr.f32.mxu0 0.0
        %1810 = vmatmul.mubr.f32.gmra.mrb[0].mxu0 %v1603
        %v1811 = vpop.f32.mrb[0].mxu0
        %v1812 = vadd.f32 0.0, %v1811
        %v1813 = vpop.f32.mrb[0].mxu0
        %1814 = vmatprep.mubr.f32.mxu0 0.0
        %1815 = vmatmul.mubr.f32.gmra.mrb[0].mxu0 %v1606
        %v1816 = vpop.f32.mrb[0].mxu0
        %v1817 = vadd.f32 0.0, %v1816
        %v1818 = vpop.f32.mrb[0].mxu0
        %1819 = vmatprep.mubr.f32.mxu0 0.0
        %1820 = vmatmul.mubr.f32.gmra.mrb[0].mxu0 %v1609
        %v1821 = vpop.f32.mrb[0].mxu0
        %v1822 = vadd.f32 0.0, %v1821
        %v1823 = vpop.f32.mrb[0].mxu0
        %1824 = vmatprep.mubr.f32.mxu0 0.0
        %1825 = vmatmul.mubr.f32.gmra.mrb[0].mxu0 %v1612
        %v1826 = vpop.f32.mrb[0].mxu0
        %v1827 = vadd.f32 0.0, %v1826
        %v1828 = vpop.f32.mrb[0].mxu0
        %1829 = vmatprep.mubr.f32.mxu0 0.0
        %1830 = vmatmul.mubr.f32.gmra.mrb[0].mxu0 %v1615
        %v1831 = vpop.f32.mrb[0].mxu0
        %v1832 = vadd.f32 0.0, %v1831
        %v1833 = vpop.f32.mrb[0].mxu0
        %1834 = vmatprep.mubr.f32.mxu0 0.0
        %1835 = vmatmul.mubr.f32.gmra.mrb[0].mxu0 %v1618
        %v1836 = vpop.f32.mrb[0].mxu0
        %v1837 = vadd.f32 0.0, %v1836
        %v1838 = vpop.f32.mrb[0].mxu0
        %1839 = vmatprep.mubr.f32.mxu0 0.0
        %1840 = vmatmul.mubr.f32.gmra.mrb[0].mxu0 %v1621
        %v1841 = vpop.f32.mrb[0].mxu0
        %v1842 = vadd.f32 0.0, %v1841
        %v1843 = vpop.f32.mrb[0].mxu0
        %1844 = vmatprep.mubr.f32.mxu0 0.0
        %1845 = vmatmul.mubr.f32.gmra.mrb[0].mxu0 %v1624
        %v1846 = vpop.f32.mrb[0].mxu0
        %v1847 = vadd.f32 0.0, %v1846
        %v1848 = vpop.f32.mrb[0].mxu0
        %1849 = vmatprep.mubr.f32.mxu0 0.0
        %1850 = vmatmul.mubr.f32.gmra.mrb[0].mxu0 %v1627
        %v1851 = vpop.f32.mrb[0].mxu0
        %v1852 = vadd.f32 0.0, %v1851
        %v1853 = vpop.f32.mrb[0].mxu0
        %1854 = vmatprep.mubr.f32.mxu0 0.0
        %1855 = vmatmul.mubr.f32.gmra.mrb[0].mxu0 %v1630
        %v1856 = vpop.f32.mrb[0].mxu0
        %v1857 = vadd.f32 0.0, %v1856
        %v1858 = vpop.f32.mrb[0].mxu0
        %1859 = vmatprep.mubr.f32.mxu0 0.0
        %1860 = vmatmul.mubr.f32.gmra.mrb[0].mxu0 %v1633
        %v1861 = vpop.f32.mrb[0].mxu0
        %v1862 = vadd.f32 0.0, %v1861
        %v1863 = vpop.f32.mrb[0].mxu0
        %1864 = vmatprep.mubr.f32.mxu0 0.0
        %1865 = vmatmul.mubr.f32.gmra.mrb[0].mxu0 %v1636
        %v1866 = vpop.f32.mrb[0].mxu0
        %v1867 = vadd.f32 0.0, %v1866
        %v1868 = vpop.f32.mrb[0].mxu0
        %1869 = vmatprep.mubr.f32.mxu0 0.0
        %1870 = vmatmul.mubr.f32.gmra.mrb[0].mxu0 %v1639
        %v1871 = vpop.f32.mrb[0].mxu0
        %v1872 = vadd.f32 0.0, %v1871
        %v1873 = vpop.f32.mrb[0].mxu0
        %1874 = vmatprep.mubr.f32.mxu0 0.0
        %1875 = vmatmul.mubr.f32.gmra.mrb[0].mxu0 %v1642
        %v1876 = vpop.f32.mrb[0].mxu0
        %v1877 = vadd.f32 0.0, %v1876
        %v1878 = vpop.f32.mrb[0].mxu0
        %1879 = vmatprep.mubr.f32.mxu0 0.0
        %1880 = vmatmul.mubr.f32.gmra.mrb[0].mxu0 %v1645
        %v1881 = vpop.f32.mrb[0].mxu0
        %v1882 = vadd.f32 0.0, %v1881
        %v1883 = vpop.f32.mrb[0].mxu0
        %1884 = vmatprep.mubr.f32.mxu0 0.0
        %1885 = vmatmul.mubr.f32.gmra.mrb[0].mxu0 %v1648
        %v1886 = vpop.f32.mrb[0].mxu0
        %v1887 = vadd.f32 0.0, %v1886
        %v1888 = vpop.f32.mrb[0].mxu0
        %1889 = vmatprep.mubr.f32.mxu0 0.0
        %1890 = vmatmul.mubr.f32.gmra.mrb[0].mxu0 %v1651
        %v1891 = vpop.f32.mrb[0].mxu0
        %v1892 = vadd.f32 0.0, %v1891
        %v1893 = vpop.f32.mrb[0].mxu0
        %1894 = vmatprep.mubr.f32.mxu0 0.0
        %1895 = vmatmul.mubr.f32.gmra.mrb[0].mxu0 %v1654
        %v1896 = vpop.f32.mrb[0].mxu0
        %v1897 = vadd.f32 0.0, %v1896
        %v1898 = vpop.f32.mrb[0].mxu0
        %1899 = vmatprep.mubr.f32.mxu0 0.0
        %1900 = vmatmul.mubr.f32.gmra.mrb[0].mxu0 %v1657
        %v1901 = vpop.f32.mrb[0].mxu0
        %v1902 = vadd.f32 0.0, %v1901
        %v1903 = vpop.f32.mrb[0].mxu0
        %1904 = vmatprep.mubr.f32.mxu0 0.0
        %1905 = vmatmul.mubr.f32.gmra.mrb[0].mxu0 %v1660
        %v1906 = vpop.f32.mrb[0].mxu0
        %v1907 = vadd.f32 0.0, %v1906
        %v1908 = vpop.f32.mrb[0].mxu0
        %1909 = vdwg.mxu0
        %v1910 = vadd.f32 %v1480, %v1732
        %v1911 = vadd.f32 %v1481, %v1737
        %v1912 = vadd.f32 %v1482, %v1742
        %v1913 = vadd.f32 %v1483, %v1747
        %v1914 = vadd.f32 %v1484, %v1752
        %v1915 = vadd.f32 %v1485, %v1757
        %v1916 = vadd.f32 %v1486, %v1762
        %v1917 = vadd.f32 %v1487, %v1767
        %v1918 = vadd.f32 %v1488, %v1772
        %v1919 = vadd.f32 %v1489, %v1777
        %v1920 = vadd.f32 %v1490, %v1782
        %v1921 = vadd.f32 %v1491, %v1787
        %v1922 = vadd.f32 %v1492, %v1792
        %v1923 = vadd.f32 %v1493, %v1797
        %v1924 = vadd.f32 %v1494, %v1802
        %v1925 = vadd.f32 %v1495, %v1807
        %v1926 = vadd.f32 %v1496, %v1812
        %v1927 = vadd.f32 %v1497, %v1817
        %v1928 = vadd.f32 %v1498, %v1822
        %v1929 = vadd.f32 %v1499, %v1827
        %v1930 = vadd.f32 %v1500, %v1832
        %v1931 = vadd.f32 %v1501, %v1837
        %v1932 = vadd.f32 %v1502, %v1842
        %v1933 = vadd.f32 %v1503, %v1847
        %v1934 = vadd.f32 %v1504, %v1852
        %v1935 = vadd.f32 %v1505, %v1857
        %v1936 = vadd.f32 %v1506, %v1862
        %v1937 = vadd.f32 %v1507, %v1867
        %v1938 = vadd.f32 %v1508, %v1872
        %v1939 = vadd.f32 %v1509, %v1877
        %v1940 = vadd.f32 %v1510, %v1882
        %v1941 = vadd.f32 %v1511, %v1887
        %v1942 = vadd.f32 %v1512, %v1892
        %v1943 = vadd.f32 %v1513, %v1897
        %v1944 = vadd.f32 %v1514, %v1902
        %v1945 = vadd.f32 %v1515, %v1907
        %v1946 = vld [vmem:[%s254 + $0x13] sm:$0xff]
        %v1947 = vld [vmem:[%s254 + $0x1b] sm:$0xff]
        %v1948 = vld [vmem:[%s254 + $0x23] sm:$0xff]
        %v1949 = vld [vmem:[%s254 + $0x2b] sm:$0xff]
        %v1950 = vld [vmem:[%s254 + $0x33] sm:$0xff]
        %v1951 = vld [vmem:[%s254 + $0x3b] sm:$0xff]
        %v1952 = vld [vmem:[%s254 + $0x43] sm:$0xff]
        %v1953 = vld [vmem:[%s254 + $0x4b] sm:$0xff]
        %v1954 = vld [vmem:[%s254 + $0x53] sm:$0xff]
        %v1955 = vld [vmem:[%s254 + $0x5b] sm:$0xff]
        %v1956 = vld [vmem:[%s254 + $0x63] sm:$0xff]
        %v1957 = vld [vmem:[%s254 + $0x6b] sm:$0xff]
        %v1958 = vld [vmem:[%s254 + $0x73] sm:$0xff]
        %v1959 = vld [vmem:[%s254 + $0x7b] sm:$0xff]
        %v1960 = vld [vmem:[%s254 + $0x83] sm:$0xff]
        %v1961 = vld [vmem:[%s254 + $0x8b] sm:$0xff]
        %v1962 = vld [vmem:[%s254 + $0x93] sm:$0xff]
        %v1963 = vld [vmem:[%s254 + $0x9b] sm:$0xff]
        %v1964 = vld [vmem:[%s254 + $0xa3] sm:$0xff]
        %v1965 = vld [vmem:[%s254 + $0xab] sm:$0xff]
        %v1966 = vld [vmem:[%s254 + $0xb3] sm:$0xff]
        %v1967 = vld [vmem:[%s254 + $0xbb] sm:$0xff]
        %v1968 = vld [vmem:[%s254 + $0xc3] sm:$0xff]
        %v1969 = vld [vmem:[%s254 + $0xcb] sm:$0xff]
        %v1970 = vld [vmem:[%s254 + $0xd3] sm:$0xff]
        %v1971 = vld [vmem:[%s254 + $0xdb] sm:$0xff]
        %v1972 = vld [vmem:[%s254 + $0xe3] sm:$0xff]
        %v1973 = vld [vmem:[%s254 + $0xeb] sm:$0xff]
        %v1974 = vld [vmem:[%s254 + $0xf3] sm:$0xff]
        %v1975 = vld [vmem:[%s254 + $0xfb] sm:$0xff]
        %v1976 = vld [vmem:[%s254 + $0x103] sm:$0xff]
        %v1977 = vld [vmem:[%s254 + $0x10b] sm:$0xff]
        %v1978 = vld [vmem:[%s254 + $0x113] sm:$0xff]
        %v1979 = vld [vmem:[%s254 + $0x11b] sm:$0xff]
        %v1980 = vld [vmem:[%s254 + $0x123] sm:$0xff]
        %v1981 = vld [vmem:[%s254 + $0x12b] sm:$0xff]
        %s1982 = scalar_lea.vmem [#allocation6], 16
        %v1983 = vld [vmem:[%s1982] sm:$0xf]
        %v1985 = vsel %vm372, %v1946, 0
        %v1988 = vsel %vm372, %v1947, 0
        %v1991 = vsel %vm372, %v1948, 0
        %v1994 = vsel %vm372, %v1949, 0
        %v1997 = vsel %vm372, %v1950, 0
        %v2000 = vsel %vm372, %v1951, 0
        %v2003 = vsel %vm372, %v1952, 0
        %v2006 = vsel %vm372, %v1953, 0
        %v2009 = vsel %vm372, %v1954, 0
        %v2012 = vsel %vm372, %v1955, 0
        %v2015 = vsel %vm372, %v1956, 0
        %v2018 = vsel %vm372, %v1957, 0
        %v2021 = vsel %vm372, %v1958, 0
        %v2024 = vsel %vm372, %v1959, 0
        %v2027 = vsel %vm372, %v1960, 0
        %v2030 = vsel %vm372, %v1961, 0
        %v2033 = vsel %vm372, %v1962, 0
        %v2036 = vsel %vm372, %v1963, 0
        %v2039 = vsel %vm372, %v1964, 0
        %v2042 = vsel %vm372, %v1965, 0
        %v2045 = vsel %vm372, %v1966, 0
        %v2048 = vsel %vm372, %v1967, 0
        %v2051 = vsel %vm372, %v1968, 0
        %v2054 = vsel %vm372, %v1969, 0
        %v2057 = vsel %vm372, %v1970, 0
        %v2060 = vsel %vm372, %v1971, 0
        %v2063 = vsel %vm372, %v1972, 0
        %v2066 = vsel %vm372, %v1973, 0
        %v2069 = vsel %vm372, %v1974, 0
        %v2072 = vsel %vm372, %v1975, 0
        %v2075 = vsel %vm372, %v1976, 0
        %v2078 = vsel %vm372, %v1977, 0
        %v2081 = vsel %vm372, %v1978, 0
        %v2084 = vsel %vm372, %v1979, 0
        %v2087 = vsel %vm372, %v1980, 0
        %v2090 = vsel %vm372, %v1981, 0
        %v2093 = vsel %vm481, %v1983, 0
        %2095 = vmatprep.subr.mxu0 0.0
        %2096 = vmatpush1.msra.mxu0 %v2093
        %2097 = vmatprep.subr.mxu0 0.0
        %2098 = vmatpush1.msra.mxu0 0.0
        %2099 = vmatprep.subr.mxu0 0.0
        %2100 = vmatpush1.msra.mxu0 0.0
        %2101 = vmatprep.subr.mxu0 0.0
        %2102 = vmatpush1.msra.mxu0 0.0
        %2103 = vmatprep.subr.mxu0 0.0
        %2104 = vmatpush1.msra.mxu0 0.0
        %2105 = vmatprep.subr.mxu0 0.0
        %2106 = vmatpush1.msra.mxu0 0.0
        %2107 = vmatprep.subr.mxu0 0.0
        %2108 = vmatpush1.msra.mxu0 0.0
        %2109 = vmatprep.subr.mxu0 0.0
        %2110 = vmatpush1.msra.mxu0 0.0
        %2111 = vmatprep.subr.mxu0 0.0
        %2112 = vmatpush1.msra.mxu0 0.0
        %2113 = vmatprep.subr.mxu0 0.0
        %2114 = vmatpush1.msra.mxu0 0.0
        %2115 = vmatprep.subr.mxu0 0.0
        %2116 = vmatpush1.msra.mxu0 0.0
        %2117 = vmatprep.subr.mxu0 0.0
        %2118 = vmatpush1.msra.mxu0 0.0
        %2119 = vmatprep.subr.mxu0 0.0
        %2120 = vmatpush1.msra.mxu0 0.0
        %2121 = vmatprep.subr.mxu0 0.0
        %2122 = vmatpush1.msra.mxu0 0.0
        %2123 = vmatprep.subr.mxu0 0.0
        %2124 = vmatpush1.msra.mxu0 0.0
        %2125 = vmatprep.subr.mxu0 0.0
        %2126 = vmatpush1.msra.mxu0 0.0
        %2127 = vmatprep.subr.mxu0 0.0
        %2128 = vmatpush1.msra.mxu0 0.0
        %2129 = vmatprep.subr.mxu0 0.0
        %2130 = vmatpush1.msra.mxu0 0.0
        %2131 = vmatprep.subr.mxu0 0.0
        %2132 = vmatpush1.msra.mxu0 0.0
        %2133 = vmatprep.subr.mxu0 0.0
        %2134 = vmatpush1.msra.mxu0 0.0
        %2135 = vmatprep.subr.mxu0 0.0
        %2136 = vmatpush1.msra.mxu0 0.0
        %2137 = vmatprep.subr.mxu0 0.0
        %2138 = vmatpush1.msra.mxu0 0.0
        %2139 = vmatprep.subr.mxu0 0.0
        %2140 = vmatpush1.msra.mxu0 0.0
        %2141 = vmatprep.subr.mxu0 0.0
        %2142 = vmatpush1.msra.mxu0 0.0
        %2143 = vmatprep.subr.mxu0 0.0
        %2144 = vmatpush1.msra.mxu0 0.0
        %2145 = vmatprep.subr.mxu0 0.0
        %2146 = vmatpush1.msra.mxu0 0.0
        %2147 = vmatprep.subr.mxu0 0.0
        %2148 = vmatpush1.msra.mxu0 0.0
        %2149 = vmatprep.subr.mxu0 0.0
        %2150 = vmatpush1.msra.mxu0 0.0
        %2151 = vmatprep.subr.mxu0 0.0
        %2152 = vmatpush1.msra.mxu0 0.0
        %2153 = vmatprep.subr.mxu0 0.0
        %2154 = vmatpush1.msra.mxu0 0.0
        %2155 = vmatprep.subr.mxu0 0.0
        %2156 = vmatpush1.msra.mxu0 0.0
        %2157 = vmatprep.subr.mxu0 0.0
        %2158 = vmatpush1.msra.mxu0 0.0
        %2159 = vmatprep.mubr.f32.mxu0 0.0
        %2160 = vmatmul.mubr.f32.gmra.mrb[0].mxu0 %v1985
        %v2161 = vpop.f32.mrb[0].mxu0
        %v2162 = vadd.f32 0.0, %v2161
        %v2163 = vpop.f32.mrb[0].mxu0
        %2164 = vmatprep.mubr.f32.mxu0 0.0
        %2165 = vmatmul.mubr.f32.gmra.mrb[0].mxu0 %v1988
        %v2166 = vpop.f32.mrb[0].mxu0
        %v2167 = vadd.f32 0.0, %v2166
        %v2168 = vpop.f32.mrb[0].mxu0
        %2169 = vmatprep.mubr.f32.mxu0 0.0
        %2170 = vmatmul.mubr.f32.gmra.mrb[0].mxu0 %v1991
        %v2171 = vpop.f32.mrb[0].mxu0
        %v2172 = vadd.f32 0.0, %v2171
        %v2173 = vpop.f32.mrb[0].mxu0
        %2174 = vmatprep.mubr.f32.mxu0 0.0
        %2175 = vmatmul.mubr.f32.gmra.mrb[0].mxu0 %v1994
        %v2176 = vpop.f32.mrb[0].mxu0
        %v2177 = vadd.f32 0.0, %v2176
        %v2178 = vpop.f32.mrb[0].mxu0
        %2179 = vmatprep.mubr.f32.mxu0 0.0
        %2180 = vmatmul.mubr.f32.gmra.mrb[0].mxu0 %v1997
        %v2181 = vpop.f32.mrb[0].mxu0
        %v2182 = vadd.f32 0.0, %v2181
        %v2183 = vpop.f32.mrb[0].mxu0
        %2184 = vmatprep.mubr.f32.mxu0 0.0
        %2185 = vmatmul.mubr.f32.gmra.mrb[0].mxu0 %v2000
        %v2186 = vpop.f32.mrb[0].mxu0
        %v2187 = vadd.f32 0.0, %v2186
        %v2188 = vpop.f32.mrb[0].mxu0
        %2189 = vmatprep.mubr.f32.mxu0 0.0
        %2190 = vmatmul.mubr.f32.gmra.mrb[0].mxu0 %v2003
        %v2191 = vpop.f32.mrb[0].mxu0
        %v2192 = vadd.f32 0.0, %v2191
        %v2193 = vpop.f32.mrb[0].mxu0
        %2194 = vmatprep.mubr.f32.mxu0 0.0
        %2195 = vmatmul.mubr.f32.gmra.mrb[0].mxu0 %v2006
        %v2196 = vpop.f32.mrb[0].mxu0
        %v2197 = vadd.f32 0.0, %v2196
        %v2198 = vpop.f32.mrb[0].mxu0
        %2199 = vmatprep.mubr.f32.mxu0 0.0
        %2200 = vmatmul.mubr.f32.gmra.mrb[0].mxu0 %v2009
        %v2201 = vpop.f32.mrb[0].mxu0
        %v2202 = vadd.f32 0.0, %v2201
        %v2203 = vpop.f32.mrb[0].mxu0
        %2204 = vmatprep.mubr.f32.mxu0 0.0
        %2205 = vmatmul.mubr.f32.gmra.mrb[0].mxu0 %v2012
        %v2206 = vpop.f32.mrb[0].mxu0
        %v2207 = vadd.f32 0.0, %v2206
        %v2208 = vpop.f32.mrb[0].mxu0
        %2209 = vmatprep.mubr.f32.mxu0 0.0
        %2210 = vmatmul.mubr.f32.gmra.mrb[0].mxu0 %v2015
        %v2211 = vpop.f32.mrb[0].mxu0
        %v2212 = vadd.f32 0.0, %v2211
        %v2213 = vpop.f32.mrb[0].mxu0
        %2214 = vmatprep.mubr.f32.mxu0 0.0
        %2215 = vmatmul.mubr.f32.gmra.mrb[0].mxu0 %v2018
        %v2216 = vpop.f32.mrb[0].mxu0
        %v2217 = vadd.f32 0.0, %v2216
        %v2218 = vpop.f32.mrb[0].mxu0
        %2219 = vmatprep.mubr.f32.mxu0 0.0
        %2220 = vmatmul.mubr.f32.gmra.mrb[0].mxu0 %v2021
        %v2221 = vpop.f32.mrb[0].mxu0
        %v2222 = vadd.f32 0.0, %v2221
        %v2223 = vpop.f32.mrb[0].mxu0
        %2224 = vmatprep.mubr.f32.mxu0 0.0
        %2225 = vmatmul.mubr.f32.gmra.mrb[0].mxu0 %v2024
        %v2226 = vpop.f32.mrb[0].mxu0
        %v2227 = vadd.f32 0.0, %v2226
        %v2228 = vpop.f32.mrb[0].mxu0
        %2229 = vmatprep.mubr.f32.mxu0 0.0
        %2230 = vmatmul.mubr.f32.gmra.mrb[0].mxu0 %v2027
        %v2231 = vpop.f32.mrb[0].mxu0
        %v2232 = vadd.f32 0.0, %v2231
        %v2233 = vpop.f32.mrb[0].mxu0
        %2234 = vmatprep.mubr.f32.mxu0 0.0
        %2235 = vmatmul.mubr.f32.gmra.mrb[0].mxu0 %v2030
        %v2236 = vpop.f32.mrb[0].mxu0
        %v2237 = vadd.f32 0.0, %v2236
        %v2238 = vpop.f32.mrb[0].mxu0
        %2239 = vmatprep.mubr.f32.mxu0 0.0
        %2240 = vmatmul.mubr.f32.gmra.mrb[0].mxu0 %v2033
        %v2241 = vpop.f32.mrb[0].mxu0
        %v2242 = vadd.f32 0.0, %v2241
        %v2243 = vpop.f32.mrb[0].mxu0
        %2244 = vmatprep.mubr.f32.mxu0 0.0
        %2245 = vmatmul.mubr.f32.gmra.mrb[0].mxu0 %v2036
        %v2246 = vpop.f32.mrb[0].mxu0
        %v2247 = vadd.f32 0.0, %v2246
        %v2248 = vpop.f32.mrb[0].mxu0
        %2249 = vmatprep.mubr.f32.mxu0 0.0
        %2250 = vmatmul.mubr.f32.gmra.mrb[0].mxu0 %v2039
        %v2251 = vpop.f32.mrb[0].mxu0
        %v2252 = vadd.f32 0.0, %v2251
        %v2253 = vpop.f32.mrb[0].mxu0
        %2254 = vmatprep.mubr.f32.mxu0 0.0
        %2255 = vmatmul.mubr.f32.gmra.mrb[0].mxu0 %v2042
        %v2256 = vpop.f32.mrb[0].mxu0
        %v2257 = vadd.f32 0.0, %v2256
        %v2258 = vpop.f32.mrb[0].mxu0
        %2259 = vmatprep.mubr.f32.mxu0 0.0
        %2260 = vmatmul.mubr.f32.gmra.mrb[0].mxu0 %v2045
        %v2261 = vpop.f32.mrb[0].mxu0
        %v2262 = vadd.f32 0.0, %v2261
        %v2263 = vpop.f32.mrb[0].mxu0
        %2264 = vmatprep.mubr.f32.mxu0 0.0
        %2265 = vmatmul.mubr.f32.gmra.mrb[0].mxu0 %v2048
        %v2266 = vpop.f32.mrb[0].mxu0
        %v2267 = vadd.f32 0.0, %v2266
        %v2268 = vpop.f32.mrb[0].mxu0
        %2269 = vmatprep.mubr.f32.mxu0 0.0
        %2270 = vmatmul.mubr.f32.gmra.mrb[0].mxu0 %v2051
        %v2271 = vpop.f32.mrb[0].mxu0
        %v2272 = vadd.f32 0.0, %v2271
        %v2273 = vpop.f32.mrb[0].mxu0
        %2274 = vmatprep.mubr.f32.mxu0 0.0
        %2275 = vmatmul.mubr.f32.gmra.mrb[0].mxu0 %v2054
        %v2276 = vpop.f32.mrb[0].mxu0
        %v2277 = vadd.f32 0.0, %v2276
        %v2278 = vpop.f32.mrb[0].mxu0
        %2279 = vmatprep.mubr.f32.mxu0 0.0
        %2280 = vmatmul.mubr.f32.gmra.mrb[0].mxu0 %v2057
        %v2281 = vpop.f32.mrb[0].mxu0
        %v2282 = vadd.f32 0.0, %v2281
        %v2283 = vpop.f32.mrb[0].mxu0
        %2284 = vmatprep.mubr.f32.mxu0 0.0
        %2285 = vmatmul.mubr.f32.gmra.mrb[0].mxu0 %v2060
        %v2286 = vpop.f32.mrb[0].mxu0
        %v2287 = vadd.f32 0.0, %v2286
        %v2288 = vpop.f32.mrb[0].mxu0
        %2289 = vmatprep.mubr.f32.mxu0 0.0
        %2290 = vmatmul.mubr.f32.gmra.mrb[0].mxu0 %v2063
        %v2291 = vpop.f32.mrb[0].mxu0
        %v2292 = vadd.f32 0.0, %v2291
        %v2293 = vpop.f32.mrb[0].mxu0
        %2294 = vmatprep.mubr.f32.mxu0 0.0
        %2295 = vmatmul.mubr.f32.gmra.mrb[0].mxu0 %v2066
        %v2296 = vpop.f32.mrb[0].mxu0
        %v2297 = vadd.f32 0.0, %v2296
        %v2298 = vpop.f32.mrb[0].mxu0
        %2299 = vmatprep.mubr.f32.mxu0 0.0
        %2300 = vmatmul.mubr.f32.gmra.mrb[0].mxu0 %v2069
        %v2301 = vpop.f32.mrb[0].mxu0
        %v2302 = vadd.f32 0.0, %v2301
        %v2303 = vpop.f32.mrb[0].mxu0
        %2304 = vmatprep.mubr.f32.mxu0 0.0
        %2305 = vmatmul.mubr.f32.gmra.mrb[0].mxu0 %v2072
        %v2306 = vpop.f32.mrb[0].mxu0
        %v2307 = vadd.f32 0.0, %v2306
        %v2308 = vpop.f32.mrb[0].mxu0
        %2309 = vmatprep.mubr.f32.mxu0 0.0
        %2310 = vmatmul.mubr.f32.gmra.mrb[0].mxu0 %v2075
        %v2311 = vpop.f32.mrb[0].mxu0
        %v2312 = vadd.f32 0.0, %v2311
        %v2313 = vpop.f32.mrb[0].mxu0
        %2314 = vmatprep.mubr.f32.mxu0 0.0
        %2315 = vmatmul.mubr.f32.gmra.mrb[0].mxu0 %v2078
        %v2316 = vpop.f32.mrb[0].mxu0
        %v2317 = vadd.f32 0.0, %v2316
        %v2318 = vpop.f32.mrb[0].mxu0
        %2319 = vmatprep.mubr.f32.mxu0 0.0
        %2320 = vmatmul.mubr.f32.gmra.mrb[0].mxu0 %v2081
        %v2321 = vpop.f32.mrb[0].mxu0
        %v2322 = vadd.f32 0.0, %v2321
        %v2323 = vpop.f32.mrb[0].mxu0
        %2324 = vmatprep.mubr.f32.mxu0 0.0
        %2325 = vmatmul.mubr.f32.gmra.mrb[0].mxu0 %v2084
        %v2326 = vpop.f32.mrb[0].mxu0
        %v2327 = vadd.f32 0.0, %v2326
        %v2328 = vpop.f32.mrb[0].mxu0
        %2329 = vmatprep.mubr.f32.mxu0 0.0
        %2330 = vmatmul.mubr.f32.gmra.mrb[0].mxu0 %v2087
        %v2331 = vpop.f32.mrb[0].mxu0
        %v2332 = vadd.f32 0.0, %v2331
        %v2333 = vpop.f32.mrb[0].mxu0
        %2334 = vmatprep.mubr.f32.mxu0 0.0
        %2335 = vmatmul.mubr.f32.gmra.mrb[0].mxu0 %v2090
        %v2336 = vpop.f32.mrb[0].mxu0
        %v2337 = vadd.f32 0.0, %v2336
        %v2338 = vpop.f32.mrb[0].mxu0
        %2339 = vdwg.mxu0
        %v2340 = vadd.f32 %v1910, %v2162
        %v2341 = vadd.f32 %v1911, %v2167
        %v2342 = vadd.f32 %v1912, %v2172
        %v2343 = vadd.f32 %v1913, %v2177
        %v2344 = vadd.f32 %v1914, %v2182
        %v2345 = vadd.f32 %v1915, %v2187
        %v2346 = vadd.f32 %v1916, %v2192
        %v2347 = vadd.f32 %v1917, %v2197
        %v2348 = vadd.f32 %v1918, %v2202
        %v2349 = vadd.f32 %v1919, %v2207
        %v2350 = vadd.f32 %v1920, %v2212
        %v2351 = vadd.f32 %v1921, %v2217
        %v2352 = vadd.f32 %v1922, %v2222
        %v2353 = vadd.f32 %v1923, %v2227
        %v2354 = vadd.f32 %v1924, %v2232
        %v2355 = vadd.f32 %v1925, %v2237
        %v2356 = vadd.f32 %v1926, %v2242
        %v2357 = vadd.f32 %v1927, %v2247
        %v2358 = vadd.f32 %v1928, %v2252
        %v2359 = vadd.f32 %v1929, %v2257
        %v2360 = vadd.f32 %v1930, %v2262
        %v2361 = vadd.f32 %v1931, %v2267
        %v2362 = vadd.f32 %v1932, %v2272
        %v2363 = vadd.f32 %v1933, %v2277
        %v2364 = vadd.f32 %v1934, %v2282
        %v2365 = vadd.f32 %v1935, %v2287
        %v2366 = vadd.f32 %v1936, %v2292
        %v2367 = vadd.f32 %v1937, %v2297
        %v2368 = vadd.f32 %v1938, %v2302
        %v2369 = vadd.f32 %v1939, %v2307
        %v2370 = vadd.f32 %v1940, %v2312
        %v2371 = vadd.f32 %v1941, %v2317
        %v2372 = vadd.f32 %v1942, %v2322
        %v2373 = vadd.f32 %v1943, %v2327
        %v2374 = vadd.f32 %v1944, %v2332
        %v2375 = vadd.f32 %v1945, %v2337
        %v2376 = vld [vmem:[%s254 + $0x14] sm:$0xff]
        %v2377 = vld [vmem:[%s254 + $0x1c] sm:$0xff]
        %v2378 = vld [vmem:[%s254 + $0x24] sm:$0xff]
        %v2379 = vld [vmem:[%s254 + $0x2c] sm:$0xff]
        %v2380 = vld [vmem:[%s254 + $0x34] sm:$0xff]
        %v2381 = vld [vmem:[%s254 + $0x3c] sm:$0xff]
        %v2382 = vld [vmem:[%s254 + $0x44] sm:$0xff]
        %v2383 = vld [vmem:[%s254 + $0x4c] sm:$0xff]
        %v2384 = vld [vmem:[%s254 + $0x54] sm:$0xff]
        %v2385 = vld [vmem:[%s254 + $0x5c] sm:$0xff]
        %v2386 = vld [vmem:[%s254 + $0x64] sm:$0xff]
        %v2387 = vld [vmem:[%s254 + $0x6c] sm:$0xff]
        %v2388 = vld [vmem:[%s254 + $0x74] sm:$0xff]
        %v2389 = vld [vmem:[%s254 + $0x7c] sm:$0xff]
        %v2390 = vld [vmem:[%s254 + $0x84] sm:$0xff]
        %v2391 = vld [vmem:[%s254 + $0x8c] sm:$0xff]
        %v2392 = vld [vmem:[%s254 + $0x94] sm:$0xff]
        %v2393 = vld [vmem:[%s254 + $0x9c] sm:$0xff]
        %v2394 = vld [vmem:[%s254 + $0xa4] sm:$0xff]
        %v2395 = vld [vmem:[%s254 + $0xac] sm:$0xff]
        %v2396 = vld [vmem:[%s254 + $0xb4] sm:$0xff]
        %v2397 = vld [vmem:[%s254 + $0xbc] sm:$0xff]
        %v2398 = vld [vmem:[%s254 + $0xc4] sm:$0xff]
        %v2399 = vld [vmem:[%s254 + $0xcc] sm:$0xff]
        %v2400 = vld [vmem:[%s254 + $0xd4] sm:$0xff]
        %v2401 = vld [vmem:[%s254 + $0xdc] sm:$0xff]
        %v2402 = vld [vmem:[%s254 + $0xe4] sm:$0xff]
        %v2403 = vld [vmem:[%s254 + $0xec] sm:$0xff]
        %v2404 = vld [vmem:[%s254 + $0xf4] sm:$0xff]
        %v2405 = vld [vmem:[%s254 + $0xfc] sm:$0xff]
        %v2406 = vld [vmem:[%s254 + $0x104] sm:$0xff]
        %v2407 = vld [vmem:[%s254 + $0x10c] sm:$0xff]
        %v2408 = vld [vmem:[%s254 + $0x114] sm:$0xff]
        %v2409 = vld [vmem:[%s254 + $0x11c] sm:$0xff]
        %v2410 = vld [vmem:[%s254 + $0x124] sm:$0xff]
        %v2411 = vld [vmem:[%s254 + $0x12c] sm:$0xff]
        %s2412 = scalar_lea.vmem [#allocation6], 20
        %v2413 = vld [vmem:[%s2412] sm:$0xf]
        %v2415 = vsel %vm372, %v2376, 0
        %v2418 = vsel %vm372, %v2377, 0
        %v2421 = vsel %vm372, %v2378, 0
        %v2424 = vsel %vm372, %v2379, 0
        %v2427 = vsel %vm372, %v2380, 0
        %v2430 = vsel %vm372, %v2381, 0
        %v2433 = vsel %vm372, %v2382, 0
        %v2436 = vsel %vm372, %v2383, 0
        %v2439 = vsel %vm372, %v2384, 0
        %v2442 = vsel %vm372, %v2385, 0
        %v2445 = vsel %vm372, %v2386, 0
        %v2448 = vsel %vm372, %v2387, 0
        %v2451 = vsel %vm372, %v2388, 0
        %v2454 = vsel %vm372, %v2389, 0
        %v2457 = vsel %vm372, %v2390, 0
        %v2460 = vsel %vm372, %v2391, 0
        %v2463 = vsel %vm372, %v2392, 0
        %v2466 = vsel %vm372, %v2393, 0
        %v2469 = vsel %vm372, %v2394, 0
        %v2472 = vsel %vm372, %v2395, 0
        %v2475 = vsel %vm372, %v2396, 0
        %v2478 = vsel %vm372, %v2397, 0
        %v2481 = vsel %vm372, %v2398, 0
        %v2484 = vsel %vm372, %v2399, 0
        %v2487 = vsel %vm372, %v2400, 0
        %v2490 = vsel %vm372, %v2401, 0
        %v2493 = vsel %vm372, %v2402, 0
        %v2496 = vsel %vm372, %v2403, 0
        %v2499 = vsel %vm372, %v2404, 0
        %v2502 = vsel %vm372, %v2405, 0
        %v2505 = vsel %vm372, %v2406, 0
        %v2508 = vsel %vm372, %v2407, 0
        %v2511 = vsel %vm372, %v2408, 0
        %v2514 = vsel %vm372, %v2409, 0
        %v2517 = vsel %vm372, %v2410, 0
        %v2520 = vsel %vm372, %v2411, 0
        %v2523 = vsel %vm481, %v2413, 0
        %2525 = vmatprep.subr.mxu0 0.0
        %2526 = vmatpush1.msra.mxu0 %v2523
        %2527 = vmatprep.subr.mxu0 0.0
        %2528 = vmatpush1.msra.mxu0 0.0
        %2529 = vmatprep.subr.mxu0 0.0
        %2530 = vmatpush1.msra.mxu0 0.0
        %2531 = vmatprep.subr.mxu0 0.0
        %2532 = vmatpush1.msra.mxu0 0.0
        %2533 = vmatprep.subr.mxu0 0.0
        %2534 = vmatpush1.msra.mxu0 0.0
        %2535 = vmatprep.subr.mxu0 0.0
        %2536 = vmatpush1.msra.mxu0 0.0
        %2537 = vmatprep.subr.mxu0 0.0
        %2538 = vmatpush1.msra.mxu0 0.0
        %2539 = vmatprep.subr.mxu0 0.0
        %2540 = vmatpush1.msra.mxu0 0.0
        %2541 = vmatprep.subr.mxu0 0.0
        %2542 = vmatpush1.msra.mxu0 0.0
        %2543 = vmatprep.subr.mxu0 0.0
        %2544 = vmatpush1.msra.mxu0 0.0
        %2545 = vmatprep.subr.mxu0 0.0
        %2546 = vmatpush1.msra.mxu0 0.0
        %2547 = vmatprep.subr.mxu0 0.0
        %2548 = vmatpush1.msra.mxu0 0.0
        %2549 = vmatprep.subr.mxu0 0.0
        %2550 = vmatpush1.msra.mxu0 0.0
        %2551 = vmatprep.subr.mxu0 0.0
        %2552 = vmatpush1.msra.mxu0 0.0
        %2553 = vmatprep.subr.mxu0 0.0
        %2554 = vmatpush1.msra.mxu0 0.0
        %2555 = vmatprep.subr.mxu0 0.0
        %2556 = vmatpush1.msra.mxu0 0.0
        %2557 = vmatprep.subr.mxu0 0.0
        %2558 = vmatpush1.msra.mxu0 0.0
        %2559 = vmatprep.subr.mxu0 0.0
        %2560 = vmatpush1.msra.mxu0 0.0
        %2561 = vmatprep.subr.mxu0 0.0
        %2562 = vmatpush1.msra.mxu0 0.0
        %2563 = vmatprep.subr.mxu0 0.0
        %2564 = vmatpush1.msra.mxu0 0.0
        %2565 = vmatprep.subr.mxu0 0.0
        %2566 = vmatpush1.msra.mxu0 0.0
        %2567 = vmatprep.subr.mxu0 0.0
        %2568 = vmatpush1.msra.mxu0 0.0
        %2569 = vmatprep.subr.mxu0 0.0
        %2570 = vmatpush1.msra.mxu0 0.0
        %2571 = vmatprep.subr.mxu0 0.0
        %2572 = vmatpush1.msra.mxu0 0.0
        %2573 = vmatprep.subr.mxu0 0.0
        %2574 = vmatpush1.msra.mxu0 0.0
        %2575 = vmatprep.subr.mxu0 0.0
        %2576 = vmatpush1.msra.mxu0 0.0
        %2577 = vmatprep.subr.mxu0 0.0
        %2578 = vmatpush1.msra.mxu0 0.0
        %2579 = vmatprep.subr.mxu0 0.0
        %2580 = vmatpush1.msra.mxu0 0.0
        %2581 = vmatprep.subr.mxu0 0.0
        %2582 = vmatpush1.msra.mxu0 0.0
        %2583 = vmatprep.subr.mxu0 0.0
        %2584 = vmatpush1.msra.mxu0 0.0
        %2585 = vmatprep.subr.mxu0 0.0
        %2586 = vmatpush1.msra.mxu0 0.0
        %2587 = vmatprep.subr.mxu0 0.0
        %2588 = vmatpush1.msra.mxu0 0.0
        %2589 = vmatprep.mubr.f32.mxu0 0.0
        %2590 = vmatmul.mubr.f32.gmra.mrb[0].mxu0 %v2415
        %v2591 = vpop.f32.mrb[0].mxu0
        %v2592 = vadd.f32 0.0, %v2591
        %v2593 = vpop.f32.mrb[0].mxu0
        %2594 = vmatprep.mubr.f32.mxu0 0.0
        %2595 = vmatmul.mubr.f32.gmra.mrb[0].mxu0 %v2418
        %v2596 = vpop.f32.mrb[0].mxu0
        %v2597 = vadd.f32 0.0, %v2596
        %v2598 = vpop.f32.mrb[0].mxu0
        %2599 = vmatprep.mubr.f32.mxu0 0.0
        %2600 = vmatmul.mubr.f32.gmra.mrb[0].mxu0 %v2421
        %v2601 = vpop.f32.mrb[0].mxu0
        %v2602 = vadd.f32 0.0, %v2601
        %v2603 = vpop.f32.mrb[0].mxu0
        %2604 = vmatprep.mubr.f32.mxu0 0.0
        %2605 = vmatmul.mubr.f32.gmra.mrb[0].mxu0 %v2424
        %v2606 = vpop.f32.mrb[0].mxu0
        %v2607 = vadd.f32 0.0, %v2606
        %v2608 = vpop.f32.mrb[0].mxu0
        %2609 = vmatprep.mubr.f32.mxu0 0.0
        %2610 = vmatmul.mubr.f32.gmra.mrb[0].mxu0 %v2427
        %v2611 = vpop.f32.mrb[0].mxu0
        %v2612 = vadd.f32 0.0, %v2611
        %v2613 = vpop.f32.mrb[0].mxu0
        %2614 = vmatprep.mubr.f32.mxu0 0.0
        %2615 = vmatmul.mubr.f32.gmra.mrb[0].mxu0 %v2430
        %v2616 = vpop.f32.mrb[0].mxu0
        %v2617 = vadd.f32 0.0, %v2616
        %v2618 = vpop.f32.mrb[0].mxu0
        %2619 = vmatprep.mubr.f32.mxu0 0.0
        %2620 = vmatmul.mubr.f32.gmra.mrb[0].mxu0 %v2433
        %v2621 = vpop.f32.mrb[0].mxu0
        %v2622 = vadd.f32 0.0, %v2621
        %v2623 = vpop.f32.mrb[0].mxu0
        %2624 = vmatprep.mubr.f32.mxu0 0.0
        %2625 = vmatmul.mubr.f32.gmra.mrb[0].mxu0 %v2436
        %v2626 = vpop.f32.mrb[0].mxu0
        %v2627 = vadd.f32 0.0, %v2626
        %v2628 = vpop.f32.mrb[0].mxu0
        %2629 = vmatprep.mubr.f32.mxu0 0.0
        %2630 = vmatmul.mubr.f32.gmra.mrb[0].mxu0 %v2439
        %v2631 = vpop.f32.mrb[0].mxu0
        %v2632 = vadd.f32 0.0, %v2631
        %v2633 = vpop.f32.mrb[0].mxu0
        %2634 = vmatprep.mubr.f32.mxu0 0.0
        %2635 = vmatmul.mubr.f32.gmra.mrb[0].mxu0 %v2442
        %v2636 = vpop.f32.mrb[0].mxu0
        %v2637 = vadd.f32 0.0, %v2636
        %v2638 = vpop.f32.mrb[0].mxu0
        %2639 = vmatprep.mubr.f32.mxu0 0.0
        %2640 = vmatmul.mubr.f32.gmra.mrb[0].mxu0 %v2445
        %v2641 = vpop.f32.mrb[0].mxu0
        %v2642 = vadd.f32 0.0, %v2641
        %v2643 = vpop.f32.mrb[0].mxu0
        %2644 = vmatprep.mubr.f32.mxu0 0.0
        %2645 = vmatmul.mubr.f32.gmra.mrb[0].mxu0 %v2448
        %v2646 = vpop.f32.mrb[0].mxu0
        %v2647 = vadd.f32 0.0, %v2646
        %v2648 = vpop.f32.mrb[0].mxu0
        %2649 = vmatprep.mubr.f32.mxu0 0.0
        %2650 = vmatmul.mubr.f32.gmra.mrb[0].mxu0 %v2451
        %v2651 = vpop.f32.mrb[0].mxu0
        %v2652 = vadd.f32 0.0, %v2651
        %v2653 = vpop.f32.mrb[0].mxu0
        %2654 = vmatprep.mubr.f32.mxu0 0.0
        %2655 = vmatmul.mubr.f32.gmra.mrb[0].mxu0 %v2454
        %v2656 = vpop.f32.mrb[0].mxu0
        %v2657 = vadd.f32 0.0, %v2656
        %v2658 = vpop.f32.mrb[0].mxu0
        %2659 = vmatprep.mubr.f32.mxu0 0.0
        %2660 = vmatmul.mubr.f32.gmra.mrb[0].mxu0 %v2457
        %v2661 = vpop.f32.mrb[0].mxu0
        %v2662 = vadd.f32 0.0, %v2661
        %v2663 = vpop.f32.mrb[0].mxu0
        %2664 = vmatprep.mubr.f32.mxu0 0.0
        %2665 = vmatmul.mubr.f32.gmra.mrb[0].mxu0 %v2460
        %v2666 = vpop.f32.mrb[0].mxu0
        %v2667 = vadd.f32 0.0, %v2666
        %v2668 = vpop.f32.mrb[0].mxu0
        %2669 = vmatprep.mubr.f32.mxu0 0.0
        %2670 = vmatmul.mubr.f32.gmra.mrb[0].mxu0 %v2463
        %v2671 = vpop.f32.mrb[0].mxu0
        %v2672 = vadd.f32 0.0, %v2671
        %v2673 = vpop.f32.mrb[0].mxu0
        %2674 = vmatprep.mubr.f32.mxu0 0.0
        %2675 = vmatmul.mubr.f32.gmra.mrb[0].mxu0 %v2466
        %v2676 = vpop.f32.mrb[0].mxu0
        %v2677 = vadd.f32 0.0, %v2676
        %v2678 = vpop.f32.mrb[0].mxu0
        %2679 = vmatprep.mubr.f32.mxu0 0.0
        %2680 = vmatmul.mubr.f32.gmra.mrb[0].mxu0 %v2469
        %v2681 = vpop.f32.mrb[0].mxu0
        %v2682 = vadd.f32 0.0, %v2681
        %v2683 = vpop.f32.mrb[0].mxu0
        %2684 = vmatprep.mubr.f32.mxu0 0.0
        %2685 = vmatmul.mubr.f32.gmra.mrb[0].mxu0 %v2472
        %v2686 = vpop.f32.mrb[0].mxu0
        %v2687 = vadd.f32 0.0, %v2686
        %v2688 = vpop.f32.mrb[0].mxu0
        %2689 = vmatprep.mubr.f32.mxu0 0.0
        %2690 = vmatmul.mubr.f32.gmra.mrb[0].mxu0 %v2475
        %v2691 = vpop.f32.mrb[0].mxu0
        %v2692 = vadd.f32 0.0, %v2691
        %v2693 = vpop.f32.mrb[0].mxu0
        %2694 = vmatprep.mubr.f32.mxu0 0.0
        %2695 = vmatmul.mubr.f32.gmra.mrb[0].mxu0 %v2478
        %v2696 = vpop.f32.mrb[0].mxu0
        %v2697 = vadd.f32 0.0, %v2696
        %v2698 = vpop.f32.mrb[0].mxu0
        %2699 = vmatprep.mubr.f32.mxu0 0.0
        %2700 = vmatmul.mubr.f32.gmra.mrb[0].mxu0 %v2481
        %v2701 = vpop.f32.mrb[0].mxu0
        %v2702 = vadd.f32 0.0, %v2701
        %v2703 = vpop.f32.mrb[0].mxu0
        %2704 = vmatprep.mubr.f32.mxu0 0.0
        %2705 = vmatmul.mubr.f32.gmra.mrb[0].mxu0 %v2484
        %v2706 = vpop.f32.mrb[0].mxu0
        %v2707 = vadd.f32 0.0, %v2706
        %v2708 = vpop.f32.mrb[0].mxu0
        %2709 = vmatprep.mubr.f32.mxu0 0.0
        %2710 = vmatmul.mubr.f32.gmra.mrb[0].mxu0 %v2487
        %v2711 = vpop.f32.mrb[0].mxu0
        %v2712 = vadd.f32 0.0, %v2711
        %v2713 = vpop.f32.mrb[0].mxu0
        %2714 = vmatprep.mubr.f32.mxu0 0.0
        %2715 = vmatmul.mubr.f32.gmra.mrb[0].mxu0 %v2490
        %v2716 = vpop.f32.mrb[0].mxu0
        %v2717 = vadd.f32 0.0, %v2716
        %v2718 = vpop.f32.mrb[0].mxu0
        %2719 = vmatprep.mubr.f32.mxu0 0.0
        %2720 = vmatmul.mubr.f32.gmra.mrb[0].mxu0 %v2493
        %v2721 = vpop.f32.mrb[0].mxu0
        %v2722 = vadd.f32 0.0, %v2721
        %v2723 = vpop.f32.mrb[0].mxu0
        %2724 = vmatprep.mubr.f32.mxu0 0.0
        %2725 = vmatmul.mubr.f32.gmra.mrb[0].mxu0 %v2496
        %v2726 = vpop.f32.mrb[0].mxu0
        %v2727 = vadd.f32 0.0, %v2726
        %v2728 = vpop.f32.mrb[0].mxu0
        %2729 = vmatprep.mubr.f32.mxu0 0.0
        %2730 = vmatmul.mubr.f32.gmra.mrb[0].mxu0 %v2499
        %v2731 = vpop.f32.mrb[0].mxu0
        %v2732 = vadd.f32 0.0, %v2731
        %v2733 = vpop.f32.mrb[0].mxu0
        %2734 = vmatprep.mubr.f32.mxu0 0.0
        %2735 = vmatmul.mubr.f32.gmra.mrb[0].mxu0 %v2502
        %v2736 = vpop.f32.mrb[0].mxu0
        %v2737 = vadd.f32 0.0, %v2736
        %v2738 = vpop.f32.mrb[0].mxu0
        %2739 = vmatprep.mubr.f32.mxu0 0.0
        %2740 = vmatmul.mubr.f32.gmra.mrb[0].mxu0 %v2505
        %v2741 = vpop.f32.mrb[0].mxu0
        %v2742 = vadd.f32 0.0, %v2741
        %v2743 = vpop.f32.mrb[0].mxu0
        %2744 = vmatprep.mubr.f32.mxu0 0.0
        %2745 = vmatmul.mubr.f32.gmra.mrb[0].mxu0 %v2508
        %v2746 = vpop.f32.mrb[0].mxu0
        %v2747 = vadd.f32 0.0, %v2746
        %v2748 = vpop.f32.mrb[0].mxu0
        %2749 = vmatprep.mubr.f32.mxu0 0.0
        %2750 = vmatmul.mubr.f32.gmra.mrb[0].mxu0 %v2511
        %v2751 = vpop.f32.mrb[0].mxu0
        %v2752 = vadd.f32 0.0, %v2751
        %v2753 = vpop.f32.mrb[0].mxu0
        %2754 = vmatprep.mubr.f32.mxu0 0.0
        %2755 = vmatmul.mubr.f32.gmra.mrb[0].mxu0 %v2514
        %v2756 = vpop.f32.mrb[0].mxu0
        %v2757 = vadd.f32 0.0, %v2756
        %v2758 = vpop.f32.mrb[0].mxu0
        %2759 = vmatprep.mubr.f32.mxu0 0.0
        %2760 = vmatmul.mubr.f32.gmra.mrb[0].mxu0 %v2517
        %v2761 = vpop.f32.mrb[0].mxu0
        %v2762 = vadd.f32 0.0, %v2761
        %v2763 = vpop.f32.mrb[0].mxu0
        %2764 = vmatprep.mubr.f32.mxu0 0.0
        %2765 = vmatmul.mubr.f32.gmra.mrb[0].mxu0 %v2520
        %v2766 = vpop.f32.mrb[0].mxu0
        %v2767 = vadd.f32 0.0, %v2766
        %v2768 = vpop.f32.mrb[0].mxu0
        %2769 = vdwg.mxu0
        %v2770 = vadd.f32 %v2340, %v2592
        %v2771 = vadd.f32 %v2341, %v2597
        %v2772 = vadd.f32 %v2342, %v2602
        %v2773 = vadd.f32 %v2343, %v2607
        %v2774 = vadd.f32 %v2344, %v2612
        %v2775 = vadd.f32 %v2345, %v2617
        %v2776 = vadd.f32 %v2346, %v2622
        %v2777 = vadd.f32 %v2347, %v2627
        %v2778 = vadd.f32 %v2348, %v2632
        %v2779 = vadd.f32 %v2349, %v2637
        %v2780 = vadd.f32 %v2350, %v2642
        %v2781 = vadd.f32 %v2351, %v2647
        %v2782 = vadd.f32 %v2352, %v2652
        %v2783 = vadd.f32 %v2353, %v2657
        %v2784 = vadd.f32 %v2354, %v2662
        %v2785 = vadd.f32 %v2355, %v2667
        %v2786 = vadd.f32 %v2356, %v2672
        %v2787 = vadd.f32 %v2357, %v2677
        %v2788 = vadd.f32 %v2358, %v2682
        %v2789 = vadd.f32 %v2359, %v2687
        %v2790 = vadd.f32 %v2360, %v2692
        %v2791 = vadd.f32 %v2361, %v2697
        %v2792 = vadd.f32 %v2362, %v2702
        %v2793 = vadd.f32 %v2363, %v2707
        %v2794 = vadd.f32 %v2364, %v2712
        %v2795 = vadd.f32 %v2365, %v2717
        %v2796 = vadd.f32 %v2366, %v2722
        %v2797 = vadd.f32 %v2367, %v2727
        %v2798 = vadd.f32 %v2368, %v2732
        %v2799 = vadd.f32 %v2369, %v2737
        %v2800 = vadd.f32 %v2370, %v2742
        %v2801 = vadd.f32 %v2371, %v2747
        %v2802 = vadd.f32 %v2372, %v2752
        %v2803 = vadd.f32 %v2373, %v2757
        %v2804 = vadd.f32 %v2374, %v2762
        %v2805 = vadd.f32 %v2375, %v2767
        %v2806 = vld [vmem:[%s254 + $0x24] sm:$0xff]
        %v2807 = vld [vmem:[%s254 + $0x2c] sm:$0xff]
        %v2808 = vld [vmem:[%s254 + $0x34] sm:$0xff]
        %v2809 = vld [vmem:[%s254 + $0x3c] sm:$0xff]
        %v2810 = vld [vmem:[%s254 + $0x44] sm:$0xff]
        %v2811 = vld [vmem:[%s254 + $0x4c] sm:$0xff]
        %v2812 = vld [vmem:[%s254 + $0x54] sm:$0xff]
        %v2813 = vld [vmem:[%s254 + $0x5c] sm:$0xff]
        %v2814 = vld [vmem:[%s254 + $0x64] sm:$0xff]
        %v2815 = vld [vmem:[%s254 + $0x6c] sm:$0xff]
        %v2816 = vld [vmem:[%s254 + $0x74] sm:$0xff]
        %v2817 = vld [vmem:[%s254 + $0x7c] sm:$0xff]
        %v2818 = vld [vmem:[%s254 + $0x84] sm:$0xff]
        %v2819 = vld [vmem:[%s254 + $0x8c] sm:$0xff]
        %v2820 = vld [vmem:[%s254 + $0x94] sm:$0xff]
        %v2821 = vld [vmem:[%s254 + $0x9c] sm:$0xff]
        %v2822 = vld [vmem:[%s254 + $0xa4] sm:$0xff]
        %v2823 = vld [vmem:[%s254 + $0xac] sm:$0xff]
        %v2824 = vld [vmem:[%s254 + $0xb4] sm:$0xff]
        %v2825 = vld [vmem:[%s254 + $0xbc] sm:$0xff]
        %v2826 = vld [vmem:[%s254 + $0xc4] sm:$0xff]
        %v2827 = vld [vmem:[%s254 + $0xcc] sm:$0xff]
        %v2828 = vld [vmem:[%s254 + $0xd4] sm:$0xff]
        %v2829 = vld [vmem:[%s254 + $0xdc] sm:$0xff]
        %v2830 = vld [vmem:[%s254 + $0xe4] sm:$0xff]
        %v2831 = vld [vmem:[%s254 + $0xec] sm:$0xff]
        %v2832 = vld [vmem:[%s254 + $0xf4] sm:$0xff]
        %v2833 = vld [vmem:[%s254 + $0xfc] sm:$0xff]
        %v2834 = vld [vmem:[%s254 + $0x104] sm:$0xff]
        %v2835 = vld [vmem:[%s254 + $0x10c] sm:$0xff]
        %v2836 = vld [vmem:[%s254 + $0x114] sm:$0xff]
        %v2837 = vld [vmem:[%s254 + $0x11c] sm:$0xff]
        %v2838 = vld [vmem:[%s254 + $0x124] sm:$0xff]
        %v2839 = vld [vmem:[%s254 + $0x12c] sm:$0xff]
        %v2840 = vld [vmem:[%s254 + $0x134] sm:$0xff]
        %v2841 = vld [vmem:[%s254 + $0x13c] sm:$0xff]
        %s2842 = scalar_lea.vmem [#allocation6], 24
        %v2843 = vld [vmem:[%s2842] sm:$0xf]
        %v2845 = vsel %vm372, %v2806, 0
        %v2848 = vsel %vm372, %v2807, 0
        %v2851 = vsel %vm372, %v2808, 0
        %v2854 = vsel %vm372, %v2809, 0
        %v2857 = vsel %vm372, %v2810, 0
        %v2860 = vsel %vm372, %v2811, 0
        %v2863 = vsel %vm372, %v2812, 0
        %v2866 = vsel %vm372, %v2813, 0
        %v2869 = vsel %vm372, %v2814, 0
        %v2872 = vsel %vm372, %v2815, 0
        %v2875 = vsel %vm372, %v2816, 0
        %v2878 = vsel %vm372, %v2817, 0
        %v2881 = vsel %vm372, %v2818, 0
        %v2884 = vsel %vm372, %v2819, 0
        %v2887 = vsel %vm372, %v2820, 0
        %v2890 = vsel %vm372, %v2821, 0
        %v2893 = vsel %vm372, %v2822, 0
        %v2896 = vsel %vm372, %v2823, 0
        %v2899 = vsel %vm372, %v2824, 0
        %v2902 = vsel %vm372, %v2825, 0
        %v2905 = vsel %vm372, %v2826, 0
        %v2908 = vsel %vm372, %v2827, 0
        %v2911 = vsel %vm372, %v2828, 0
        %v2914 = vsel %vm372, %v2829, 0
        %v2917 = vsel %vm372, %v2830, 0
        %v2920 = vsel %vm372, %v2831, 0
        %v2923 = vsel %vm372, %v2832, 0
        %v2926 = vsel %vm372, %v2833, 0
        %v2929 = vsel %vm372, %v2834, 0
        %v2932 = vsel %vm372, %v2835, 0
        %v2935 = vsel %vm372, %v2836, 0
        %v2938 = vsel %vm372, %v2837, 0
        %v2941 = vsel %vm372, %v2838, 0
        %v2944 = vsel %vm372, %v2839, 0
        %v2947 = vsel %vm372, %v2840, 0
        %v2950 = vsel %vm372, %v2841, 0
        %v2953 = vsel %vm481, %v2843, 0
        %2955 = vmatprep.subr.mxu0 0.0
        %2956 = vmatpush1.msra.mxu0 %v2953
        %2957 = vmatprep.subr.mxu0 0.0
        %2958 = vmatpush1.msra.mxu0 0.0
        %2959 = vmatprep.subr.mxu0 0.0
        %2960 = vmatpush1.msra.mxu0 0.0
        %2961 = vmatprep.subr.mxu0 0.0
        %2962 = vmatpush1.msra.mxu0 0.0
        %2963 = vmatprep.subr.mxu0 0.0
        %2964 = vmatpush1.msra.mxu0 0.0
        %2965 = vmatprep.subr.mxu0 0.0
        %2966 = vmatpush1.msra.mxu0 0.0
        %2967 = vmatprep.subr.mxu0 0.0
        %2968 = vmatpush1.msra.mxu0 0.0
        %2969 = vmatprep.subr.mxu0 0.0
        %2970 = vmatpush1.msra.mxu0 0.0
        %2971 = vmatprep.subr.mxu0 0.0
        %2972 = vmatpush1.msra.mxu0 0.0
        %2973 = vmatprep.subr.mxu0 0.0
        %2974 = vmatpush1.msra.mxu0 0.0
        %2975 = vmatprep.subr.mxu0 0.0
        %2976 = vmatpush1.msra.mxu0 0.0
        %2977 = vmatprep.subr.mxu0 0.0
        %2978 = vmatpush1.msra.mxu0 0.0
        %2979 = vmatprep.subr.mxu0 0.0
        %2980 = vmatpush1.msra.mxu0 0.0
        %2981 = vmatprep.subr.mxu0 0.0
        %2982 = vmatpush1.msra.mxu0 0.0
        %2983 = vmatprep.subr.mxu0 0.0
        %2984 = vmatpush1.msra.mxu0 0.0
        %2985 = vmatprep.subr.mxu0 0.0
        %2986 = vmatpush1.msra.mxu0 0.0
        %2987 = vmatprep.subr.mxu0 0.0
        %2988 = vmatpush1.msra.mxu0 0.0
        %2989 = vmatprep.subr.mxu0 0.0
        %2990 = vmatpush1.msra.mxu0 0.0
        %2991 = vmatprep.subr.mxu0 0.0
        %2992 = vmatpush1.msra.mxu0 0.0
        %2993 = vmatprep.subr.mxu0 0.0
        %2994 = vmatpush1.msra.mxu0 0.0
        %2995 = vmatprep.subr.mxu0 0.0
        %2996 = vmatpush1.msra.mxu0 0.0
        %2997 = vmatprep.subr.mxu0 0.0
        %2998 = vmatpush1.msra.mxu0 0.0
        %2999 = vmatprep.subr.mxu0 0.0
        %3000 = vmatpush1.msra.mxu0 0.0
        %3001 = vmatprep.subr.mxu0 0.0
        %3002 = vmatpush1.msra.mxu0 0.0
        %3003 = vmatprep.subr.mxu0 0.0
        %3004 = vmatpush1.msra.mxu0 0.0
        %3005 = vmatprep.subr.mxu0 0.0
        %3006 = vmatpush1.msra.mxu0 0.0
        %3007 = vmatprep.subr.mxu0 0.0
        %3008 = vmatpush1.msra.mxu0 0.0
        %3009 = vmatprep.subr.mxu0 0.0
        %3010 = vmatpush1.msra.mxu0 0.0
        %3011 = vmatprep.subr.mxu0 0.0
        %3012 = vmatpush1.msra.mxu0 0.0
        %3013 = vmatprep.subr.mxu0 0.0
        %3014 = vmatpush1.msra.mxu0 0.0
        %3015 = vmatprep.subr.mxu0 0.0
        %3016 = vmatpush1.msra.mxu0 0.0
        %3017 = vmatprep.subr.mxu0 0.0
        %3018 = vmatpush1.msra.mxu0 0.0
        %3019 = vmatprep.mubr.f32.mxu0 0.0
        %3020 = vmatmul.mubr.f32.gmra.mrb[0].mxu0 %v2845
        %v3021 = vpop.f32.mrb[0].mxu0
        %v3022 = vadd.f32 0.0, %v3021
        %v3023 = vpop.f32.mrb[0].mxu0
        %3024 = vmatprep.mubr.f32.mxu0 0.0
        %3025 = vmatmul.mubr.f32.gmra.mrb[0].mxu0 %v2848
        %v3026 = vpop.f32.mrb[0].mxu0
        %v3027 = vadd.f32 0.0, %v3026
        %v3028 = vpop.f32.mrb[0].mxu0
        %3029 = vmatprep.mubr.f32.mxu0 0.0
        %3030 = vmatmul.mubr.f32.gmra.mrb[0].mxu0 %v2851
        %v3031 = vpop.f32.mrb[0].mxu0
        %v3032 = vadd.f32 0.0, %v3031
        %v3033 = vpop.f32.mrb[0].mxu0
        %3034 = vmatprep.mubr.f32.mxu0 0.0
        %3035 = vmatmul.mubr.f32.gmra.mrb[0].mxu0 %v2854
        %v3036 = vpop.f32.mrb[0].mxu0
        %v3037 = vadd.f32 0.0, %v3036
        %v3038 = vpop.f32.mrb[0].mxu0
        %3039 = vmatprep.mubr.f32.mxu0 0.0
        %3040 = vmatmul.mubr.f32.gmra.mrb[0].mxu0 %v2857
        %v3041 = vpop.f32.mrb[0].mxu0
        %v3042 = vadd.f32 0.0, %v3041
        %v3043 = vpop.f32.mrb[0].mxu0
        %3044 = vmatprep.mubr.f32.mxu0 0.0
        %3045 = vmatmul.mubr.f32.gmra.mrb[0].mxu0 %v2860
        %v3046 = vpop.f32.mrb[0].mxu0
        %v3047 = vadd.f32 0.0, %v3046
        %v3048 = vpop.f32.mrb[0].mxu0
        %3049 = vmatprep.mubr.f32.mxu0 0.0
        %3050 = vmatmul.mubr.f32.gmra.mrb[0].mxu0 %v2863
        %v3051 = vpop.f32.mrb[0].mxu0
        %v3052 = vadd.f32 0.0, %v3051
        %v3053 = vpop.f32.mrb[0].mxu0
        %3054 = vmatprep.mubr.f32.mxu0 0.0
        %3055 = vmatmul.mubr.f32.gmra.mrb[0].mxu0 %v2866
        %v3056 = vpop.f32.mrb[0].mxu0
        %v3057 = vadd.f32 0.0, %v3056
        %v3058 = vpop.f32.mrb[0].mxu0
        %3059 = vmatprep.mubr.f32.mxu0 0.0
        %3060 = vmatmul.mubr.f32.gmra.mrb[0].mxu0 %v2869
        %v3061 = vpop.f32.mrb[0].mxu0
        %v3062 = vadd.f32 0.0, %v3061
        %v3063 = vpop.f32.mrb[0].mxu0
        %3064 = vmatprep.mubr.f32.mxu0 0.0
        %3065 = vmatmul.mubr.f32.gmra.mrb[0].mxu0 %v2872
        %v3066 = vpop.f32.mrb[0].mxu0
        %v3067 = vadd.f32 0.0, %v3066
        %v3068 = vpop.f32.mrb[0].mxu0
        %3069 = vmatprep.mubr.f32.mxu0 0.0
        %3070 = vmatmul.mubr.f32.gmra.mrb[0].mxu0 %v2875
        %v3071 = vpop.f32.mrb[0].mxu0
        %v3072 = vadd.f32 0.0, %v3071
        %v3073 = vpop.f32.mrb[0].mxu0
        %3074 = vmatprep.mubr.f32.mxu0 0.0
        %3075 = vmatmul.mubr.f32.gmra.mrb[0].mxu0 %v2878
        %v3076 = vpop.f32.mrb[0].mxu0
        %v3077 = vadd.f32 0.0, %v3076
        %v3078 = vpop.f32.mrb[0].mxu0
        %3079 = vmatprep.mubr.f32.mxu0 0.0
        %3080 = vmatmul.mubr.f32.gmra.mrb[0].mxu0 %v2881
        %v3081 = vpop.f32.mrb[0].mxu0
        %v3082 = vadd.f32 0.0, %v3081
        %v3083 = vpop.f32.mrb[0].mxu0
        %3084 = vmatprep.mubr.f32.mxu0 0.0
        %3085 = vmatmul.mubr.f32.gmra.mrb[0].mxu0 %v2884
        %v3086 = vpop.f32.mrb[0].mxu0
        %v3087 = vadd.f32 0.0, %v3086
        %v3088 = vpop.f32.mrb[0].mxu0
        %3089 = vmatprep.mubr.f32.mxu0 0.0
        %3090 = vmatmul.mubr.f32.gmra.mrb[0].mxu0 %v2887
        %v3091 = vpop.f32.mrb[0].mxu0
        %v3092 = vadd.f32 0.0, %v3091
        %v3093 = vpop.f32.mrb[0].mxu0
        %3094 = vmatprep.mubr.f32.mxu0 0.0
        %3095 = vmatmul.mubr.f32.gmra.mrb[0].mxu0 %v2890
        %v3096 = vpop.f32.mrb[0].mxu0
        %v3097 = vadd.f32 0.0, %v3096
        %v3098 = vpop.f32.mrb[0].mxu0
        %3099 = vmatprep.mubr.f32.mxu0 0.0
        %3100 = vmatmul.mubr.f32.gmra.mrb[0].mxu0 %v2893
        %v3101 = vpop.f32.mrb[0].mxu0
        %v3102 = vadd.f32 0.0, %v3101
        %v3103 = vpop.f32.mrb[0].mxu0
        %3104 = vmatprep.mubr.f32.mxu0 0.0
        %3105 = vmatmul.mubr.f32.gmra.mrb[0].mxu0 %v2896
        %v3106 = vpop.f32.mrb[0].mxu0
        %v3107 = vadd.f32 0.0, %v3106
        %v3108 = vpop.f32.mrb[0].mxu0
        %3109 = vmatprep.mubr.f32.mxu0 0.0
        %3110 = vmatmul.mubr.f32.gmra.mrb[0].mxu0 %v2899
        %v3111 = vpop.f32.mrb[0].mxu0
        %v3112 = vadd.f32 0.0, %v3111
        %v3113 = vpop.f32.mrb[0].mxu0
        %3114 = vmatprep.mubr.f32.mxu0 0.0
        %3115 = vmatmul.mubr.f32.gmra.mrb[0].mxu0 %v2902
        %v3116 = vpop.f32.mrb[0].mxu0
        %v3117 = vadd.f32 0.0, %v3116
        %v3118 = vpop.f32.mrb[0].mxu0
        %3119 = vmatprep.mubr.f32.mxu0 0.0
        %3120 = vmatmul.mubr.f32.gmra.mrb[0].mxu0 %v2905
        %v3121 = vpop.f32.mrb[0].mxu0
        %v3122 = vadd.f32 0.0, %v3121
        %v3123 = vpop.f32.mrb[0].mxu0
        %3124 = vmatprep.mubr.f32.mxu0 0.0
        %3125 = vmatmul.mubr.f32.gmra.mrb[0].mxu0 %v2908
        %v3126 = vpop.f32.mrb[0].mxu0
        %v3127 = vadd.f32 0.0, %v3126
        %v3128 = vpop.f32.mrb[0].mxu0
        %3129 = vmatprep.mubr.f32.mxu0 0.0
        %3130 = vmatmul.mubr.f32.gmra.mrb[0].mxu0 %v2911
        %v3131 = vpop.f32.mrb[0].mxu0
        %v3132 = vadd.f32 0.0, %v3131
        %v3133 = vpop.f32.mrb[0].mxu0
        %3134 = vmatprep.mubr.f32.mxu0 0.0
        %3135 = vmatmul.mubr.f32.gmra.mrb[0].mxu0 %v2914
        %v3136 = vpop.f32.mrb[0].mxu0
        %v3137 = vadd.f32 0.0, %v3136
        %v3138 = vpop.f32.mrb[0].mxu0
        %3139 = vmatprep.mubr.f32.mxu0 0.0
        %3140 = vmatmul.mubr.f32.gmra.mrb[0].mxu0 %v2917
        %v3141 = vpop.f32.mrb[0].mxu0
        %v3142 = vadd.f32 0.0, %v3141
        %v3143 = vpop.f32.mrb[0].mxu0
        %3144 = vmatprep.mubr.f32.mxu0 0.0
        %3145 = vmatmul.mubr.f32.gmra.mrb[0].mxu0 %v2920
        %v3146 = vpop.f32.mrb[0].mxu0
        %v3147 = vadd.f32 0.0, %v3146
        %v3148 = vpop.f32.mrb[0].mxu0
        %3149 = vmatprep.mubr.f32.mxu0 0.0
        %3150 = vmatmul.mubr.f32.gmra.mrb[0].mxu0 %v2923
        %v3151 = vpop.f32.mrb[0].mxu0
        %v3152 = vadd.f32 0.0, %v3151
        %v3153 = vpop.f32.mrb[0].mxu0
        %3154 = vmatprep.mubr.f32.mxu0 0.0
        %3155 = vmatmul.mubr.f32.gmra.mrb[0].mxu0 %v2926
        %v3156 = vpop.f32.mrb[0].mxu0
        %v3157 = vadd.f32 0.0, %v3156
        %v3158 = vpop.f32.mrb[0].mxu0
        %3159 = vmatprep.mubr.f32.mxu0 0.0
        %3160 = vmatmul.mubr.f32.gmra.mrb[0].mxu0 %v2929
        %v3161 = vpop.f32.mrb[0].mxu0
        %v3162 = vadd.f32 0.0, %v3161
        %v3163 = vpop.f32.mrb[0].mxu0
        %3164 = vmatprep.mubr.f32.mxu0 0.0
        %3165 = vmatmul.mubr.f32.gmra.mrb[0].mxu0 %v2932
        %v3166 = vpop.f32.mrb[0].mxu0
        %v3167 = vadd.f32 0.0, %v3166
        %v3168 = vpop.f32.mrb[0].mxu0
        %3169 = vmatprep.mubr.f32.mxu0 0.0
        %3170 = vmatmul.mubr.f32.gmra.mrb[0].mxu0 %v2935
        %v3171 = vpop.f32.mrb[0].mxu0
        %v3172 = vadd.f32 0.0, %v3171
        %v3173 = vpop.f32.mrb[0].mxu0
        %3174 = vmatprep.mubr.f32.mxu0 0.0
        %3175 = vmatmul.mubr.f32.gmra.mrb[0].mxu0 %v2938
        %v3176 = vpop.f32.mrb[0].mxu0
        %v3177 = vadd.f32 0.0, %v3176
        %v3178 = vpop.f32.mrb[0].mxu0
        %3179 = vmatprep.mubr.f32.mxu0 0.0
        %3180 = vmatmul.mubr.f32.gmra.mrb[0].mxu0 %v2941
        %v3181 = vpop.f32.mrb[0].mxu0
        %v3182 = vadd.f32 0.0, %v3181
        %v3183 = vpop.f32.mrb[0].mxu0
        %3184 = vmatprep.mubr.f32.mxu0 0.0
        %3185 = vmatmul.mubr.f32.gmra.mrb[0].mxu0 %v2944
        %v3186 = vpop.f32.mrb[0].mxu0
        %v3187 = vadd.f32 0.0, %v3186
        %v3188 = vpop.f32.mrb[0].mxu0
        %3189 = vmatprep.mubr.f32.mxu0 0.0
        %3190 = vmatmul.mubr.f32.gmra.mrb[0].mxu0 %v2947
        %v3191 = vpop.f32.mrb[0].mxu0
        %v3192 = vadd.f32 0.0, %v3191
        %v3193 = vpop.f32.mrb[0].mxu0
        %3194 = vmatprep.mubr.f32.mxu0 0.0
        %3195 = vmatmul.mubr.f32.gmra.mrb[0].mxu0 %v2950
        %v3196 = vpop.f32.mrb[0].mxu0
        %v3197 = vadd.f32 0.0, %v3196
        %v3198 = vpop.f32.mrb[0].mxu0
        %3199 = vdwg.mxu0
        %v3200 = vadd.f32 %v2770, %v3022
        %v3201 = vadd.f32 %v2771, %v3027
        %v3202 = vadd.f32 %v2772, %v3032
        %v3203 = vadd.f32 %v2773, %v3037
        %v3204 = vadd.f32 %v2774, %v3042
        %v3205 = vadd.f32 %v2775, %v3047
        %v3206 = vadd.f32 %v2776, %v3052
        %v3207 = vadd.f32 %v2777, %v3057
        %v3208 = vadd.f32 %v2778, %v3062
        %v3209 = vadd.f32 %v2779, %v3067
        %v3210 = vadd.f32 %v2780, %v3072
        %v3211 = vadd.f32 %v2781, %v3077
        %v3212 = vadd.f32 %v2782, %v3082
        %v3213 = vadd.f32 %v2783, %v3087
        %v3214 = vadd.f32 %v2784, %v3092
        %v3215 = vadd.f32 %v2785, %v3097
        %v3216 = vadd.f32 %v2786, %v3102
        %v3217 = vadd.f32 %v2787, %v3107
        %v3218 = vadd.f32 %v2788, %v3112
        %v3219 = vadd.f32 %v2789, %v3117
        %v3220 = vadd.f32 %v2790, %v3122
        %v3221 = vadd.f32 %v2791, %v3127
        %v3222 = vadd.f32 %v2792, %v3132
        %v3223 = vadd.f32 %v2793, %v3137
        %v3224 = vadd.f32 %v2794, %v3142
        %v3225 = vadd.f32 %v2795, %v3147
        %v3226 = vadd.f32 %v2796, %v3152
        %v3227 = vadd.f32 %v2797, %v3157
        %v3228 = vadd.f32 %v2798, %v3162
        %v3229 = vadd.f32 %v2799, %v3167
        %v3230 = vadd.f32 %v2800, %v3172
        %v3231 = vadd.f32 %v2801, %v3177
        %v3232 = vadd.f32 %v2802, %v3182
        %v3233 = vadd.f32 %v2803, %v3187
        %v3234 = vadd.f32 %v2804, %v3192
        %v3235 = vadd.f32 %v2805, %v3197
        %v3236 = vld [vmem:[%s254 + $0x25] sm:$0xff]
        %v3237 = vld [vmem:[%s254 + $0x2d] sm:$0xff]
        %v3238 = vld [vmem:[%s254 + $0x35] sm:$0xff]
        %v3239 = vld [vmem:[%s254 + $0x3d] sm:$0xff]
        %v3240 = vld [vmem:[%s254 + $0x45] sm:$0xff]
        %v3241 = vld [vmem:[%s254 + $0x4d] sm:$0xff]
        %v3242 = vld [vmem:[%s254 + $0x55] sm:$0xff]
        %v3243 = vld [vmem:[%s254 + $0x5d] sm:$0xff]
        %v3244 = vld [vmem:[%s254 + $0x65] sm:$0xff]
        %v3245 = vld [vmem:[%s254 + $0x6d] sm:$0xff]
        %v3246 = vld [vmem:[%s254 + $0x75] sm:$0xff]
        %v3247 = vld [vmem:[%s254 + $0x7d] sm:$0xff]
        %v3248 = vld [vmem:[%s254 + $0x85] sm:$0xff]
        %v3249 = vld [vmem:[%s254 + $0x8d] sm:$0xff]
        %v3250 = vld [vmem:[%s254 + $0x95] sm:$0xff]
        %v3251 = vld [vmem:[%s254 + $0x9d] sm:$0xff]
        %v3252 = vld [vmem:[%s254 + $0xa5] sm:$0xff]
        %v3253 = vld [vmem:[%s254 + $0xad] sm:$0xff]
        %v3254 = vld [vmem:[%s254 + $0xb5] sm:$0xff]
        %v3255 = vld [vmem:[%s254 + $0xbd] sm:$0xff]
        %v3256 = vld [vmem:[%s254 + $0xc5] sm:$0xff]
        %v3257 = vld [vmem:[%s254 + $0xcd] sm:$0xff]
        %v3258 = vld [vmem:[%s254 + $0xd5] sm:$0xff]
        %v3259 = vld [vmem:[%s254 + $0xdd] sm:$0xff]
        %v3260 = vld [vmem:[%s254 + $0xe5] sm:$0xff]
        %v3261 = vld [vmem:[%s254 + $0xed] sm:$0xff]
        %v3262 = vld [vmem:[%s254 + $0xf5] sm:$0xff]
        %v3263 = vld [vmem:[%s254 + $0xfd] sm:$0xff]
        %v3264 = vld [vmem:[%s254 + $0x105] sm:$0xff]
        %v3265 = vld [vmem:[%s254 + $0x10d] sm:$0xff]
        %v3266 = vld [vmem:[%s254 + $0x115] sm:$0xff]
        %v3267 = vld [vmem:[%s254 + $0x11d] sm:$0xff]
        %v3268 = vld [vmem:[%s254 + $0x125] sm:$0xff]
        %v3269 = vld [vmem:[%s254 + $0x12d] sm:$0xff]
        %v3270 = vld [vmem:[%s254 + $0x135] sm:$0xff]
        %v3271 = vld [vmem:[%s254 + $0x13d] sm:$0xff]
        %s3272 = scalar_lea.vmem [#allocation6], 28
        %v3273 = vld [vmem:[%s3272] sm:$0xf]
        %v3275 = vsel %vm372, %v3236, 0
        %v3278 = vsel %vm372, %v3237, 0
        %v3281 = vsel %vm372, %v3238, 0
        %v3284 = vsel %vm372, %v3239, 0
        %v3287 = vsel %vm372, %v3240, 0
        %v3290 = vsel %vm372, %v3241, 0
        %v3293 = vsel %vm372, %v3242, 0
        %v3296 = vsel %vm372, %v3243, 0
        %v3299 = vsel %vm372, %v3244, 0
        %v3302 = vsel %vm372, %v3245, 0
        %v3305 = vsel %vm372, %v3246, 0
        %v3308 = vsel %vm372, %v3247, 0
        %v3311 = vsel %vm372, %v3248, 0
        %v3314 = vsel %vm372, %v3249, 0
        %v3317 = vsel %vm372, %v3250, 0
        %v3320 = vsel %vm372, %v3251, 0
        %v3323 = vsel %vm372, %v3252, 0
        %v3326 = vsel %vm372, %v3253, 0
        %v3329 = vsel %vm372, %v3254, 0
        %v3332 = vsel %vm372, %v3255, 0
        %v3335 = vsel %vm372, %v3256, 0
        %v3338 = vsel %vm372, %v3257, 0
        %v3341 = vsel %vm372, %v3258, 0
        %v3344 = vsel %vm372, %v3259, 0
        %v3347 = vsel %vm372, %v3260, 0
        %v3350 = vsel %vm372, %v3261, 0
        %v3353 = vsel %vm372, %v3262, 0
        %v3356 = vsel %vm372, %v3263, 0
        %v3359 = vsel %vm372, %v3264, 0
        %v3362 = vsel %vm372, %v3265, 0
        %v3365 = vsel %vm372, %v3266, 0
        %v3368 = vsel %vm372, %v3267, 0
        %v3371 = vsel %vm372, %v3268, 0
        %v3374 = vsel %vm372, %v3269, 0
        %v3377 = vsel %vm372, %v3270, 0
        %v3380 = vsel %vm372, %v3271, 0
        %v3383 = vsel %vm481, %v3273, 0
        %3385 = vmatprep.subr.mxu0 0.0
        %3386 = vmatpush1.msra.mxu0 %v3383
        %3387 = vmatprep.subr.mxu0 0.0
        %3388 = vmatpush1.msra.mxu0 0.0
        %3389 = vmatprep.subr.mxu0 0.0
        %3390 = vmatpush1.msra.mxu0 0.0
        %3391 = vmatprep.subr.mxu0 0.0
        %3392 = vmatpush1.msra.mxu0 0.0
        %3393 = vmatprep.subr.mxu0 0.0
        %3394 = vmatpush1.msra.mxu0 0.0
        %3395 = vmatprep.subr.mxu0 0.0
        %3396 = vmatpush1.msra.mxu0 0.0
        %3397 = vmatprep.subr.mxu0 0.0
        %3398 = vmatpush1.msra.mxu0 0.0
        %3399 = vmatprep.subr.mxu0 0.0
        %3400 = vmatpush1.msra.mxu0 0.0
        %3401 = vmatprep.subr.mxu0 0.0
        %3402 = vmatpush1.msra.mxu0 0.0
        %3403 = vmatprep.subr.mxu0 0.0
        %3404 = vmatpush1.msra.mxu0 0.0
        %3405 = vmatprep.subr.mxu0 0.0
        %3406 = vmatpush1.msra.mxu0 0.0
        %3407 = vmatprep.subr.mxu0 0.0
        %3408 = vmatpush1.msra.mxu0 0.0
        %3409 = vmatprep.subr.mxu0 0.0
        %3410 = vmatpush1.msra.mxu0 0.0
        %3411 = vmatprep.subr.mxu0 0.0
        %3412 = vmatpush1.msra.mxu0 0.0
        %3413 = vmatprep.subr.mxu0 0.0
        %3414 = vmatpush1.msra.mxu0 0.0
        %3415 = vmatprep.subr.mxu0 0.0
        %3416 = vmatpush1.msra.mxu0 0.0
        %3417 = vmatprep.subr.mxu0 0.0
        %3418 = vmatpush1.msra.mxu0 0.0
        %3419 = vmatprep.subr.mxu0 0.0
        %3420 = vmatpush1.msra.mxu0 0.0
        %3421 = vmatprep.subr.mxu0 0.0
        %3422 = vmatpush1.msra.mxu0 0.0
        %3423 = vmatprep.subr.mxu0 0.0
        %3424 = vmatpush1.msra.mxu0 0.0
        %3425 = vmatprep.subr.mxu0 0.0
        %3426 = vmatpush1.msra.mxu0 0.0
        %3427 = vmatprep.subr.mxu0 0.0
        %3428 = vmatpush1.msra.mxu0 0.0
        %3429 = vmatprep.subr.mxu0 0.0
        %3430 = vmatpush1.msra.mxu0 0.0
        %3431 = vmatprep.subr.mxu0 0.0
        %3432 = vmatpush1.msra.mxu0 0.0
        %3433 = vmatprep.subr.mxu0 0.0
        %3434 = vmatpush1.msra.mxu0 0.0
        %3435 = vmatprep.subr.mxu0 0.0
        %3436 = vmatpush1.msra.mxu0 0.0
        %3437 = vmatprep.subr.mxu0 0.0
        %3438 = vmatpush1.msra.mxu0 0.0
        %3439 = vmatprep.subr.mxu0 0.0
        %3440 = vmatpush1.msra.mxu0 0.0
        %3441 = vmatprep.subr.mxu0 0.0
        %3442 = vmatpush1.msra.mxu0 0.0
        %3443 = vmatprep.subr.mxu0 0.0
        %3444 = vmatpush1.msra.mxu0 0.0
        %3445 = vmatprep.subr.mxu0 0.0
        %3446 = vmatpush1.msra.mxu0 0.0
        %3447 = vmatprep.subr.mxu0 0.0
        %3448 = vmatpush1.msra.mxu0 0.0
        %3449 = vmatprep.mubr.f32.mxu0 0.0
        %3450 = vmatmul.mubr.f32.gmra.mrb[0].mxu0 %v3275
        %v3451 = vpop.f32.mrb[0].mxu0
        %v3452 = vadd.f32 0.0, %v3451
        %v3453 = vpop.f32.mrb[0].mxu0
        %3454 = vmatprep.mubr.f32.mxu0 0.0
        %3455 = vmatmul.mubr.f32.gmra.mrb[0].mxu0 %v3278
        %v3456 = vpop.f32.mrb[0].mxu0
        %v3457 = vadd.f32 0.0, %v3456
        %v3458 = vpop.f32.mrb[0].mxu0
        %3459 = vmatprep.mubr.f32.mxu0 0.0
        %3460 = vmatmul.mubr.f32.gmra.mrb[0].mxu0 %v3281
        %v3461 = vpop.f32.mrb[0].mxu0
        %v3462 = vadd.f32 0.0, %v3461
        %v3463 = vpop.f32.mrb[0].mxu0
        %3464 = vmatprep.mubr.f32.mxu0 0.0
        %3465 = vmatmul.mubr.f32.gmra.mrb[0].mxu0 %v3284
        %v3466 = vpop.f32.mrb[0].mxu0
        %v3467 = vadd.f32 0.0, %v3466
        %v3468 = vpop.f32.mrb[0].mxu0
        %3469 = vmatprep.mubr.f32.mxu0 0.0
        %3470 = vmatmul.mubr.f32.gmra.mrb[0].mxu0 %v3287
        %v3471 = vpop.f32.mrb[0].mxu0
        %v3472 = vadd.f32 0.0, %v3471
        %v3473 = vpop.f32.mrb[0].mxu0
        %3474 = vmatprep.mubr.f32.mxu0 0.0
        %3475 = vmatmul.mubr.f32.gmra.mrb[0].mxu0 %v3290
        %v3476 = vpop.f32.mrb[0].mxu0
        %v3477 = vadd.f32 0.0, %v3476
        %v3478 = vpop.f32.mrb[0].mxu0
        %3479 = vmatprep.mubr.f32.mxu0 0.0
        %3480 = vmatmul.mubr.f32.gmra.mrb[0].mxu0 %v3293
        %v3481 = vpop.f32.mrb[0].mxu0
        %v3482 = vadd.f32 0.0, %v3481
        %v3483 = vpop.f32.mrb[0].mxu0
        %3484 = vmatprep.mubr.f32.mxu0 0.0
        %3485 = vmatmul.mubr.f32.gmra.mrb[0].mxu0 %v3296
        %v3486 = vpop.f32.mrb[0].mxu0
        %v3487 = vadd.f32 0.0, %v3486
        %v3488 = vpop.f32.mrb[0].mxu0
        %3489 = vmatprep.mubr.f32.mxu0 0.0
        %3490 = vmatmul.mubr.f32.gmra.mrb[0].mxu0 %v3299
        %v3491 = vpop.f32.mrb[0].mxu0
        %v3492 = vadd.f32 0.0, %v3491
        %v3493 = vpop.f32.mrb[0].mxu0
        %3494 = vmatprep.mubr.f32.mxu0 0.0
        %3495 = vmatmul.mubr.f32.gmra.mrb[0].mxu0 %v3302
        %v3496 = vpop.f32.mrb[0].mxu0
        %v3497 = vadd.f32 0.0, %v3496
        %v3498 = vpop.f32.mrb[0].mxu0
        %3499 = vmatprep.mubr.f32.mxu0 0.0
        %3500 = vmatmul.mubr.f32.gmra.mrb[0].mxu0 %v3305
        %v3501 = vpop.f32.mrb[0].mxu0
        %v3502 = vadd.f32 0.0, %v3501
        %v3503 = vpop.f32.mrb[0].mxu0
        %3504 = vmatprep.mubr.f32.mxu0 0.0
        %3505 = vmatmul.mubr.f32.gmra.mrb[0].mxu0 %v3308
        %v3506 = vpop.f32.mrb[0].mxu0
        %v3507 = vadd.f32 0.0, %v3506
        %v3508 = vpop.f32.mrb[0].mxu0
        %3509 = vmatprep.mubr.f32.mxu0 0.0
        %3510 = vmatmul.mubr.f32.gmra.mrb[0].mxu0 %v3311
        %v3511 = vpop.f32.mrb[0].mxu0
        %v3512 = vadd.f32 0.0, %v3511
        %v3513 = vpop.f32.mrb[0].mxu0
        %3514 = vmatprep.mubr.f32.mxu0 0.0
        %3515 = vmatmul.mubr.f32.gmra.mrb[0].mxu0 %v3314
        %v3516 = vpop.f32.mrb[0].mxu0
        %v3517 = vadd.f32 0.0, %v3516
        %v3518 = vpop.f32.mrb[0].mxu0
        %3519 = vmatprep.mubr.f32.mxu0 0.0
        %3520 = vmatmul.mubr.f32.gmra.mrb[0].mxu0 %v3317
        %v3521 = vpop.f32.mrb[0].mxu0
        %v3522 = vadd.f32 0.0, %v3521
        %v3523 = vpop.f32.mrb[0].mxu0
        %3524 = vmatprep.mubr.f32.mxu0 0.0
        %3525 = vmatmul.mubr.f32.gmra.mrb[0].mxu0 %v3320
        %v3526 = vpop.f32.mrb[0].mxu0
        %v3527 = vadd.f32 0.0, %v3526
        %v3528 = vpop.f32.mrb[0].mxu0
        %3529 = vmatprep.mubr.f32.mxu0 0.0
        %3530 = vmatmul.mubr.f32.gmra.mrb[0].mxu0 %v3323
        %v3531 = vpop.f32.mrb[0].mxu0
        %v3532 = vadd.f32 0.0, %v3531
        %v3533 = vpop.f32.mrb[0].mxu0
        %3534 = vmatprep.mubr.f32.mxu0 0.0
        %3535 = vmatmul.mubr.f32.gmra.mrb[0].mxu0 %v3326
        %v3536 = vpop.f32.mrb[0].mxu0
        %v3537 = vadd.f32 0.0, %v3536
        %v3538 = vpop.f32.mrb[0].mxu0
        %3539 = vmatprep.mubr.f32.mxu0 0.0
        %3540 = vmatmul.mubr.f32.gmra.mrb[0].mxu0 %v3329
        %v3541 = vpop.f32.mrb[0].mxu0
        %v3542 = vadd.f32 0.0, %v3541
        %v3543 = vpop.f32.mrb[0].mxu0
        %3544 = vmatprep.mubr.f32.mxu0 0.0
        %3545 = vmatmul.mubr.f32.gmra.mrb[0].mxu0 %v3332
        %v3546 = vpop.f32.mrb[0].mxu0
        %v3547 = vadd.f32 0.0, %v3546
        %v3548 = vpop.f32.mrb[0].mxu0
        %3549 = vmatprep.mubr.f32.mxu0 0.0
        %3550 = vmatmul.mubr.f32.gmra.mrb[0].mxu0 %v3335
        %v3551 = vpop.f32.mrb[0].mxu0
        %v3552 = vadd.f32 0.0, %v3551
        %v3553 = vpop.f32.mrb[0].mxu0
        %3554 = vmatprep.mubr.f32.mxu0 0.0
        %3555 = vmatmul.mubr.f32.gmra.mrb[0].mxu0 %v3338
        %v3556 = vpop.f32.mrb[0].mxu0
        %v3557 = vadd.f32 0.0, %v3556
        %v3558 = vpop.f32.mrb[0].mxu0
        %3559 = vmatprep.mubr.f32.mxu0 0.0
        %3560 = vmatmul.mubr.f32.gmra.mrb[0].mxu0 %v3341
        %v3561 = vpop.f32.mrb[0].mxu0
        %v3562 = vadd.f32 0.0, %v3561
        %v3563 = vpop.f32.mrb[0].mxu0
        %3564 = vmatprep.mubr.f32.mxu0 0.0
        %3565 = vmatmul.mubr.f32.gmra.mrb[0].mxu0 %v3344
        %v3566 = vpop.f32.mrb[0].mxu0
        %v3567 = vadd.f32 0.0, %v3566
        %v3568 = vpop.f32.mrb[0].mxu0
        %3569 = vmatprep.mubr.f32.mxu0 0.0
        %3570 = vmatmul.mubr.f32.gmra.mrb[0].mxu0 %v3347
        %v3571 = vpop.f32.mrb[0].mxu0
        %v3572 = vadd.f32 0.0, %v3571
        %v3573 = vpop.f32.mrb[0].mxu0
        %3574 = vmatprep.mubr.f32.mxu0 0.0
        %3575 = vmatmul.mubr.f32.gmra.mrb[0].mxu0 %v3350
        %v3576 = vpop.f32.mrb[0].mxu0
        %v3577 = vadd.f32 0.0, %v3576
        %v3578 = vpop.f32.mrb[0].mxu0
        %3579 = vmatprep.mubr.f32.mxu0 0.0
        %3580 = vmatmul.mubr.f32.gmra.mrb[0].mxu0 %v3353
        %v3581 = vpop.f32.mrb[0].mxu0
        %v3582 = vadd.f32 0.0, %v3581
        %v3583 = vpop.f32.mrb[0].mxu0
        %3584 = vmatprep.mubr.f32.mxu0 0.0
        %3585 = vmatmul.mubr.f32.gmra.mrb[0].mxu0 %v3356
        %v3586 = vpop.f32.mrb[0].mxu0
        %v3587 = vadd.f32 0.0, %v3586
        %v3588 = vpop.f32.mrb[0].mxu0
        %3589 = vmatprep.mubr.f32.mxu0 0.0
        %3590 = vmatmul.mubr.f32.gmra.mrb[0].mxu0 %v3359
        %v3591 = vpop.f32.mrb[0].mxu0
        %v3592 = vadd.f32 0.0, %v3591
        %v3593 = vpop.f32.mrb[0].mxu0
        %3594 = vmatprep.mubr.f32.mxu0 0.0
        %3595 = vmatmul.mubr.f32.gmra.mrb[0].mxu0 %v3362
        %v3596 = vpop.f32.mrb[0].mxu0
        %v3597 = vadd.f32 0.0, %v3596
        %v3598 = vpop.f32.mrb[0].mxu0
        %3599 = vmatprep.mubr.f32.mxu0 0.0
        %3600 = vmatmul.mubr.f32.gmra.mrb[0].mxu0 %v3365
        %v3601 = vpop.f32.mrb[0].mxu0
        %v3602 = vadd.f32 0.0, %v3601
        %v3603 = vpop.f32.mrb[0].mxu0
        %3604 = vmatprep.mubr.f32.mxu0 0.0
        %3605 = vmatmul.mubr.f32.gmra.mrb[0].mxu0 %v3368
        %v3606 = vpop.f32.mrb[0].mxu0
        %v3607 = vadd.f32 0.0, %v3606
        %v3608 = vpop.f32.mrb[0].mxu0
        %3609 = vmatprep.mubr.f32.mxu0 0.0
        %3610 = vmatmul.mubr.f32.gmra.mrb[0].mxu0 %v3371
        %v3611 = vpop.f32.mrb[0].mxu0
        %v3612 = vadd.f32 0.0, %v3611
        %v3613 = vpop.f32.mrb[0].mxu0
        %3614 = vmatprep.mubr.f32.mxu0 0.0
        %3615 = vmatmul.mubr.f32.gmra.mrb[0].mxu0 %v3374
        %v3616 = vpop.f32.mrb[0].mxu0
        %v3617 = vadd.f32 0.0, %v3616
        %v3618 = vpop.f32.mrb[0].mxu0
        %3619 = vmatprep.mubr.f32.mxu0 0.0
        %3620 = vmatmul.mubr.f32.gmra.mrb[0].mxu0 %v3377
        %v3621 = vpop.f32.mrb[0].mxu0
        %v3622 = vadd.f32 0.0, %v3621
        %v3623 = vpop.f32.mrb[0].mxu0
        %3624 = vmatprep.mubr.f32.mxu0 0.0
        %3625 = vmatmul.mubr.f32.gmra.mrb[0].mxu0 %v3380
        %v3626 = vpop.f32.mrb[0].mxu0
        %v3627 = vadd.f32 0.0, %v3626
        %v3628 = vpop.f32.mrb[0].mxu0
        %3629 = vdwg.mxu0
        %v3630 = vadd.f32 %v3200, %v3452
        %v3631 = vadd.f32 %v3201, %v3457
        %v3632 = vadd.f32 %v3202, %v3462
        %v3633 = vadd.f32 %v3203, %v3467
        %v3634 = vadd.f32 %v3204, %v3472
        %v3635 = vadd.f32 %v3205, %v3477
        %v3636 = vadd.f32 %v3206, %v3482
        %v3637 = vadd.f32 %v3207, %v3487
        %v3638 = vadd.f32 %v3208, %v3492
        %v3639 = vadd.f32 %v3209, %v3497
        %v3640 = vadd.f32 %v3210, %v3502
        %v3641 = vadd.f32 %v3211, %v3507
        %v3642 = vadd.f32 %v3212, %v3512
        %v3643 = vadd.f32 %v3213, %v3517
        %v3644 = vadd.f32 %v3214, %v3522
        %v3645 = vadd.f32 %v3215, %v3527
        %v3646 = vadd.f32 %v3216, %v3532
        %v3647 = vadd.f32 %v3217, %v3537
        %v3648 = vadd.f32 %v3218, %v3542
        %v3649 = vadd.f32 %v3219, %v3547
        %v3650 = vadd.f32 %v3220, %v3552
        %v3651 = vadd.f32 %v3221, %v3557
        %v3652 = vadd.f32 %v3222, %v3562
        %v3653 = vadd.f32 %v3223, %v3567
        %v3654 = vadd.f32 %v3224, %v3572
        %v3655 = vadd.f32 %v3225, %v3577
        %v3656 = vadd.f32 %v3226, %v3582
        %v3657 = vadd.f32 %v3227, %v3587
        %v3658 = vadd.f32 %v3228, %v3592
        %v3659 = vadd.f32 %v3229, %v3597
        %v3660 = vadd.f32 %v3230, %v3602
        %v3661 = vadd.f32 %v3231, %v3607
        %v3662 = vadd.f32 %v3232, %v3612
        %v3663 = vadd.f32 %v3233, %v3617
        %v3664 = vadd.f32 %v3234, %v3622
        %v3665 = vadd.f32 %v3235, %v3627
        %v3666 = vld [vmem:[%s254 + $0x26] sm:$0xff]
        %v3667 = vld [vmem:[%s254 + $0x2e] sm:$0xff]
        %v3668 = vld [vmem:[%s254 + $0x36] sm:$0xff]
        %v3669 = vld [vmem:[%s254 + $0x3e] sm:$0xff]
        %v3670 = vld [vmem:[%s254 + $0x46] sm:$0xff]
        %v3671 = vld [vmem:[%s254 + $0x4e] sm:$0xff]
        %v3672 = vld [vmem:[%s254 + $0x56] sm:$0xff]
        %v3673 = vld [vmem:[%s254 + $0x5e] sm:$0xff]
        %v3674 = vld [vmem:[%s254 + $0x66] sm:$0xff]
        %v3675 = vld [vmem:[%s254 + $0x6e] sm:$0xff]
        %v3676 = vld [vmem:[%s254 + $0x76] sm:$0xff]
        %v3677 = vld [vmem:[%s254 + $0x7e] sm:$0xff]
        %v3678 = vld [vmem:[%s254 + $0x86] sm:$0xff]
        %v3679 = vld [vmem:[%s254 + $0x8e] sm:$0xff]
        %v3680 = vld [vmem:[%s254 + $0x96] sm:$0xff]
        %v3681 = vld [vmem:[%s254 + $0x9e] sm:$0xff]
        %v3682 = vld [vmem:[%s254 + $0xa6] sm:$0xff]
        %v3683 = vld [vmem:[%s254 + $0xae] sm:$0xff]
        %v3684 = vld [vmem:[%s254 + $0xb6] sm:$0xff]
        %v3685 = vld [vmem:[%s254 + $0xbe] sm:$0xff]
        %v3686 = vld [vmem:[%s254 + $0xc6] sm:$0xff]
        %v3687 = vld [vmem:[%s254 + $0xce] sm:$0xff]
        %v3688 = vld [vmem:[%s254 + $0xd6] sm:$0xff]
        %v3689 = vld [vmem:[%s254 + $0xde] sm:$0xff]
        %v3690 = vld [vmem:[%s254 + $0xe6] sm:$0xff]
        %v3691 = vld [vmem:[%s254 + $0xee] sm:$0xff]
        %v3692 = vld [vmem:[%s254 + $0xf6] sm:$0xff]
        %v3693 = vld [vmem:[%s254 + $0xfe] sm:$0xff]
        %v3694 = vld [vmem:[%s254 + $0x106] sm:$0xff]
        %v3695 = vld [vmem:[%s254 + $0x10e] sm:$0xff]
        %v3696 = vld [vmem:[%s254 + $0x116] sm:$0xff]
        %v3697 = vld [vmem:[%s254 + $0x11e] sm:$0xff]
        %v3698 = vld [vmem:[%s254 + $0x126] sm:$0xff]
        %v3699 = vld [vmem:[%s254 + $0x12e] sm:$0xff]
        %v3700 = vld [vmem:[%s254 + $0x136] sm:$0xff]
        %v3701 = vld [vmem:[%s254 + $0x13e] sm:$0xff]
        %s3702 = scalar_lea.vmem [#allocation6], 32
        %v3703 = vld [vmem:[%s3702] sm:$0xf]
        %v3705 = vsel %vm372, %v3666, 0
        %v3708 = vsel %vm372, %v3667, 0
        %v3711 = vsel %vm372, %v3668, 0
        %v3714 = vsel %vm372, %v3669, 0
        %v3717 = vsel %vm372, %v3670, 0
        %v3720 = vsel %vm372, %v3671, 0
        %v3723 = vsel %vm372, %v3672, 0
        %v3726 = vsel %vm372, %v3673, 0
        %v3729 = vsel %vm372, %v3674, 0
        %v3732 = vsel %vm372, %v3675, 0
        %v3735 = vsel %vm372, %v3676, 0
        %v3738 = vsel %vm372, %v3677, 0
        %v3741 = vsel %vm372, %v3678, 0
        %v3744 = vsel %vm372, %v3679, 0
        %v3747 = vsel %vm372, %v3680, 0
        %v3750 = vsel %vm372, %v3681, 0
        %v3753 = vsel %vm372, %v3682, 0
        %v3756 = vsel %vm372, %v3683, 0
        %v3759 = vsel %vm372, %v3684, 0
        %v3762 = vsel %vm372, %v3685, 0
        %v3765 = vsel %vm372, %v3686, 0
        %v3768 = vsel %vm372, %v3687, 0
        %v3771 = vsel %vm372, %v3688, 0
        %v3774 = vsel %vm372, %v3689, 0
        %v3777 = vsel %vm372, %v3690, 0
        %v3780 = vsel %vm372, %v3691, 0
        %v3783 = vsel %vm372, %v3692, 0
        %v3786 = vsel %vm372, %v3693, 0
        %v3789 = vsel %vm372, %v3694, 0
        %v3792 = vsel %vm372, %v3695, 0
        %v3795 = vsel %vm372, %v3696, 0
        %v3798 = vsel %vm372, %v3697, 0
        %v3801 = vsel %vm372, %v3698, 0
        %v3804 = vsel %vm372, %v3699, 0
        %v3807 = vsel %vm372, %v3700, 0
        %v3810 = vsel %vm372, %v3701, 0
        %v3813 = vsel %vm481, %v3703, 0
        %3815 = vmatprep.subr.mxu0 0.0
        %3816 = vmatpush1.msra.mxu0 %v3813
        %3817 = vmatprep.subr.mxu0 0.0
        %3818 = vmatpush1.msra.mxu0 0.0
        %3819 = vmatprep.subr.mxu0 0.0
        %3820 = vmatpush1.msra.mxu0 0.0
        %3821 = vmatprep.subr.mxu0 0.0
        %3822 = vmatpush1.msra.mxu0 0.0
        %3823 = vmatprep.subr.mxu0 0.0
        %3824 = vmatpush1.msra.mxu0 0.0
        %3825 = vmatprep.subr.mxu0 0.0
        %3826 = vmatpush1.msra.mxu0 0.0
        %3827 = vmatprep.subr.mxu0 0.0
        %3828 = vmatpush1.msra.mxu0 0.0
        %3829 = vmatprep.subr.mxu0 0.0
        %3830 = vmatpush1.msra.mxu0 0.0
        %3831 = vmatprep.subr.mxu0 0.0
        %3832 = vmatpush1.msra.mxu0 0.0
        %3833 = vmatprep.subr.mxu0 0.0
        %3834 = vmatpush1.msra.mxu0 0.0
        %3835 = vmatprep.subr.mxu0 0.0
        %3836 = vmatpush1.msra.mxu0 0.0
        %3837 = vmatprep.subr.mxu0 0.0
        %3838 = vmatpush1.msra.mxu0 0.0
        %3839 = vmatprep.subr.mxu0 0.0
        %3840 = vmatpush1.msra.mxu0 0.0
        %3841 = vmatprep.subr.mxu0 0.0
        %3842 = vmatpush1.msra.mxu0 0.0
        %3843 = vmatprep.subr.mxu0 0.0
        %3844 = vmatpush1.msra.mxu0 0.0
        %3845 = vmatprep.subr.mxu0 0.0
        %3846 = vmatpush1.msra.mxu0 0.0
        %3847 = vmatprep.subr.mxu0 0.0
        %3848 = vmatpush1.msra.mxu0 0.0
        %3849 = vmatprep.subr.mxu0 0.0
        %3850 = vmatpush1.msra.mxu0 0.0
        %3851 = vmatprep.subr.mxu0 0.0
        %3852 = vmatpush1.msra.mxu0 0.0
        %3853 = vmatprep.subr.mxu0 0.0
        %3854 = vmatpush1.msra.mxu0 0.0
        %3855 = vmatprep.subr.mxu0 0.0
        %3856 = vmatpush1.msra.mxu0 0.0
        %3857 = vmatprep.subr.mxu0 0.0
        %3858 = vmatpush1.msra.mxu0 0.0
        %3859 = vmatprep.subr.mxu0 0.0
        %3860 = vmatpush1.msra.mxu0 0.0
        %3861 = vmatprep.subr.mxu0 0.0
        %3862 = vmatpush1.msra.mxu0 0.0
        %3863 = vmatprep.subr.mxu0 0.0
        %3864 = vmatpush1.msra.mxu0 0.0
        %3865 = vmatprep.subr.mxu0 0.0
        %3866 = vmatpush1.msra.mxu0 0.0
        %3867 = vmatprep.subr.mxu0 0.0
        %3868 = vmatpush1.msra.mxu0 0.0
        %3869 = vmatprep.subr.mxu0 0.0
        %3870 = vmatpush1.msra.mxu0 0.0
        %3871 = vmatprep.subr.mxu0 0.0
        %3872 = vmatpush1.msra.mxu0 0.0
        %3873 = vmatprep.subr.mxu0 0.0
        %3874 = vmatpush1.msra.mxu0 0.0
        %3875 = vmatprep.subr.mxu0 0.0
        %3876 = vmatpush1.msra.mxu0 0.0
        %3877 = vmatprep.subr.mxu0 0.0
        %3878 = vmatpush1.msra.mxu0 0.0
        %3879 = vmatprep.mubr.f32.mxu0 0.0
        %3880 = vmatmul.mubr.f32.gmra.mrb[0].mxu0 %v3705
        %v3881 = vpop.f32.mrb[0].mxu0
        %v3882 = vadd.f32 0.0, %v3881
        %v3883 = vpop.f32.mrb[0].mxu0
        %3884 = vmatprep.mubr.f32.mxu0 0.0
        %3885 = vmatmul.mubr.f32.gmra.mrb[0].mxu0 %v3708
        %v3886 = vpop.f32.mrb[0].mxu0
        %v3887 = vadd.f32 0.0, %v3886
        %v3888 = vpop.f32.mrb[0].mxu0
        %3889 = vmatprep.mubr.f32.mxu0 0.0
        %3890 = vmatmul.mubr.f32.gmra.mrb[0].mxu0 %v3711
        %v3891 = vpop.f32.mrb[0].mxu0
        %v3892 = vadd.f32 0.0, %v3891
        %v3893 = vpop.f32.mrb[0].mxu0
        %3894 = vmatprep.mubr.f32.mxu0 0.0
        %3895 = vmatmul.mubr.f32.gmra.mrb[0].mxu0 %v3714
        %v3896 = vpop.f32.mrb[0].mxu0
        %v3897 = vadd.f32 0.0, %v3896
        %v3898 = vpop.f32.mrb[0].mxu0
        %3899 = vmatprep.mubr.f32.mxu0 0.0
        %3900 = vmatmul.mubr.f32.gmra.mrb[0].mxu0 %v3717
        %v3901 = vpop.f32.mrb[0].mxu0
        %v3902 = vadd.f32 0.0, %v3901
        %v3903 = vpop.f32.mrb[0].mxu0
        %3904 = vmatprep.mubr.f32.mxu0 0.0
        %3905 = vmatmul.mubr.f32.gmra.mrb[0].mxu0 %v3720
        %v3906 = vpop.f32.mrb[0].mxu0
        %v3907 = vadd.f32 0.0, %v3906
        %v3908 = vpop.f32.mrb[0].mxu0
        %3909 = vmatprep.mubr.f32.mxu0 0.0
        %3910 = vmatmul.mubr.f32.gmra.mrb[0].mxu0 %v3723
        %v3911 = vpop.f32.mrb[0].mxu0
        %v3912 = vadd.f32 0.0, %v3911
        %v3913 = vpop.f32.mrb[0].mxu0
        %3914 = vmatprep.mubr.f32.mxu0 0.0
        %3915 = vmatmul.mubr.f32.gmra.mrb[0].mxu0 %v3726
        %v3916 = vpop.f32.mrb[0].mxu0
        %v3917 = vadd.f32 0.0, %v3916
        %v3918 = vpop.f32.mrb[0].mxu0
        %3919 = vmatprep.mubr.f32.mxu0 0.0
        %3920 = vmatmul.mubr.f32.gmra.mrb[0].mxu0 %v3729
        %v3921 = vpop.f32.mrb[0].mxu0
        %v3922 = vadd.f32 0.0, %v3921
        %v3923 = vpop.f32.mrb[0].mxu0
        %3924 = vmatprep.mubr.f32.mxu0 0.0
        %3925 = vmatmul.mubr.f32.gmra.mrb[0].mxu0 %v3732
        %v3926 = vpop.f32.mrb[0].mxu0
        %v3927 = vadd.f32 0.0, %v3926
        %v3928 = vpop.f32.mrb[0].mxu0
        %3929 = vmatprep.mubr.f32.mxu0 0.0
        %3930 = vmatmul.mubr.f32.gmra.mrb[0].mxu0 %v3735
        %v3931 = vpop.f32.mrb[0].mxu0
        %v3932 = vadd.f32 0.0, %v3931
        %v3933 = vpop.f32.mrb[0].mxu0
        %3934 = vmatprep.mubr.f32.mxu0 0.0
        %3935 = vmatmul.mubr.f32.gmra.mrb[0].mxu0 %v3738
        %v3936 = vpop.f32.mrb[0].mxu0
        %v3937 = vadd.f32 0.0, %v3936
        %v3938 = vpop.f32.mrb[0].mxu0
        %3939 = vmatprep.mubr.f32.mxu0 0.0
        %3940 = vmatmul.mubr.f32.gmra.mrb[0].mxu0 %v3741
        %v3941 = vpop.f32.mrb[0].mxu0
        %v3942 = vadd.f32 0.0, %v3941
        %v3943 = vpop.f32.mrb[0].mxu0
        %3944 = vmatprep.mubr.f32.mxu0 0.0
        %3945 = vmatmul.mubr.f32.gmra.mrb[0].mxu0 %v3744
        %v3946 = vpop.f32.mrb[0].mxu0
        %v3947 = vadd.f32 0.0, %v3946
        %v3948 = vpop.f32.mrb[0].mxu0
        %3949 = vmatprep.mubr.f32.mxu0 0.0
        %3950 = vmatmul.mubr.f32.gmra.mrb[0].mxu0 %v3747
        %v3951 = vpop.f32.mrb[0].mxu0
        %v3952 = vadd.f32 0.0, %v3951
        %v3953 = vpop.f32.mrb[0].mxu0
        %3954 = vmatprep.mubr.f32.mxu0 0.0
        %3955 = vmatmul.mubr.f32.gmra.mrb[0].mxu0 %v3750
        %v3956 = vpop.f32.mrb[0].mxu0
        %v3957 = vadd.f32 0.0, %v3956
        %v3958 = vpop.f32.mrb[0].mxu0
        %3959 = vmatprep.mubr.f32.mxu0 0.0
        %3960 = vmatmul.mubr.f32.gmra.mrb[0].mxu0 %v3753
        %v3961 = vpop.f32.mrb[0].mxu0
        %v3962 = vadd.f32 0.0, %v3961
        %v3963 = vpop.f32.mrb[0].mxu0
        %3964 = vmatprep.mubr.f32.mxu0 0.0
        %3965 = vmatmul.mubr.f32.gmra.mrb[0].mxu0 %v3756
        %v3966 = vpop.f32.mrb[0].mxu0
        %v3967 = vadd.f32 0.0, %v3966
        %v3968 = vpop.f32.mrb[0].mxu0
        %3969 = vmatprep.mubr.f32.mxu0 0.0
        %3970 = vmatmul.mubr.f32.gmra.mrb[0].mxu0 %v3759
        %v3971 = vpop.f32.mrb[0].mxu0
        %v3972 = vadd.f32 0.0, %v3971
        %v3973 = vpop.f32.mrb[0].mxu0
        %3974 = vmatprep.mubr.f32.mxu0 0.0
        %3975 = vmatmul.mubr.f32.gmra.mrb[0].mxu0 %v3762
        %v3976 = vpop.f32.mrb[0].mxu0
        %v3977 = vadd.f32 0.0, %v3976
        %v3978 = vpop.f32.mrb[0].mxu0
        %3979 = vmatprep.mubr.f32.mxu0 0.0
        %3980 = vmatmul.mubr.f32.gmra.mrb[0].mxu0 %v3765
        %v3981 = vpop.f32.mrb[0].mxu0
        %v3982 = vadd.f32 0.0, %v3981
        %v3983 = vpop.f32.mrb[0].mxu0
        %3984 = vmatprep.mubr.f32.mxu0 0.0
        %3985 = vmatmul.mubr.f32.gmra.mrb[0].mxu0 %v3768
        %v3986 = vpop.f32.mrb[0].mxu0
        %v3987 = vadd.f32 0.0, %v3986
        %v3988 = vpop.f32.mrb[0].mxu0
        %3989 = vmatprep.mubr.f32.mxu0 0.0
        %3990 = vmatmul.mubr.f32.gmra.mrb[0].mxu0 %v3771
        %v3991 = vpop.f32.mrb[0].mxu0
        %v3992 = vadd.f32 0.0, %v3991
        %v3993 = vpop.f32.mrb[0].mxu0
        %3994 = vmatprep.mubr.f32.mxu0 0.0
        %3995 = vmatmul.mubr.f32.gmra.mrb[0].mxu0 %v3774
        %v3996 = vpop.f32.mrb[0].mxu0
        %v3997 = vadd.f32 0.0, %v3996
        %v3998 = vpop.f32.mrb[0].mxu0
        %3999 = vmatprep.mubr.f32.mxu0 0.0
        %4000 = vmatmul.mubr.f32.gmra.mrb[0].mxu0 %v3777
        %v4001 = vpop.f32.mrb[0].mxu0
        %v4002 = vadd.f32 0.0, %v4001
        %v4003 = vpop.f32.mrb[0].mxu0
        %4004 = vmatprep.mubr.f32.mxu0 0.0
        %4005 = vmatmul.mubr.f32.gmra.mrb[0].mxu0 %v3780
        %v4006 = vpop.f32.mrb[0].mxu0
        %v4007 = vadd.f32 0.0, %v4006
        %v4008 = vpop.f32.mrb[0].mxu0
        %4009 = vmatprep.mubr.f32.mxu0 0.0
        %4010 = vmatmul.mubr.f32.gmra.mrb[0].mxu0 %v3783
        %v4011 = vpop.f32.mrb[0].mxu0
        %v4012 = vadd.f32 0.0, %v4011
        %v4013 = vpop.f32.mrb[0].mxu0
        %4014 = vmatprep.mubr.f32.mxu0 0.0
        %4015 = vmatmul.mubr.f32.gmra.mrb[0].mxu0 %v3786
        %v4016 = vpop.f32.mrb[0].mxu0
        %v4017 = vadd.f32 0.0, %v4016
        %v4018 = vpop.f32.mrb[0].mxu0
        %4019 = vmatprep.mubr.f32.mxu0 0.0
        %4020 = vmatmul.mubr.f32.gmra.mrb[0].mxu0 %v3789
        %v4021 = vpop.f32.mrb[0].mxu0
        %v4022 = vadd.f32 0.0, %v4021
        %v4023 = vpop.f32.mrb[0].mxu0
        %4024 = vmatprep.mubr.f32.mxu0 0.0
        %4025 = vmatmul.mubr.f32.gmra.mrb[0].mxu0 %v3792
        %v4026 = vpop.f32.mrb[0].mxu0
        %v4027 = vadd.f32 0.0, %v4026
        %v4028 = vpop.f32.mrb[0].mxu0
        %4029 = vmatprep.mubr.f32.mxu0 0.0
        %4030 = vmatmul.mubr.f32.gmra.mrb[0].mxu0 %v3795
        %v4031 = vpop.f32.mrb[0].mxu0
        %v4032 = vadd.f32 0.0, %v4031
        %v4033 = vpop.f32.mrb[0].mxu0
        %4034 = vmatprep.mubr.f32.mxu0 0.0
        %4035 = vmatmul.mubr.f32.gmra.mrb[0].mxu0 %v3798
        %v4036 = vpop.f32.mrb[0].mxu0
        %v4037 = vadd.f32 0.0, %v4036
        %v4038 = vpop.f32.mrb[0].mxu0
        %4039 = vmatprep.mubr.f32.mxu0 0.0
        %4040 = vmatmul.mubr.f32.gmra.mrb[0].mxu0 %v3801
        %v4041 = vpop.f32.mrb[0].mxu0
        %v4042 = vadd.f32 0.0, %v4041
        %v4043 = vpop.f32.mrb[0].mxu0
        %4044 = vmatprep.mubr.f32.mxu0 0.0
        %4045 = vmatmul.mubr.f32.gmra.mrb[0].mxu0 %v3804
        %v4046 = vpop.f32.mrb[0].mxu0
        %v4047 = vadd.f32 0.0, %v4046
        %v4048 = vpop.f32.mrb[0].mxu0
        %4049 = vmatprep.mubr.f32.mxu0 0.0
        %4050 = vmatmul.mubr.f32.gmra.mrb[0].mxu0 %v3807
        %v4051 = vpop.f32.mrb[0].mxu0
        %v4052 = vadd.f32 0.0, %v4051
        %v4053 = vpop.f32.mrb[0].mxu0
        %4054 = vmatprep.mubr.f32.mxu0 0.0
        %4055 = vmatmul.mubr.f32.gmra.mrb[0].mxu0 %v3810
        %v4056 = vpop.f32.mrb[0].mxu0
        %v4057 = vadd.f32 0.0, %v4056
        %v4058 = vpop.f32.mrb[0].mxu0
        %4059 = vdwg.mxu0
        %v4060 = vadd.f32 %v3630, %v3882
        %v4061 = vadd.f32 %v3631, %v3887
        %v4062 = vadd.f32 %v3632, %v3892
        %v4063 = vadd.f32 %v3633, %v3897
        %v4064 = vadd.f32 %v3634, %v3902
        %v4065 = vadd.f32 %v3635, %v3907
        %v4066 = vadd.f32 %v3636, %v3912
        %v4067 = vadd.f32 %v3637, %v3917
        %v4068 = vadd.f32 %v3638, %v3922
        %v4069 = vadd.f32 %v3639, %v3927
        %v4070 = vadd.f32 %v3640, %v3932
        %v4071 = vadd.f32 %v3641, %v3937
        %v4072 = vadd.f32 %v3642, %v3942
        %v4073 = vadd.f32 %v3643, %v3947
        %v4074 = vadd.f32 %v3644, %v3952
        %v4075 = vadd.f32 %v3645, %v3957
        %v4076 = vadd.f32 %v3646, %v3962
        %v4077 = vadd.f32 %v3647, %v3967
        %v4078 = vadd.f32 %v3648, %v3972
        %v4079 = vadd.f32 %v3649, %v3977
        %v4080 = vadd.f32 %v3650, %v3982
        %v4081 = vadd.f32 %v3651, %v3987
        %v4082 = vadd.f32 %v3652, %v3992
        %v4083 = vadd.f32 %v3653, %v3997
        %v4084 = vadd.f32 %v3654, %v4002
        %v4085 = vadd.f32 %v3655, %v4007
        %v4086 = vadd.f32 %v3656, %v4012
        %v4087 = vadd.f32 %v3657, %v4017
        %v4088 = vadd.f32 %v3658, %v4022
        %v4089 = vadd.f32 %v3659, %v4027
        %v4090 = vadd.f32 %v3660, %v4032
        %v4091 = vadd.f32 %v3661, %v4037
        %v4092 = vadd.f32 %v3662, %v4042
        %v4093 = vadd.f32 %v3663, %v4047
        %v4094 = vadd.f32 %v3664, %v4052
        %v4095 = vadd.f32 %v3665, %v4057
        %v4096 = vld [vmem:[#allocation8] sm:$0x1]
        %v4098 = vlaneseq
        %v4099 = vshrl.u32 %v4098, 7
        %v4100 = vsub.s32 0, %v4099
        %v4101 = vrot.slane %v4096, %v4100
        %v4103 = vadd.f32 %v4060, %v4101
        %v4104 = vadd.f32 %v4061, %v4101
        %v4105 = vadd.f32 %v4062, %v4101
        %v4106 = vadd.f32 %v4063, %v4101
        %v4107 = vadd.f32 %v4064, %v4101
        %v4108 = vadd.f32 %v4065, %v4101
        %v4109 = vadd.f32 %v4066, %v4101
        %v4110 = vadd.f32 %v4067, %v4101
        %v4111 = vadd.f32 %v4068, %v4101
        %v4112 = vadd.f32 %v4069, %v4101
        %v4113 = vadd.f32 %v4070, %v4101
        %v4114 = vadd.f32 %v4071, %v4101
        %v4115 = vadd.f32 %v4072, %v4101
        %v4116 = vadd.f32 %v4073, %v4101
        %v4117 = vadd.f32 %v4074, %v4101
        %v4118 = vadd.f32 %v4075, %v4101
        %v4119 = vadd.f32 %v4076, %v4101
        %v4120 = vadd.f32 %v4077, %v4101
        %v4121 = vadd.f32 %v4078, %v4101
        %v4122 = vadd.f32 %v4079, %v4101
        %v4123 = vadd.f32 %v4080, %v4101
        %v4124 = vadd.f32 %v4081, %v4101
        %v4125 = vadd.f32 %v4082, %v4101
        %v4126 = vadd.f32 %v4083, %v4101
        %v4127 = vadd.f32 %v4084, %v4101
        %v4128 = vadd.f32 %v4085, %v4101
        %v4129 = vadd.f32 %v4086, %v4101
        %v4130 = vadd.f32 %v4087, %v4101
        %v4131 = vadd.f32 %v4088, %v4101
        %v4132 = vadd.f32 %v4089, %v4101
        %v4133 = vadd.f32 %v4090, %v4101
        %v4134 = vadd.f32 %v4091, %v4101
        %v4135 = vadd.f32 %v4092, %v4101
        %v4136 = vadd.f32 %v4093, %v4101
        %v4137 = vadd.f32 %v4094, %v4101
        %v4138 = vadd.f32 %v4095, %v4101
        %v4139 = vmax.f32 %v4103, 0.0
        %v4140 = vmax.f32 %v4104, 0.0
        %v4141 = vmax.f32 %v4105, 0.0
        %v4142 = vmax.f32 %v4106, 0.0
        %v4143 = vmax.f32 %v4107, 0.0
        %v4144 = vmax.f32 %v4108, 0.0
        %v4145 = vmax.f32 %v4109, 0.0
        %v4146 = vmax.f32 %v4110, 0.0
        %v4147 = vmax.f32 %v4111, 0.0
        %v4148 = vmax.f32 %v4112, 0.0
        %v4149 = vmax.f32 %v4113, 0.0
        %v4150 = vmax.f32 %v4114, 0.0
        %v4151 = vmax.f32 %v4115, 0.0
        %v4152 = vmax.f32 %v4116, 0.0
        %v4153 = vmax.f32 %v4117, 0.0
        %v4154 = vmax.f32 %v4118, 0.0
        %v4155 = vmax.f32 %v4119, 0.0
        %v4156 = vmax.f32 %v4120, 0.0
        %v4157 = vmax.f32 %v4121, 0.0
        %v4158 = vmax.f32 %v4122, 0.0
        %v4159 = vmax.f32 %v4123, 0.0
        %v4160 = vmax.f32 %v4124, 0.0
        %v4161 = vmax.f32 %v4125, 0.0
        %v4162 = vmax.f32 %v4126, 0.0
        %v4163 = vmax.f32 %v4127, 0.0
        %v4164 = vmax.f32 %v4128, 0.0
        %v4165 = vmax.f32 %v4129, 0.0
        %v4166 = vmax.f32 %v4130, 0.0
        %v4167 = vmax.f32 %v4131, 0.0
        %v4168 = vmax.f32 %v4132, 0.0
        %v4169 = vmax.f32 %v4133, 0.0
        %v4170 = vmax.f32 %v4134, 0.0
        %v4171 = vmax.f32 %v4135, 0.0
        %v4172 = vmax.f32 %v4136, 0.0
        %v4173 = vmax.f32 %v4137, 0.0
        %v4174 = vmax.f32 %v4138, 0.0
        %v4175 = vlaneseq
        %v4176 = vshrl.u32 %v4175, 7
        %v4177 = vadd.s32 %v4176, 8
        %v4178 = vadd.s32 %v4176, 16
        %v4179 = vadd.s32 %v4176, 24
        %v4180 = vadd.s32 %v4176, 32
        %v4181 = vadd.s32 %v4176, 40
        %v4182 = vadd.s32 %v4176, 48
        %v4183 = vadd.s32 %v4176, 56
        %v4184 = vadd.s32 %v4176, 64
        %v4185 = vadd.s32 %v4176, 72
        %v4186 = vadd.s32 %v4176, 80
        %v4187 = vadd.s32 %v4176, 88
        %v4188 = vadd.s32 %v4176, 96
        %v4189 = vadd.s32 %v4176, 104
        %v4190 = vadd.s32 %v4176, 112
        %v4191 = vadd.s32 %v4176, 120
        %v4192 = vadd.s32 %v4176, 128
        %v4193 = vadd.s32 %v4176, 136
        %v4194 = vadd.s32 %v4176, 144
        %v4195 = vadd.s32 %v4176, 152
        %v4196 = vadd.s32 %v4176, 160
        %v4197 = vadd.s32 %v4176, 168
        %v4198 = vadd.s32 %v4176, 176
        %v4199 = vadd.s32 %v4176, 184
        %v4200 = vadd.s32 %v4176, 192
        %v4201 = vadd.s32 %v4176, 200
        %v4202 = vadd.s32 %v4176, 208
        %v4203 = vadd.s32 %v4176, 216
        %v4204 = vadd.s32 %v4176, 224
        %v4205 = vadd.s32 %v4176, 232
        %v4206 = vadd.s32 %v4176, 240
        %v4207 = vadd.s32 %v4176, 248
        %v4208 = vadd.s32 %v4176, 256
        %v4209 = vadd.s32 %v4176, 264
        %v4210 = vadd.s32 %v4176, 272
        %v4211 = vadd.s32 %v4176, 280
        %v4212 = vcvt.s32.f32 %v4176
        %v4213 = vcvt.s32.f32 %v4177
        %v4214 = vcvt.s32.f32 %v4178
        %v4215 = vcvt.s32.f32 %v4179
        %v4216 = vcvt.s32.f32 %v4180
        %v4217 = vcvt.s32.f32 %v4181
        %v4218 = vcvt.s32.f32 %v4182
        %v4219 = vcvt.s32.f32 %v4183
        %v4220 = vcvt.s32.f32 %v4184
        %v4221 = vcvt.s32.f32 %v4185
        %v4222 = vcvt.s32.f32 %v4186
        %v4223 = vcvt.s32.f32 %v4187
        %v4224 = vcvt.s32.f32 %v4188
        %v4225 = vcvt.s32.f32 %v4189
        %v4226 = vcvt.s32.f32 %v4190
        %v4227 = vcvt.s32.f32 %v4191
        %v4228 = vcvt.s32.f32 %v4192
        %v4229 = vcvt.s32.f32 %v4193
        %v4230 = vcvt.s32.f32 %v4194
        %v4231 = vcvt.s32.f32 %v4195
        %v4232 = vcvt.s32.f32 %v4196
        %v4233 = vcvt.s32.f32 %v4197
        %v4234 = vcvt.s32.f32 %v4198
        %v4235 = vcvt.s32.f32 %v4199
        %v4236 = vcvt.s32.f32 %v4200
        %v4237 = vcvt.s32.f32 %v4201
        %v4238 = vcvt.s32.f32 %v4202
        %v4239 = vcvt.s32.f32 %v4203
        %v4240 = vcvt.s32.f32 %v4204
        %v4241 = vcvt.s32.f32 %v4205
        %v4242 = vcvt.s32.f32 %v4206
        %v4243 = vcvt.s32.f32 %v4207
        %v4244 = vcvt.s32.f32 %v4208
        %v4245 = vcvt.s32.f32 %v4209
        %v4246 = vcvt.s32.f32 %v4210
        %v4247 = vcvt.s32.f32 %v4211
        %v4248 = vmul.f32 %v4212, 0.055555556
        %v4249 = vmul.f32 %v4213, 0.055555556
        %v4250 = vmul.f32 %v4214, 0.055555556
        %v4251 = vmul.f32 %v4215, 0.055555556
        %v4252 = vmul.f32 %v4216, 0.055555556
        %v4253 = vmul.f32 %v4217, 0.055555556
        %v4254 = vmul.f32 %v4218, 0.055555556
        %v4255 = vmul.f32 %v4219, 0.055555556
        %v4256 = vmul.f32 %v4220, 0.055555556
        %v4257 = vmul.f32 %v4221, 0.055555556
        %v4258 = vmul.f32 %v4222, 0.055555556
        %v4259 = vmul.f32 %v4223, 0.055555556
        %v4260 = vmul.f32 %v4224, 0.055555556
        %v4261 = vmul.f32 %v4225, 0.055555556
        %v4262 = vmul.f32 %v4226, 0.055555556
        %v4263 = vmul.f32 %v4227, 0.055555556
        %v4264 = vmul.f32 %v4228, 0.055555556
        %v4265 = vmul.f32 %v4229, 0.055555556
        %v4266 = vmul.f32 %v4230, 0.055555556
        %v4267 = vmul.f32 %v4231, 0.055555556
        %v4268 = vmul.f32 %v4232, 0.055555556
        %v4269 = vmul.f32 %v4233, 0.055555556
        %v4270 = vmul.f32 %v4234, 0.055555556
        %v4271 = vmul.f32 %v4235, 0.055555556
        %v4272 = vmul.f32 %v4236, 0.055555556
        %v4273 = vmul.f32 %v4237, 0.055555556
        %v4274 = vmul.f32 %v4238, 0.055555556
        %v4275 = vmul.f32 %v4239, 0.055555556
        %v4276 = vmul.f32 %v4240, 0.055555556
        %v4277 = vmul.f32 %v4241, 0.055555556
        %v4278 = vmul.f32 %v4242, 0.055555556
        %v4279 = vmul.f32 %v4243, 0.055555556
        %v4280 = vmul.f32 %v4244, 0.055555556
        %v4281 = vmul.f32 %v4245, 0.055555556
        %v4282 = vmul.f32 %v4246, 0.055555556
        %v4283 = vmul.f32 %v4247, 0.055555556
        %v4284 = vadd.f32 %v4248, 0.027777778
        %v4285 = vadd.f32 %v4249, 0.027777778
        %v4286 = vadd.f32 %v4250, 0.027777778
        %v4287 = vadd.f32 %v4251, 0.027777778
        %v4288 = vadd.f32 %v4252, 0.027777778
        %v4289 = vadd.f32 %v4253, 0.027777778
        %v4290 = vadd.f32 %v4254, 0.027777778
        %v4291 = vadd.f32 %v4255, 0.027777778
        %v4292 = vadd.f32 %v4256, 0.027777778
        %v4293 = vadd.f32 %v4257, 0.027777778
        %v4294 = vadd.f32 %v4258, 0.027777778
        %v4295 = vadd.f32 %v4259, 0.027777778
        %v4296 = vadd.f32 %v4260, 0.027777778
        %v4297 = vadd.f32 %v4261, 0.027777778
        %v4298 = vadd.f32 %v4262, 0.027777778
        %v4299 = vadd.f32 %v4263, 0.027777778
        %v4300 = vadd.f32 %v4264, 0.027777778
        %v4301 = vadd.f32 %v4265, 0.027777778
        %v4302 = vadd.f32 %v4266, 0.027777778
        %v4303 = vadd.f32 %v4267, 0.027777778
        %v4304 = vadd.f32 %v4268, 0.027777778
        %v4305 = vadd.f32 %v4269, 0.027777778
        %v4306 = vadd.f32 %v4270, 0.027777778
        %v4307 = vadd.f32 %v4271, 0.027777778
        %v4308 = vadd.f32 %v4272, 0.027777778
        %v4309 = vadd.f32 %v4273, 0.027777778
        %v4310 = vadd.f32 %v4274, 0.027777778
        %v4311 = vadd.f32 %v4275, 0.027777778
        %v4312 = vadd.f32 %v4276, 0.027777778
        %v4313 = vadd.f32 %v4277, 0.027777778
        %v4314 = vadd.f32 %v4278, 0.027777778
        %v4315 = vadd.f32 %v4279, 0.027777778
        %v4316 = vadd.f32 %v4280, 0.027777778
        %v4317 = vadd.f32 %v4281, 0.027777778
        %v4318 = vadd.f32 %v4282, 0.027777778
        %v4319 = vadd.f32 %v4283, 0.027777778
        %v4320 = vcvt.f32.s32.to.zero.pseudo %v4284
        %v4321 = vcvt.f32.s32.to.zero.pseudo %v4285
        %v4322 = vcvt.f32.s32.to.zero.pseudo %v4286
        %v4323 = vcvt.f32.s32.to.zero.pseudo %v4287
        %v4324 = vcvt.f32.s32.to.zero.pseudo %v4288
        %v4325 = vcvt.f32.s32.to.zero.pseudo %v4289
        %v4326 = vcvt.f32.s32.to.zero.pseudo %v4290
        %v4327 = vcvt.f32.s32.to.zero.pseudo %v4291
        %v4328 = vcvt.f32.s32.to.zero.pseudo %v4292
        %v4329 = vcvt.f32.s32.to.zero.pseudo %v4293
        %v4330 = vcvt.f32.s32.to.zero.pseudo %v4294
        %v4331 = vcvt.f32.s32.to.zero.pseudo %v4295
        %v4332 = vcvt.f32.s32.to.zero.pseudo %v4296
        %v4333 = vcvt.f32.s32.to.zero.pseudo %v4297
        %v4334 = vcvt.f32.s32.to.zero.pseudo %v4298
        %v4335 = vcvt.f32.s32.to.zero.pseudo %v4299
        %v4336 = vcvt.f32.s32.to.zero.pseudo %v4300
        %v4337 = vcvt.f32.s32.to.zero.pseudo %v4301
        %v4338 = vcvt.f32.s32.to.zero.pseudo %v4302
        %v4339 = vcvt.f32.s32.to.zero.pseudo %v4303
        %v4340 = vcvt.f32.s32.to.zero.pseudo %v4304
        %v4341 = vcvt.f32.s32.to.zero.pseudo %v4305
        %v4342 = vcvt.f32.s32.to.zero.pseudo %v4306
        %v4343 = vcvt.f32.s32.to.zero.pseudo %v4307
        %v4344 = vcvt.f32.s32.to.zero.pseudo %v4308
        %v4345 = vcvt.f32.s32.to.zero.pseudo %v4309
        %v4346 = vcvt.f32.s32.to.zero.pseudo %v4310
        %v4347 = vcvt.f32.s32.to.zero.pseudo %v4311
        %v4348 = vcvt.f32.s32.to.zero.pseudo %v4312
        %v4349 = vcvt.f32.s32.to.zero.pseudo %v4313
        %v4350 = vcvt.f32.s32.to.zero.pseudo %v4314
        %v4351 = vcvt.f32.s32.to.zero.pseudo %v4315
        %v4352 = vcvt.f32.s32.to.zero.pseudo %v4316
        %v4353 = vcvt.f32.s32.to.zero.pseudo %v4317
        %v4354 = vcvt.f32.s32.to.zero.pseudo %v4318
        %v4355 = vcvt.f32.s32.to.zero.pseudo %v4319
        %v4356 = vmul.u32 %v4320, 18
        %v4357 = vmul.u32 %v4321, 18
        %v4358 = vmul.u32 %v4322, 18
        %v4359 = vmul.u32 %v4323, 18
        %v4360 = vmul.u32 %v4324, 18
        %v4361 = vmul.u32 %v4325, 18
        %v4362 = vmul.u32 %v4326, 18
        %v4363 = vmul.u32 %v4327, 18
        %v4364 = vmul.u32 %v4328, 18
        %v4365 = vmul.u32 %v4329, 18
        %v4366 = vmul.u32 %v4330, 18
        %v4367 = vmul.u32 %v4331, 18
        %v4368 = vmul.u32 %v4332, 18
        %v4369 = vmul.u32 %v4333, 18
        %v4370 = vmul.u32 %v4334, 18
        %v4371 = vmul.u32 %v4335, 18
        %v4372 = vmul.u32 %v4336, 18
        %v4373 = vmul.u32 %v4337, 18
        %v4374 = vmul.u32 %v4338, 18
        %v4375 = vmul.u32 %v4339, 18
        %v4376 = vmul.u32 %v4340, 18
        %v4377 = vmul.u32 %v4341, 18
        %v4378 = vmul.u32 %v4342, 18
        %v4379 = vmul.u32 %v4343, 18
        %v4380 = vmul.u32 %v4344, 18
        %v4381 = vmul.u32 %v4345, 18
        %v4382 = vmul.u32 %v4346, 18
        %v4383 = vmul.u32 %v4347, 18
        %v4384 = vmul.u32 %v4348, 18
        %v4385 = vmul.u32 %v4349, 18
        %v4386 = vmul.u32 %v4350, 18
        %v4387 = vmul.u32 %v4351, 18
        %v4388 = vmul.u32 %v4352, 18
        %v4389 = vmul.u32 %v4353, 18
        %v4390 = vmul.u32 %v4354, 18
        %v4391 = vmul.u32 %v4355, 18
        %v4392 = vsub.s32 %v4176, %v4356
        %v4393 = vsub.s32 %v4177, %v4357
        %v4394 = vsub.s32 %v4178, %v4358
        %v4395 = vsub.s32 %v4179, %v4359
        %v4396 = vsub.s32 %v4180, %v4360
        %v4397 = vsub.s32 %v4181, %v4361
        %v4398 = vsub.s32 %v4182, %v4362
        %v4399 = vsub.s32 %v4183, %v4363
        %v4400 = vsub.s32 %v4184, %v4364
        %v4401 = vsub.s32 %v4185, %v4365
        %v4402 = vsub.s32 %v4186, %v4366
        %v4403 = vsub.s32 %v4187, %v4367
        %v4404 = vsub.s32 %v4188, %v4368
        %v4405 = vsub.s32 %v4189, %v4369
        %v4406 = vsub.s32 %v4190, %v4370
        %v4407 = vsub.s32 %v4191, %v4371
        %v4408 = vsub.s32 %v4192, %v4372
        %v4409 = vsub.s32 %v4193, %v4373
        %v4410 = vsub.s32 %v4194, %v4374
        %v4411 = vsub.s32 %v4195, %v4375
        %v4412 = vsub.s32 %v4196, %v4376
        %v4413 = vsub.s32 %v4197, %v4377
        %v4414 = vsub.s32 %v4198, %v4378
        %v4415 = vsub.s32 %v4199, %v4379
        %v4416 = vsub.s32 %v4200, %v4380
        %v4417 = vsub.s32 %v4201, %v4381
        %v4418 = vsub.s32 %v4202, %v4382
        %v4419 = vsub.s32 %v4203, %v4383
        %v4420 = vsub.s32 %v4204, %v4384
        %v4421 = vsub.s32 %v4205, %v4385
        %v4422 = vsub.s32 %v4206, %v4386
        %v4423 = vsub.s32 %v4207, %v4387
        %v4424 = vsub.s32 %v4208, %v4388
        %v4425 = vsub.s32 %v4209, %v4389
        %v4426 = vsub.s32 %v4210, %v4390
        %v4427 = vsub.s32 %v4211, %v4391
        %vm4428 = vcmp.lt.s32.totalorder %v4392, 16
        %vm4429 = vcmp.lt.s32.totalorder %v4393, 16
        %vm4430 = vcmp.lt.s32.totalorder %v4394, 16
        %vm4431 = vcmp.lt.s32.totalorder %v4395, 16
        %vm4432 = vcmp.lt.s32.totalorder %v4396, 16
        %vm4433 = vcmp.lt.s32.totalorder %v4397, 16
        %vm4434 = vcmp.lt.s32.totalorder %v4398, 16
        %vm4435 = vcmp.lt.s32.totalorder %v4399, 16
        %vm4436 = vcmp.lt.s32.totalorder %v4400, 16
        %vm4437 = vcmp.lt.s32.totalorder %v4401, 16
        %vm4438 = vcmp.lt.s32.totalorder %v4402, 16
        %vm4439 = vcmp.lt.s32.totalorder %v4403, 16
        %vm4440 = vcmp.lt.s32.totalorder %v4404, 16
        %vm4441 = vcmp.lt.s32.totalorder %v4405, 16
        %vm4442 = vcmp.lt.s32.totalorder %v4406, 16
        %vm4443 = vcmp.lt.s32.totalorder %v4407, 16
        %vm4444 = vcmp.lt.s32.totalorder %v4408, 16
        %vm4445 = vcmp.lt.s32.totalorder %v4409, 16
        %vm4446 = vcmp.lt.s32.totalorder %v4410, 16
        %vm4447 = vcmp.lt.s32.totalorder %v4411, 16
        %vm4448 = vcmp.lt.s32.totalorder %v4412, 16
        %vm4449 = vcmp.lt.s32.totalorder %v4413, 16
        %vm4450 = vcmp.lt.s32.totalorder %v4414, 16
        %vm4451 = vcmp.lt.s32.totalorder %v4415, 16
        %vm4452 = vcmp.lt.s32.totalorder %v4416, 16
        %vm4453 = vcmp.lt.s32.totalorder %v4417, 16
        %vm4454 = vcmp.lt.s32.totalorder %v4418, 16
        %vm4455 = vcmp.lt.s32.totalorder %v4419, 16
        %vm4456 = vcmp.lt.s32.totalorder %v4420, 16
        %vm4457 = vcmp.lt.s32.totalorder %v4421, 16
        %vm4458 = vcmp.lt.s32.totalorder %v4422, 16
        %vm4459 = vcmp.lt.s32.totalorder %v4423, 16
        %vm4460 = vcmp.lt.s32.totalorder %v4424, 16
        %vm4461 = vcmp.lt.s32.totalorder %v4425, 16
        %vm4462 = vcmp.lt.s32.totalorder %v4426, 16
        %vm4463 = vcmp.lt.s32.totalorder %v4427, 16
        %v4464 = vsel %vm4428, %v4139, 0.0
        %v4465 = vsel %vm4429, %v4140, 0.0
        %v4466 = vsel %vm4430, %v4141, 0.0
        %v4467 = vsel %vm4431, %v4142, 0.0
        %v4468 = vsel %vm4432, %v4143, 0.0
        %v4469 = vsel %vm4433, %v4144, 0.0
        %v4470 = vsel %vm4434, %v4145, 0.0
        %v4471 = vsel %vm4435, %v4146, 0.0
        %v4472 = vsel %vm4436, %v4147, 0.0
        %v4473 = vsel %vm4437, %v4148, 0.0
        %v4474 = vsel %vm4438, %v4149, 0.0
        %v4475 = vsel %vm4439, %v4150, 0.0
        %v4476 = vsel %vm4440, %v4151, 0.0
        %v4477 = vsel %vm4441, %v4152, 0.0
        %v4478 = vsel %vm4442, %v4153, 0.0
        %v4479 = vsel %vm4443, %v4154, 0.0
        %v4480 = vsel %vm4444, %v4155, 0.0
        %v4481 = vsel %vm4445, %v4156, 0.0
        %v4482 = vsel %vm4446, %v4157, 0.0
        %v4483 = vsel %vm4447, %v4158, 0.0
        %v4484 = vsel %vm4448, %v4159, 0.0
        %v4485 = vsel %vm4449, %v4160, 0.0
        %v4486 = vsel %vm4450, %v4161, 0.0
        %v4487 = vsel %vm4451, %v4162, 0.0
        %v4488 = vsel %vm4452, %v4163, 0.0
        %v4489 = vsel %vm4453, %v4164, 0.0
        %v4490 = vsel %vm4454, %v4165, 0.0
        %v4491 = vsel %vm4455, %v4166, 0.0
        %v4492 = vsel %vm4456, %v4167, 0.0
        %v4493 = vsel %vm4457, %v4168, 0.0
        %v4494 = vsel %vm4458, %v4169, 0.0
        %v4495 = vsel %vm4459, %v4170, 0.0
        %v4496 = vsel %vm4460, %v4171, 0.0
        %v4497 = vsel %vm4461, %v4172, 0.0
        %v4498 = vsel %vm4462, %v4173, 0.0
        %v4499 = vsel %vm4463, %v4174, 0.0
        %vm4500 = vcmask 64512
        %4501 = vst.msk [vmem:[#allocation2] sm:$0xff] %vm4500, 0.0
        %4502 = vst.msk [vmem:[#allocation2 + $0x8] sm:$0xff] %vm4500, 0.0
        %4503 = vst.msk [vmem:[#allocation2 + $0x10] sm:$0xff] %vm4500, 0.0
        %4504 = vst.msk [vmem:[#allocation2 + $0x138] sm:$0xff] %vm4500, 0.0
        %4505 = vst.msk [vmem:[#allocation2 + $0x140] sm:$0xff] %vm4500, 0.0
        %4506 = vst.msk [vmem:[#allocation2 + $0x148] sm:$0xff] %vm4500, 0.0
        %4507 = vst.msk [vmem:[#allocation2 + $0x18] sm:$0xff] %vm4500, %v4464
        %4508 = vst.msk [vmem:[#allocation2 + $0x20] sm:$0xff] %vm4500, %v4465
        %4509 = vst.msk [vmem:[#allocation2 + $0x28] sm:$0xff] %vm4500, %v4466
        %4510 = vst.msk [vmem:[#allocation2 + $0x30] sm:$0xff] %vm4500, %v4467
        %4511 = vst.msk [vmem:[#allocation2 + $0x38] sm:$0xff] %vm4500, %v4468
        %4512 = vst.msk [vmem:[#allocation2 + $0x40] sm:$0xff] %vm4500, %v4469
        %4513 = vst.msk [vmem:[#allocation2 + $0x48] sm:$0xff] %vm4500, %v4470
        %4514 = vst.msk [vmem:[#allocation2 + $0x50] sm:$0xff] %vm4500, %v4471
        %4515 = vst.msk [vmem:[#allocation2 + $0x58] sm:$0xff] %vm4500, %v4472
        %4516 = vst.msk [vmem:[#allocation2 + $0x60] sm:$0xff] %vm4500, %v4473
        %4517 = vst.msk [vmem:[#allocation2 + $0x68] sm:$0xff] %vm4500, %v4474
        %4518 = vst.msk [vmem:[#allocation2 + $0x70] sm:$0xff] %vm4500, %v4475
        %4519 = vst.msk [vmem:[#allocation2 + $0x78] sm:$0xff] %vm4500, %v4476
        %4520 = vst.msk [vmem:[#allocation2 + $0x80] sm:$0xff] %vm4500, %v4477
        %4521 = vst.msk [vmem:[#allocation2 + $0x88] sm:$0xff] %vm4500, %v4478
        %4522 = vst.msk [vmem:[#allocation2 + $0x90] sm:$0xff] %vm4500, %v4479
        %4523 = vst.msk [vmem:[#allocation2 + $0x98] sm:$0xff] %vm4500, %v4480
        %4524 = vst.msk [vmem:[#allocation2 + $0xa0] sm:$0xff] %vm4500, %v4481
        %4525 = vst.msk [vmem:[#allocation2 + $0xa8] sm:$0xff] %vm4500, %v4482
        %4526 = vst.msk [vmem:[#allocation2 + $0xb0] sm:$0xff] %vm4500, %v4483
        %4527 = vst.msk [vmem:[#allocation2 + $0xb8] sm:$0xff] %vm4500, %v4484
        %4528 = vst.msk [vmem:[#allocation2 + $0xc0] sm:$0xff] %vm4500, %v4485
        %4529 = vst.msk [vmem:[#allocation2 + $0xc8] sm:$0xff] %vm4500, %v4486
        %4530 = vst.msk [vmem:[#allocation2 + $0xd0] sm:$0xff] %vm4500, %v4487
        %4531 = vst.msk [vmem:[#allocation2 + $0xd8] sm:$0xff] %vm4500, %v4488
        %4532 = vst.msk [vmem:[#allocation2 + $0xe0] sm:$0xff] %vm4500, %v4489
        %4533 = vst.msk [vmem:[#allocation2 + $0xe8] sm:$0xff] %vm4500, %v4490
        %4534 = vst.msk [vmem:[#allocation2 + $0xf0] sm:$0xff] %vm4500, %v4491
        %4535 = vst.msk [vmem:[#allocation2 + $0xf8] sm:$0xff] %vm4500, %v4492
        %4536 = vst.msk [vmem:[#allocation2 + $0x100] sm:$0xff] %vm4500, %v4493
        %4537 = vst.msk [vmem:[#allocation2 + $0x108] sm:$0xff] %vm4500, %v4494
        %4538 = vst.msk [vmem:[#allocation2 + $0x110] sm:$0xff] %vm4500, %v4495
        %4539 = vst.msk [vmem:[#allocation2 + $0x118] sm:$0xff] %vm4500, %v4496
        %4540 = vst.msk [vmem:[#allocation2 + $0x120] sm:$0xff] %vm4500, %v4497
        %4541 = vst.msk [vmem:[#allocation2 + $0x128] sm:$0xff] %vm4500, %v4498
        %4542 = vst.msk [vmem:[#allocation2 + $0x130] sm:$0xff] %vm4500, %v4499
        %v4543 = vld [vmem:[#allocation2 + $0x5] sm:$0xff]
        %v4544 = vld [vmem:[#allocation2 + $0xd] sm:$0xff]
        %v4545 = vld [vmem:[#allocation2 + $0x15] sm:$0xff]
        %v4546 = vld [vmem:[#allocation2 + $0x1d] sm:$0xff]
        %v4547 = vld [vmem:[#allocation2 + $0x25] sm:$0xff]
        %v4548 = vld [vmem:[#allocation2 + $0x2d] sm:$0xff]
        %v4549 = vld [vmem:[#allocation2 + $0x35] sm:$0xff]
        %v4550 = vld [vmem:[#allocation2 + $0x3d] sm:$0xff]
        %v4551 = vld [vmem:[#allocation2 + $0x45] sm:$0xff]
        %v4552 = vld [vmem:[#allocation2 + $0x4d] sm:$0xff]
        %v4553 = vld [vmem:[#allocation2 + $0x55] sm:$0xff]
        %v4554 = vld [vmem:[#allocation2 + $0x5d] sm:$0xff]
        %v4555 = vld [vmem:[#allocation2 + $0x65] sm:$0xff]
        %v4556 = vld [vmem:[#allocation2 + $0x6d] sm:$0xff]
        %v4557 = vld [vmem:[#allocation2 + $0x75] sm:$0xff]
        %v4558 = vld [vmem:[#allocation2 + $0x7d] sm:$0xff]
        %v4559 = vld [vmem:[#allocation2 + $0x85] sm:$0xff]
        %v4560 = vld [vmem:[#allocation2 + $0x8d] sm:$0xff]
        %v4561 = vld [vmem:[#allocation2 + $0x95] sm:$0xff]
        %v4562 = vld [vmem:[#allocation2 + $0x9d] sm:$0xff]
        %v4563 = vld [vmem:[#allocation2 + $0xa5] sm:$0xff]
        %v4564 = vld [vmem:[#allocation2 + $0xad] sm:$0xff]
        %v4565 = vld [vmem:[#allocation2 + $0xb5] sm:$0xff]
        %v4566 = vld [vmem:[#allocation2 + $0xbd] sm:$0xff]
        %v4567 = vld [vmem:[#allocation2 + $0xc5] sm:$0xff]
        %v4568 = vld [vmem:[#allocation2 + $0xcd] sm:$0xff]
        %v4569 = vld [vmem:[#allocation2 + $0xd5] sm:$0xff]
        %v4570 = vld [vmem:[#allocation2 + $0xdd] sm:$0xff]
        %v4571 = vld [vmem:[#allocation2 + $0xe5] sm:$0xff]
        %v4572 = vld [vmem:[#allocation2 + $0xed] sm:$0xff]
        %v4573 = vld [vmem:[#allocation2 + $0xf5] sm:$0xff]
        %v4574 = vld [vmem:[#allocation2 + $0xfd] sm:$0xff]
        %v4575 = vld [vmem:[#allocation2 + $0x105] sm:$0xff]
        %v4576 = vld [vmem:[#allocation2 + $0x10d] sm:$0xff]
        %v4577 = vld [vmem:[#allocation2 + $0x115] sm:$0xff]
        %v4578 = vld [vmem:[#allocation2 + $0x11d] sm:$0xff]
        %v4579 = vld [vmem:[#allocation9] sm:$0xff]
        %v4580 = vld [vmem:[#allocation2 + $0x6] sm:$0xff]
        %v4581 = vld [vmem:[#allocation2 + $0xe] sm:$0xff]
        %v4582 = vld [vmem:[#allocation2 + $0x16] sm:$0xff]
        %v4583 = vld [vmem:[#allocation2 + $0x1e] sm:$0xff]
        %v4584 = vld [vmem:[#allocation2 + $0x26] sm:$0xff]
        %v4585 = vld [vmem:[#allocation2 + $0x2e] sm:$0xff]
        %v4586 = vld [vmem:[#allocation2 + $0x36] sm:$0xff]
        %v4587 = vld [vmem:[#allocation2 + $0x3e] sm:$0xff]
        %v4588 = vld [vmem:[#allocation2 + $0x46] sm:$0xff]
        %v4589 = vld [vmem:[#allocation2 + $0x4e] sm:$0xff]
        %v4590 = vld [vmem:[#allocation2 + $0x56] sm:$0xff]
        %v4591 = vld [vmem:[#allocation2 + $0x5e] sm:$0xff]
        %v4592 = vld [vmem:[#allocation2 + $0x66] sm:$0xff]
        %v4593 = vld [vmem:[#allocation2 + $0x6e] sm:$0xff]
        %v4594 = vld [vmem:[#allocation2 + $0x76] sm:$0xff]
        %v4595 = vld [vmem:[#allocation2 + $0x7e] sm:$0xff]
        %v4596 = vld [vmem:[#allocation2 + $0x86] sm:$0xff]
        %v4597 = vld [vmem:[#allocation2 + $0x8e] sm:$0xff]
        %v4598 = vld [vmem:[#allocation2 + $0x96] sm:$0xff]
        %v4599 = vld [vmem:[#allocation2 + $0x9e] sm:$0xff]
        %v4600 = vld [vmem:[#allocation2 + $0xa6] sm:$0xff]
        %v4601 = vld [vmem:[#allocation2 + $0xae] sm:$0xff]
        %v4602 = vld [vmem:[#allocation2 + $0xb6] sm:$0xff]
        %v4603 = vld [vmem:[#allocation2 + $0xbe] sm:$0xff]
        %v4604 = vld [vmem:[#allocation2 + $0xc6] sm:$0xff]
        %v4605 = vld [vmem:[#allocation2 + $0xce] sm:$0xff]
        %v4606 = vld [vmem:[#allocation2 + $0xd6] sm:$0xff]
        %v4607 = vld [vmem:[#allocation2 + $0xde] sm:$0xff]
        %v4608 = vld [vmem:[#allocation2 + $0xe6] sm:$0xff]
        %v4609 = vld [vmem:[#allocation2 + $0xee] sm:$0xff]
        %v4610 = vld [vmem:[#allocation2 + $0xf6] sm:$0xff]
        %v4611 = vld [vmem:[#allocation2 + $0xfe] sm:$0xff]
        %v4612 = vld [vmem:[#allocation2 + $0x106] sm:$0xff]
        %v4613 = vld [vmem:[#allocation2 + $0x10e] sm:$0xff]
        %v4614 = vld [vmem:[#allocation2 + $0x116] sm:$0xff]
        %v4615 = vld [vmem:[#allocation2 + $0x11e] sm:$0xff]
        %s4616 = scalar_lea.vmem [#allocation9], 8
        %v4617 = vld [vmem:[%s4616] sm:$0xff]
        %v4619 = vsel %vm4500, %v4580, 0
        %v4622 = vsel %vm4500, %v4581, 0
        %v4625 = vsel %vm4500, %v4582, 0
        %v4628 = vsel %vm4500, %v4583, 0
        %v4631 = vsel %vm4500, %v4584, 0
        %v4634 = vsel %vm4500, %v4585, 0
        %v4637 = vsel %vm4500, %v4586, 0
        %v4640 = vsel %vm4500, %v4587, 0
        %v4643 = vsel %vm4500, %v4588, 0
        %v4646 = vsel %vm4500, %v4589, 0
        %v4649 = vsel %vm4500, %v4590, 0
        %v4652 = vsel %vm4500, %v4591, 0
        %v4655 = vsel %vm4500, %v4592, 0
        %v4658 = vsel %vm4500, %v4593, 0
        %v4661 = vsel %vm4500, %v4594, 0
        %v4664 = vsel %vm4500, %v4595, 0
        %v4667 = vsel %vm4500, %v4596, 0
        %v4670 = vsel %vm4500, %v4597, 0
        %v4673 = vsel %vm4500, %v4598, 0
        %v4676 = vsel %vm4500, %v4599, 0
        %v4679 = vsel %vm4500, %v4600, 0
        %v4682 = vsel %vm4500, %v4601, 0
        %v4685 = vsel %vm4500, %v4602, 0
        %v4688 = vsel %vm4500, %v4603, 0
        %v4691 = vsel %vm4500, %v4604, 0
        %v4694 = vsel %vm4500, %v4605, 0
        %v4697 = vsel %vm4500, %v4606, 0
        %v4700 = vsel %vm4500, %v4607, 0
        %v4703 = vsel %vm4500, %v4608, 0
        %v4706 = vsel %vm4500, %v4609, 0
        %v4709 = vsel %vm4500, %v4610, 0
        %v4712 = vsel %vm4500, %v4611, 0
        %v4715 = vsel %vm4500, %v4612, 0
        %v4718 = vsel %vm4500, %v4613, 0
        %v4721 = vsel %vm4500, %v4614, 0
        %v4724 = vsel %vm4500, %v4615, 0
        %4726 = vmatprep.subr.mxu0 0.0
        %4727 = vmatpush1.msra.mxu0 %v4617
        %4728 = vmatprep.subr.mxu0 0.0
        %4729 = vmatpush1.msra.mxu0 0.0
        %4730 = vmatprep.subr.mxu0 0.0
        %4731 = vmatpush1.msra.mxu0 0.0
        %4732 = vmatprep.subr.mxu0 0.0
        %4733 = vmatpush1.msra.mxu0 0.0
        %4734 = vmatprep.subr.mxu0 0.0
        %4735 = vmatpush1.msra.mxu0 0.0
        %4736 = vmatprep.subr.mxu0 0.0
        %4737 = vmatpush1.msra.mxu0 0.0
        %4738 = vmatprep.subr.mxu0 0.0
        %4739 = vmatpush1.msra.mxu0 0.0
        %4740 = vmatprep.subr.mxu0 0.0
        %4741 = vmatpush1.msra.mxu0 0.0
        %4742 = vmatprep.subr.mxu0 0.0
        %4743 = vmatpush1.msra.mxu0 0.0
        %4744 = vmatprep.subr.mxu0 0.0
        %4745 = vmatpush1.msra.mxu0 0.0
        %4746 = vmatprep.subr.mxu0 0.0
        %4747 = vmatpush1.msra.mxu0 0.0
        %4748 = vmatprep.subr.mxu0 0.0
        %4749 = vmatpush1.msra.mxu0 0.0
        %4750 = vmatprep.subr.mxu0 0.0
        %4751 = vmatpush1.msra.mxu0 0.0
        %4752 = vmatprep.subr.mxu0 0.0
        %4753 = vmatpush1.msra.mxu0 0.0
        %4754 = vmatprep.subr.mxu0 0.0
        %4755 = vmatpush1.msra.mxu0 0.0
        %4756 = vmatprep.subr.mxu0 0.0
        %4757 = vmatpush1.msra.mxu0 0.0
        %4758 = vmatprep.subr.mxu0 0.0
        %4759 = vmatpush1.msra.mxu0 0.0
        %4760 = vmatprep.subr.mxu0 0.0
        %4761 = vmatpush1.msra.mxu0 0.0
        %4762 = vmatprep.subr.mxu0 0.0
        %4763 = vmatpush1.msra.mxu0 0.0
        %4764 = vmatprep.subr.mxu0 0.0
        %4765 = vmatpush1.msra.mxu0 0.0
        %4766 = vmatprep.subr.mxu0 0.0
        %4767 = vmatpush1.msra.mxu0 0.0
        %4768 = vmatprep.subr.mxu0 0.0
        %4769 = vmatpush1.msra.mxu0 0.0
        %4770 = vmatprep.subr.mxu0 0.0
        %4771 = vmatpush1.msra.mxu0 0.0
        %4772 = vmatprep.subr.mxu0 0.0
        %4773 = vmatpush1.msra.mxu0 0.0
        %4774 = vmatprep.subr.mxu0 0.0
        %4775 = vmatpush1.msra.mxu0 0.0
        %4776 = vmatprep.subr.mxu0 0.0
        %4777 = vmatpush1.msra.mxu0 0.0
        %4778 = vmatprep.subr.mxu0 0.0
        %4779 = vmatpush1.msra.mxu0 0.0
        %4780 = vmatprep.subr.mxu0 0.0
        %4781 = vmatpush1.msra.mxu0 0.0
        %4782 = vmatprep.subr.mxu0 0.0
        %4783 = vmatpush1.msra.mxu0 0.0
        %4784 = vmatprep.subr.mxu0 0.0
        %4785 = vmatpush1.msra.mxu0 0.0
        %4786 = vmatprep.subr.mxu0 0.0
        %4787 = vmatpush1.msra.mxu0 0.0
        %4788 = vmatprep.subr.mxu0 0.0
        %4789 = vmatpush1.msra.mxu0 0.0
        %4790 = vmatprep.mubr.f32.mxu0 0.0
        %4791 = vmatmul.mubr.f32.gmra.mrb[0].mxu0 %v4619
        %v4792 = vpop.f32.mrb[0].mxu0
        %v4793 = vadd.f32 0.0, %v4792
        %v4794 = vpop.f32.mrb[0].mxu0
        %4795 = vmatprep.mubr.f32.mxu0 0.0
        %4796 = vmatmul.mubr.f32.gmra.mrb[0].mxu0 %v4622
        %v4797 = vpop.f32.mrb[0].mxu0
        %v4798 = vadd.f32 0.0, %v4797
        %v4799 = vpop.f32.mrb[0].mxu0
        %4800 = vmatprep.mubr.f32.mxu0 0.0
        %4801 = vmatmul.mubr.f32.gmra.mrb[0].mxu0 %v4625
        %v4802 = vpop.f32.mrb[0].mxu0
        %v4803 = vadd.f32 0.0, %v4802
        %v4804 = vpop.f32.mrb[0].mxu0
        %4805 = vmatprep.mubr.f32.mxu0 0.0
        %4806 = vmatmul.mubr.f32.gmra.mrb[0].mxu0 %v4628
        %v4807 = vpop.f32.mrb[0].mxu0
        %v4808 = vadd.f32 0.0, %v4807
        %v4809 = vpop.f32.mrb[0].mxu0
        %4810 = vmatprep.mubr.f32.mxu0 0.0
        %4811 = vmatmul.mubr.f32.gmra.mrb[0].mxu0 %v4631
        %v4812 = vpop.f32.mrb[0].mxu0
        %v4813 = vadd.f32 0.0, %v4812
        %v4814 = vpop.f32.mrb[0].mxu0
        %4815 = vmatprep.mubr.f32.mxu0 0.0
        %4816 = vmatmul.mubr.f32.gmra.mrb[0].mxu0 %v4634
        %v4817 = vpop.f32.mrb[0].mxu0
        %v4818 = vadd.f32 0.0, %v4817
        %v4819 = vpop.f32.mrb[0].mxu0
        %4820 = vmatprep.mubr.f32.mxu0 0.0
        %4821 = vmatmul.mubr.f32.gmra.mrb[0].mxu0 %v4637
        %v4822 = vpop.f32.mrb[0].mxu0
        %v4823 = vadd.f32 0.0, %v4822
        %v4824 = vpop.f32.mrb[0].mxu0
        %4825 = vmatprep.mubr.f32.mxu0 0.0
        %4826 = vmatmul.mubr.f32.gmra.mrb[0].mxu0 %v4640
        %v4827 = vpop.f32.mrb[0].mxu0
        %v4828 = vadd.f32 0.0, %v4827
        %v4829 = vpop.f32.mrb[0].mxu0
        %4830 = vmatprep.mubr.f32.mxu0 0.0
        %4831 = vmatmul.mubr.f32.gmra.mrb[0].mxu0 %v4643
        %v4832 = vpop.f32.mrb[0].mxu0
        %v4833 = vadd.f32 0.0, %v4832
        %v4834 = vpop.f32.mrb[0].mxu0
        %4835 = vmatprep.mubr.f32.mxu0 0.0
        %4836 = vmatmul.mubr.f32.gmra.mrb[0].mxu0 %v4646
        %v4837 = vpop.f32.mrb[0].mxu0
        %v4838 = vadd.f32 0.0, %v4837
        %v4839 = vpop.f32.mrb[0].mxu0
        %4840 = vmatprep.mubr.f32.mxu0 0.0
        %4841 = vmatmul.mubr.f32.gmra.mrb[0].mxu0 %v4649
        %v4842 = vpop.f32.mrb[0].mxu0
        %v4843 = vadd.f32 0.0, %v4842
        %v4844 = vpop.f32.mrb[0].mxu0
        %4845 = vmatprep.mubr.f32.mxu0 0.0
        %4846 = vmatmul.mubr.f32.gmra.mrb[0].mxu0 %v4652
        %v4847 = vpop.f32.mrb[0].mxu0
        %v4848 = vadd.f32 0.0, %v4847
        %v4849 = vpop.f32.mrb[0].mxu0
        %4850 = vmatprep.mubr.f32.mxu0 0.0
        %4851 = vmatmul.mubr.f32.gmra.mrb[0].mxu0 %v4655
        %v4852 = vpop.f32.mrb[0].mxu0
        %v4853 = vadd.f32 0.0, %v4852
        %v4854 = vpop.f32.mrb[0].mxu0
        %4855 = vmatprep.mubr.f32.mxu0 0.0
        %4856 = vmatmul.mubr.f32.gmra.mrb[0].mxu0 %v4658
        %v4857 = vpop.f32.mrb[0].mxu0
        %v4858 = vadd.f32 0.0, %v4857
        %v4859 = vpop.f32.mrb[0].mxu0
        %4860 = vmatprep.mubr.f32.mxu0 0.0
        %4861 = vmatmul.mubr.f32.gmra.mrb[0].mxu0 %v4661
        %v4862 = vpop.f32.mrb[0].mxu0
        %v4863 = vadd.f32 0.0, %v4862
        %v4864 = vpop.f32.mrb[0].mxu0
        %4865 = vmatprep.mubr.f32.mxu0 0.0
        %4866 = vmatmul.mubr.f32.gmra.mrb[0].mxu0 %v4664
        %v4867 = vpop.f32.mrb[0].mxu0
        %v4868 = vadd.f32 0.0, %v4867
        %v4869 = vpop.f32.mrb[0].mxu0
        %4870 = vmatprep.mubr.f32.mxu0 0.0
        %4871 = vmatmul.mubr.f32.gmra.mrb[0].mxu0 %v4667
        %v4872 = vpop.f32.mrb[0].mxu0
        %v4873 = vadd.f32 0.0, %v4872
        %v4874 = vpop.f32.mrb[0].mxu0
        %4875 = vmatprep.mubr.f32.mxu0 0.0
        %4876 = vmatmul.mubr.f32.gmra.mrb[0].mxu0 %v4670
        %v4877 = vpop.f32.mrb[0].mxu0
        %v4878 = vadd.f32 0.0, %v4877
        %v4879 = vpop.f32.mrb[0].mxu0
        %4880 = vmatprep.mubr.f32.mxu0 0.0
        %4881 = vmatmul.mubr.f32.gmra.mrb[0].mxu0 %v4673
        %v4882 = vpop.f32.mrb[0].mxu0
        %v4883 = vadd.f32 0.0, %v4882
        %v4884 = vpop.f32.mrb[0].mxu0
        %4885 = vmatprep.mubr.f32.mxu0 0.0
        %4886 = vmatmul.mubr.f32.gmra.mrb[0].mxu0 %v4676
        %v4887 = vpop.f32.mrb[0].mxu0
        %v4888 = vadd.f32 0.0, %v4887
        %v4889 = vpop.f32.mrb[0].mxu0
        %4890 = vmatprep.mubr.f32.mxu0 0.0
        %4891 = vmatmul.mubr.f32.gmra.mrb[0].mxu0 %v4679
        %v4892 = vpop.f32.mrb[0].mxu0
        %v4893 = vadd.f32 0.0, %v4892
        %v4894 = vpop.f32.mrb[0].mxu0
        %4895 = vmatprep.mubr.f32.mxu0 0.0
        %4896 = vmatmul.mubr.f32.gmra.mrb[0].mxu0 %v4682
        %v4897 = vpop.f32.mrb[0].mxu0
        %v4898 = vadd.f32 0.0, %v4897
        %v4899 = vpop.f32.mrb[0].mxu0
        %4900 = vmatprep.mubr.f32.mxu0 0.0
        %4901 = vmatmul.mubr.f32.gmra.mrb[0].mxu0 %v4685
        %v4902 = vpop.f32.mrb[0].mxu0
        %v4903 = vadd.f32 0.0, %v4902
        %v4904 = vpop.f32.mrb[0].mxu0
        %4905 = vmatprep.mubr.f32.mxu0 0.0
        %4906 = vmatmul.mubr.f32.gmra.mrb[0].mxu0 %v4688
        %v4907 = vpop.f32.mrb[0].mxu0
        %v4908 = vadd.f32 0.0, %v4907
        %v4909 = vpop.f32.mrb[0].mxu0
        %4910 = vmatprep.mubr.f32.mxu0 0.0
        %4911 = vmatmul.mubr.f32.gmra.mrb[0].mxu0 %v4691
        %v4912 = vpop.f32.mrb[0].mxu0
        %v4913 = vadd.f32 0.0, %v4912
        %v4914 = vpop.f32.mrb[0].mxu0
        %4915 = vmatprep.mubr.f32.mxu0 0.0
        %4916 = vmatmul.mubr.f32.gmra.mrb[0].mxu0 %v4694
        %v4917 = vpop.f32.mrb[0].mxu0
        %v4918 = vadd.f32 0.0, %v4917
        %v4919 = vpop.f32.mrb[0].mxu0
        %4920 = vmatprep.mubr.f32.mxu0 0.0
        %4921 = vmatmul.mubr.f32.gmra.mrb[0].mxu0 %v4697
        %v4922 = vpop.f32.mrb[0].mxu0
        %v4923 = vadd.f32 0.0, %v4922
        %v4924 = vpop.f32.mrb[0].mxu0
        %4925 = vmatprep.mubr.f32.mxu0 0.0
        %4926 = vmatmul.mubr.f32.gmra.mrb[0].mxu0 %v4700
        %v4927 = vpop.f32.mrb[0].mxu0
        %v4928 = vadd.f32 0.0, %v4927
        %v4929 = vpop.f32.mrb[0].mxu0
        %4930 = vmatprep.mubr.f32.mxu0 0.0
        %4931 = vmatmul.mubr.f32.gmra.mrb[0].mxu0 %v4703
        %v4932 = vpop.f32.mrb[0].mxu0
        %v4933 = vadd.f32 0.0, %v4932
        %v4934 = vpop.f32.mrb[0].mxu0
        %4935 = vmatprep.mubr.f32.mxu0 0.0
        %4936 = vmatmul.mubr.f32.gmra.mrb[0].mxu0 %v4706
        %v4937 = vpop.f32.mrb[0].mxu0
        %v4938 = vadd.f32 0.0, %v4937
        %v4939 = vpop.f32.mrb[0].mxu0
        %4940 = vmatprep.mubr.f32.mxu0 0.0
        %4941 = vmatmul.mubr.f32.gmra.mrb[0].mxu0 %v4709
        %v4942 = vpop.f32.mrb[0].mxu0
        %v4943 = vadd.f32 0.0, %v4942
        %v4944 = vpop.f32.mrb[0].mxu0
        %4945 = vmatprep.mubr.f32.mxu0 0.0
        %4946 = vmatmul.mubr.f32.gmra.mrb[0].mxu0 %v4712
        %v4947 = vpop.f32.mrb[0].mxu0
        %v4948 = vadd.f32 0.0, %v4947
        %v4949 = vpop.f32.mrb[0].mxu0
        %4950 = vmatprep.mubr.f32.mxu0 0.0
        %4951 = vmatmul.mubr.f32.gmra.mrb[0].mxu0 %v4715
        %v4952 = vpop.f32.mrb[0].mxu0
        %v4953 = vadd.f32 0.0, %v4952
        %v4954 = vpop.f32.mrb[0].mxu0
        %4955 = vmatprep.mubr.f32.mxu0 0.0
        %4956 = vmatmul.mubr.f32.gmra.mrb[0].mxu0 %v4718
        %v4957 = vpop.f32.mrb[0].mxu0
        %v4958 = vadd.f32 0.0, %v4957
        %v4959 = vpop.f32.mrb[0].mxu0
        %4960 = vmatprep.mubr.f32.mxu0 0.0
        %4961 = vmatmul.mubr.f32.gmra.mrb[0].mxu0 %v4721
        %v4962 = vpop.f32.mrb[0].mxu0
        %v4963 = vadd.f32 0.0, %v4962
        %v4964 = vpop.f32.mrb[0].mxu0
        %4965 = vmatprep.mubr.f32.mxu0 0.0
        %4966 = vmatmul.mubr.f32.gmra.mrb[0].mxu0 %v4724
        %v4967 = vpop.f32.mrb[0].mxu0
        %v4968 = vadd.f32 0.0, %v4967
        %v4969 = vpop.f32.mrb[0].mxu0
        %4970 = vdwg.mxu0
        %v4972 = vsel %vm4500, %v4543, 0
        %v4975 = vsel %vm4500, %v4544, 0
        %v4978 = vsel %vm4500, %v4545, 0
        %v4981 = vsel %vm4500, %v4546, 0
        %v4984 = vsel %vm4500, %v4547, 0
        %v4987 = vsel %vm4500, %v4548, 0
        %v4990 = vsel %vm4500, %v4549, 0
        %v4993 = vsel %vm4500, %v4550, 0
        %v4996 = vsel %vm4500, %v4551, 0
        %v4999 = vsel %vm4500, %v4552, 0
        %v5002 = vsel %vm4500, %v4553, 0
        %v5005 = vsel %vm4500, %v4554, 0
        %v5008 = vsel %vm4500, %v4555, 0
        %v5011 = vsel %vm4500, %v4556, 0
        %v5014 = vsel %vm4500, %v4557, 0
        %v5017 = vsel %vm4500, %v4558, 0
        %v5020 = vsel %vm4500, %v4559, 0
        %v5023 = vsel %vm4500, %v4560, 0
        %v5026 = vsel %vm4500, %v4561, 0
        %v5029 = vsel %vm4500, %v4562, 0
        %v5032 = vsel %vm4500, %v4563, 0
        %v5035 = vsel %vm4500, %v4564, 0
        %v5038 = vsel %vm4500, %v4565, 0
        %v5041 = vsel %vm4500, %v4566, 0
        %v5044 = vsel %vm4500, %v4567, 0
        %v5047 = vsel %vm4500, %v4568, 0
        %v5050 = vsel %vm4500, %v4569, 0
        %v5053 = vsel %vm4500, %v4570, 0
        %v5056 = vsel %vm4500, %v4571, 0
        %v5059 = vsel %vm4500, %v4572, 0
        %v5062 = vsel %vm4500, %v4573, 0
        %v5065 = vsel %vm4500, %v4574, 0
        %v5068 = vsel %vm4500, %v4575, 0
        %v5071 = vsel %vm4500, %v4576, 0
        %v5074 = vsel %vm4500, %v4577, 0
        %v5077 = vsel %vm4500, %v4578, 0
        %5079 = vmatprep.subr.mxu0 0.0
        %5080 = vmatpush1.msra.mxu0 %v4579
        %5081 = vmatprep.subr.mxu0 0.0
        %5082 = vmatpush1.msra.mxu0 0.0
        %5083 = vmatprep.subr.mxu0 0.0
        %5084 = vmatpush1.msra.mxu0 0.0
        %5085 = vmatprep.subr.mxu0 0.0
        %5086 = vmatpush1.msra.mxu0 0.0
        %5087 = vmatprep.subr.mxu0 0.0
        %5088 = vmatpush1.msra.mxu0 0.0
        %5089 = vmatprep.subr.mxu0 0.0
        %5090 = vmatpush1.msra.mxu0 0.0
        %5091 = vmatprep.subr.mxu0 0.0
        %5092 = vmatpush1.msra.mxu0 0.0
        %5093 = vmatprep.subr.mxu0 0.0
        %5094 = vmatpush1.msra.mxu0 0.0
        %5095 = vmatprep.subr.mxu0 0.0
        %5096 = vmatpush1.msra.mxu0 0.0
        %5097 = vmatprep.subr.mxu0 0.0
        %5098 = vmatpush1.msra.mxu0 0.0
        %5099 = vmatprep.subr.mxu0 0.0
        %5100 = vmatpush1.msra.mxu0 0.0
        %5101 = vmatprep.subr.mxu0 0.0
        %5102 = vmatpush1.msra.mxu0 0.0
        %5103 = vmatprep.subr.mxu0 0.0
        %5104 = vmatpush1.msra.mxu0 0.0
        %5105 = vmatprep.subr.mxu0 0.0
        %5106 = vmatpush1.msra.mxu0 0.0
        %5107 = vmatprep.subr.mxu0 0.0
        %5108 = vmatpush1.msra.mxu0 0.0
        %5109 = vmatprep.subr.mxu0 0.0
        %5110 = vmatpush1.msra.mxu0 0.0
        %5111 = vmatprep.subr.mxu0 0.0
        %5112 = vmatpush1.msra.mxu0 0.0
        %5113 = vmatprep.subr.mxu0 0.0
        %5114 = vmatpush1.msra.mxu0 0.0
        %5115 = vmatprep.subr.mxu0 0.0
        %5116 = vmatpush1.msra.mxu0 0.0
        %5117 = vmatprep.subr.mxu0 0.0
        %5118 = vmatpush1.msra.mxu0 0.0
        %5119 = vmatprep.subr.mxu0 0.0
        %5120 = vmatpush1.msra.mxu0 0.0
        %5121 = vmatprep.subr.mxu0 0.0
        %5122 = vmatpush1.msra.mxu0 0.0
        %5123 = vmatprep.subr.mxu0 0.0
        %5124 = vmatpush1.msra.mxu0 0.0
        %5125 = vmatprep.subr.mxu0 0.0
        %5126 = vmatpush1.msra.mxu0 0.0
        %5127 = vmatprep.subr.mxu0 0.0
        %5128 = vmatpush1.msra.mxu0 0.0
        %5129 = vmatprep.subr.mxu0 0.0
        %5130 = vmatpush1.msra.mxu0 0.0
        %5131 = vmatprep.subr.mxu0 0.0
        %5132 = vmatpush1.msra.mxu0 0.0
        %5133 = vmatprep.subr.mxu0 0.0
        %5134 = vmatpush1.msra.mxu0 0.0
        %5135 = vmatprep.subr.mxu0 0.0
        %5136 = vmatpush1.msra.mxu0 0.0
        %5137 = vmatprep.subr.mxu0 0.0
        %5138 = vmatpush1.msra.mxu0 0.0
        %5139 = vmatprep.subr.mxu0 0.0
        %5140 = vmatpush1.msra.mxu0 0.0
        %5141 = vmatprep.subr.mxu0 0.0
        %5142 = vmatpush1.msra.mxu0 0.0
        %5143 = vmatprep.mubr.f32.mxu0 0.0
        %5144 = vmatmul.mubr.f32.gmra.mrb[0].mxu0 %v4972
        %v5145 = vpop.f32.mrb[0].mxu0
        %v5146 = vadd.f32 %v4793, %v5145
        %v5147 = vpop.f32.mrb[0].mxu0
        %5148 = vmatprep.mubr.f32.mxu0 0.0
        %5149 = vmatmul.mubr.f32.gmra.mrb[0].mxu0 %v4975
        %v5150 = vpop.f32.mrb[0].mxu0
        %v5151 = vadd.f32 %v4798, %v5150
        %v5152 = vpop.f32.mrb[0].mxu0
        %5153 = vmatprep.mubr.f32.mxu0 0.0
        %5154 = vmatmul.mubr.f32.gmra.mrb[0].mxu0 %v4978
        %v5155 = vpop.f32.mrb[0].mxu0
        %v5156 = vadd.f32 %v4803, %v5155
        %v5157 = vpop.f32.mrb[0].mxu0
        %5158 = vmatprep.mubr.f32.mxu0 0.0
        %5159 = vmatmul.mubr.f32.gmra.mrb[0].mxu0 %v4981
        %v5160 = vpop.f32.mrb[0].mxu0
        %v5161 = vadd.f32 %v4808, %v5160
        %v5162 = vpop.f32.mrb[0].mxu0
        %5163 = vmatprep.mubr.f32.mxu0 0.0
        %5164 = vmatmul.mubr.f32.gmra.mrb[0].mxu0 %v4984
        %v5165 = vpop.f32.mrb[0].mxu0
        %v5166 = vadd.f32 %v4813, %v5165
        %v5167 = vpop.f32.mrb[0].mxu0
        %5168 = vmatprep.mubr.f32.mxu0 0.0
        %5169 = vmatmul.mubr.f32.gmra.mrb[0].mxu0 %v4987
        %v5170 = vpop.f32.mrb[0].mxu0
        %v5171 = vadd.f32 %v4818, %v5170
        %v5172 = vpop.f32.mrb[0].mxu0
        %5173 = vmatprep.mubr.f32.mxu0 0.0
        %5174 = vmatmul.mubr.f32.gmra.mrb[0].mxu0 %v4990
        %v5175 = vpop.f32.mrb[0].mxu0
        %v5176 = vadd.f32 %v4823, %v5175
        %v5177 = vpop.f32.mrb[0].mxu0
        %5178 = vmatprep.mubr.f32.mxu0 0.0
        %5179 = vmatmul.mubr.f32.gmra.mrb[0].mxu0 %v4993
        %v5180 = vpop.f32.mrb[0].mxu0
        %v5181 = vadd.f32 %v4828, %v5180
        %v5182 = vpop.f32.mrb[0].mxu0
        %5183 = vmatprep.mubr.f32.mxu0 0.0
        %5184 = vmatmul.mubr.f32.gmra.mrb[0].mxu0 %v4996
        %v5185 = vpop.f32.mrb[0].mxu0
        %v5186 = vadd.f32 %v4833, %v5185
        %v5187 = vpop.f32.mrb[0].mxu0
        %5188 = vmatprep.mubr.f32.mxu0 0.0
        %5189 = vmatmul.mubr.f32.gmra.mrb[0].mxu0 %v4999
        %v5190 = vpop.f32.mrb[0].mxu0
        %v5191 = vadd.f32 %v4838, %v5190
        %v5192 = vpop.f32.mrb[0].mxu0
        %5193 = vmatprep.mubr.f32.mxu0 0.0
        %5194 = vmatmul.mubr.f32.gmra.mrb[0].mxu0 %v5002
        %v5195 = vpop.f32.mrb[0].mxu0
        %v5196 = vadd.f32 %v4843, %v5195
        %v5197 = vpop.f32.mrb[0].mxu0
        %5198 = vmatprep.mubr.f32.mxu0 0.0
        %5199 = vmatmul.mubr.f32.gmra.mrb[0].mxu0 %v5005
        %v5200 = vpop.f32.mrb[0].mxu0
        %v5201 = vadd.f32 %v4848, %v5200
        %v5202 = vpop.f32.mrb[0].mxu0
        %5203 = vmatprep.mubr.f32.mxu0 0.0
        %5204 = vmatmul.mubr.f32.gmra.mrb[0].mxu0 %v5008
        %v5205 = vpop.f32.mrb[0].mxu0
        %v5206 = vadd.f32 %v4853, %v5205
        %v5207 = vpop.f32.mrb[0].mxu0
        %5208 = vmatprep.mubr.f32.mxu0 0.0
        %5209 = vmatmul.mubr.f32.gmra.mrb[0].mxu0 %v5011
        %v5210 = vpop.f32.mrb[0].mxu0
        %v5211 = vadd.f32 %v4858, %v5210
        %v5212 = vpop.f32.mrb[0].mxu0
        %5213 = vmatprep.mubr.f32.mxu0 0.0
        %5214 = vmatmul.mubr.f32.gmra.mrb[0].mxu0 %v5014
        %v5215 = vpop.f32.mrb[0].mxu0
        %v5216 = vadd.f32 %v4863, %v5215
        %v5217 = vpop.f32.mrb[0].mxu0
        %5218 = vmatprep.mubr.f32.mxu0 0.0
        %5219 = vmatmul.mubr.f32.gmra.mrb[0].mxu0 %v5017
        %v5220 = vpop.f32.mrb[0].mxu0
        %v5221 = vadd.f32 %v4868, %v5220
        %v5222 = vpop.f32.mrb[0].mxu0
        %5223 = vmatprep.mubr.f32.mxu0 0.0
        %5224 = vmatmul.mubr.f32.gmra.mrb[0].mxu0 %v5020
        %v5225 = vpop.f32.mrb[0].mxu0
        %v5226 = vadd.f32 %v4873, %v5225
        %v5227 = vpop.f32.mrb[0].mxu0
        %5228 = vmatprep.mubr.f32.mxu0 0.0
        %5229 = vmatmul.mubr.f32.gmra.mrb[0].mxu0 %v5023
        %v5230 = vpop.f32.mrb[0].mxu0
        %v5231 = vadd.f32 %v4878, %v5230
        %v5232 = vpop.f32.mrb[0].mxu0
        %5233 = vmatprep.mubr.f32.mxu0 0.0
        %5234 = vmatmul.mubr.f32.gmra.mrb[0].mxu0 %v5026
        %v5235 = vpop.f32.mrb[0].mxu0
        %v5236 = vadd.f32 %v4883, %v5235
        %v5237 = vpop.f32.mrb[0].mxu0
        %5238 = vmatprep.mubr.f32.mxu0 0.0
        %5239 = vmatmul.mubr.f32.gmra.mrb[0].mxu0 %v5029
        %v5240 = vpop.f32.mrb[0].mxu0
        %v5241 = vadd.f32 %v4888, %v5240
        %v5242 = vpop.f32.mrb[0].mxu0
        %5243 = vmatprep.mubr.f32.mxu0 0.0
        %5244 = vmatmul.mubr.f32.gmra.mrb[0].mxu0 %v5032
        %v5245 = vpop.f32.mrb[0].mxu0
        %v5246 = vadd.f32 %v4893, %v5245
        %v5247 = vpop.f32.mrb[0].mxu0
        %5248 = vmatprep.mubr.f32.mxu0 0.0
        %5249 = vmatmul.mubr.f32.gmra.mrb[0].mxu0 %v5035
        %v5250 = vpop.f32.mrb[0].mxu0
        %v5251 = vadd.f32 %v4898, %v5250
        %v5252 = vpop.f32.mrb[0].mxu0
        %5253 = vmatprep.mubr.f32.mxu0 0.0
        %5254 = vmatmul.mubr.f32.gmra.mrb[0].mxu0 %v5038
        %v5255 = vpop.f32.mrb[0].mxu0
        %v5256 = vadd.f32 %v4903, %v5255
        %v5257 = vpop.f32.mrb[0].mxu0
        %5258 = vmatprep.mubr.f32.mxu0 0.0
        %5259 = vmatmul.mubr.f32.gmra.mrb[0].mxu0 %v5041
        %v5260 = vpop.f32.mrb[0].mxu0
        %v5261 = vadd.f32 %v4908, %v5260
        %v5262 = vpop.f32.mrb[0].mxu0
        %5263 = vmatprep.mubr.f32.mxu0 0.0
        %5264 = vmatmul.mubr.f32.gmra.mrb[0].mxu0 %v5044
        %v5265 = vpop.f32.mrb[0].mxu0
        %v5266 = vadd.f32 %v4913, %v5265
        %v5267 = vpop.f32.mrb[0].mxu0
        %5268 = vmatprep.mubr.f32.mxu0 0.0
        %5269 = vmatmul.mubr.f32.gmra.mrb[0].mxu0 %v5047
        %v5270 = vpop.f32.mrb[0].mxu0
        %v5271 = vadd.f32 %v4918, %v5270
        %v5272 = vpop.f32.mrb[0].mxu0
        %5273 = vmatprep.mubr.f32.mxu0 0.0
        %5274 = vmatmul.mubr.f32.gmra.mrb[0].mxu0 %v5050
        %v5275 = vpop.f32.mrb[0].mxu0
        %v5276 = vadd.f32 %v4923, %v5275
        %v5277 = vpop.f32.mrb[0].mxu0
        %5278 = vmatprep.mubr.f32.mxu0 0.0
        %5279 = vmatmul.mubr.f32.gmra.mrb[0].mxu0 %v5053
        %v5280 = vpop.f32.mrb[0].mxu0
        %v5281 = vadd.f32 %v4928, %v5280
        %v5282 = vpop.f32.mrb[0].mxu0
        %5283 = vmatprep.mubr.f32.mxu0 0.0
        %5284 = vmatmul.mubr.f32.gmra.mrb[0].mxu0 %v5056
        %v5285 = vpop.f32.mrb[0].mxu0
        %v5286 = vadd.f32 %v4933, %v5285
        %v5287 = vpop.f32.mrb[0].mxu0
        %5288 = vmatprep.mubr.f32.mxu0 0.0
        %5289 = vmatmul.mubr.f32.gmra.mrb[0].mxu0 %v5059
        %v5290 = vpop.f32.mrb[0].mxu0
        %v5291 = vadd.f32 %v4938, %v5290
        %v5292 = vpop.f32.mrb[0].mxu0
        %5293 = vmatprep.mubr.f32.mxu0 0.0
        %5294 = vmatmul.mubr.f32.gmra.mrb[0].mxu0 %v5062
        %v5295 = vpop.f32.mrb[0].mxu0
        %v5296 = vadd.f32 %v4943, %v5295
        %v5297 = vpop.f32.mrb[0].mxu0
        %5298 = vmatprep.mubr.f32.mxu0 0.0
        %5299 = vmatmul.mubr.f32.gmra.mrb[0].mxu0 %v5065
        %v5300 = vpop.f32.mrb[0].mxu0
        %v5301 = vadd.f32 %v4948, %v5300
        %v5302 = vpop.f32.mrb[0].mxu0
        %5303 = vmatprep.mubr.f32.mxu0 0.0
        %5304 = vmatmul.mubr.f32.gmra.mrb[0].mxu0 %v5068
        %v5305 = vpop.f32.mrb[0].mxu0
        %v5306 = vadd.f32 %v4953, %v5305
        %v5307 = vpop.f32.mrb[0].mxu0
        %5308 = vmatprep.mubr.f32.mxu0 0.0
        %5309 = vmatmul.mubr.f32.gmra.mrb[0].mxu0 %v5071
        %v5310 = vpop.f32.mrb[0].mxu0
        %v5311 = vadd.f32 %v4958, %v5310
        %v5312 = vpop.f32.mrb[0].mxu0
        %5313 = vmatprep.mubr.f32.mxu0 0.0
        %5314 = vmatmul.mubr.f32.gmra.mrb[0].mxu0 %v5074
        %v5315 = vpop.f32.mrb[0].mxu0
        %v5316 = vadd.f32 %v4963, %v5315
        %v5317 = vpop.f32.mrb[0].mxu0
        %5318 = vmatprep.mubr.f32.mxu0 0.0
        %5319 = vmatmul.mubr.f32.gmra.mrb[0].mxu0 %v5077
        %v5320 = vpop.f32.mrb[0].mxu0
        %v5321 = vadd.f32 %v4968, %v5320
        %v5322 = vpop.f32.mrb[0].mxu0
        %5323 = vdwg.mxu0
        %v5324 = vld [vmem:[#allocation2 + $0x7] sm:$0xff]
        %v5325 = vld [vmem:[#allocation2 + $0xf] sm:$0xff]
        %v5326 = vld [vmem:[#allocation2 + $0x17] sm:$0xff]
        %v5327 = vld [vmem:[#allocation2 + $0x1f] sm:$0xff]
        %v5328 = vld [vmem:[#allocation2 + $0x27] sm:$0xff]
        %v5329 = vld [vmem:[#allocation2 + $0x2f] sm:$0xff]
        %v5330 = vld [vmem:[#allocation2 + $0x37] sm:$0xff]
        %v5331 = vld [vmem:[#allocation2 + $0x3f] sm:$0xff]
        %v5332 = vld [vmem:[#allocation2 + $0x47] sm:$0xff]
        %v5333 = vld [vmem:[#allocation2 + $0x4f] sm:$0xff]
        %v5334 = vld [vmem:[#allocation2 + $0x57] sm:$0xff]
        %v5335 = vld [vmem:[#allocation2 + $0x5f] sm:$0xff]
        %v5336 = vld [vmem:[#allocation2 + $0x67] sm:$0xff]
        %v5337 = vld [vmem:[#allocation2 + $0x6f] sm:$0xff]
        %v5338 = vld [vmem:[#allocation2 + $0x77] sm:$0xff]
        %v5339 = vld [vmem:[#allocation2 + $0x7f] sm:$0xff]
        %v5340 = vld [vmem:[#allocation2 + $0x87] sm:$0xff]
        %v5341 = vld [vmem:[#allocation2 + $0x8f] sm:$0xff]
        %v5342 = vld [vmem:[#allocation2 + $0x97] sm:$0xff]
        %v5343 = vld [vmem:[#allocation2 + $0x9f] sm:$0xff]
        %v5344 = vld [vmem:[#allocation2 + $0xa7] sm:$0xff]
        %v5345 = vld [vmem:[#allocation2 + $0xaf] sm:$0xff]
        %v5346 = vld [vmem:[#allocation2 + $0xb7] sm:$0xff]
        %v5347 = vld [vmem:[#allocation2 + $0xbf] sm:$0xff]
        %v5348 = vld [vmem:[#allocation2 + $0xc7] sm:$0xff]
        %v5349 = vld [vmem:[#allocation2 + $0xcf] sm:$0xff]
        %v5350 = vld [vmem:[#allocation2 + $0xd7] sm:$0xff]
        %v5351 = vld [vmem:[#allocation2 + $0xdf] sm:$0xff]
        %v5352 = vld [vmem:[#allocation2 + $0xe7] sm:$0xff]
        %v5353 = vld [vmem:[#allocation2 + $0xef] sm:$0xff]
        %v5354 = vld [vmem:[#allocation2 + $0xf7] sm:$0xff]
        %v5355 = vld [vmem:[#allocation2 + $0xff] sm:$0xff]
        %v5356 = vld [vmem:[#allocation2 + $0x107] sm:$0xff]
        %v5357 = vld [vmem:[#allocation2 + $0x10f] sm:$0xff]
        %v5358 = vld [vmem:[#allocation2 + $0x117] sm:$0xff]
        %v5359 = vld [vmem:[#allocation2 + $0x11f] sm:$0xff]
        %s5360 = scalar_lea.vmem [#allocation9], 16
        %v5361 = vld [vmem:[%s5360] sm:$0xff]
        %v5363 = vsel %vm4500, %v5324, 0
        %v5366 = vsel %vm4500, %v5325, 0
        %v5369 = vsel %vm4500, %v5326, 0
        %v5372 = vsel %vm4500, %v5327, 0
        %v5375 = vsel %vm4500, %v5328, 0
        %v5378 = vsel %vm4500, %v5329, 0
        %v5381 = vsel %vm4500, %v5330, 0
        %v5384 = vsel %vm4500, %v5331, 0
        %v5387 = vsel %vm4500, %v5332, 0
        %v5390 = vsel %vm4500, %v5333, 0
        %v5393 = vsel %vm4500, %v5334, 0
        %v5396 = vsel %vm4500, %v5335, 0
        %v5399 = vsel %vm4500, %v5336, 0
        %v5402 = vsel %vm4500, %v5337, 0
        %v5405 = vsel %vm4500, %v5338, 0
        %v5408 = vsel %vm4500, %v5339, 0
        %v5411 = vsel %vm4500, %v5340, 0
        %v5414 = vsel %vm4500, %v5341, 0
        %v5417 = vsel %vm4500, %v5342, 0
        %v5420 = vsel %vm4500, %v5343, 0
        %v5423 = vsel %vm4500, %v5344, 0
        %v5426 = vsel %vm4500, %v5345, 0
        %v5429 = vsel %vm4500, %v5346, 0
        %v5432 = vsel %vm4500, %v5347, 0
        %v5435 = vsel %vm4500, %v5348, 0
        %v5438 = vsel %vm4500, %v5349, 0
        %v5441 = vsel %vm4500, %v5350, 0
        %v5444 = vsel %vm4500, %v5351, 0
        %v5447 = vsel %vm4500, %v5352, 0
        %v5450 = vsel %vm4500, %v5353, 0
        %v5453 = vsel %vm4500, %v5354, 0
        %v5456 = vsel %vm4500, %v5355, 0
        %v5459 = vsel %vm4500, %v5356, 0
        %v5462 = vsel %vm4500, %v5357, 0
        %v5465 = vsel %vm4500, %v5358, 0
        %v5468 = vsel %vm4500, %v5359, 0
        %5470 = vmatprep.subr.mxu0 0.0
        %5471 = vmatpush1.msra.mxu0 %v5361
        %5472 = vmatprep.subr.mxu0 0.0
        %5473 = vmatpush1.msra.mxu0 0.0
        %5474 = vmatprep.subr.mxu0 0.0
        %5475 = vmatpush1.msra.mxu0 0.0
        %5476 = vmatprep.subr.mxu0 0.0
        %5477 = vmatpush1.msra.mxu0 0.0
        %5478 = vmatprep.subr.mxu0 0.0
        %5479 = vmatpush1.msra.mxu0 0.0
        %5480 = vmatprep.subr.mxu0 0.0
        %5481 = vmatpush1.msra.mxu0 0.0
        %5482 = vmatprep.subr.mxu0 0.0
        %5483 = vmatpush1.msra.mxu0 0.0
        %5484 = vmatprep.subr.mxu0 0.0
        %5485 = vmatpush1.msra.mxu0 0.0
        %5486 = vmatprep.subr.mxu0 0.0
        %5487 = vmatpush1.msra.mxu0 0.0
        %5488 = vmatprep.subr.mxu0 0.0
        %5489 = vmatpush1.msra.mxu0 0.0
        %5490 = vmatprep.subr.mxu0 0.0
        %5491 = vmatpush1.msra.mxu0 0.0
        %5492 = vmatprep.subr.mxu0 0.0
        %5493 = vmatpush1.msra.mxu0 0.0
        %5494 = vmatprep.subr.mxu0 0.0
        %5495 = vmatpush1.msra.mxu0 0.0
        %5496 = vmatprep.subr.mxu0 0.0
        %5497 = vmatpush1.msra.mxu0 0.0
        %5498 = vmatprep.subr.mxu0 0.0
        %5499 = vmatpush1.msra.mxu0 0.0
        %5500 = vmatprep.subr.mxu0 0.0
        %5501 = vmatpush1.msra.mxu0 0.0
        %5502 = vmatprep.subr.mxu0 0.0
        %5503 = vmatpush1.msra.mxu0 0.0
        %5504 = vmatprep.subr.mxu0 0.0
        %5505 = vmatpush1.msra.mxu0 0.0
        %5506 = vmatprep.subr.mxu0 0.0
        %5507 = vmatpush1.msra.mxu0 0.0
        %5508 = vmatprep.subr.mxu0 0.0
        %5509 = vmatpush1.msra.mxu0 0.0
        %5510 = vmatprep.subr.mxu0 0.0
        %5511 = vmatpush1.msra.mxu0 0.0
        %5512 = vmatprep.subr.mxu0 0.0
        %5513 = vmatpush1.msra.mxu0 0.0
        %5514 = vmatprep.subr.mxu0 0.0
        %5515 = vmatpush1.msra.mxu0 0.0
        %5516 = vmatprep.subr.mxu0 0.0
        %5517 = vmatpush1.msra.mxu0 0.0
        %5518 = vmatprep.subr.mxu0 0.0
        %5519 = vmatpush1.msra.mxu0 0.0
        %5520 = vmatprep.subr.mxu0 0.0
        %5521 = vmatpush1.msra.mxu0 0.0
        %5522 = vmatprep.subr.mxu0 0.0
        %5523 = vmatpush1.msra.mxu0 0.0
        %5524 = vmatprep.subr.mxu0 0.0
        %5525 = vmatpush1.msra.mxu0 0.0
        %5526 = vmatprep.subr.mxu0 0.0
        %5527 = vmatpush1.msra.mxu0 0.0
        %5528 = vmatprep.subr.mxu0 0.0
        %5529 = vmatpush1.msra.mxu0 0.0
        %5530 = vmatprep.subr.mxu0 0.0
        %5531 = vmatpush1.msra.mxu0 0.0
        %5532 = vmatprep.subr.mxu0 0.0
        %5533 = vmatpush1.msra.mxu0 0.0
        %5534 = vmatprep.mubr.f32.mxu0 0.0
        %5535 = vmatmul.mubr.f32.gmra.mrb[0].mxu0 %v5363
        %v5536 = vpop.f32.mrb[0].mxu0
        %v5537 = vadd.f32 0.0, %v5536
        %v5538 = vpop.f32.mrb[0].mxu0
        %5539 = vmatprep.mubr.f32.mxu0 0.0
        %5540 = vmatmul.mubr.f32.gmra.mrb[0].mxu0 %v5366
        %v5541 = vpop.f32.mrb[0].mxu0
        %v5542 = vadd.f32 0.0, %v5541
        %v5543 = vpop.f32.mrb[0].mxu0
        %5544 = vmatprep.mubr.f32.mxu0 0.0
        %5545 = vmatmul.mubr.f32.gmra.mrb[0].mxu0 %v5369
        %v5546 = vpop.f32.mrb[0].mxu0
        %v5547 = vadd.f32 0.0, %v5546
        %v5548 = vpop.f32.mrb[0].mxu0
        %5549 = vmatprep.mubr.f32.mxu0 0.0
        %5550 = vmatmul.mubr.f32.gmra.mrb[0].mxu0 %v5372
        %v5551 = vpop.f32.mrb[0].mxu0
        %v5552 = vadd.f32 0.0, %v5551
        %v5553 = vpop.f32.mrb[0].mxu0
        %5554 = vmatprep.mubr.f32.mxu0 0.0
        %5555 = vmatmul.mubr.f32.gmra.mrb[0].mxu0 %v5375
        %v5556 = vpop.f32.mrb[0].mxu0
        %v5557 = vadd.f32 0.0, %v5556
        %v5558 = vpop.f32.mrb[0].mxu0
        %5559 = vmatprep.mubr.f32.mxu0 0.0
        %5560 = vmatmul.mubr.f32.gmra.mrb[0].mxu0 %v5378
        %v5561 = vpop.f32.mrb[0].mxu0
        %v5562 = vadd.f32 0.0, %v5561
        %v5563 = vpop.f32.mrb[0].mxu0
        %5564 = vmatprep.mubr.f32.mxu0 0.0
        %5565 = vmatmul.mubr.f32.gmra.mrb[0].mxu0 %v5381
        %v5566 = vpop.f32.mrb[0].mxu0
        %v5567 = vadd.f32 0.0, %v5566
        %v5568 = vpop.f32.mrb[0].mxu0
        %5569 = vmatprep.mubr.f32.mxu0 0.0
        %5570 = vmatmul.mubr.f32.gmra.mrb[0].mxu0 %v5384
        %v5571 = vpop.f32.mrb[0].mxu0
        %v5572 = vadd.f32 0.0, %v5571
        %v5573 = vpop.f32.mrb[0].mxu0
        %5574 = vmatprep.mubr.f32.mxu0 0.0
        %5575 = vmatmul.mubr.f32.gmra.mrb[0].mxu0 %v5387
        %v5576 = vpop.f32.mrb[0].mxu0
        %v5577 = vadd.f32 0.0, %v5576
        %v5578 = vpop.f32.mrb[0].mxu0
        %5579 = vmatprep.mubr.f32.mxu0 0.0
        %5580 = vmatmul.mubr.f32.gmra.mrb[0].mxu0 %v5390
        %v5581 = vpop.f32.mrb[0].mxu0
        %v5582 = vadd.f32 0.0, %v5581
        %v5583 = vpop.f32.mrb[0].mxu0
        %5584 = vmatprep.mubr.f32.mxu0 0.0
        %5585 = vmatmul.mubr.f32.gmra.mrb[0].mxu0 %v5393
        %v5586 = vpop.f32.mrb[0].mxu0
        %v5587 = vadd.f32 0.0, %v5586
        %v5588 = vpop.f32.mrb[0].mxu0
        %5589 = vmatprep.mubr.f32.mxu0 0.0
        %5590 = vmatmul.mubr.f32.gmra.mrb[0].mxu0 %v5396
        %v5591 = vpop.f32.mrb[0].mxu0
        %v5592 = vadd.f32 0.0, %v5591
        %v5593 = vpop.f32.mrb[0].mxu0
        %5594 = vmatprep.mubr.f32.mxu0 0.0
        %5595 = vmatmul.mubr.f32.gmra.mrb[0].mxu0 %v5399
        %v5596 = vpop.f32.mrb[0].mxu0
        %v5597 = vadd.f32 0.0, %v5596
        %v5598 = vpop.f32.mrb[0].mxu0
        %5599 = vmatprep.mubr.f32.mxu0 0.0
        %5600 = vmatmul.mubr.f32.gmra.mrb[0].mxu0 %v5402
        %v5601 = vpop.f32.mrb[0].mxu0
        %v5602 = vadd.f32 0.0, %v5601
        %v5603 = vpop.f32.mrb[0].mxu0
        %5604 = vmatprep.mubr.f32.mxu0 0.0
        %5605 = vmatmul.mubr.f32.gmra.mrb[0].mxu0 %v5405
        %v5606 = vpop.f32.mrb[0].mxu0
        %v5607 = vadd.f32 0.0, %v5606
        %v5608 = vpop.f32.mrb[0].mxu0
        %5609 = vmatprep.mubr.f32.mxu0 0.0
        %5610 = vmatmul.mubr.f32.gmra.mrb[0].mxu0 %v5408
        %v5611 = vpop.f32.mrb[0].mxu0
        %v5612 = vadd.f32 0.0, %v5611
        %v5613 = vpop.f32.mrb[0].mxu0
        %5614 = vmatprep.mubr.f32.mxu0 0.0
        %5615 = vmatmul.mubr.f32.gmra.mrb[0].mxu0 %v5411
        %v5616 = vpop.f32.mrb[0].mxu0
        %v5617 = vadd.f32 0.0, %v5616
        %v5618 = vpop.f32.mrb[0].mxu0
        %5619 = vmatprep.mubr.f32.mxu0 0.0
        %5620 = vmatmul.mubr.f32.gmra.mrb[0].mxu0 %v5414
        %v5621 = vpop.f32.mrb[0].mxu0
        %v5622 = vadd.f32 0.0, %v5621
        %v5623 = vpop.f32.mrb[0].mxu0
        %5624 = vmatprep.mubr.f32.mxu0 0.0
        %5625 = vmatmul.mubr.f32.gmra.mrb[0].mxu0 %v5417
        %v5626 = vpop.f32.mrb[0].mxu0
        %v5627 = vadd.f32 0.0, %v5626
        %v5628 = vpop.f32.mrb[0].mxu0
        %5629 = vmatprep.mubr.f32.mxu0 0.0
        %5630 = vmatmul.mubr.f32.gmra.mrb[0].mxu0 %v5420
        %v5631 = vpop.f32.mrb[0].mxu0
        %v5632 = vadd.f32 0.0, %v5631
        %v5633 = vpop.f32.mrb[0].mxu0
        %5634 = vmatprep.mubr.f32.mxu0 0.0
        %5635 = vmatmul.mubr.f32.gmra.mrb[0].mxu0 %v5423
        %v5636 = vpop.f32.mrb[0].mxu0
        %v5637 = vadd.f32 0.0, %v5636
        %v5638 = vpop.f32.mrb[0].mxu0
        %5639 = vmatprep.mubr.f32.mxu0 0.0
        %5640 = vmatmul.mubr.f32.gmra.mrb[0].mxu0 %v5426
        %v5641 = vpop.f32.mrb[0].mxu0
        %v5642 = vadd.f32 0.0, %v5641
        %v5643 = vpop.f32.mrb[0].mxu0
        %5644 = vmatprep.mubr.f32.mxu0 0.0
        %5645 = vmatmul.mubr.f32.gmra.mrb[0].mxu0 %v5429
        %v5646 = vpop.f32.mrb[0].mxu0
        %v5647 = vadd.f32 0.0, %v5646
        %v5648 = vpop.f32.mrb[0].mxu0
        %5649 = vmatprep.mubr.f32.mxu0 0.0
        %5650 = vmatmul.mubr.f32.gmra.mrb[0].mxu0 %v5432
        %v5651 = vpop.f32.mrb[0].mxu0
        %v5652 = vadd.f32 0.0, %v5651
        %v5653 = vpop.f32.mrb[0].mxu0
        %5654 = vmatprep.mubr.f32.mxu0 0.0
        %5655 = vmatmul.mubr.f32.gmra.mrb[0].mxu0 %v5435
        %v5656 = vpop.f32.mrb[0].mxu0
        %v5657 = vadd.f32 0.0, %v5656
        %v5658 = vpop.f32.mrb[0].mxu0
        %5659 = vmatprep.mubr.f32.mxu0 0.0
        %5660 = vmatmul.mubr.f32.gmra.mrb[0].mxu0 %v5438
        %v5661 = vpop.f32.mrb[0].mxu0
        %v5662 = vadd.f32 0.0, %v5661
        %v5663 = vpop.f32.mrb[0].mxu0
        %5664 = vmatprep.mubr.f32.mxu0 0.0
        %5665 = vmatmul.mubr.f32.gmra.mrb[0].mxu0 %v5441
        %v5666 = vpop.f32.mrb[0].mxu0
        %v5667 = vadd.f32 0.0, %v5666
        %v5668 = vpop.f32.mrb[0].mxu0
        %5669 = vmatprep.mubr.f32.mxu0 0.0
        %5670 = vmatmul.mubr.f32.gmra.mrb[0].mxu0 %v5444
        %v5671 = vpop.f32.mrb[0].mxu0
        %v5672 = vadd.f32 0.0, %v5671
        %v5673 = vpop.f32.mrb[0].mxu0
        %5674 = vmatprep.mubr.f32.mxu0 0.0
        %5675 = vmatmul.mubr.f32.gmra.mrb[0].mxu0 %v5447
        %v5676 = vpop.f32.mrb[0].mxu0
        %v5677 = vadd.f32 0.0, %v5676
        %v5678 = vpop.f32.mrb[0].mxu0
        %5679 = vmatprep.mubr.f32.mxu0 0.0
        %5680 = vmatmul.mubr.f32.gmra.mrb[0].mxu0 %v5450
        %v5681 = vpop.f32.mrb[0].mxu0
        %v5682 = vadd.f32 0.0, %v5681
        %v5683 = vpop.f32.mrb[0].mxu0
        %5684 = vmatprep.mubr.f32.mxu0 0.0
        %5685 = vmatmul.mubr.f32.gmra.mrb[0].mxu0 %v5453
        %v5686 = vpop.f32.mrb[0].mxu0
        %v5687 = vadd.f32 0.0, %v5686
        %v5688 = vpop.f32.mrb[0].mxu0
        %5689 = vmatprep.mubr.f32.mxu0 0.0
        %5690 = vmatmul.mubr.f32.gmra.mrb[0].mxu0 %v5456
        %v5691 = vpop.f32.mrb[0].mxu0
        %v5692 = vadd.f32 0.0, %v5691
        %v5693 = vpop.f32.mrb[0].mxu0
        %5694 = vmatprep.mubr.f32.mxu0 0.0
        %5695 = vmatmul.mubr.f32.gmra.mrb[0].mxu0 %v5459
        %v5696 = vpop.f32.mrb[0].mxu0
        %v5697 = vadd.f32 0.0, %v5696
        %v5698 = vpop.f32.mrb[0].mxu0
        %5699 = vmatprep.mubr.f32.mxu0 0.0
        %5700 = vmatmul.mubr.f32.gmra.mrb[0].mxu0 %v5462
        %v5701 = vpop.f32.mrb[0].mxu0
        %v5702 = vadd.f32 0.0, %v5701
        %v5703 = vpop.f32.mrb[0].mxu0
        %5704 = vmatprep.mubr.f32.mxu0 0.0
        %5705 = vmatmul.mubr.f32.gmra.mrb[0].mxu0 %v5465
        %v5706 = vpop.f32.mrb[0].mxu0
        %v5707 = vadd.f32 0.0, %v5706
        %v5708 = vpop.f32.mrb[0].mxu0
        %5709 = vmatprep.mubr.f32.mxu0 0.0
        %5710 = vmatmul.mubr.f32.gmra.mrb[0].mxu0 %v5468
        %v5711 = vpop.f32.mrb[0].mxu0
        %v5712 = vadd.f32 0.0, %v5711
        %v5713 = vpop.f32.mrb[0].mxu0
        %5714 = vdwg.mxu0
        %v5715 = vadd.f32 %v5146, %v5537
        %v5716 = vadd.f32 %v5151, %v5542
        %v5717 = vadd.f32 %v5156, %v5547
        %v5718 = vadd.f32 %v5161, %v5552
        %v5719 = vadd.f32 %v5166, %v5557
        %v5720 = vadd.f32 %v5171, %v5562
        %v5721 = vadd.f32 %v5176, %v5567
        %v5722 = vadd.f32 %v5181, %v5572
        %v5723 = vadd.f32 %v5186, %v5577
        %v5724 = vadd.f32 %v5191, %v5582
        %v5725 = vadd.f32 %v5196, %v5587
        %v5726 = vadd.f32 %v5201, %v5592
        %v5727 = vadd.f32 %v5206, %v5597
        %v5728 = vadd.f32 %v5211, %v5602
        %v5729 = vadd.f32 %v5216, %v5607
        %v5730 = vadd.f32 %v5221, %v5612
        %v5731 = vadd.f32 %v5226, %v5617
        %v5732 = vadd.f32 %v5231, %v5622
        %v5733 = vadd.f32 %v5236, %v5627
        %v5734 = vadd.f32 %v5241, %v5632
        %v5735 = vadd.f32 %v5246, %v5637
        %v5736 = vadd.f32 %v5251, %v5642
        %v5737 = vadd.f32 %v5256, %v5647
        %v5738 = vadd.f32 %v5261, %v5652
        %v5739 = vadd.f32 %v5266, %v5657
        %v5740 = vadd.f32 %v5271, %v5662
        %v5741 = vadd.f32 %v5276, %v5667
        %v5742 = vadd.f32 %v5281, %v5672
        %v5743 = vadd.f32 %v5286, %v5677
        %v5744 = vadd.f32 %v5291, %v5682
        %v5745 = vadd.f32 %v5296, %v5687
        %v5746 = vadd.f32 %v5301, %v5692
        %v5747 = vadd.f32 %v5306, %v5697
        %v5748 = vadd.f32 %v5311, %v5702
        %v5749 = vadd.f32 %v5316, %v5707
        %v5750 = vadd.f32 %v5321, %v5712
        %v5751 = vld [vmem:[#allocation2 + $0x17] sm:$0xff]
        %v5752 = vld [vmem:[#allocation2 + $0x1f] sm:$0xff]
        %v5753 = vld [vmem:[#allocation2 + $0x27] sm:$0xff]
        %v5754 = vld [vmem:[#allocation2 + $0x2f] sm:$0xff]
        %v5755 = vld [vmem:[#allocation2 + $0x37] sm:$0xff]
        %v5756 = vld [vmem:[#allocation2 + $0x3f] sm:$0xff]
        %v5757 = vld [vmem:[#allocation2 + $0x47] sm:$0xff]
        %v5758 = vld [vmem:[#allocation2 + $0x4f] sm:$0xff]
        %v5759 = vld [vmem:[#allocation2 + $0x57] sm:$0xff]
        %v5760 = vld [vmem:[#allocation2 + $0x5f] sm:$0xff]
        %v5761 = vld [vmem:[#allocation2 + $0x67] sm:$0xff]
        %v5762 = vld [vmem:[#allocation2 + $0x6f] sm:$0xff]
        %v5763 = vld [vmem:[#allocation2 + $0x77] sm:$0xff]
        %v5764 = vld [vmem:[#allocation2 + $0x7f] sm:$0xff]
        %v5765 = vld [vmem:[#allocation2 + $0x87] sm:$0xff]
        %v5766 = vld [vmem:[#allocation2 + $0x8f] sm:$0xff]
        %v5767 = vld [vmem:[#allocation2 + $0x97] sm:$0xff]
        %v5768 = vld [vmem:[#allocation2 + $0x9f] sm:$0xff]
        %v5769 = vld [vmem:[#allocation2 + $0xa7] sm:$0xff]
        %v5770 = vld [vmem:[#allocation2 + $0xaf] sm:$0xff]
        %v5771 = vld [vmem:[#allocation2 + $0xb7] sm:$0xff]
        %v5772 = vld [vmem:[#allocation2 + $0xbf] sm:$0xff]
        %v5773 = vld [vmem:[#allocation2 + $0xc7] sm:$0xff]
        %v5774 = vld [vmem:[#allocation2 + $0xcf] sm:$0xff]
        %v5775 = vld [vmem:[#allocation2 + $0xd7] sm:$0xff]
        %v5776 = vld [vmem:[#allocation2 + $0xdf] sm:$0xff]
        %v5777 = vld [vmem:[#allocation2 + $0xe7] sm:$0xff]
        %v5778 = vld [vmem:[#allocation2 + $0xef] sm:$0xff]
        %v5779 = vld [vmem:[#allocation2 + $0xf7] sm:$0xff]
        %v5780 = vld [vmem:[#allocation2 + $0xff] sm:$0xff]
        %v5781 = vld [vmem:[#allocation2 + $0x107] sm:$0xff]
        %v5782 = vld [vmem:[#allocation2 + $0x10f] sm:$0xff]
        %v5783 = vld [vmem:[#allocation2 + $0x117] sm:$0xff]
        %v5784 = vld [vmem:[#allocation2 + $0x11f] sm:$0xff]
        %v5785 = vld [vmem:[#allocation2 + $0x127] sm:$0xff]
        %v5786 = vld [vmem:[#allocation2 + $0x12f] sm:$0xff]
        %s5787 = scalar_lea.vmem [#allocation9], 24
        %v5788 = vld [vmem:[%s5787] sm:$0xff]
        %v5790 = vsel %vm4500, %v5751, 0
        %v5793 = vsel %vm4500, %v5752, 0
        %v5796 = vsel %vm4500, %v5753, 0
        %v5799 = vsel %vm4500, %v5754, 0
        %v5802 = vsel %vm4500, %v5755, 0
        %v5805 = vsel %vm4500, %v5756, 0
        %v5808 = vsel %vm4500, %v5757, 0
        %v5811 = vsel %vm4500, %v5758, 0
        %v5814 = vsel %vm4500, %v5759, 0
        %v5817 = vsel %vm4500, %v5760, 0
        %v5820 = vsel %vm4500, %v5761, 0
        %v5823 = vsel %vm4500, %v5762, 0
        %v5826 = vsel %vm4500, %v5763, 0
        %v5829 = vsel %vm4500, %v5764, 0
        %v5832 = vsel %vm4500, %v5765, 0
        %v5835 = vsel %vm4500, %v5766, 0
        %v5838 = vsel %vm4500, %v5767, 0
        %v5841 = vsel %vm4500, %v5768, 0
        %v5844 = vsel %vm4500, %v5769, 0
        %v5847 = vsel %vm4500, %v5770, 0
        %v5850 = vsel %vm4500, %v5771, 0
        %v5853 = vsel %vm4500, %v5772, 0
        %v5856 = vsel %vm4500, %v5773, 0
        %v5859 = vsel %vm4500, %v5774, 0
        %v5862 = vsel %vm4500, %v5775, 0
        %v5865 = vsel %vm4500, %v5776, 0
        %v5868 = vsel %vm4500, %v5777, 0
        %v5871 = vsel %vm4500, %v5778, 0
        %v5874 = vsel %vm4500, %v5779, 0
        %v5877 = vsel %vm4500, %v5780, 0
        %v5880 = vsel %vm4500, %v5781, 0
        %v5883 = vsel %vm4500, %v5782, 0
        %v5886 = vsel %vm4500, %v5783, 0
        %v5889 = vsel %vm4500, %v5784, 0
        %v5892 = vsel %vm4500, %v5785, 0
        %v5895 = vsel %vm4500, %v5786, 0
        %5897 = vmatprep.subr.mxu0 0.0
        %5898 = vmatpush1.msra.mxu0 %v5788
        %5899 = vmatprep.subr.mxu0 0.0
        %5900 = vmatpush1.msra.mxu0 0.0
        %5901 = vmatprep.subr.mxu0 0.0
        %5902 = vmatpush1.msra.mxu0 0.0
        %5903 = vmatprep.subr.mxu0 0.0
        %5904 = vmatpush1.msra.mxu0 0.0
        %5905 = vmatprep.subr.mxu0 0.0
        %5906 = vmatpush1.msra.mxu0 0.0
        %5907 = vmatprep.subr.mxu0 0.0
        %5908 = vmatpush1.msra.mxu0 0.0
        %5909 = vmatprep.subr.mxu0 0.0
        %5910 = vmatpush1.msra.mxu0 0.0
        %5911 = vmatprep.subr.mxu0 0.0
        %5912 = vmatpush1.msra.mxu0 0.0
        %5913 = vmatprep.subr.mxu0 0.0
        %5914 = vmatpush1.msra.mxu0 0.0
        %5915 = vmatprep.subr.mxu0 0.0
        %5916 = vmatpush1.msra.mxu0 0.0
        %5917 = vmatprep.subr.mxu0 0.0
        %5918 = vmatpush1.msra.mxu0 0.0
        %5919 = vmatprep.subr.mxu0 0.0
        %5920 = vmatpush1.msra.mxu0 0.0
        %5921 = vmatprep.subr.mxu0 0.0
        %5922 = vmatpush1.msra.mxu0 0.0
        %5923 = vmatprep.subr.mxu0 0.0
        %5924 = vmatpush1.msra.mxu0 0.0
        %5925 = vmatprep.subr.mxu0 0.0
        %5926 = vmatpush1.msra.mxu0 0.0
        %5927 = vmatprep.subr.mxu0 0.0
        %5928 = vmatpush1.msra.mxu0 0.0
        %5929 = vmatprep.subr.mxu0 0.0
        %5930 = vmatpush1.msra.mxu0 0.0
        %5931 = vmatprep.subr.mxu0 0.0
        %5932 = vmatpush1.msra.mxu0 0.0
        %5933 = vmatprep.subr.mxu0 0.0
        %5934 = vmatpush1.msra.mxu0 0.0
        %5935 = vmatprep.subr.mxu0 0.0
        %5936 = vmatpush1.msra.mxu0 0.0
        %5937 = vmatprep.subr.mxu0 0.0
        %5938 = vmatpush1.msra.mxu0 0.0
        %5939 = vmatprep.subr.mxu0 0.0
        %5940 = vmatpush1.msra.mxu0 0.0
        %5941 = vmatprep.subr.mxu0 0.0
        %5942 = vmatpush1.msra.mxu0 0.0
        %5943 = vmatprep.subr.mxu0 0.0
        %5944 = vmatpush1.msra.mxu0 0.0
        %5945 = vmatprep.subr.mxu0 0.0
        %5946 = vmatpush1.msra.mxu0 0.0
        %5947 = vmatprep.subr.mxu0 0.0
        %5948 = vmatpush1.msra.mxu0 0.0
        %5949 = vmatprep.subr.mxu0 0.0
        %5950 = vmatpush1.msra.mxu0 0.0
        %5951 = vmatprep.subr.mxu0 0.0
        %5952 = vmatpush1.msra.mxu0 0.0
        %5953 = vmatprep.subr.mxu0 0.0
        %5954 = vmatpush1.msra.mxu0 0.0
        %5955 = vmatprep.subr.mxu0 0.0
        %5956 = vmatpush1.msra.mxu0 0.0
        %5957 = vmatprep.subr.mxu0 0.0
        %5958 = vmatpush1.msra.mxu0 0.0
        %5959 = vmatprep.subr.mxu0 0.0
        %5960 = vmatpush1.msra.mxu0 0.0
        %5961 = vmatprep.mubr.f32.mxu0 0.0
        %5962 = vmatmul.mubr.f32.gmra.mrb[0].mxu0 %v5790
        %v5963 = vpop.f32.mrb[0].mxu0
        %v5964 = vadd.f32 0.0, %v5963
        %v5965 = vpop.f32.mrb[0].mxu0
        %5966 = vmatprep.mubr.f32.mxu0 0.0
        %5967 = vmatmul.mubr.f32.gmra.mrb[0].mxu0 %v5793
        %v5968 = vpop.f32.mrb[0].mxu0
        %v5969 = vadd.f32 0.0, %v5968
        %v5970 = vpop.f32.mrb[0].mxu0
        %5971 = vmatprep.mubr.f32.mxu0 0.0
        %5972 = vmatmul.mubr.f32.gmra.mrb[0].mxu0 %v5796
        %v5973 = vpop.f32.mrb[0].mxu0
        %v5974 = vadd.f32 0.0, %v5973
        %v5975 = vpop.f32.mrb[0].mxu0
        %5976 = vmatprep.mubr.f32.mxu0 0.0
        %5977 = vmatmul.mubr.f32.gmra.mrb[0].mxu0 %v5799
        %v5978 = vpop.f32.mrb[0].mxu0
        %v5979 = vadd.f32 0.0, %v5978
        %v5980 = vpop.f32.mrb[0].mxu0
        %5981 = vmatprep.mubr.f32.mxu0 0.0
        %5982 = vmatmul.mubr.f32.gmra.mrb[0].mxu0 %v5802
        %v5983 = vpop.f32.mrb[0].mxu0
        %v5984 = vadd.f32 0.0, %v5983
        %v5985 = vpop.f32.mrb[0].mxu0
        %5986 = vmatprep.mubr.f32.mxu0 0.0
        %5987 = vmatmul.mubr.f32.gmra.mrb[0].mxu0 %v5805
        %v5988 = vpop.f32.mrb[0].mxu0
        %v5989 = vadd.f32 0.0, %v5988
        %v5990 = vpop.f32.mrb[0].mxu0
        %5991 = vmatprep.mubr.f32.mxu0 0.0
        %5992 = vmatmul.mubr.f32.gmra.mrb[0].mxu0 %v5808
        %v5993 = vpop.f32.mrb[0].mxu0
        %v5994 = vadd.f32 0.0, %v5993
        %v5995 = vpop.f32.mrb[0].mxu0
        %5996 = vmatprep.mubr.f32.mxu0 0.0
        %5997 = vmatmul.mubr.f32.gmra.mrb[0].mxu0 %v5811
        %v5998 = vpop.f32.mrb[0].mxu0
        %v5999 = vadd.f32 0.0, %v5998
        %v6000 = vpop.f32.mrb[0].mxu0
        %6001 = vmatprep.mubr.f32.mxu0 0.0
        %6002 = vmatmul.mubr.f32.gmra.mrb[0].mxu0 %v5814
        %v6003 = vpop.f32.mrb[0].mxu0
        %v6004 = vadd.f32 0.0, %v6003
        %v6005 = vpop.f32.mrb[0].mxu0
        %6006 = vmatprep.mubr.f32.mxu0 0.0
        %6007 = vmatmul.mubr.f32.gmra.mrb[0].mxu0 %v5817
        %v6008 = vpop.f32.mrb[0].mxu0
        %v6009 = vadd.f32 0.0, %v6008
        %v6010 = vpop.f32.mrb[0].mxu0
        %6011 = vmatprep.mubr.f32.mxu0 0.0
        %6012 = vmatmul.mubr.f32.gmra.mrb[0].mxu0 %v5820
        %v6013 = vpop.f32.mrb[0].mxu0
        %v6014 = vadd.f32 0.0, %v6013
        %v6015 = vpop.f32.mrb[0].mxu0
        %6016 = vmatprep.mubr.f32.mxu0 0.0
        %6017 = vmatmul.mubr.f32.gmra.mrb[0].mxu0 %v5823
        %v6018 = vpop.f32.mrb[0].mxu0
        %v6019 = vadd.f32 0.0, %v6018
        %v6020 = vpop.f32.mrb[0].mxu0
        %6021 = vmatprep.mubr.f32.mxu0 0.0
        %6022 = vmatmul.mubr.f32.gmra.mrb[0].mxu0 %v5826
        %v6023 = vpop.f32.mrb[0].mxu0
        %v6024 = vadd.f32 0.0, %v6023
        %v6025 = vpop.f32.mrb[0].mxu0
        %6026 = vmatprep.mubr.f32.mxu0 0.0
        %6027 = vmatmul.mubr.f32.gmra.mrb[0].mxu0 %v5829
        %v6028 = vpop.f32.mrb[0].mxu0
        %v6029 = vadd.f32 0.0, %v6028
        %v6030 = vpop.f32.mrb[0].mxu0
        %6031 = vmatprep.mubr.f32.mxu0 0.0
        %6032 = vmatmul.mubr.f32.gmra.mrb[0].mxu0 %v5832
        %v6033 = vpop.f32.mrb[0].mxu0
        %v6034 = vadd.f32 0.0, %v6033
        %v6035 = vpop.f32.mrb[0].mxu0
        %6036 = vmatprep.mubr.f32.mxu0 0.0
        %6037 = vmatmul.mubr.f32.gmra.mrb[0].mxu0 %v5835
        %v6038 = vpop.f32.mrb[0].mxu0
        %v6039 = vadd.f32 0.0, %v6038
        %v6040 = vpop.f32.mrb[0].mxu0
        %6041 = vmatprep.mubr.f32.mxu0 0.0
        %6042 = vmatmul.mubr.f32.gmra.mrb[0].mxu0 %v5838
        %v6043 = vpop.f32.mrb[0].mxu0
        %v6044 = vadd.f32 0.0, %v6043
        %v6045 = vpop.f32.mrb[0].mxu0
        %6046 = vmatprep.mubr.f32.mxu0 0.0
        %6047 = vmatmul.mubr.f32.gmra.mrb[0].mxu0 %v5841
        %v6048 = vpop.f32.mrb[0].mxu0
        %v6049 = vadd.f32 0.0, %v6048
        %v6050 = vpop.f32.mrb[0].mxu0
        %6051 = vmatprep.mubr.f32.mxu0 0.0
        %6052 = vmatmul.mubr.f32.gmra.mrb[0].mxu0 %v5844
        %v6053 = vpop.f32.mrb[0].mxu0
        %v6054 = vadd.f32 0.0, %v6053
        %v6055 = vpop.f32.mrb[0].mxu0
        %6056 = vmatprep.mubr.f32.mxu0 0.0
        %6057 = vmatmul.mubr.f32.gmra.mrb[0].mxu0 %v5847
        %v6058 = vpop.f32.mrb[0].mxu0
        %v6059 = vadd.f32 0.0, %v6058
        %v6060 = vpop.f32.mrb[0].mxu0
        %6061 = vmatprep.mubr.f32.mxu0 0.0
        %6062 = vmatmul.mubr.f32.gmra.mrb[0].mxu0 %v5850
        %v6063 = vpop.f32.mrb[0].mxu0
        %v6064 = vadd.f32 0.0, %v6063
        %v6065 = vpop.f32.mrb[0].mxu0
        %6066 = vmatprep.mubr.f32.mxu0 0.0
        %6067 = vmatmul.mubr.f32.gmra.mrb[0].mxu0 %v5853
        %v6068 = vpop.f32.mrb[0].mxu0
        %v6069 = vadd.f32 0.0, %v6068
        %v6070 = vpop.f32.mrb[0].mxu0
        %6071 = vmatprep.mubr.f32.mxu0 0.0
        %6072 = vmatmul.mubr.f32.gmra.mrb[0].mxu0 %v5856
        %v6073 = vpop.f32.mrb[0].mxu0
        %v6074 = vadd.f32 0.0, %v6073
        %v6075 = vpop.f32.mrb[0].mxu0
        %6076 = vmatprep.mubr.f32.mxu0 0.0
        %6077 = vmatmul.mubr.f32.gmra.mrb[0].mxu0 %v5859
        %v6078 = vpop.f32.mrb[0].mxu0
        %v6079 = vadd.f32 0.0, %v6078
        %v6080 = vpop.f32.mrb[0].mxu0
        %6081 = vmatprep.mubr.f32.mxu0 0.0
        %6082 = vmatmul.mubr.f32.gmra.mrb[0].mxu0 %v5862
        %v6083 = vpop.f32.mrb[0].mxu0
        %v6084 = vadd.f32 0.0, %v6083
        %v6085 = vpop.f32.mrb[0].mxu0
        %6086 = vmatprep.mubr.f32.mxu0 0.0
        %6087 = vmatmul.mubr.f32.gmra.mrb[0].mxu0 %v5865
        %v6088 = vpop.f32.mrb[0].mxu0
        %v6089 = vadd.f32 0.0, %v6088
        %v6090 = vpop.f32.mrb[0].mxu0
        %6091 = vmatprep.mubr.f32.mxu0 0.0
        %6092 = vmatmul.mubr.f32.gmra.mrb[0].mxu0 %v5868
        %v6093 = vpop.f32.mrb[0].mxu0
        %v6094 = vadd.f32 0.0, %v6093
        %v6095 = vpop.f32.mrb[0].mxu0
        %6096 = vmatprep.mubr.f32.mxu0 0.0
        %6097 = vmatmul.mubr.f32.gmra.mrb[0].mxu0 %v5871
        %v6098 = vpop.f32.mrb[0].mxu0
        %v6099 = vadd.f32 0.0, %v6098
        %v6100 = vpop.f32.mrb[0].mxu0
        %6101 = vmatprep.mubr.f32.mxu0 0.0
        %6102 = vmatmul.mubr.f32.gmra.mrb[0].mxu0 %v5874
        %v6103 = vpop.f32.mrb[0].mxu0
        %v6104 = vadd.f32 0.0, %v6103
        %v6105 = vpop.f32.mrb[0].mxu0
        %6106 = vmatprep.mubr.f32.mxu0 0.0
        %6107 = vmatmul.mubr.f32.gmra.mrb[0].mxu0 %v5877
        %v6108 = vpop.f32.mrb[0].mxu0
        %v6109 = vadd.f32 0.0, %v6108
        %v6110 = vpop.f32.mrb[0].mxu0
        %6111 = vmatprep.mubr.f32.mxu0 0.0
        %6112 = vmatmul.mubr.f32.gmra.mrb[0].mxu0 %v5880
        %v6113 = vpop.f32.mrb[0].mxu0
        %v6114 = vadd.f32 0.0, %v6113
        %v6115 = vpop.f32.mrb[0].mxu0
        %6116 = vmatprep.mubr.f32.mxu0 0.0
        %6117 = vmatmul.mubr.f32.gmra.mrb[0].mxu0 %v5883
        %v6118 = vpop.f32.mrb[0].mxu0
        %v6119 = vadd.f32 0.0, %v6118
        %v6120 = vpop.f32.mrb[0].mxu0
        %6121 = vmatprep.mubr.f32.mxu0 0.0
        %6122 = vmatmul.mubr.f32.gmra.mrb[0].mxu0 %v5886
        %v6123 = vpop.f32.mrb[0].mxu0
        %v6124 = vadd.f32 0.0, %v6123
        %v6125 = vpop.f32.mrb[0].mxu0
        %6126 = vmatprep.mubr.f32.mxu0 0.0
        %6127 = vmatmul.mubr.f32.gmra.mrb[0].mxu0 %v5889
        %v6128 = vpop.f32.mrb[0].mxu0
        %v6129 = vadd.f32 0.0, %v6128
        %v6130 = vpop.f32.mrb[0].mxu0
        %6131 = vmatprep.mubr.f32.mxu0 0.0
        %6132 = vmatmul.mubr.f32.gmra.mrb[0].mxu0 %v5892
        %v6133 = vpop.f32.mrb[0].mxu0
        %v6134 = vadd.f32 0.0, %v6133
        %v6135 = vpop.f32.mrb[0].mxu0
        %6136 = vmatprep.mubr.f32.mxu0 0.0
        %6137 = vmatmul.mubr.f32.gmra.mrb[0].mxu0 %v5895
        %v6138 = vpop.f32.mrb[0].mxu0
        %v6139 = vadd.f32 0.0, %v6138
        %v6140 = vpop.f32.mrb[0].mxu0
        %6141 = vdwg.mxu0
        %v6142 = vadd.f32 %v5715, %v5964
        %v6143 = vadd.f32 %v5716, %v5969
        %v6144 = vadd.f32 %v5717, %v5974
        %v6145 = vadd.f32 %v5718, %v5979
        %v6146 = vadd.f32 %v5719, %v5984
        %v6147 = vadd.f32 %v5720, %v5989
        %v6148 = vadd.f32 %v5721, %v5994
        %v6149 = vadd.f32 %v5722, %v5999
        %v6150 = vadd.f32 %v5723, %v6004
        %v6151 = vadd.f32 %v5724, %v6009
        %v6152 = vadd.f32 %v5725, %v6014
        %v6153 = vadd.f32 %v5726, %v6019
        %v6154 = vadd.f32 %v5727, %v6024
        %v6155 = vadd.f32 %v5728, %v6029
        %v6156 = vadd.f32 %v5729, %v6034
        %v6157 = vadd.f32 %v5730, %v6039
        %v6158 = vadd.f32 %v5731, %v6044
        %v6159 = vadd.f32 %v5732, %v6049
        %v6160 = vadd.f32 %v5733, %v6054
        %v6161 = vadd.f32 %v5734, %v6059
        %v6162 = vadd.f32 %v5735, %v6064
        %v6163 = vadd.f32 %v5736, %v6069
        %v6164 = vadd.f32 %v5737, %v6074
        %v6165 = vadd.f32 %v5738, %v6079
        %v6166 = vadd.f32 %v5739, %v6084
        %v6167 = vadd.f32 %v5740, %v6089
        %v6168 = vadd.f32 %v5741, %v6094
        %v6169 = vadd.f32 %v5742, %v6099
        %v6170 = vadd.f32 %v5743, %v6104
        %v6171 = vadd.f32 %v5744, %v6109
        %v6172 = vadd.f32 %v5745, %v6114
        %v6173 = vadd.f32 %v5746, %v6119
        %v6174 = vadd.f32 %v5747, %v6124
        %v6175 = vadd.f32 %v5748, %v6129
        %v6176 = vadd.f32 %v5749, %v6134
        %v6177 = vadd.f32 %v5750, %v6139
        %v6178 = vld [vmem:[#allocation2 + $0x18] sm:$0xff]
        %v6179 = vld [vmem:[#allocation2 + $0x20] sm:$0xff]
        %v6180 = vld [vmem:[#allocation2 + $0x28] sm:$0xff]
        %v6181 = vld [vmem:[#allocation2 + $0x30] sm:$0xff]
        %v6182 = vld [vmem:[#allocation2 + $0x38] sm:$0xff]
        %v6183 = vld [vmem:[#allocation2 + $0x40] sm:$0xff]
        %v6184 = vld [vmem:[#allocation2 + $0x48] sm:$0xff]
        %v6185 = vld [vmem:[#allocation2 + $0x50] sm:$0xff]
        %v6186 = vld [vmem:[#allocation2 + $0x58] sm:$0xff]
        %v6187 = vld [vmem:[#allocation2 + $0x60] sm:$0xff]
        %v6188 = vld [vmem:[#allocation2 + $0x68] sm:$0xff]
        %v6189 = vld [vmem:[#allocation2 + $0x70] sm:$0xff]
        %v6190 = vld [vmem:[#allocation2 + $0x78] sm:$0xff]
        %v6191 = vld [vmem:[#allocation2 + $0x80] sm:$0xff]
        %v6192 = vld [vmem:[#allocation2 + $0x88] sm:$0xff]
        %v6193 = vld [vmem:[#allocation2 + $0x90] sm:$0xff]
        %v6194 = vld [vmem:[#allocation2 + $0x98] sm:$0xff]
        %v6195 = vld [vmem:[#allocation2 + $0xa0] sm:$0xff]
        %v6196 = vld [vmem:[#allocation2 + $0xa8] sm:$0xff]
        %v6197 = vld [vmem:[#allocation2 + $0xb0] sm:$0xff]
        %v6198 = vld [vmem:[#allocation2 + $0xb8] sm:$0xff]
        %v6199 = vld [vmem:[#allocation2 + $0xc0] sm:$0xff]
        %v6200 = vld [vmem:[#allocation2 + $0xc8] sm:$0xff]
        %v6201 = vld [vmem:[#allocation2 + $0xd0] sm:$0xff]
        %v6202 = vld [vmem:[#allocation2 + $0xd8] sm:$0xff]
        %v6203 = vld [vmem:[#allocation2 + $0xe0] sm:$0xff]
        %v6204 = vld [vmem:[#allocation2 + $0xe8] sm:$0xff]
        %v6205 = vld [vmem:[#allocation2 + $0xf0] sm:$0xff]
        %v6206 = vld [vmem:[#allocation2 + $0xf8] sm:$0xff]
        %v6207 = vld [vmem:[#allocation2 + $0x100] sm:$0xff]
        %v6208 = vld [vmem:[#allocation2 + $0x108] sm:$0xff]
        %v6209 = vld [vmem:[#allocation2 + $0x110] sm:$0xff]
        %v6210 = vld [vmem:[#allocation2 + $0x118] sm:$0xff]
        %v6211 = vld [vmem:[#allocation2 + $0x120] sm:$0xff]
        %v6212 = vld [vmem:[#allocation2 + $0x128] sm:$0xff]
        %v6213 = vld [vmem:[#allocation2 + $0x130] sm:$0xff]
        %s6214 = scalar_lea.vmem [#allocation9], 32
        %v6215 = vld [vmem:[%s6214] sm:$0xff]
        %v6217 = vsel %vm4500, %v6178, 0
        %v6220 = vsel %vm4500, %v6179, 0
        %v6223 = vsel %vm4500, %v6180, 0
        %v6226 = vsel %vm4500, %v6181, 0
        %v6229 = vsel %vm4500, %v6182, 0
        %v6232 = vsel %vm4500, %v6183, 0
        %v6235 = vsel %vm4500, %v6184, 0
        %v6238 = vsel %vm4500, %v6185, 0
        %v6241 = vsel %vm4500, %v6186, 0
        %v6244 = vsel %vm4500, %v6187, 0
        %v6247 = vsel %vm4500, %v6188, 0
        %v6250 = vsel %vm4500, %v6189, 0
        %v6253 = vsel %vm4500, %v6190, 0
        %v6256 = vsel %vm4500, %v6191, 0
        %v6259 = vsel %vm4500, %v6192, 0
        %v6262 = vsel %vm4500, %v6193, 0
        %v6265 = vsel %vm4500, %v6194, 0
        %v6268 = vsel %vm4500, %v6195, 0
        %v6271 = vsel %vm4500, %v6196, 0
        %v6274 = vsel %vm4500, %v6197, 0
        %v6277 = vsel %vm4500, %v6198, 0
        %v6280 = vsel %vm4500, %v6199, 0
        %v6283 = vsel %vm4500, %v6200, 0
        %v6286 = vsel %vm4500, %v6201, 0
        %v6289 = vsel %vm4500, %v6202, 0
        %v6292 = vsel %vm4500, %v6203, 0
        %v6295 = vsel %vm4500, %v6204, 0
        %v6298 = vsel %vm4500, %v6205, 0
        %v6301 = vsel %vm4500, %v6206, 0
        %v6304 = vsel %vm4500, %v6207, 0
        %v6307 = vsel %vm4500, %v6208, 0
        %v6310 = vsel %vm4500, %v6209, 0
        %v6313 = vsel %vm4500, %v6210, 0
        %v6316 = vsel %vm4500, %v6211, 0
        %v6319 = vsel %vm4500, %v6212, 0
        %v6322 = vsel %vm4500, %v6213, 0
        %6324 = vmatprep.subr.mxu0 0.0
        %6325 = vmatpush1.msra.mxu0 %v6215
        %6326 = vmatprep.subr.mxu0 0.0
        %6327 = vmatpush1.msra.mxu0 0.0
        %6328 = vmatprep.subr.mxu0 0.0
        %6329 = vmatpush1.msra.mxu0 0.0
        %6330 = vmatprep.subr.mxu0 0.0
        %6331 = vmatpush1.msra.mxu0 0.0
        %6332 = vmatprep.subr.mxu0 0.0
        %6333 = vmatpush1.msra.mxu0 0.0
        %6334 = vmatprep.subr.mxu0 0.0
        %6335 = vmatpush1.msra.mxu0 0.0
        %6336 = vmatprep.subr.mxu0 0.0
        %6337 = vmatpush1.msra.mxu0 0.0
        %6338 = vmatprep.subr.mxu0 0.0
        %6339 = vmatpush1.msra.mxu0 0.0
        %6340 = vmatprep.subr.mxu0 0.0
        %6341 = vmatpush1.msra.mxu0 0.0
        %6342 = vmatprep.subr.mxu0 0.0
        %6343 = vmatpush1.msra.mxu0 0.0
        %6344 = vmatprep.subr.mxu0 0.0
        %6345 = vmatpush1.msra.mxu0 0.0
        %6346 = vmatprep.subr.mxu0 0.0
        %6347 = vmatpush1.msra.mxu0 0.0
        %6348 = vmatprep.subr.mxu0 0.0
        %6349 = vmatpush1.msra.mxu0 0.0
        %6350 = vmatprep.subr.mxu0 0.0
        %6351 = vmatpush1.msra.mxu0 0.0
        %6352 = vmatprep.subr.mxu0 0.0
        %6353 = vmatpush1.msra.mxu0 0.0
        %6354 = vmatprep.subr.mxu0 0.0
        %6355 = vmatpush1.msra.mxu0 0.0
        %6356 = vmatprep.subr.mxu0 0.0
        %6357 = vmatpush1.msra.mxu0 0.0
        %6358 = vmatprep.subr.mxu0 0.0
        %6359 = vmatpush1.msra.mxu0 0.0
        %6360 = vmatprep.subr.mxu0 0.0
        %6361 = vmatpush1.msra.mxu0 0.0
        %6362 = vmatprep.subr.mxu0 0.0
        %6363 = vmatpush1.msra.mxu0 0.0
        %6364 = vmatprep.subr.mxu0 0.0
        %6365 = vmatpush1.msra.mxu0 0.0
        %6366 = vmatprep.subr.mxu0 0.0
        %6367 = vmatpush1.msra.mxu0 0.0
        %6368 = vmatprep.subr.mxu0 0.0
        %6369 = vmatpush1.msra.mxu0 0.0
        %6370 = vmatprep.subr.mxu0 0.0
        %6371 = vmatpush1.msra.mxu0 0.0
        %6372 = vmatprep.subr.mxu0 0.0
        %6373 = vmatpush1.msra.mxu0 0.0
        %6374 = vmatprep.subr.mxu0 0.0
        %6375 = vmatpush1.msra.mxu0 0.0
        %6376 = vmatprep.subr.mxu0 0.0
        %6377 = vmatpush1.msra.mxu0 0.0
        %6378 = vmatprep.subr.mxu0 0.0
        %6379 = vmatpush1.msra.mxu0 0.0
        %6380 = vmatprep.subr.mxu0 0.0
        %6381 = vmatpush1.msra.mxu0 0.0
        %6382 = vmatprep.subr.mxu0 0.0
        %6383 = vmatpush1.msra.mxu0 0.0
        %6384 = vmatprep.subr.mxu0 0.0
        %6385 = vmatpush1.msra.mxu0 0.0
        %6386 = vmatprep.subr.mxu0 0.0
        %6387 = vmatpush1.msra.mxu0 0.0
        %6388 = vmatprep.mubr.f32.mxu0 0.0
        %6389 = vmatmul.mubr.f32.gmra.mrb[0].mxu0 %v6217
        %v6390 = vpop.f32.mrb[0].mxu0
        %v6391 = vadd.f32 0.0, %v6390
        %v6392 = vpop.f32.mrb[0].mxu0
        %6393 = vmatprep.mubr.f32.mxu0 0.0
        %6394 = vmatmul.mubr.f32.gmra.mrb[0].mxu0 %v6220
        %v6395 = vpop.f32.mrb[0].mxu0
        %v6396 = vadd.f32 0.0, %v6395
        %v6397 = vpop.f32.mrb[0].mxu0
        %6398 = vmatprep.mubr.f32.mxu0 0.0
        %6399 = vmatmul.mubr.f32.gmra.mrb[0].mxu0 %v6223
        %v6400 = vpop.f32.mrb[0].mxu0
        %v6401 = vadd.f32 0.0, %v6400
        %v6402 = vpop.f32.mrb[0].mxu0
        %6403 = vmatprep.mubr.f32.mxu0 0.0
        %6404 = vmatmul.mubr.f32.gmra.mrb[0].mxu0 %v6226
        %v6405 = vpop.f32.mrb[0].mxu0
        %v6406 = vadd.f32 0.0, %v6405
        %v6407 = vpop.f32.mrb[0].mxu0
        %6408 = vmatprep.mubr.f32.mxu0 0.0
        %6409 = vmatmul.mubr.f32.gmra.mrb[0].mxu0 %v6229
        %v6410 = vpop.f32.mrb[0].mxu0
        %v6411 = vadd.f32 0.0, %v6410
        %v6412 = vpop.f32.mrb[0].mxu0
        %6413 = vmatprep.mubr.f32.mxu0 0.0
        %6414 = vmatmul.mubr.f32.gmra.mrb[0].mxu0 %v6232
        %v6415 = vpop.f32.mrb[0].mxu0
        %v6416 = vadd.f32 0.0, %v6415
        %v6417 = vpop.f32.mrb[0].mxu0
        %6418 = vmatprep.mubr.f32.mxu0 0.0
        %6419 = vmatmul.mubr.f32.gmra.mrb[0].mxu0 %v6235
        %v6420 = vpop.f32.mrb[0].mxu0
        %v6421 = vadd.f32 0.0, %v6420
        %v6422 = vpop.f32.mrb[0].mxu0
        %6423 = vmatprep.mubr.f32.mxu0 0.0
        %6424 = vmatmul.mubr.f32.gmra.mrb[0].mxu0 %v6238
        %v6425 = vpop.f32.mrb[0].mxu0
        %v6426 = vadd.f32 0.0, %v6425
        %v6427 = vpop.f32.mrb[0].mxu0
        %6428 = vmatprep.mubr.f32.mxu0 0.0
        %6429 = vmatmul.mubr.f32.gmra.mrb[0].mxu0 %v6241
        %v6430 = vpop.f32.mrb[0].mxu0
        %v6431 = vadd.f32 0.0, %v6430
        %v6432 = vpop.f32.mrb[0].mxu0
        %6433 = vmatprep.mubr.f32.mxu0 0.0
        %6434 = vmatmul.mubr.f32.gmra.mrb[0].mxu0 %v6244
        %v6435 = vpop.f32.mrb[0].mxu0
        %v6436 = vadd.f32 0.0, %v6435
        %v6437 = vpop.f32.mrb[0].mxu0
        %6438 = vmatprep.mubr.f32.mxu0 0.0
        %6439 = vmatmul.mubr.f32.gmra.mrb[0].mxu0 %v6247
        %v6440 = vpop.f32.mrb[0].mxu0
        %v6441 = vadd.f32 0.0, %v6440
        %v6442 = vpop.f32.mrb[0].mxu0
        %6443 = vmatprep.mubr.f32.mxu0 0.0
        %6444 = vmatmul.mubr.f32.gmra.mrb[0].mxu0 %v6250
        %v6445 = vpop.f32.mrb[0].mxu0
        %v6446 = vadd.f32 0.0, %v6445
        %v6447 = vpop.f32.mrb[0].mxu0
        %6448 = vmatprep.mubr.f32.mxu0 0.0
        %6449 = vmatmul.mubr.f32.gmra.mrb[0].mxu0 %v6253
        %v6450 = vpop.f32.mrb[0].mxu0
        %v6451 = vadd.f32 0.0, %v6450
        %v6452 = vpop.f32.mrb[0].mxu0
        %6453 = vmatprep.mubr.f32.mxu0 0.0
        %6454 = vmatmul.mubr.f32.gmra.mrb[0].mxu0 %v6256
        %v6455 = vpop.f32.mrb[0].mxu0
        %v6456 = vadd.f32 0.0, %v6455
        %v6457 = vpop.f32.mrb[0].mxu0
        %6458 = vmatprep.mubr.f32.mxu0 0.0
        %6459 = vmatmul.mubr.f32.gmra.mrb[0].mxu0 %v6259
        %v6460 = vpop.f32.mrb[0].mxu0
        %v6461 = vadd.f32 0.0, %v6460
        %v6462 = vpop.f32.mrb[0].mxu0
        %6463 = vmatprep.mubr.f32.mxu0 0.0
        %6464 = vmatmul.mubr.f32.gmra.mrb[0].mxu0 %v6262
        %v6465 = vpop.f32.mrb[0].mxu0
        %v6466 = vadd.f32 0.0, %v6465
        %v6467 = vpop.f32.mrb[0].mxu0
        %6468 = vmatprep.mubr.f32.mxu0 0.0
        %6469 = vmatmul.mubr.f32.gmra.mrb[0].mxu0 %v6265
        %v6470 = vpop.f32.mrb[0].mxu0
        %v6471 = vadd.f32 0.0, %v6470
        %v6472 = vpop.f32.mrb[0].mxu0
        %6473 = vmatprep.mubr.f32.mxu0 0.0
        %6474 = vmatmul.mubr.f32.gmra.mrb[0].mxu0 %v6268
        %v6475 = vpop.f32.mrb[0].mxu0
        %v6476 = vadd.f32 0.0, %v6475
        %v6477 = vpop.f32.mrb[0].mxu0
        %6478 = vmatprep.mubr.f32.mxu0 0.0
        %6479 = vmatmul.mubr.f32.gmra.mrb[0].mxu0 %v6271
        %v6480 = vpop.f32.mrb[0].mxu0
        %v6481 = vadd.f32 0.0, %v6480
        %v6482 = vpop.f32.mrb[0].mxu0
        %6483 = vmatprep.mubr.f32.mxu0 0.0
        %6484 = vmatmul.mubr.f32.gmra.mrb[0].mxu0 %v6274
        %v6485 = vpop.f32.mrb[0].mxu0
        %v6486 = vadd.f32 0.0, %v6485
        %v6487 = vpop.f32.mrb[0].mxu0
        %6488 = vmatprep.mubr.f32.mxu0 0.0
        %6489 = vmatmul.mubr.f32.gmra.mrb[0].mxu0 %v6277
        %v6490 = vpop.f32.mrb[0].mxu0
        %v6491 = vadd.f32 0.0, %v6490
        %v6492 = vpop.f32.mrb[0].mxu0
        %6493 = vmatprep.mubr.f32.mxu0 0.0
        %6494 = vmatmul.mubr.f32.gmra.mrb[0].mxu0 %v6280
        %v6495 = vpop.f32.mrb[0].mxu0
        %v6496 = vadd.f32 0.0, %v6495
        %v6497 = vpop.f32.mrb[0].mxu0
        %6498 = vmatprep.mubr.f32.mxu0 0.0
        %6499 = vmatmul.mubr.f32.gmra.mrb[0].mxu0 %v6283
        %v6500 = vpop.f32.mrb[0].mxu0
        %v6501 = vadd.f32 0.0, %v6500
        %v6502 = vpop.f32.mrb[0].mxu0
        %6503 = vmatprep.mubr.f32.mxu0 0.0
        %6504 = vmatmul.mubr.f32.gmra.mrb[0].mxu0 %v6286
        %v6505 = vpop.f32.mrb[0].mxu0
        %v6506 = vadd.f32 0.0, %v6505
        %v6507 = vpop.f32.mrb[0].mxu0
        %6508 = vmatprep.mubr.f32.mxu0 0.0
        %6509 = vmatmul.mubr.f32.gmra.mrb[0].mxu0 %v6289
        %v6510 = vpop.f32.mrb[0].mxu0
        %v6511 = vadd.f32 0.0, %v6510
        %v6512 = vpop.f32.mrb[0].mxu0
        %6513 = vmatprep.mubr.f32.mxu0 0.0
        %6514 = vmatmul.mubr.f32.gmra.mrb[0].mxu0 %v6292
        %v6515 = vpop.f32.mrb[0].mxu0
        %v6516 = vadd.f32 0.0, %v6515
        %v6517 = vpop.f32.mrb[0].mxu0
        %6518 = vmatprep.mubr.f32.mxu0 0.0
        %6519 = vmatmul.mubr.f32.gmra.mrb[0].mxu0 %v6295
        %v6520 = vpop.f32.mrb[0].mxu0
        %v6521 = vadd.f32 0.0, %v6520
        %v6522 = vpop.f32.mrb[0].mxu0
        %6523 = vmatprep.mubr.f32.mxu0 0.0
        %6524 = vmatmul.mubr.f32.gmra.mrb[0].mxu0 %v6298
        %v6525 = vpop.f32.mrb[0].mxu0
        %v6526 = vadd.f32 0.0, %v6525
        %v6527 = vpop.f32.mrb[0].mxu0
        %6528 = vmatprep.mubr.f32.mxu0 0.0
        %6529 = vmatmul.mubr.f32.gmra.mrb[0].mxu0 %v6301
        %v6530 = vpop.f32.mrb[0].mxu0
        %v6531 = vadd.f32 0.0, %v6530
        %v6532 = vpop.f32.mrb[0].mxu0
        %6533 = vmatprep.mubr.f32.mxu0 0.0
        %6534 = vmatmul.mubr.f32.gmra.mrb[0].mxu0 %v6304
        %v6535 = vpop.f32.mrb[0].mxu0
        %v6536 = vadd.f32 0.0, %v6535
        %v6537 = vpop.f32.mrb[0].mxu0
        %6538 = vmatprep.mubr.f32.mxu0 0.0
        %6539 = vmatmul.mubr.f32.gmra.mrb[0].mxu0 %v6307
        %v6540 = vpop.f32.mrb[0].mxu0
        %v6541 = vadd.f32 0.0, %v6540
        %v6542 = vpop.f32.mrb[0].mxu0
        %6543 = vmatprep.mubr.f32.mxu0 0.0
        %6544 = vmatmul.mubr.f32.gmra.mrb[0].mxu0 %v6310
        %v6545 = vpop.f32.mrb[0].mxu0
        %v6546 = vadd.f32 0.0, %v6545
        %v6547 = vpop.f32.mrb[0].mxu0
        %6548 = vmatprep.mubr.f32.mxu0 0.0
        %6549 = vmatmul.mubr.f32.gmra.mrb[0].mxu0 %v6313
        %v6550 = vpop.f32.mrb[0].mxu0
        %v6551 = vadd.f32 0.0, %v6550
        %v6552 = vpop.f32.mrb[0].mxu0
        %6553 = vmatprep.mubr.f32.mxu0 0.0
        %6554 = vmatmul.mubr.f32.gmra.mrb[0].mxu0 %v6316
        %v6555 = vpop.f32.mrb[0].mxu0
        %v6556 = vadd.f32 0.0, %v6555
        %v6557 = vpop.f32.mrb[0].mxu0
        %6558 = vmatprep.mubr.f32.mxu0 0.0
        %6559 = vmatmul.mubr.f32.gmra.mrb[0].mxu0 %v6319
        %v6560 = vpop.f32.mrb[0].mxu0
        %v6561 = vadd.f32 0.0, %v6560
        %v6562 = vpop.f32.mrb[0].mxu0
        %6563 = vmatprep.mubr.f32.mxu0 0.0
        %6564 = vmatmul.mubr.f32.gmra.mrb[0].mxu0 %v6322
        %v6565 = vpop.f32.mrb[0].mxu0
        %v6566 = vadd.f32 0.0, %v6565
        %v6567 = vpop.f32.mrb[0].mxu0
        %6568 = vdwg.mxu0
        %v6569 = vadd.f32 %v6142, %v6391
        %v6570 = vadd.f32 %v6143, %v6396
        %v6571 = vadd.f32 %v6144, %v6401
        %v6572 = vadd.f32 %v6145, %v6406
        %v6573 = vadd.f32 %v6146, %v6411
        %v6574 = vadd.f32 %v6147, %v6416
        %v6575 = vadd.f32 %v6148, %v6421
        %v6576 = vadd.f32 %v6149, %v6426
        %v6577 = vadd.f32 %v6150, %v6431
        %v6578 = vadd.f32 %v6151, %v6436
        %v6579 = vadd.f32 %v6152, %v6441
        %v6580 = vadd.f32 %v6153, %v6446
        %v6581 = vadd.f32 %v6154, %v6451
        %v6582 = vadd.f32 %v6155, %v6456
        %v6583 = vadd.f32 %v6156, %v6461
        %v6584 = vadd.f32 %v6157, %v6466
        %v6585 = vadd.f32 %v6158, %v6471
        %v6586 = vadd.f32 %v6159, %v6476
        %v6587 = vadd.f32 %v6160, %v6481
        %v6588 = vadd.f32 %v6161, %v6486
        %v6589 = vadd.f32 %v6162, %v6491
        %v6590 = vadd.f32 %v6163, %v6496
        %v6591 = vadd.f32 %v6164, %v6501
        %v6592 = vadd.f32 %v6165, %v6506
        %v6593 = vadd.f32 %v6166, %v6511
        %v6594 = vadd.f32 %v6167, %v6516
        %v6595 = vadd.f32 %v6168, %v6521
        %v6596 = vadd.f32 %v6169, %v6526
        %v6597 = vadd.f32 %v6170, %v6531
        %v6598 = vadd.f32 %v6171, %v6536
        %v6599 = vadd.f32 %v6172, %v6541
        %v6600 = vadd.f32 %v6173, %v6546
        %v6601 = vadd.f32 %v6174, %v6551
        %v6602 = vadd.f32 %v6175, %v6556
        %v6603 = vadd.f32 %v6176, %v6561
        %v6604 = vadd.f32 %v6177, %v6566
        %v6605 = vld [vmem:[#allocation2 + $0x19] sm:$0xff]
        %v6606 = vld [vmem:[#allocation2 + $0x21] sm:$0xff]
        %v6607 = vld [vmem:[#allocation2 + $0x29] sm:$0xff]
        %v6608 = vld [vmem:[#allocation2 + $0x31] sm:$0xff]
        %v6609 = vld [vmem:[#allocation2 + $0x39] sm:$0xff]
        %v6610 = vld [vmem:[#allocation2 + $0x41] sm:$0xff]
        %v6611 = vld [vmem:[#allocation2 + $0x49] sm:$0xff]
        %v6612 = vld [vmem:[#allocation2 + $0x51] sm:$0xff]
        %v6613 = vld [vmem:[#allocation2 + $0x59] sm:$0xff]
        %v6614 = vld [vmem:[#allocation2 + $0x61] sm:$0xff]
        %v6615 = vld [vmem:[#allocation2 + $0x69] sm:$0xff]
        %v6616 = vld [vmem:[#allocation2 + $0x71] sm:$0xff]
        %v6617 = vld [vmem:[#allocation2 + $0x79] sm:$0xff]
        %v6618 = vld [vmem:[#allocation2 + $0x81] sm:$0xff]
        %v6619 = vld [vmem:[#allocation2 + $0x89] sm:$0xff]
        %v6620 = vld [vmem:[#allocation2 + $0x91] sm:$0xff]
        %v6621 = vld [vmem:[#allocation2 + $0x99] sm:$0xff]
        %v6622 = vld [vmem:[#allocation2 + $0xa1] sm:$0xff]
        %v6623 = vld [vmem:[#allocation2 + $0xa9] sm:$0xff]
        %v6624 = vld [vmem:[#allocation2 + $0xb1] sm:$0xff]
        %v6625 = vld [vmem:[#allocation2 + $0xb9] sm:$0xff]
        %v6626 = vld [vmem:[#allocation2 + $0xc1] sm:$0xff]
        %v6627 = vld [vmem:[#allocation2 + $0xc9] sm:$0xff]
        %v6628 = vld [vmem:[#allocation2 + $0xd1] sm:$0xff]
        %v6629 = vld [vmem:[#allocation2 + $0xd9] sm:$0xff]
        %v6630 = vld [vmem:[#allocation2 + $0xe1] sm:$0xff]
        %v6631 = vld [vmem:[#allocation2 + $0xe9] sm:$0xff]
        %v6632 = vld [vmem:[#allocation2 + $0xf1] sm:$0xff]
        %v6633 = vld [vmem:[#allocation2 + $0xf9] sm:$0xff]
        %v6634 = vld [vmem:[#allocation2 + $0x101] sm:$0xff]
        %v6635 = vld [vmem:[#allocation2 + $0x109] sm:$0xff]
        %v6636 = vld [vmem:[#allocation2 + $0x111] sm:$0xff]
        %v6637 = vld [vmem:[#allocation2 + $0x119] sm:$0xff]
        %v6638 = vld [vmem:[#allocation2 + $0x121] sm:$0xff]
        %v6639 = vld [vmem:[#allocation2 + $0x129] sm:$0xff]
        %v6640 = vld [vmem:[#allocation2 + $0x131] sm:$0xff]
        %s6641 = scalar_lea.vmem [#allocation9], 40
        %v6642 = vld [vmem:[%s6641] sm:$0xff]
        %v6644 = vsel %vm4500, %v6605, 0
        %v6647 = vsel %vm4500, %v6606, 0
        %v6650 = vsel %vm4500, %v6607, 0
        %v6653 = vsel %vm4500, %v6608, 0
        %v6656 = vsel %vm4500, %v6609, 0
        %v6659 = vsel %vm4500, %v6610, 0
        %v6662 = vsel %vm4500, %v6611, 0
        %v6665 = vsel %vm4500, %v6612, 0
        %v6668 = vsel %vm4500, %v6613, 0
        %v6671 = vsel %vm4500, %v6614, 0
        %v6674 = vsel %vm4500, %v6615, 0
        %v6677 = vsel %vm4500, %v6616, 0
        %v6680 = vsel %vm4500, %v6617, 0
        %v6683 = vsel %vm4500, %v6618, 0
        %v6686 = vsel %vm4500, %v6619, 0
        %v6689 = vsel %vm4500, %v6620, 0
        %v6692 = vsel %vm4500, %v6621, 0
        %v6695 = vsel %vm4500, %v6622, 0
        %v6698 = vsel %vm4500, %v6623, 0
        %v6701 = vsel %vm4500, %v6624, 0
        %v6704 = vsel %vm4500, %v6625, 0
        %v6707 = vsel %vm4500, %v6626, 0
        %v6710 = vsel %vm4500, %v6627, 0
        %v6713 = vsel %vm4500, %v6628, 0
        %v6716 = vsel %vm4500, %v6629, 0
        %v6719 = vsel %vm4500, %v6630, 0
        %v6722 = vsel %vm4500, %v6631, 0
        %v6725 = vsel %vm4500, %v6632, 0
        %v6728 = vsel %vm4500, %v6633, 0
        %v6731 = vsel %vm4500, %v6634, 0
        %v6734 = vsel %vm4500, %v6635, 0
        %v6737 = vsel %vm4500, %v6636, 0
        %v6740 = vsel %vm4500, %v6637, 0
        %v6743 = vsel %vm4500, %v6638, 0
        %v6746 = vsel %vm4500, %v6639, 0
        %v6749 = vsel %vm4500, %v6640, 0
        %6751 = vmatprep.subr.mxu0 0.0
        %6752 = vmatpush1.msra.mxu0 %v6642
        %6753 = vmatprep.subr.mxu0 0.0
        %6754 = vmatpush1.msra.mxu0 0.0
        %6755 = vmatprep.subr.mxu0 0.0
        %6756 = vmatpush1.msra.mxu0 0.0
        %6757 = vmatprep.subr.mxu0 0.0
        %6758 = vmatpush1.msra.mxu0 0.0
        %6759 = vmatprep.subr.mxu0 0.0
        %6760 = vmatpush1.msra.mxu0 0.0
        %6761 = vmatprep.subr.mxu0 0.0
        %6762 = vmatpush1.msra.mxu0 0.0
        %6763 = vmatprep.subr.mxu0 0.0
        %6764 = vmatpush1.msra.mxu0 0.0
        %6765 = vmatprep.subr.mxu0 0.0
        %6766 = vmatpush1.msra.mxu0 0.0
        %6767 = vmatprep.subr.mxu0 0.0
        %6768 = vmatpush1.msra.mxu0 0.0
        %6769 = vmatprep.subr.mxu0 0.0
        %6770 = vmatpush1.msra.mxu0 0.0
        %6771 = vmatprep.subr.mxu0 0.0
        %6772 = vmatpush1.msra.mxu0 0.0
        %6773 = vmatprep.subr.mxu0 0.0
        %6774 = vmatpush1.msra.mxu0 0.0
        %6775 = vmatprep.subr.mxu0 0.0
        %6776 = vmatpush1.msra.mxu0 0.0
        %6777 = vmatprep.subr.mxu0 0.0
        %6778 = vmatpush1.msra.mxu0 0.0
        %6779 = vmatprep.subr.mxu0 0.0
        %6780 = vmatpush1.msra.mxu0 0.0
        %6781 = vmatprep.subr.mxu0 0.0
        %6782 = vmatpush1.msra.mxu0 0.0
        %6783 = vmatprep.subr.mxu0 0.0
        %6784 = vmatpush1.msra.mxu0 0.0
        %6785 = vmatprep.subr.mxu0 0.0
        %6786 = vmatpush1.msra.mxu0 0.0
        %6787 = vmatprep.subr.mxu0 0.0
        %6788 = vmatpush1.msra.mxu0 0.0
        %6789 = vmatprep.subr.mxu0 0.0
        %6790 = vmatpush1.msra.mxu0 0.0
        %6791 = vmatprep.subr.mxu0 0.0
        %6792 = vmatpush1.msra.mxu0 0.0
        %6793 = vmatprep.subr.mxu0 0.0
        %6794 = vmatpush1.msra.mxu0 0.0
        %6795 = vmatprep.subr.mxu0 0.0
        %6796 = vmatpush1.msra.mxu0 0.0
        %6797 = vmatprep.subr.mxu0 0.0
        %6798 = vmatpush1.msra.mxu0 0.0
        %6799 = vmatprep.subr.mxu0 0.0
        %6800 = vmatpush1.msra.mxu0 0.0
        %6801 = vmatprep.subr.mxu0 0.0
        %6802 = vmatpush1.msra.mxu0 0.0
        %6803 = vmatprep.subr.mxu0 0.0
        %6804 = vmatpush1.msra.mxu0 0.0
        %6805 = vmatprep.subr.mxu0 0.0
        %6806 = vmatpush1.msra.mxu0 0.0
        %6807 = vmatprep.subr.mxu0 0.0
        %6808 = vmatpush1.msra.mxu0 0.0
        %6809 = vmatprep.subr.mxu0 0.0
        %6810 = vmatpush1.msra.mxu0 0.0
        %6811 = vmatprep.subr.mxu0 0.0
        %6812 = vmatpush1.msra.mxu0 0.0
        %6813 = vmatprep.subr.mxu0 0.0
        %6814 = vmatpush1.msra.mxu0 0.0
        %6815 = vmatprep.mubr.f32.mxu0 0.0
        %6816 = vmatmul.mubr.f32.gmra.mrb[0].mxu0 %v6644
        %v6817 = vpop.f32.mrb[0].mxu0
        %v6818 = vadd.f32 0.0, %v6817
        %v6819 = vpop.f32.mrb[0].mxu0
        %6820 = vmatprep.mubr.f32.mxu0 0.0
        %6821 = vmatmul.mubr.f32.gmra.mrb[0].mxu0 %v6647
        %v6822 = vpop.f32.mrb[0].mxu0
        %v6823 = vadd.f32 0.0, %v6822
        %v6824 = vpop.f32.mrb[0].mxu0
        %6825 = vmatprep.mubr.f32.mxu0 0.0
        %6826 = vmatmul.mubr.f32.gmra.mrb[0].mxu0 %v6650
        %v6827 = vpop.f32.mrb[0].mxu0
        %v6828 = vadd.f32 0.0, %v6827
        %v6829 = vpop.f32.mrb[0].mxu0
        %6830 = vmatprep.mubr.f32.mxu0 0.0
        %6831 = vmatmul.mubr.f32.gmra.mrb[0].mxu0 %v6653
        %v6832 = vpop.f32.mrb[0].mxu0
        %v6833 = vadd.f32 0.0, %v6832
        %v6834 = vpop.f32.mrb[0].mxu0
        %6835 = vmatprep.mubr.f32.mxu0 0.0
        %6836 = vmatmul.mubr.f32.gmra.mrb[0].mxu0 %v6656
        %v6837 = vpop.f32.mrb[0].mxu0
        %v6838 = vadd.f32 0.0, %v6837
        %v6839 = vpop.f32.mrb[0].mxu0
        %6840 = vmatprep.mubr.f32.mxu0 0.0
        %6841 = vmatmul.mubr.f32.gmra.mrb[0].mxu0 %v6659
        %v6842 = vpop.f32.mrb[0].mxu0
        %v6843 = vadd.f32 0.0, %v6842
        %v6844 = vpop.f32.mrb[0].mxu0
        %6845 = vmatprep.mubr.f32.mxu0 0.0
        %6846 = vmatmul.mubr.f32.gmra.mrb[0].mxu0 %v6662
        %v6847 = vpop.f32.mrb[0].mxu0
        %v6848 = vadd.f32 0.0, %v6847
        %v6849 = vpop.f32.mrb[0].mxu0
        %6850 = vmatprep.mubr.f32.mxu0 0.0
        %6851 = vmatmul.mubr.f32.gmra.mrb[0].mxu0 %v6665
        %v6852 = vpop.f32.mrb[0].mxu0
        %v6853 = vadd.f32 0.0, %v6852
        %v6854 = vpop.f32.mrb[0].mxu0
        %6855 = vmatprep.mubr.f32.mxu0 0.0
        %6856 = vmatmul.mubr.f32.gmra.mrb[0].mxu0 %v6668
        %v6857 = vpop.f32.mrb[0].mxu0
        %v6858 = vadd.f32 0.0, %v6857
        %v6859 = vpop.f32.mrb[0].mxu0
        %6860 = vmatprep.mubr.f32.mxu0 0.0
        %6861 = vmatmul.mubr.f32.gmra.mrb[0].mxu0 %v6671
        %v6862 = vpop.f32.mrb[0].mxu0
        %v6863 = vadd.f32 0.0, %v6862
        %v6864 = vpop.f32.mrb[0].mxu0
        %6865 = vmatprep.mubr.f32.mxu0 0.0
        %6866 = vmatmul.mubr.f32.gmra.mrb[0].mxu0 %v6674
        %v6867 = vpop.f32.mrb[0].mxu0
        %v6868 = vadd.f32 0.0, %v6867
        %v6869 = vpop.f32.mrb[0].mxu0
        %6870 = vmatprep.mubr.f32.mxu0 0.0
        %6871 = vmatmul.mubr.f32.gmra.mrb[0].mxu0 %v6677
        %v6872 = vpop.f32.mrb[0].mxu0
        %v6873 = vadd.f32 0.0, %v6872
        %v6874 = vpop.f32.mrb[0].mxu0
        %6875 = vmatprep.mubr.f32.mxu0 0.0
        %6876 = vmatmul.mubr.f32.gmra.mrb[0].mxu0 %v6680
        %v6877 = vpop.f32.mrb[0].mxu0
        %v6878 = vadd.f32 0.0, %v6877
        %v6879 = vpop.f32.mrb[0].mxu0
        %6880 = vmatprep.mubr.f32.mxu0 0.0
        %6881 = vmatmul.mubr.f32.gmra.mrb[0].mxu0 %v6683
        %v6882 = vpop.f32.mrb[0].mxu0
        %v6883 = vadd.f32 0.0, %v6882
        %v6884 = vpop.f32.mrb[0].mxu0
        %6885 = vmatprep.mubr.f32.mxu0 0.0
        %6886 = vmatmul.mubr.f32.gmra.mrb[0].mxu0 %v6686
        %v6887 = vpop.f32.mrb[0].mxu0
        %v6888 = vadd.f32 0.0, %v6887
        %v6889 = vpop.f32.mrb[0].mxu0
        %6890 = vmatprep.mubr.f32.mxu0 0.0
        %6891 = vmatmul.mubr.f32.gmra.mrb[0].mxu0 %v6689
        %v6892 = vpop.f32.mrb[0].mxu0
        %v6893 = vadd.f32 0.0, %v6892
        %v6894 = vpop.f32.mrb[0].mxu0
        %6895 = vmatprep.mubr.f32.mxu0 0.0
        %6896 = vmatmul.mubr.f32.gmra.mrb[0].mxu0 %v6692
        %v6897 = vpop.f32.mrb[0].mxu0
        %v6898 = vadd.f32 0.0, %v6897
        %v6899 = vpop.f32.mrb[0].mxu0
        %6900 = vmatprep.mubr.f32.mxu0 0.0
        %6901 = vmatmul.mubr.f32.gmra.mrb[0].mxu0 %v6695
        %v6902 = vpop.f32.mrb[0].mxu0
        %v6903 = vadd.f32 0.0, %v6902
        %v6904 = vpop.f32.mrb[0].mxu0
        %6905 = vmatprep.mubr.f32.mxu0 0.0
        %6906 = vmatmul.mubr.f32.gmra.mrb[0].mxu0 %v6698
        %v6907 = vpop.f32.mrb[0].mxu0
        %v6908 = vadd.f32 0.0, %v6907
        %v6909 = vpop.f32.mrb[0].mxu0
        %6910 = vmatprep.mubr.f32.mxu0 0.0
        %6911 = vmatmul.mubr.f32.gmra.mrb[0].mxu0 %v6701
        %v6912 = vpop.f32.mrb[0].mxu0
        %v6913 = vadd.f32 0.0, %v6912
        %v6914 = vpop.f32.mrb[0].mxu0
        %6915 = vmatprep.mubr.f32.mxu0 0.0
        %6916 = vmatmul.mubr.f32.gmra.mrb[0].mxu0 %v6704
        %v6917 = vpop.f32.mrb[0].mxu0
        %v6918 = vadd.f32 0.0, %v6917
        %v6919 = vpop.f32.mrb[0].mxu0
        %6920 = vmatprep.mubr.f32.mxu0 0.0
        %6921 = vmatmul.mubr.f32.gmra.mrb[0].mxu0 %v6707
        %v6922 = vpop.f32.mrb[0].mxu0
        %v6923 = vadd.f32 0.0, %v6922
        %v6924 = vpop.f32.mrb[0].mxu0
        %6925 = vmatprep.mubr.f32.mxu0 0.0
        %6926 = vmatmul.mubr.f32.gmra.mrb[0].mxu0 %v6710
        %v6927 = vpop.f32.mrb[0].mxu0
        %v6928 = vadd.f32 0.0, %v6927
        %v6929 = vpop.f32.mrb[0].mxu0
        %6930 = vmatprep.mubr.f32.mxu0 0.0
        %6931 = vmatmul.mubr.f32.gmra.mrb[0].mxu0 %v6713
        %v6932 = vpop.f32.mrb[0].mxu0
        %v6933 = vadd.f32 0.0, %v6932
        %v6934 = vpop.f32.mrb[0].mxu0
        %6935 = vmatprep.mubr.f32.mxu0 0.0
        %6936 = vmatmul.mubr.f32.gmra.mrb[0].mxu0 %v6716
        %v6937 = vpop.f32.mrb[0].mxu0
        %v6938 = vadd.f32 0.0, %v6937
        %v6939 = vpop.f32.mrb[0].mxu0
        %6940 = vmatprep.mubr.f32.mxu0 0.0
        %6941 = vmatmul.mubr.f32.gmra.mrb[0].mxu0 %v6719
        %v6942 = vpop.f32.mrb[0].mxu0
        %v6943 = vadd.f32 0.0, %v6942
        %v6944 = vpop.f32.mrb[0].mxu0
        %6945 = vmatprep.mubr.f32.mxu0 0.0
        %6946 = vmatmul.mubr.f32.gmra.mrb[0].mxu0 %v6722
        %v6947 = vpop.f32.mrb[0].mxu0
        %v6948 = vadd.f32 0.0, %v6947
        %v6949 = vpop.f32.mrb[0].mxu0
        %6950 = vmatprep.mubr.f32.mxu0 0.0
        %6951 = vmatmul.mubr.f32.gmra.mrb[0].mxu0 %v6725
        %v6952 = vpop.f32.mrb[0].mxu0
        %v6953 = vadd.f32 0.0, %v6952
        %v6954 = vpop.f32.mrb[0].mxu0
        %6955 = vmatprep.mubr.f32.mxu0 0.0
        %6956 = vmatmul.mubr.f32.gmra.mrb[0].mxu0 %v6728
        %v6957 = vpop.f32.mrb[0].mxu0
        %v6958 = vadd.f32 0.0, %v6957
        %v6959 = vpop.f32.mrb[0].mxu0
        %6960 = vmatprep.mubr.f32.mxu0 0.0
        %6961 = vmatmul.mubr.f32.gmra.mrb[0].mxu0 %v6731
        %v6962 = vpop.f32.mrb[0].mxu0
        %v6963 = vadd.f32 0.0, %v6962
        %v6964 = vpop.f32.mrb[0].mxu0
        %6965 = vmatprep.mubr.f32.mxu0 0.0
        %6966 = vmatmul.mubr.f32.gmra.mrb[0].mxu0 %v6734
        %v6967 = vpop.f32.mrb[0].mxu0
        %v6968 = vadd.f32 0.0, %v6967
        %v6969 = vpop.f32.mrb[0].mxu0
        %6970 = vmatprep.mubr.f32.mxu0 0.0
        %6971 = vmatmul.mubr.f32.gmra.mrb[0].mxu0 %v6737
        %v6972 = vpop.f32.mrb[0].mxu0
        %v6973 = vadd.f32 0.0, %v6972
        %v6974 = vpop.f32.mrb[0].mxu0
        %6975 = vmatprep.mubr.f32.mxu0 0.0
        %6976 = vmatmul.mubr.f32.gmra.mrb[0].mxu0 %v6740
        %v6977 = vpop.f32.mrb[0].mxu0
        %v6978 = vadd.f32 0.0, %v6977
        %v6979 = vpop.f32.mrb[0].mxu0
        %6980 = vmatprep.mubr.f32.mxu0 0.0
        %6981 = vmatmul.mubr.f32.gmra.mrb[0].mxu0 %v6743
        %v6982 = vpop.f32.mrb[0].mxu0
        %v6983 = vadd.f32 0.0, %v6982
        %v6984 = vpop.f32.mrb[0].mxu0
        %6985 = vmatprep.mubr.f32.mxu0 0.0
        %6986 = vmatmul.mubr.f32.gmra.mrb[0].mxu0 %v6746
        %v6987 = vpop.f32.mrb[0].mxu0
        %v6988 = vadd.f32 0.0, %v6987
        %v6989 = vpop.f32.mrb[0].mxu0
        %6990 = vmatprep.mubr.f32.mxu0 0.0
        %6991 = vmatmul.mubr.f32.gmra.mrb[0].mxu0 %v6749
        %v6992 = vpop.f32.mrb[0].mxu0
        %v6993 = vadd.f32 0.0, %v6992
        %v6994 = vpop.f32.mrb[0].mxu0
        %6995 = vdwg.mxu0
        %v6996 = vadd.f32 %v6569, %v6818
        %v6997 = vadd.f32 %v6570, %v6823
        %v6998 = vadd.f32 %v6571, %v6828
        %v6999 = vadd.f32 %v6572, %v6833
        %v7000 = vadd.f32 %v6573, %v6838
        %v7001 = vadd.f32 %v6574, %v6843
        %v7002 = vadd.f32 %v6575, %v6848
        %v7003 = vadd.f32 %v6576, %v6853
        %v7004 = vadd.f32 %v6577, %v6858
        %v7005 = vadd.f32 %v6578, %v6863
        %v7006 = vadd.f32 %v6579, %v6868
        %v7007 = vadd.f32 %v6580, %v6873
        %v7008 = vadd.f32 %v6581, %v6878
        %v7009 = vadd.f32 %v6582, %v6883
        %v7010 = vadd.f32 %v6583, %v6888
        %v7011 = vadd.f32 %v6584, %v6893
        %v7012 = vadd.f32 %v6585, %v6898
        %v7013 = vadd.f32 %v6586, %v6903
        %v7014 = vadd.f32 %v6587, %v6908
        %v7015 = vadd.f32 %v6588, %v6913
        %v7016 = vadd.f32 %v6589, %v6918
        %v7017 = vadd.f32 %v6590, %v6923
        %v7018 = vadd.f32 %v6591, %v6928
        %v7019 = vadd.f32 %v6592, %v6933
        %v7020 = vadd.f32 %v6593, %v6938
        %v7021 = vadd.f32 %v6594, %v6943
        %v7022 = vadd.f32 %v6595, %v6948
        %v7023 = vadd.f32 %v6596, %v6953
        %v7024 = vadd.f32 %v6597, %v6958
        %v7025 = vadd.f32 %v6598, %v6963
        %v7026 = vadd.f32 %v6599, %v6968
        %v7027 = vadd.f32 %v6600, %v6973
        %v7028 = vadd.f32 %v6601, %v6978
        %v7029 = vadd.f32 %v6602, %v6983
        %v7030 = vadd.f32 %v6603, %v6988
        %v7031 = vadd.f32 %v6604, %v6993
        %v7032 = vld [vmem:[#allocation2 + $0x29] sm:$0xff]
        %v7033 = vld [vmem:[#allocation2 + $0x31] sm:$0xff]
        %v7034 = vld [vmem:[#allocation2 + $0x39] sm:$0xff]
        %v7035 = vld [vmem:[#allocation2 + $0x41] sm:$0xff]
        %v7036 = vld [vmem:[#allocation2 + $0x49] sm:$0xff]
        %v7037 = vld [vmem:[#allocation2 + $0x51] sm:$0xff]
        %v7038 = vld [vmem:[#allocation2 + $0x59] sm:$0xff]
        %v7039 = vld [vmem:[#allocation2 + $0x61] sm:$0xff]
        %v7040 = vld [vmem:[#allocation2 + $0x69] sm:$0xff]
        %v7041 = vld [vmem:[#allocation2 + $0x71] sm:$0xff]
        %v7042 = vld [vmem:[#allocation2 + $0x79] sm:$0xff]
        %v7043 = vld [vmem:[#allocation2 + $0x81] sm:$0xff]
        %v7044 = vld [vmem:[#allocation2 + $0x89] sm:$0xff]
        %v7045 = vld [vmem:[#allocation2 + $0x91] sm:$0xff]
        %v7046 = vld [vmem:[#allocation2 + $0x99] sm:$0xff]
        %v7047 = vld [vmem:[#allocation2 + $0xa1] sm:$0xff]
        %v7048 = vld [vmem:[#allocation2 + $0xa9] sm:$0xff]
        %v7049 = vld [vmem:[#allocation2 + $0xb1] sm:$0xff]
        %v7050 = vld [vmem:[#allocation2 + $0xb9] sm:$0xff]
        %v7051 = vld [vmem:[#allocation2 + $0xc1] sm:$0xff]
        %v7052 = vld [vmem:[#allocation2 + $0xc9] sm:$0xff]
        %v7053 = vld [vmem:[#allocation2 + $0xd1] sm:$0xff]
        %v7054 = vld [vmem:[#allocation2 + $0xd9] sm:$0xff]
        %v7055 = vld [vmem:[#allocation2 + $0xe1] sm:$0xff]
        %v7056 = vld [vmem:[#allocation2 + $0xe9] sm:$0xff]
        %v7057 = vld [vmem:[#allocation2 + $0xf1] sm:$0xff]
        %v7058 = vld [vmem:[#allocation2 + $0xf9] sm:$0xff]
        %v7059 = vld [vmem:[#allocation2 + $0x101] sm:$0xff]
        %v7060 = vld [vmem:[#allocation2 + $0x109] sm:$0xff]
        %v7061 = vld [vmem:[#allocation2 + $0x111] sm:$0xff]
        %v7062 = vld [vmem:[#allocation2 + $0x119] sm:$0xff]
        %v7063 = vld [vmem:[#allocation2 + $0x121] sm:$0xff]
        %v7064 = vld [vmem:[#allocation2 + $0x129] sm:$0xff]
        %v7065 = vld [vmem:[#allocation2 + $0x131] sm:$0xff]
        %v7066 = vld [vmem:[#allocation2 + $0x139] sm:$0xff]
        %v7067 = vld [vmem:[#allocation2 + $0x141] sm:$0xff]
        %s7068 = scalar_lea.vmem [#allocation9], 48
        %v7069 = vld [vmem:[%s7068] sm:$0xff]
        %v7071 = vsel %vm4500, %v7032, 0
        %v7074 = vsel %vm4500, %v7033, 0
        %v7077 = vsel %vm4500, %v7034, 0
        %v7080 = vsel %vm4500, %v7035, 0
        %v7083 = vsel %vm4500, %v7036, 0
        %v7086 = vsel %vm4500, %v7037, 0
        %v7089 = vsel %vm4500, %v7038, 0
        %v7092 = vsel %vm4500, %v7039, 0
        %v7095 = vsel %vm4500, %v7040, 0
        %v7098 = vsel %vm4500, %v7041, 0
        %v7101 = vsel %vm4500, %v7042, 0
        %v7104 = vsel %vm4500, %v7043, 0
        %v7107 = vsel %vm4500, %v7044, 0
        %v7110 = vsel %vm4500, %v7045, 0
        %v7113 = vsel %vm4500, %v7046, 0
        %v7116 = vsel %vm4500, %v7047, 0
        %v7119 = vsel %vm4500, %v7048, 0
        %v7122 = vsel %vm4500, %v7049, 0
        %v7125 = vsel %vm4500, %v7050, 0
        %v7128 = vsel %vm4500, %v7051, 0
        %v7131 = vsel %vm4500, %v7052, 0
        %v7134 = vsel %vm4500, %v7053, 0
        %v7137 = vsel %vm4500, %v7054, 0
        %v7140 = vsel %vm4500, %v7055, 0
        %v7143 = vsel %vm4500, %v7056, 0
        %v7146 = vsel %vm4500, %v7057, 0
        %v7149 = vsel %vm4500, %v7058, 0
        %v7152 = vsel %vm4500, %v7059, 0
        %v7155 = vsel %vm4500, %v7060, 0
        %v7158 = vsel %vm4500, %v7061, 0
        %v7161 = vsel %vm4500, %v7062, 0
        %v7164 = vsel %vm4500, %v7063, 0
        %v7167 = vsel %vm4500, %v7064, 0
        %v7170 = vsel %vm4500, %v7065, 0
        %v7173 = vsel %vm4500, %v7066, 0
        %v7176 = vsel %vm4500, %v7067, 0
        %7178 = vmatprep.subr.mxu0 0.0
        %7179 = vmatpush1.msra.mxu0 %v7069
        %7180 = vmatprep.subr.mxu0 0.0
        %7181 = vmatpush1.msra.mxu0 0.0
        %7182 = vmatprep.subr.mxu0 0.0
        %7183 = vmatpush1.msra.mxu0 0.0
        %7184 = vmatprep.subr.mxu0 0.0
        %7185 = vmatpush1.msra.mxu0 0.0
        %7186 = vmatprep.subr.mxu0 0.0
        %7187 = vmatpush1.msra.mxu0 0.0
        %7188 = vmatprep.subr.mxu0 0.0
        %7189 = vmatpush1.msra.mxu0 0.0
        %7190 = vmatprep.subr.mxu0 0.0
        %7191 = vmatpush1.msra.mxu0 0.0
        %7192 = vmatprep.subr.mxu0 0.0
        %7193 = vmatpush1.msra.mxu0 0.0
        %7194 = vmatprep.subr.mxu0 0.0
        %7195 = vmatpush1.msra.mxu0 0.0
        %7196 = vmatprep.subr.mxu0 0.0
        %7197 = vmatpush1.msra.mxu0 0.0
        %7198 = vmatprep.subr.mxu0 0.0
        %7199 = vmatpush1.msra.mxu0 0.0
        %7200 = vmatprep.subr.mxu0 0.0
        %7201 = vmatpush1.msra.mxu0 0.0
        %7202 = vmatprep.subr.mxu0 0.0
        %7203 = vmatpush1.msra.mxu0 0.0
        %7204 = vmatprep.subr.mxu0 0.0
        %7205 = vmatpush1.msra.mxu0 0.0
        %7206 = vmatprep.subr.mxu0 0.0
        %7207 = vmatpush1.msra.mxu0 0.0
        %7208 = vmatprep.subr.mxu0 0.0
        %7209 = vmatpush1.msra.mxu0 0.0
        %7210 = vmatprep.subr.mxu0 0.0
        %7211 = vmatpush1.msra.mxu0 0.0
        %7212 = vmatprep.subr.mxu0 0.0
        %7213 = vmatpush1.msra.mxu0 0.0
        %7214 = vmatprep.subr.mxu0 0.0
        %7215 = vmatpush1.msra.mxu0 0.0
        %7216 = vmatprep.subr.mxu0 0.0
        %7217 = vmatpush1.msra.mxu0 0.0
        %7218 = vmatprep.subr.mxu0 0.0
        %7219 = vmatpush1.msra.mxu0 0.0
        %7220 = vmatprep.subr.mxu0 0.0
        %7221 = vmatpush1.msra.mxu0 0.0
        %7222 = vmatprep.subr.mxu0 0.0
        %7223 = vmatpush1.msra.mxu0 0.0
        %7224 = vmatprep.subr.mxu0 0.0
        %7225 = vmatpush1.msra.mxu0 0.0
        %7226 = vmatprep.subr.mxu0 0.0
        %7227 = vmatpush1.msra.mxu0 0.0
        %7228 = vmatprep.subr.mxu0 0.0
        %7229 = vmatpush1.msra.mxu0 0.0
        %7230 = vmatprep.subr.mxu0 0.0
        %7231 = vmatpush1.msra.mxu0 0.0
        %7232 = vmatprep.subr.mxu0 0.0
        %7233 = vmatpush1.msra.mxu0 0.0
        %7234 = vmatprep.subr.mxu0 0.0
        %7235 = vmatpush1.msra.mxu0 0.0
        %7236 = vmatprep.subr.mxu0 0.0
        %7237 = vmatpush1.msra.mxu0 0.0
        %7238 = vmatprep.subr.mxu0 0.0
        %7239 = vmatpush1.msra.mxu0 0.0
        %7240 = vmatprep.subr.mxu0 0.0
        %7241 = vmatpush1.msra.mxu0 0.0
        %7242 = vmatprep.mubr.f32.mxu0 0.0
        %7243 = vmatmul.mubr.f32.gmra.mrb[0].mxu0 %v7071
        %v7244 = vpop.f32.mrb[0].mxu0
        %v7245 = vadd.f32 0.0, %v7244
        %v7246 = vpop.f32.mrb[0].mxu0
        %7247 = vmatprep.mubr.f32.mxu0 0.0
        %7248 = vmatmul.mubr.f32.gmra.mrb[0].mxu0 %v7074
        %v7249 = vpop.f32.mrb[0].mxu0
        %v7250 = vadd.f32 0.0, %v7249
        %v7251 = vpop.f32.mrb[0].mxu0
        %7252 = vmatprep.mubr.f32.mxu0 0.0
        %7253 = vmatmul.mubr.f32.gmra.mrb[0].mxu0 %v7077
        %v7254 = vpop.f32.mrb[0].mxu0
        %v7255 = vadd.f32 0.0, %v7254
        %v7256 = vpop.f32.mrb[0].mxu0
        %7257 = vmatprep.mubr.f32.mxu0 0.0
        %7258 = vmatmul.mubr.f32.gmra.mrb[0].mxu0 %v7080
        %v7259 = vpop.f32.mrb[0].mxu0
        %v7260 = vadd.f32 0.0, %v7259
        %v7261 = vpop.f32.mrb[0].mxu0
        %7262 = vmatprep.mubr.f32.mxu0 0.0
        %7263 = vmatmul.mubr.f32.gmra.mrb[0].mxu0 %v7083
        %v7264 = vpop.f32.mrb[0].mxu0
        %v7265 = vadd.f32 0.0, %v7264
        %v7266 = vpop.f32.mrb[0].mxu0
        %7267 = vmatprep.mubr.f32.mxu0 0.0
        %7268 = vmatmul.mubr.f32.gmra.mrb[0].mxu0 %v7086
        %v7269 = vpop.f32.mrb[0].mxu0
        %v7270 = vadd.f32 0.0, %v7269
        %v7271 = vpop.f32.mrb[0].mxu0
        %7272 = vmatprep.mubr.f32.mxu0 0.0
        %7273 = vmatmul.mubr.f32.gmra.mrb[0].mxu0 %v7089
        %v7274 = vpop.f32.mrb[0].mxu0
        %v7275 = vadd.f32 0.0, %v7274
        %v7276 = vpop.f32.mrb[0].mxu0
        %7277 = vmatprep.mubr.f32.mxu0 0.0
        %7278 = vmatmul.mubr.f32.gmra.mrb[0].mxu0 %v7092
        %v7279 = vpop.f32.mrb[0].mxu0
        %v7280 = vadd.f32 0.0, %v7279
        %v7281 = vpop.f32.mrb[0].mxu0
        %7282 = vmatprep.mubr.f32.mxu0 0.0
        %7283 = vmatmul.mubr.f32.gmra.mrb[0].mxu0 %v7095
        %v7284 = vpop.f32.mrb[0].mxu0
        %v7285 = vadd.f32 0.0, %v7284
        %v7286 = vpop.f32.mrb[0].mxu0
        %7287 = vmatprep.mubr.f32.mxu0 0.0
        %7288 = vmatmul.mubr.f32.gmra.mrb[0].mxu0 %v7098
        %v7289 = vpop.f32.mrb[0].mxu0
        %v7290 = vadd.f32 0.0, %v7289
        %v7291 = vpop.f32.mrb[0].mxu0
        %7292 = vmatprep.mubr.f32.mxu0 0.0
        %7293 = vmatmul.mubr.f32.gmra.mrb[0].mxu0 %v7101
        %v7294 = vpop.f32.mrb[0].mxu0
        %v7295 = vadd.f32 0.0, %v7294
        %v7296 = vpop.f32.mrb[0].mxu0
        %7297 = vmatprep.mubr.f32.mxu0 0.0
        %7298 = vmatmul.mubr.f32.gmra.mrb[0].mxu0 %v7104
        %v7299 = vpop.f32.mrb[0].mxu0
        %v7300 = vadd.f32 0.0, %v7299
        %v7301 = vpop.f32.mrb[0].mxu0
        %7302 = vmatprep.mubr.f32.mxu0 0.0
        %7303 = vmatmul.mubr.f32.gmra.mrb[0].mxu0 %v7107
        %v7304 = vpop.f32.mrb[0].mxu0
        %v7305 = vadd.f32 0.0, %v7304
        %v7306 = vpop.f32.mrb[0].mxu0
        %7307 = vmatprep.mubr.f32.mxu0 0.0
        %7308 = vmatmul.mubr.f32.gmra.mrb[0].mxu0 %v7110
        %v7309 = vpop.f32.mrb[0].mxu0
        %v7310 = vadd.f32 0.0, %v7309
        %v7311 = vpop.f32.mrb[0].mxu0
        %7312 = vmatprep.mubr.f32.mxu0 0.0
        %7313 = vmatmul.mubr.f32.gmra.mrb[0].mxu0 %v7113
        %v7314 = vpop.f32.mrb[0].mxu0
        %v7315 = vadd.f32 0.0, %v7314
        %v7316 = vpop.f32.mrb[0].mxu0
        %7317 = vmatprep.mubr.f32.mxu0 0.0
        %7318 = vmatmul.mubr.f32.gmra.mrb[0].mxu0 %v7116
        %v7319 = vpop.f32.mrb[0].mxu0
        %v7320 = vadd.f32 0.0, %v7319
        %v7321 = vpop.f32.mrb[0].mxu0
        %7322 = vmatprep.mubr.f32.mxu0 0.0
        %7323 = vmatmul.mubr.f32.gmra.mrb[0].mxu0 %v7119
        %v7324 = vpop.f32.mrb[0].mxu0
        %v7325 = vadd.f32 0.0, %v7324
        %v7326 = vpop.f32.mrb[0].mxu0
        %7327 = vmatprep.mubr.f32.mxu0 0.0
        %7328 = vmatmul.mubr.f32.gmra.mrb[0].mxu0 %v7122
        %v7329 = vpop.f32.mrb[0].mxu0
        %v7330 = vadd.f32 0.0, %v7329
        %v7331 = vpop.f32.mrb[0].mxu0
        %7332 = vmatprep.mubr.f32.mxu0 0.0
        %7333 = vmatmul.mubr.f32.gmra.mrb[0].mxu0 %v7125
        %v7334 = vpop.f32.mrb[0].mxu0
        %v7335 = vadd.f32 0.0, %v7334
        %v7336 = vpop.f32.mrb[0].mxu0
        %7337 = vmatprep.mubr.f32.mxu0 0.0
        %7338 = vmatmul.mubr.f32.gmra.mrb[0].mxu0 %v7128
        %v7339 = vpop.f32.mrb[0].mxu0
        %v7340 = vadd.f32 0.0, %v7339
        %v7341 = vpop.f32.mrb[0].mxu0
        %7342 = vmatprep.mubr.f32.mxu0 0.0
        %7343 = vmatmul.mubr.f32.gmra.mrb[0].mxu0 %v7131
        %v7344 = vpop.f32.mrb[0].mxu0
        %v7345 = vadd.f32 0.0, %v7344
        %v7346 = vpop.f32.mrb[0].mxu0
        %7347 = vmatprep.mubr.f32.mxu0 0.0
        %7348 = vmatmul.mubr.f32.gmra.mrb[0].mxu0 %v7134
        %v7349 = vpop.f32.mrb[0].mxu0
        %v7350 = vadd.f32 0.0, %v7349
        %v7351 = vpop.f32.mrb[0].mxu0
        %7352 = vmatprep.mubr.f32.mxu0 0.0
        %7353 = vmatmul.mubr.f32.gmra.mrb[0].mxu0 %v7137
        %v7354 = vpop.f32.mrb[0].mxu0
        %v7355 = vadd.f32 0.0, %v7354
        %v7356 = vpop.f32.mrb[0].mxu0
        %7357 = vmatprep.mubr.f32.mxu0 0.0
        %7358 = vmatmul.mubr.f32.gmra.mrb[0].mxu0 %v7140
        %v7359 = vpop.f32.mrb[0].mxu0
        %v7360 = vadd.f32 0.0, %v7359
        %v7361 = vpop.f32.mrb[0].mxu0
        %7362 = vmatprep.mubr.f32.mxu0 0.0
        %7363 = vmatmul.mubr.f32.gmra.mrb[0].mxu0 %v7143
        %v7364 = vpop.f32.mrb[0].mxu0
        %v7365 = vadd.f32 0.0, %v7364
        %v7366 = vpop.f32.mrb[0].mxu0
        %7367 = vmatprep.mubr.f32.mxu0 0.0
        %7368 = vmatmul.mubr.f32.gmra.mrb[0].mxu0 %v7146
        %v7369 = vpop.f32.mrb[0].mxu0
        %v7370 = vadd.f32 0.0, %v7369
        %v7371 = vpop.f32.mrb[0].mxu0
        %7372 = vmatprep.mubr.f32.mxu0 0.0
        %7373 = vmatmul.mubr.f32.gmra.mrb[0].mxu0 %v7149
        %v7374 = vpop.f32.mrb[0].mxu0
        %v7375 = vadd.f32 0.0, %v7374
        %v7376 = vpop.f32.mrb[0].mxu0
        %7377 = vmatprep.mubr.f32.mxu0 0.0
        %7378 = vmatmul.mubr.f32.gmra.mrb[0].mxu0 %v7152
        %v7379 = vpop.f32.mrb[0].mxu0
        %v7380 = vadd.f32 0.0, %v7379
        %v7381 = vpop.f32.mrb[0].mxu0
        %7382 = vmatprep.mubr.f32.mxu0 0.0
        %7383 = vmatmul.mubr.f32.gmra.mrb[0].mxu0 %v7155
        %v7384 = vpop.f32.mrb[0].mxu0
        %v7385 = vadd.f32 0.0, %v7384
        %v7386 = vpop.f32.mrb[0].mxu0
        %7387 = vmatprep.mubr.f32.mxu0 0.0
        %7388 = vmatmul.mubr.f32.gmra.mrb[0].mxu0 %v7158
        %v7389 = vpop.f32.mrb[0].mxu0
        %v7390 = vadd.f32 0.0, %v7389
        %v7391 = vpop.f32.mrb[0].mxu0
        %7392 = vmatprep.mubr.f32.mxu0 0.0
        %7393 = vmatmul.mubr.f32.gmra.mrb[0].mxu0 %v7161
        %v7394 = vpop.f32.mrb[0].mxu0
        %v7395 = vadd.f32 0.0, %v7394
        %v7396 = vpop.f32.mrb[0].mxu0
        %7397 = vmatprep.mubr.f32.mxu0 0.0
        %7398 = vmatmul.mubr.f32.gmra.mrb[0].mxu0 %v7164
        %v7399 = vpop.f32.mrb[0].mxu0
        %v7400 = vadd.f32 0.0, %v7399
        %v7401 = vpop.f32.mrb[0].mxu0
        %7402 = vmatprep.mubr.f32.mxu0 0.0
        %7403 = vmatmul.mubr.f32.gmra.mrb[0].mxu0 %v7167
        %v7404 = vpop.f32.mrb[0].mxu0
        %v7405 = vadd.f32 0.0, %v7404
        %v7406 = vpop.f32.mrb[0].mxu0
        %7407 = vmatprep.mubr.f32.mxu0 0.0
        %7408 = vmatmul.mubr.f32.gmra.mrb[0].mxu0 %v7170
        %v7409 = vpop.f32.mrb[0].mxu0
        %v7410 = vadd.f32 0.0, %v7409
        %v7411 = vpop.f32.mrb[0].mxu0
        %7412 = vmatprep.mubr.f32.mxu0 0.0
        %7413 = vmatmul.mubr.f32.gmra.mrb[0].mxu0 %v7173
        %v7414 = vpop.f32.mrb[0].mxu0
        %v7415 = vadd.f32 0.0, %v7414
        %v7416 = vpop.f32.mrb[0].mxu0
        %7417 = vmatprep.mubr.f32.mxu0 0.0
        %7418 = vmatmul.mubr.f32.gmra.mrb[0].mxu0 %v7176
        %v7419 = vpop.f32.mrb[0].mxu0
        %v7420 = vadd.f32 0.0, %v7419
        %v7421 = vpop.f32.mrb[0].mxu0
        %7422 = vdwg.mxu0
        %v7423 = vadd.f32 %v6996, %v7245
        %v7424 = vadd.f32 %v6997, %v7250
        %v7425 = vadd.f32 %v6998, %v7255
        %v7426 = vadd.f32 %v6999, %v7260
        %v7427 = vadd.f32 %v7000, %v7265
        %v7428 = vadd.f32 %v7001, %v7270
        %v7429 = vadd.f32 %v7002, %v7275
        %v7430 = vadd.f32 %v7003, %v7280
        %v7431 = vadd.f32 %v7004, %v7285
        %v7432 = vadd.f32 %v7005, %v7290
        %v7433 = vadd.f32 %v7006, %v7295
        %v7434 = vadd.f32 %v7007, %v7300
        %v7435 = vadd.f32 %v7008, %v7305
        %v7436 = vadd.f32 %v7009, %v7310
        %v7437 = vadd.f32 %v7010, %v7315
        %v7438 = vadd.f32 %v7011, %v7320
        %v7439 = vadd.f32 %v7012, %v7325
        %v7440 = vadd.f32 %v7013, %v7330
        %v7441 = vadd.f32 %v7014, %v7335
        %v7442 = vadd.f32 %v7015, %v7340
        %v7443 = vadd.f32 %v7016, %v7345
        %v7444 = vadd.f32 %v7017, %v7350
        %v7445 = vadd.f32 %v7018, %v7355
        %v7446 = vadd.f32 %v7019, %v7360
        %v7447 = vadd.f32 %v7020, %v7365
        %v7448 = vadd.f32 %v7021, %v7370
        %v7449 = vadd.f32 %v7022, %v7375
        %v7450 = vadd.f32 %v7023, %v7380
        %v7451 = vadd.f32 %v7024, %v7385
        %v7452 = vadd.f32 %v7025, %v7390
        %v7453 = vadd.f32 %v7026, %v7395
        %v7454 = vadd.f32 %v7027, %v7400
        %v7455 = vadd.f32 %v7028, %v7405
        %v7456 = vadd.f32 %v7029, %v7410
        %v7457 = vadd.f32 %v7030, %v7415
        %v7458 = vadd.f32 %v7031, %v7420
        %v7459 = vld [vmem:[#allocation2 + $0x2a] sm:$0xff]
        %v7460 = vld [vmem:[#allocation2 + $0x32] sm:$0xff]
        %v7461 = vld [vmem:[#allocation2 + $0x3a] sm:$0xff]
        %v7462 = vld [vmem:[#allocation2 + $0x42] sm:$0xff]
        %v7463 = vld [vmem:[#allocation2 + $0x4a] sm:$0xff]
        %v7464 = vld [vmem:[#allocation2 + $0x52] sm:$0xff]
        %v7465 = vld [vmem:[#allocation2 + $0x5a] sm:$0xff]
        %v7466 = vld [vmem:[#allocation2 + $0x62] sm:$0xff]
        %v7467 = vld [vmem:[#allocation2 + $0x6a] sm:$0xff]
        %v7468 = vld [vmem:[#allocation2 + $0x72] sm:$0xff]
        %v7469 = vld [vmem:[#allocation2 + $0x7a] sm:$0xff]
        %v7470 = vld [vmem:[#allocation2 + $0x82] sm:$0xff]
        %v7471 = vld [vmem:[#allocation2 + $0x8a] sm:$0xff]
        %v7472 = vld [vmem:[#allocation2 + $0x92] sm:$0xff]
        %v7473 = vld [vmem:[#allocation2 + $0x9a] sm:$0xff]
        %v7474 = vld [vmem:[#allocation2 + $0xa2] sm:$0xff]
        %v7475 = vld [vmem:[#allocation2 + $0xaa] sm:$0xff]
        %v7476 = vld [vmem:[#allocation2 + $0xb2] sm:$0xff]
        %v7477 = vld [vmem:[#allocation2 + $0xba] sm:$0xff]
        %v7478 = vld [vmem:[#allocation2 + $0xc2] sm:$0xff]
        %v7479 = vld [vmem:[#allocation2 + $0xca] sm:$0xff]
        %v7480 = vld [vmem:[#allocation2 + $0xd2] sm:$0xff]
        %v7481 = vld [vmem:[#allocation2 + $0xda] sm:$0xff]
        %v7482 = vld [vmem:[#allocation2 + $0xe2] sm:$0xff]
        %v7483 = vld [vmem:[#allocation2 + $0xea] sm:$0xff]
        %v7484 = vld [vmem:[#allocation2 + $0xf2] sm:$0xff]
        %v7485 = vld [vmem:[#allocation2 + $0xfa] sm:$0xff]
        %v7486 = vld [vmem:[#allocation2 + $0x102] sm:$0xff]
        %v7487 = vld [vmem:[#allocation2 + $0x10a] sm:$0xff]
        %v7488 = vld [vmem:[#allocation2 + $0x112] sm:$0xff]
        %v7489 = vld [vmem:[#allocation2 + $0x11a] sm:$0xff]
        %v7490 = vld [vmem:[#allocation2 + $0x122] sm:$0xff]
        %v7491 = vld [vmem:[#allocation2 + $0x12a] sm:$0xff]
        %v7492 = vld [vmem:[#allocation2 + $0x132] sm:$0xff]
        %v7493 = vld [vmem:[#allocation2 + $0x13a] sm:$0xff]
        %v7494 = vld [vmem:[#allocation2 + $0x142] sm:$0xff]
        %s7495 = scalar_lea.vmem [#allocation9], 56
        %v7496 = vld [vmem:[%s7495] sm:$0xff]
        %v7498 = vsel %vm4500, %v7459, 0
        %v7501 = vsel %vm4500, %v7460, 0
        %v7504 = vsel %vm4500, %v7461, 0
        %v7507 = vsel %vm4500, %v7462, 0
        %v7510 = vsel %vm4500, %v7463, 0
        %v7513 = vsel %vm4500, %v7464, 0
        %v7516 = vsel %vm4500, %v7465, 0
        %v7519 = vsel %vm4500, %v7466, 0
        %v7522 = vsel %vm4500, %v7467, 0
        %v7525 = vsel %vm4500, %v7468, 0
        %v7528 = vsel %vm4500, %v7469, 0
        %v7531 = vsel %vm4500, %v7470, 0
        %v7534 = vsel %vm4500, %v7471, 0
        %v7537 = vsel %vm4500, %v7472, 0
        %v7540 = vsel %vm4500, %v7473, 0
        %v7543 = vsel %vm4500, %v7474, 0
        %v7546 = vsel %vm4500, %v7475, 0
        %v7549 = vsel %vm4500, %v7476, 0
        %v7552 = vsel %vm4500, %v7477, 0
        %v7555 = vsel %vm4500, %v7478, 0
        %v7558 = vsel %vm4500, %v7479, 0
        %v7561 = vsel %vm4500, %v7480, 0
        %v7564 = vsel %vm4500, %v7481, 0
        %v7567 = vsel %vm4500, %v7482, 0
        %v7570 = vsel %vm4500, %v7483, 0
        %v7573 = vsel %vm4500, %v7484, 0
        %v7576 = vsel %vm4500, %v7485, 0
        %v7579 = vsel %vm4500, %v7486, 0
        %v7582 = vsel %vm4500, %v7487, 0
        %v7585 = vsel %vm4500, %v7488, 0
        %v7588 = vsel %vm4500, %v7489, 0
        %v7591 = vsel %vm4500, %v7490, 0
        %v7594 = vsel %vm4500, %v7491, 0
        %v7597 = vsel %vm4500, %v7492, 0
        %v7600 = vsel %vm4500, %v7493, 0
        %v7603 = vsel %vm4500, %v7494, 0
        %7605 = vmatprep.subr.mxu0 0.0
        %7606 = vmatpush1.msra.mxu0 %v7496
        %7607 = vmatprep.subr.mxu0 0.0
        %7608 = vmatpush1.msra.mxu0 0.0
        %7609 = vmatprep.subr.mxu0 0.0
        %7610 = vmatpush1.msra.mxu0 0.0
        %7611 = vmatprep.subr.mxu0 0.0
        %7612 = vmatpush1.msra.mxu0 0.0
        %7613 = vmatprep.subr.mxu0 0.0
        %7614 = vmatpush1.msra.mxu0 0.0
        %7615 = vmatprep.subr.mxu0 0.0
        %7616 = vmatpush1.msra.mxu0 0.0
        %7617 = vmatprep.subr.mxu0 0.0
        %7618 = vmatpush1.msra.mxu0 0.0
        %7619 = vmatprep.subr.mxu0 0.0
        %7620 = vmatpush1.msra.mxu0 0.0
        %7621 = vmatprep.subr.mxu0 0.0
        %7622 = vmatpush1.msra.mxu0 0.0
        %7623 = vmatprep.subr.mxu0 0.0
        %7624 = vmatpush1.msra.mxu0 0.0
        %7625 = vmatprep.subr.mxu0 0.0
        %7626 = vmatpush1.msra.mxu0 0.0
        %7627 = vmatprep.subr.mxu0 0.0
        %7628 = vmatpush1.msra.mxu0 0.0
        %7629 = vmatprep.subr.mxu0 0.0
        %7630 = vmatpush1.msra.mxu0 0.0
        %7631 = vmatprep.subr.mxu0 0.0
        %7632 = vmatpush1.msra.mxu0 0.0
        %7633 = vmatprep.subr.mxu0 0.0
        %7634 = vmatpush1.msra.mxu0 0.0
        %7635 = vmatprep.subr.mxu0 0.0
        %7636 = vmatpush1.msra.mxu0 0.0
        %7637 = vmatprep.subr.mxu0 0.0
        %7638 = vmatpush1.msra.mxu0 0.0
        %7639 = vmatprep.subr.mxu0 0.0
        %7640 = vmatpush1.msra.mxu0 0.0
        %7641 = vmatprep.subr.mxu0 0.0
        %7642 = vmatpush1.msra.mxu0 0.0
        %7643 = vmatprep.subr.mxu0 0.0
        %7644 = vmatpush1.msra.mxu0 0.0
        %7645 = vmatprep.subr.mxu0 0.0
        %7646 = vmatpush1.msra.mxu0 0.0
        %7647 = vmatprep.subr.mxu0 0.0
        %7648 = vmatpush1.msra.mxu0 0.0
        %7649 = vmatprep.subr.mxu0 0.0
        %7650 = vmatpush1.msra.mxu0 0.0
        %7651 = vmatprep.subr.mxu0 0.0
        %7652 = vmatpush1.msra.mxu0 0.0
        %7653 = vmatprep.subr.mxu0 0.0
        %7654 = vmatpush1.msra.mxu0 0.0
        %7655 = vmatprep.subr.mxu0 0.0
        %7656 = vmatpush1.msra.mxu0 0.0
        %7657 = vmatprep.subr.mxu0 0.0
        %7658 = vmatpush1.msra.mxu0 0.0
        %7659 = vmatprep.subr.mxu0 0.0
        %7660 = vmatpush1.msra.mxu0 0.0
        %7661 = vmatprep.subr.mxu0 0.0
        %7662 = vmatpush1.msra.mxu0 0.0
        %7663 = vmatprep.subr.mxu0 0.0
        %7664 = vmatpush1.msra.mxu0 0.0
        %7665 = vmatprep.subr.mxu0 0.0
        %7666 = vmatpush1.msra.mxu0 0.0
        %7667 = vmatprep.subr.mxu0 0.0
        %7668 = vmatpush1.msra.mxu0 0.0
        %7669 = vmatprep.mubr.f32.mxu0 0.0
        %7670 = vmatmul.mubr.f32.gmra.mrb[0].mxu0 %v7498
        %v7671 = vpop.f32.mrb[0].mxu0
        %v7672 = vadd.f32 0.0, %v7671
        %v7673 = vpop.f32.mrb[0].mxu0
        %7674 = vmatprep.mubr.f32.mxu0 0.0
        %7675 = vmatmul.mubr.f32.gmra.mrb[0].mxu0 %v7501
        %v7676 = vpop.f32.mrb[0].mxu0
        %v7677 = vadd.f32 0.0, %v7676
        %v7678 = vpop.f32.mrb[0].mxu0
        %7679 = vmatprep.mubr.f32.mxu0 0.0
        %7680 = vmatmul.mubr.f32.gmra.mrb[0].mxu0 %v7504
        %v7681 = vpop.f32.mrb[0].mxu0
        %v7682 = vadd.f32 0.0, %v7681
        %v7683 = vpop.f32.mrb[0].mxu0
        %7684 = vmatprep.mubr.f32.mxu0 0.0
        %7685 = vmatmul.mubr.f32.gmra.mrb[0].mxu0 %v7507
        %v7686 = vpop.f32.mrb[0].mxu0
        %v7687 = vadd.f32 0.0, %v7686
        %v7688 = vpop.f32.mrb[0].mxu0
        %7689 = vmatprep.mubr.f32.mxu0 0.0
        %7690 = vmatmul.mubr.f32.gmra.mrb[0].mxu0 %v7510
        %v7691 = vpop.f32.mrb[0].mxu0
        %v7692 = vadd.f32 0.0, %v7691
        %v7693 = vpop.f32.mrb[0].mxu0
        %7694 = vmatprep.mubr.f32.mxu0 0.0
        %7695 = vmatmul.mubr.f32.gmra.mrb[0].mxu0 %v7513
        %v7696 = vpop.f32.mrb[0].mxu0
        %v7697 = vadd.f32 0.0, %v7696
        %v7698 = vpop.f32.mrb[0].mxu0
        %7699 = vmatprep.mubr.f32.mxu0 0.0
        %7700 = vmatmul.mubr.f32.gmra.mrb[0].mxu0 %v7516
        %v7701 = vpop.f32.mrb[0].mxu0
        %v7702 = vadd.f32 0.0, %v7701
        %v7703 = vpop.f32.mrb[0].mxu0
        %7704 = vmatprep.mubr.f32.mxu0 0.0
        %7705 = vmatmul.mubr.f32.gmra.mrb[0].mxu0 %v7519
        %v7706 = vpop.f32.mrb[0].mxu0
        %v7707 = vadd.f32 0.0, %v7706
        %v7708 = vpop.f32.mrb[0].mxu0
        %7709 = vmatprep.mubr.f32.mxu0 0.0
        %7710 = vmatmul.mubr.f32.gmra.mrb[0].mxu0 %v7522
        %v7711 = vpop.f32.mrb[0].mxu0
        %v7712 = vadd.f32 0.0, %v7711
        %v7713 = vpop.f32.mrb[0].mxu0
        %7714 = vmatprep.mubr.f32.mxu0 0.0
        %7715 = vmatmul.mubr.f32.gmra.mrb[0].mxu0 %v7525
        %v7716 = vpop.f32.mrb[0].mxu0
        %v7717 = vadd.f32 0.0, %v7716
        %v7718 = vpop.f32.mrb[0].mxu0
        %7719 = vmatprep.mubr.f32.mxu0 0.0
        %7720 = vmatmul.mubr.f32.gmra.mrb[0].mxu0 %v7528
        %v7721 = vpop.f32.mrb[0].mxu0
        %v7722 = vadd.f32 0.0, %v7721
        %v7723 = vpop.f32.mrb[0].mxu0
        %7724 = vmatprep.mubr.f32.mxu0 0.0
        %7725 = vmatmul.mubr.f32.gmra.mrb[0].mxu0 %v7531
        %v7726 = vpop.f32.mrb[0].mxu0
        %v7727 = vadd.f32 0.0, %v7726
        %v7728 = vpop.f32.mrb[0].mxu0
        %7729 = vmatprep.mubr.f32.mxu0 0.0
        %7730 = vmatmul.mubr.f32.gmra.mrb[0].mxu0 %v7534
        %v7731 = vpop.f32.mrb[0].mxu0
        %v7732 = vadd.f32 0.0, %v7731
        %v7733 = vpop.f32.mrb[0].mxu0
        %7734 = vmatprep.mubr.f32.mxu0 0.0
        %7735 = vmatmul.mubr.f32.gmra.mrb[0].mxu0 %v7537
        %v7736 = vpop.f32.mrb[0].mxu0
        %v7737 = vadd.f32 0.0, %v7736
        %v7738 = vpop.f32.mrb[0].mxu0
        %7739 = vmatprep.mubr.f32.mxu0 0.0
        %7740 = vmatmul.mubr.f32.gmra.mrb[0].mxu0 %v7540
        %v7741 = vpop.f32.mrb[0].mxu0
        %v7742 = vadd.f32 0.0, %v7741
        %v7743 = vpop.f32.mrb[0].mxu0
        %7744 = vmatprep.mubr.f32.mxu0 0.0
        %7745 = vmatmul.mubr.f32.gmra.mrb[0].mxu0 %v7543
        %v7746 = vpop.f32.mrb[0].mxu0
        %v7747 = vadd.f32 0.0, %v7746
        %v7748 = vpop.f32.mrb[0].mxu0
        %7749 = vmatprep.mubr.f32.mxu0 0.0
        %7750 = vmatmul.mubr.f32.gmra.mrb[0].mxu0 %v7546
        %v7751 = vpop.f32.mrb[0].mxu0
        %v7752 = vadd.f32 0.0, %v7751
        %v7753 = vpop.f32.mrb[0].mxu0
        %7754 = vmatprep.mubr.f32.mxu0 0.0
        %7755 = vmatmul.mubr.f32.gmra.mrb[0].mxu0 %v7549
        %v7756 = vpop.f32.mrb[0].mxu0
        %v7757 = vadd.f32 0.0, %v7756
        %v7758 = vpop.f32.mrb[0].mxu0
        %7759 = vmatprep.mubr.f32.mxu0 0.0
        %7760 = vmatmul.mubr.f32.gmra.mrb[0].mxu0 %v7552
        %v7761 = vpop.f32.mrb[0].mxu0
        %v7762 = vadd.f32 0.0, %v7761
        %v7763 = vpop.f32.mrb[0].mxu0
        %7764 = vmatprep.mubr.f32.mxu0 0.0
        %7765 = vmatmul.mubr.f32.gmra.mrb[0].mxu0 %v7555
        %v7766 = vpop.f32.mrb[0].mxu0
        %v7767 = vadd.f32 0.0, %v7766
        %v7768 = vpop.f32.mrb[0].mxu0
        %7769 = vmatprep.mubr.f32.mxu0 0.0
        %7770 = vmatmul.mubr.f32.gmra.mrb[0].mxu0 %v7558
        %v7771 = vpop.f32.mrb[0].mxu0
        %v7772 = vadd.f32 0.0, %v7771
        %v7773 = vpop.f32.mrb[0].mxu0
        %7774 = vmatprep.mubr.f32.mxu0 0.0
        %7775 = vmatmul.mubr.f32.gmra.mrb[0].mxu0 %v7561
        %v7776 = vpop.f32.mrb[0].mxu0
        %v7777 = vadd.f32 0.0, %v7776
        %v7778 = vpop.f32.mrb[0].mxu0
        %7779 = vmatprep.mubr.f32.mxu0 0.0
        %7780 = vmatmul.mubr.f32.gmra.mrb[0].mxu0 %v7564
        %v7781 = vpop.f32.mrb[0].mxu0
        %v7782 = vadd.f32 0.0, %v7781
        %v7783 = vpop.f32.mrb[0].mxu0
        %7784 = vmatprep.mubr.f32.mxu0 0.0
        %7785 = vmatmul.mubr.f32.gmra.mrb[0].mxu0 %v7567
        %v7786 = vpop.f32.mrb[0].mxu0
        %v7787 = vadd.f32 0.0, %v7786
        %v7788 = vpop.f32.mrb[0].mxu0
        %7789 = vmatprep.mubr.f32.mxu0 0.0
        %7790 = vmatmul.mubr.f32.gmra.mrb[0].mxu0 %v7570
        %v7791 = vpop.f32.mrb[0].mxu0
        %v7792 = vadd.f32 0.0, %v7791
        %v7793 = vpop.f32.mrb[0].mxu0
        %7794 = vmatprep.mubr.f32.mxu0 0.0
        %7795 = vmatmul.mubr.f32.gmra.mrb[0].mxu0 %v7573
        %v7796 = vpop.f32.mrb[0].mxu0
        %v7797 = vadd.f32 0.0, %v7796
        %v7798 = vpop.f32.mrb[0].mxu0
        %7799 = vmatprep.mubr.f32.mxu0 0.0
        %7800 = vmatmul.mubr.f32.gmra.mrb[0].mxu0 %v7576
        %v7801 = vpop.f32.mrb[0].mxu0
        %v7802 = vadd.f32 0.0, %v7801
        %v7803 = vpop.f32.mrb[0].mxu0
        %7804 = vmatprep.mubr.f32.mxu0 0.0
        %7805 = vmatmul.mubr.f32.gmra.mrb[0].mxu0 %v7579
        %v7806 = vpop.f32.mrb[0].mxu0
        %v7807 = vadd.f32 0.0, %v7806
        %v7808 = vpop.f32.mrb[0].mxu0
        %7809 = vmatprep.mubr.f32.mxu0 0.0
        %7810 = vmatmul.mubr.f32.gmra.mrb[0].mxu0 %v7582
        %v7811 = vpop.f32.mrb[0].mxu0
        %v7812 = vadd.f32 0.0, %v7811
        %v7813 = vpop.f32.mrb[0].mxu0
        %7814 = vmatprep.mubr.f32.mxu0 0.0
        %7815 = vmatmul.mubr.f32.gmra.mrb[0].mxu0 %v7585
        %v7816 = vpop.f32.mrb[0].mxu0
        %v7817 = vadd.f32 0.0, %v7816
        %v7818 = vpop.f32.mrb[0].mxu0
        %7819 = vmatprep.mubr.f32.mxu0 0.0
        %7820 = vmatmul.mubr.f32.gmra.mrb[0].mxu0 %v7588
        %v7821 = vpop.f32.mrb[0].mxu0
        %v7822 = vadd.f32 0.0, %v7821
        %v7823 = vpop.f32.mrb[0].mxu0
        %7824 = vmatprep.mubr.f32.mxu0 0.0
        %7825 = vmatmul.mubr.f32.gmra.mrb[0].mxu0 %v7591
        %v7826 = vpop.f32.mrb[0].mxu0
        %v7827 = vadd.f32 0.0, %v7826
        %v7828 = vpop.f32.mrb[0].mxu0
        %7829 = vmatprep.mubr.f32.mxu0 0.0
        %7830 = vmatmul.mubr.f32.gmra.mrb[0].mxu0 %v7594
        %v7831 = vpop.f32.mrb[0].mxu0
        %v7832 = vadd.f32 0.0, %v7831
        %v7833 = vpop.f32.mrb[0].mxu0
        %7834 = vmatprep.mubr.f32.mxu0 0.0
        %7835 = vmatmul.mubr.f32.gmra.mrb[0].mxu0 %v7597
        %v7836 = vpop.f32.mrb[0].mxu0
        %v7837 = vadd.f32 0.0, %v7836
        %v7838 = vpop.f32.mrb[0].mxu0
        %7839 = vmatprep.mubr.f32.mxu0 0.0
        %7840 = vmatmul.mubr.f32.gmra.mrb[0].mxu0 %v7600
        %v7841 = vpop.f32.mrb[0].mxu0
        %v7842 = vadd.f32 0.0, %v7841
        %v7843 = vpop.f32.mrb[0].mxu0
        %7844 = vmatprep.mubr.f32.mxu0 0.0
        %7845 = vmatmul.mubr.f32.gmra.mrb[0].mxu0 %v7603
        %v7846 = vpop.f32.mrb[0].mxu0
        %v7847 = vadd.f32 0.0, %v7846
        %v7848 = vpop.f32.mrb[0].mxu0
        %7849 = vdwg.mxu0
        %v7850 = vadd.f32 %v7423, %v7672
        %v7851 = vadd.f32 %v7424, %v7677
        %v7852 = vadd.f32 %v7425, %v7682
        %v7853 = vadd.f32 %v7426, %v7687
        %v7854 = vadd.f32 %v7427, %v7692
        %v7855 = vadd.f32 %v7428, %v7697
        %v7856 = vadd.f32 %v7429, %v7702
        %v7857 = vadd.f32 %v7430, %v7707
        %v7858 = vadd.f32 %v7431, %v7712
        %v7859 = vadd.f32 %v7432, %v7717
        %v7860 = vadd.f32 %v7433, %v7722
        %v7861 = vadd.f32 %v7434, %v7727
        %v7862 = vadd.f32 %v7435, %v7732
        %v7863 = vadd.f32 %v7436, %v7737
        %v7864 = vadd.f32 %v7437, %v7742
        %v7865 = vadd.f32 %v7438, %v7747
        %v7866 = vadd.f32 %v7439, %v7752
        %v7867 = vadd.f32 %v7440, %v7757
        %v7868 = vadd.f32 %v7441, %v7762
        %v7869 = vadd.f32 %v7442, %v7767
        %v7870 = vadd.f32 %v7443, %v7772
        %v7871 = vadd.f32 %v7444, %v7777
        %v7872 = vadd.f32 %v7445, %v7782
        %v7873 = vadd.f32 %v7446, %v7787
        %v7874 = vadd.f32 %v7447, %v7792
        %v7875 = vadd.f32 %v7448, %v7797
        %v7876 = vadd.f32 %v7449, %v7802
        %v7877 = vadd.f32 %v7450, %v7807
        %v7878 = vadd.f32 %v7451, %v7812
        %v7879 = vadd.f32 %v7452, %v7817
        %v7880 = vadd.f32 %v7453, %v7822
        %v7881 = vadd.f32 %v7454, %v7827
        %v7882 = vadd.f32 %v7455, %v7832
        %v7883 = vadd.f32 %v7456, %v7837
        %v7884 = vadd.f32 %v7457, %v7842
        %v7885 = vadd.f32 %v7458, %v7847
        %v7886 = vld [vmem:[#allocation2 + $0x2b] sm:$0xff]
        %v7887 = vld [vmem:[#allocation2 + $0x33] sm:$0xff]
        %v7888 = vld [vmem:[#allocation2 + $0x3b] sm:$0xff]
        %v7889 = vld [vmem:[#allocation2 + $0x43] sm:$0xff]
        %v7890 = vld [vmem:[#allocation2 + $0x4b] sm:$0xff]
        %v7891 = vld [vmem:[#allocation2 + $0x53] sm:$0xff]
        %v7892 = vld [vmem:[#allocation2 + $0x5b] sm:$0xff]
        %v7893 = vld [vmem:[#allocation2 + $0x63] sm:$0xff]
        %v7894 = vld [vmem:[#allocation2 + $0x6b] sm:$0xff]
        %v7895 = vld [vmem:[#allocation2 + $0x73] sm:$0xff]
        %v7896 = vld [vmem:[#allocation2 + $0x7b] sm:$0xff]
        %v7897 = vld [vmem:[#allocation2 + $0x83] sm:$0xff]
        %v7898 = vld [vmem:[#allocation2 + $0x8b] sm:$0xff]
        %v7899 = vld [vmem:[#allocation2 + $0x93] sm:$0xff]
        %v7900 = vld [vmem:[#allocation2 + $0x9b] sm:$0xff]
        %v7901 = vld [vmem:[#allocation2 + $0xa3] sm:$0xff]
        %v7902 = vld [vmem:[#allocation2 + $0xab] sm:$0xff]
        %v7903 = vld [vmem:[#allocation2 + $0xb3] sm:$0xff]
        %v7904 = vld [vmem:[#allocation2 + $0xbb] sm:$0xff]
        %v7905 = vld [vmem:[#allocation2 + $0xc3] sm:$0xff]
        %v7906 = vld [vmem:[#allocation2 + $0xcb] sm:$0xff]
        %v7907 = vld [vmem:[#allocation2 + $0xd3] sm:$0xff]
        %v7908 = vld [vmem:[#allocation2 + $0xdb] sm:$0xff]
        %v7909 = vld [vmem:[#allocation2 + $0xe3] sm:$0xff]
        %v7910 = vld [vmem:[#allocation2 + $0xeb] sm:$0xff]
        %v7911 = vld [vmem:[#allocation2 + $0xf3] sm:$0xff]
        %v7912 = vld [vmem:[#allocation2 + $0xfb] sm:$0xff]
        %v7913 = vld [vmem:[#allocation2 + $0x103] sm:$0xff]
        %v7914 = vld [vmem:[#allocation2 + $0x10b] sm:$0xff]
        %v7915 = vld [vmem:[#allocation2 + $0x113] sm:$0xff]
        %v7916 = vld [vmem:[#allocation2 + $0x11b] sm:$0xff]
        %v7917 = vld [vmem:[#allocation2 + $0x123] sm:$0xff]
        %v7918 = vld [vmem:[#allocation2 + $0x12b] sm:$0xff]
        %v7919 = vld [vmem:[#allocation2 + $0x133] sm:$0xff]
        %v7920 = vld [vmem:[#allocation2 + $0x13b] sm:$0xff]
        %v7921 = vld [vmem:[#allocation2 + $0x143] sm:$0xff]
        %s7922 = scalar_lea.vmem [#allocation9], 64
        %v7923 = vld [vmem:[%s7922] sm:$0xff]
        %v7925 = vsel %vm4500, %v7886, 0
        %v7928 = vsel %vm4500, %v7887, 0
        %v7931 = vsel %vm4500, %v7888, 0
        %v7934 = vsel %vm4500, %v7889, 0
        %v7937 = vsel %vm4500, %v7890, 0
        %v7940 = vsel %vm4500, %v7891, 0
        %v7943 = vsel %vm4500, %v7892, 0
        %v7946 = vsel %vm4500, %v7893, 0
        %v7949 = vsel %vm4500, %v7894, 0
        %v7952 = vsel %vm4500, %v7895, 0
        %v7955 = vsel %vm4500, %v7896, 0
        %v7958 = vsel %vm4500, %v7897, 0
        %v7961 = vsel %vm4500, %v7898, 0
        %v7964 = vsel %vm4500, %v7899, 0
        %v7967 = vsel %vm4500, %v7900, 0
        %v7970 = vsel %vm4500, %v7901, 0
        %v7973 = vsel %vm4500, %v7902, 0
        %v7976 = vsel %vm4500, %v7903, 0
        %v7979 = vsel %vm4500, %v7904, 0
        %v7982 = vsel %vm4500, %v7905, 0
        %v7985 = vsel %vm4500, %v7906, 0
        %v7988 = vsel %vm4500, %v7907, 0
        %v7991 = vsel %vm4500, %v7908, 0
        %v7994 = vsel %vm4500, %v7909, 0
        %v7997 = vsel %vm4500, %v7910, 0
        %v8000 = vsel %vm4500, %v7911, 0
        %v8003 = vsel %vm4500, %v7912, 0
        %v8006 = vsel %vm4500, %v7913, 0
        %v8009 = vsel %vm4500, %v7914, 0
        %v8012 = vsel %vm4500, %v7915, 0
        %v8015 = vsel %vm4500, %v7916, 0
        %v8018 = vsel %vm4500, %v7917, 0
        %v8021 = vsel %vm4500, %v7918, 0
        %v8024 = vsel %vm4500, %v7919, 0
        %v8027 = vsel %vm4500, %v7920, 0
        %v8030 = vsel %vm4500, %v7921, 0
        %8032 = vmatprep.subr.mxu0 0.0
        %8033 = vmatpush1.msra.mxu0 %v7923
        %8034 = vmatprep.subr.mxu0 0.0
        %8035 = vmatpush1.msra.mxu0 0.0
        %8036 = vmatprep.subr.mxu0 0.0
        %8037 = vmatpush1.msra.mxu0 0.0
        %8038 = vmatprep.subr.mxu0 0.0
        %8039 = vmatpush1.msra.mxu0 0.0
        %8040 = vmatprep.subr.mxu0 0.0
        %8041 = vmatpush1.msra.mxu0 0.0
        %8042 = vmatprep.subr.mxu0 0.0
        %8043 = vmatpush1.msra.mxu0 0.0
        %8044 = vmatprep.subr.mxu0 0.0
        %8045 = vmatpush1.msra.mxu0 0.0
        %8046 = vmatprep.subr.mxu0 0.0
        %8047 = vmatpush1.msra.mxu0 0.0
        %8048 = vmatprep.subr.mxu0 0.0
        %8049 = vmatpush1.msra.mxu0 0.0
        %8050 = vmatprep.subr.mxu0 0.0
        %8051 = vmatpush1.msra.mxu0 0.0
        %8052 = vmatprep.subr.mxu0 0.0
        %8053 = vmatpush1.msra.mxu0 0.0
        %8054 = vmatprep.subr.mxu0 0.0
        %8055 = vmatpush1.msra.mxu0 0.0
        %8056 = vmatprep.subr.mxu0 0.0
        %8057 = vmatpush1.msra.mxu0 0.0
        %8058 = vmatprep.subr.mxu0 0.0
        %8059 = vmatpush1.msra.mxu0 0.0
        %8060 = vmatprep.subr.mxu0 0.0
        %8061 = vmatpush1.msra.mxu0 0.0
        %8062 = vmatprep.subr.mxu0 0.0
        %8063 = vmatpush1.msra.mxu0 0.0
        %8064 = vmatprep.subr.mxu0 0.0
        %8065 = vmatpush1.msra.mxu0 0.0
        %8066 = vmatprep.subr.mxu0 0.0
        %8067 = vmatpush1.msra.mxu0 0.0
        %8068 = vmatprep.subr.mxu0 0.0
        %8069 = vmatpush1.msra.mxu0 0.0
        %8070 = vmatprep.subr.mxu0 0.0
        %8071 = vmatpush1.msra.mxu0 0.0
        %8072 = vmatprep.subr.mxu0 0.0
        %8073 = vmatpush1.msra.mxu0 0.0
        %8074 = vmatprep.subr.mxu0 0.0
        %8075 = vmatpush1.msra.mxu0 0.0
        %8076 = vmatprep.subr.mxu0 0.0
        %8077 = vmatpush1.msra.mxu0 0.0
        %8078 = vmatprep.subr.mxu0 0.0
        %8079 = vmatpush1.msra.mxu0 0.0
        %8080 = vmatprep.subr.mxu0 0.0
        %8081 = vmatpush1.msra.mxu0 0.0
        %8082 = vmatprep.subr.mxu0 0.0
        %8083 = vmatpush1.msra.mxu0 0.0
        %8084 = vmatprep.subr.mxu0 0.0
        %8085 = vmatpush1.msra.mxu0 0.0
        %8086 = vmatprep.subr.mxu0 0.0
        %8087 = vmatpush1.msra.mxu0 0.0
        %8088 = vmatprep.subr.mxu0 0.0
        %8089 = vmatpush1.msra.mxu0 0.0
        %8090 = vmatprep.subr.mxu0 0.0
        %8091 = vmatpush1.msra.mxu0 0.0
        %8092 = vmatprep.subr.mxu0 0.0
        %8093 = vmatpush1.msra.mxu0 0.0
        %8094 = vmatprep.subr.mxu0 0.0
        %8095 = vmatpush1.msra.mxu0 0.0
        %8096 = vmatprep.mubr.f32.mxu0 0.0
        %8097 = vmatmul.mubr.f32.gmra.mrb[0].mxu0 %v7925
        %v8098 = vpop.f32.mrb[0].mxu0
        %v8099 = vadd.f32 0.0, %v8098
        %v8100 = vpop.f32.mrb[0].mxu0
        %8101 = vmatprep.mubr.f32.mxu0 0.0
        %8102 = vmatmul.mubr.f32.gmra.mrb[0].mxu0 %v7928
        %v8103 = vpop.f32.mrb[0].mxu0
        %v8104 = vadd.f32 0.0, %v8103
        %v8105 = vpop.f32.mrb[0].mxu0
        %8106 = vmatprep.mubr.f32.mxu0 0.0
        %8107 = vmatmul.mubr.f32.gmra.mrb[0].mxu0 %v7931
        %v8108 = vpop.f32.mrb[0].mxu0
        %v8109 = vadd.f32 0.0, %v8108
        %v8110 = vpop.f32.mrb[0].mxu0
        %8111 = vmatprep.mubr.f32.mxu0 0.0
        %8112 = vmatmul.mubr.f32.gmra.mrb[0].mxu0 %v7934
        %v8113 = vpop.f32.mrb[0].mxu0
        %v8114 = vadd.f32 0.0, %v8113
        %v8115 = vpop.f32.mrb[0].mxu0
        %8116 = vmatprep.mubr.f32.mxu0 0.0
        %8117 = vmatmul.mubr.f32.gmra.mrb[0].mxu0 %v7937
        %v8118 = vpop.f32.mrb[0].mxu0
        %v8119 = vadd.f32 0.0, %v8118
        %v8120 = vpop.f32.mrb[0].mxu0
        %8121 = vmatprep.mubr.f32.mxu0 0.0
        %8122 = vmatmul.mubr.f32.gmra.mrb[0].mxu0 %v7940
        %v8123 = vpop.f32.mrb[0].mxu0
        %v8124 = vadd.f32 0.0, %v8123
        %v8125 = vpop.f32.mrb[0].mxu0
        %8126 = vmatprep.mubr.f32.mxu0 0.0
        %8127 = vmatmul.mubr.f32.gmra.mrb[0].mxu0 %v7943
        %v8128 = vpop.f32.mrb[0].mxu0
        %v8129 = vadd.f32 0.0, %v8128
        %v8130 = vpop.f32.mrb[0].mxu0
        %8131 = vmatprep.mubr.f32.mxu0 0.0
        %8132 = vmatmul.mubr.f32.gmra.mrb[0].mxu0 %v7946
        %v8133 = vpop.f32.mrb[0].mxu0
        %v8134 = vadd.f32 0.0, %v8133
        %v8135 = vpop.f32.mrb[0].mxu0
        %8136 = vmatprep.mubr.f32.mxu0 0.0
        %8137 = vmatmul.mubr.f32.gmra.mrb[0].mxu0 %v7949
        %v8138 = vpop.f32.mrb[0].mxu0
        %v8139 = vadd.f32 0.0, %v8138
        %v8140 = vpop.f32.mrb[0].mxu0
        %8141 = vmatprep.mubr.f32.mxu0 0.0
        %8142 = vmatmul.mubr.f32.gmra.mrb[0].mxu0 %v7952
        %v8143 = vpop.f32.mrb[0].mxu0
        %v8144 = vadd.f32 0.0, %v8143
        %v8145 = vpop.f32.mrb[0].mxu0
        %8146 = vmatprep.mubr.f32.mxu0 0.0
        %8147 = vmatmul.mubr.f32.gmra.mrb[0].mxu0 %v7955
        %v8148 = vpop.f32.mrb[0].mxu0
        %v8149 = vadd.f32 0.0, %v8148
        %v8150 = vpop.f32.mrb[0].mxu0
        %8151 = vmatprep.mubr.f32.mxu0 0.0
        %8152 = vmatmul.mubr.f32.gmra.mrb[0].mxu0 %v7958
        %v8153 = vpop.f32.mrb[0].mxu0
        %v8154 = vadd.f32 0.0, %v8153
        %v8155 = vpop.f32.mrb[0].mxu0
        %8156 = vmatprep.mubr.f32.mxu0 0.0
        %8157 = vmatmul.mubr.f32.gmra.mrb[0].mxu0 %v7961
        %v8158 = vpop.f32.mrb[0].mxu0
        %v8159 = vadd.f32 0.0, %v8158
        %v8160 = vpop.f32.mrb[0].mxu0
        %8161 = vmatprep.mubr.f32.mxu0 0.0
        %8162 = vmatmul.mubr.f32.gmra.mrb[0].mxu0 %v7964
        %v8163 = vpop.f32.mrb[0].mxu0
        %v8164 = vadd.f32 0.0, %v8163
        %v8165 = vpop.f32.mrb[0].mxu0
        %8166 = vmatprep.mubr.f32.mxu0 0.0
        %8167 = vmatmul.mubr.f32.gmra.mrb[0].mxu0 %v7967
        %v8168 = vpop.f32.mrb[0].mxu0
        %v8169 = vadd.f32 0.0, %v8168
        %v8170 = vpop.f32.mrb[0].mxu0
        %8171 = vmatprep.mubr.f32.mxu0 0.0
        %8172 = vmatmul.mubr.f32.gmra.mrb[0].mxu0 %v7970
        %v8173 = vpop.f32.mrb[0].mxu0
        %v8174 = vadd.f32 0.0, %v8173
        %v8175 = vpop.f32.mrb[0].mxu0
        %8176 = vmatprep.mubr.f32.mxu0 0.0
        %8177 = vmatmul.mubr.f32.gmra.mrb[0].mxu0 %v7973
        %v8178 = vpop.f32.mrb[0].mxu0
        %v8179 = vadd.f32 0.0, %v8178
        %v8180 = vpop.f32.mrb[0].mxu0
        %8181 = vmatprep.mubr.f32.mxu0 0.0
        %8182 = vmatmul.mubr.f32.gmra.mrb[0].mxu0 %v7976
        %v8183 = vpop.f32.mrb[0].mxu0
        %v8184 = vadd.f32 0.0, %v8183
        %v8185 = vpop.f32.mrb[0].mxu0
        %8186 = vmatprep.mubr.f32.mxu0 0.0
        %8187 = vmatmul.mubr.f32.gmra.mrb[0].mxu0 %v7979
        %v8188 = vpop.f32.mrb[0].mxu0
        %v8189 = vadd.f32 0.0, %v8188
        %v8190 = vpop.f32.mrb[0].mxu0
        %8191 = vmatprep.mubr.f32.mxu0 0.0
        %8192 = vmatmul.mubr.f32.gmra.mrb[0].mxu0 %v7982
        %v8193 = vpop.f32.mrb[0].mxu0
        %v8194 = vadd.f32 0.0, %v8193
        %v8195 = vpop.f32.mrb[0].mxu0
        %8196 = vmatprep.mubr.f32.mxu0 0.0
        %8197 = vmatmul.mubr.f32.gmra.mrb[0].mxu0 %v7985
        %v8198 = vpop.f32.mrb[0].mxu0
        %v8199 = vadd.f32 0.0, %v8198
        %v8200 = vpop.f32.mrb[0].mxu0
        %8201 = vmatprep.mubr.f32.mxu0 0.0
        %8202 = vmatmul.mubr.f32.gmra.mrb[0].mxu0 %v7988
        %v8203 = vpop.f32.mrb[0].mxu0
        %v8204 = vadd.f32 0.0, %v8203
        %v8205 = vpop.f32.mrb[0].mxu0
        %8206 = vmatprep.mubr.f32.mxu0 0.0
        %8207 = vmatmul.mubr.f32.gmra.mrb[0].mxu0 %v7991
        %v8208 = vpop.f32.mrb[0].mxu0
        %v8209 = vadd.f32 0.0, %v8208
        %v8210 = vpop.f32.mrb[0].mxu0
        %8211 = vmatprep.mubr.f32.mxu0 0.0
        %8212 = vmatmul.mubr.f32.gmra.mrb[0].mxu0 %v7994
        %v8213 = vpop.f32.mrb[0].mxu0
        %v8214 = vadd.f32 0.0, %v8213
        %v8215 = vpop.f32.mrb[0].mxu0
        %8216 = vmatprep.mubr.f32.mxu0 0.0
        %8217 = vmatmul.mubr.f32.gmra.mrb[0].mxu0 %v7997
        %v8218 = vpop.f32.mrb[0].mxu0
        %v8219 = vadd.f32 0.0, %v8218
        %v8220 = vpop.f32.mrb[0].mxu0
        %8221 = vmatprep.mubr.f32.mxu0 0.0
        %8222 = vmatmul.mubr.f32.gmra.mrb[0].mxu0 %v8000
        %v8223 = vpop.f32.mrb[0].mxu0
        %v8224 = vadd.f32 0.0, %v8223
        %v8225 = vpop.f32.mrb[0].mxu0
        %8226 = vmatprep.mubr.f32.mxu0 0.0
        %8227 = vmatmul.mubr.f32.gmra.mrb[0].mxu0 %v8003
        %v8228 = vpop.f32.mrb[0].mxu0
        %v8229 = vadd.f32 0.0, %v8228
        %v8230 = vpop.f32.mrb[0].mxu0
        %8231 = vmatprep.mubr.f32.mxu0 0.0
        %8232 = vmatmul.mubr.f32.gmra.mrb[0].mxu0 %v8006
        %v8233 = vpop.f32.mrb[0].mxu0
        %v8234 = vadd.f32 0.0, %v8233
        %v8235 = vpop.f32.mrb[0].mxu0
        %8236 = vmatprep.mubr.f32.mxu0 0.0
        %8237 = vmatmul.mubr.f32.gmra.mrb[0].mxu0 %v8009
        %v8238 = vpop.f32.mrb[0].mxu0
        %v8239 = vadd.f32 0.0, %v8238
        %v8240 = vpop.f32.mrb[0].mxu0
        %8241 = vmatprep.mubr.f32.mxu0 0.0
        %8242 = vmatmul.mubr.f32.gmra.mrb[0].mxu0 %v8012
        %v8243 = vpop.f32.mrb[0].mxu0
        %v8244 = vadd.f32 0.0, %v8243
        %v8245 = vpop.f32.mrb[0].mxu0
        %8246 = vmatprep.mubr.f32.mxu0 0.0
        %8247 = vmatmul.mubr.f32.gmra.mrb[0].mxu0 %v8015
        %v8248 = vpop.f32.mrb[0].mxu0
        %v8249 = vadd.f32 0.0, %v8248
        %v8250 = vpop.f32.mrb[0].mxu0
        %8251 = vmatprep.mubr.f32.mxu0 0.0
        %8252 = vmatmul.mubr.f32.gmra.mrb[0].mxu0 %v8018
        %v8253 = vpop.f32.mrb[0].mxu0
        %v8254 = vadd.f32 0.0, %v8253
        %v8255 = vpop.f32.mrb[0].mxu0
        %8256 = vmatprep.mubr.f32.mxu0 0.0
        %8257 = vmatmul.mubr.f32.gmra.mrb[0].mxu0 %v8021
        %v8258 = vpop.f32.mrb[0].mxu0
        %v8259 = vadd.f32 0.0, %v8258
        %v8260 = vpop.f32.mrb[0].mxu0
        %8261 = vmatprep.mubr.f32.mxu0 0.0
        %8262 = vmatmul.mubr.f32.gmra.mrb[0].mxu0 %v8024
        %v8263 = vpop.f32.mrb[0].mxu0
        %v8264 = vadd.f32 0.0, %v8263
        %v8265 = vpop.f32.mrb[0].mxu0
        %8266 = vmatprep.mubr.f32.mxu0 0.0
        %8267 = vmatmul.mubr.f32.gmra.mrb[0].mxu0 %v8027
        %v8268 = vpop.f32.mrb[0].mxu0
        %v8269 = vadd.f32 0.0, %v8268
        %v8270 = vpop.f32.mrb[0].mxu0
        %8271 = vmatprep.mubr.f32.mxu0 0.0
        %8272 = vmatmul.mubr.f32.gmra.mrb[0].mxu0 %v8030
        %v8273 = vpop.f32.mrb[0].mxu0
        %v8274 = vadd.f32 0.0, %v8273
        %v8275 = vpop.f32.mrb[0].mxu0
        %8276 = vdwg.mxu0
        %v8277 = vadd.f32 %v7850, %v8099
        %v8278 = vadd.f32 %v7851, %v8104
        %v8279 = vadd.f32 %v7852, %v8109
        %v8280 = vadd.f32 %v7853, %v8114
        %v8281 = vadd.f32 %v7854, %v8119
        %v8282 = vadd.f32 %v7855, %v8124
        %v8283 = vadd.f32 %v7856, %v8129
        %v8284 = vadd.f32 %v7857, %v8134
        %v8285 = vadd.f32 %v7858, %v8139
        %v8286 = vadd.f32 %v7859, %v8144
        %v8287 = vadd.f32 %v7860, %v8149
        %v8288 = vadd.f32 %v7861, %v8154
        %v8289 = vadd.f32 %v7862, %v8159
        %v8290 = vadd.f32 %v7863, %v8164
        %v8291 = vadd.f32 %v7864, %v8169
        %v8292 = vadd.f32 %v7865, %v8174
        %v8293 = vadd.f32 %v7866, %v8179
        %v8294 = vadd.f32 %v7867, %v8184
        %v8295 = vadd.f32 %v7868, %v8189
        %v8296 = vadd.f32 %v7869, %v8194
        %v8297 = vadd.f32 %v7870, %v8199
        %v8298 = vadd.f32 %v7871, %v8204
        %v8299 = vadd.f32 %v7872, %v8209
        %v8300 = vadd.f32 %v7873, %v8214
        %v8301 = vadd.f32 %v7874, %v8219
        %v8302 = vadd.f32 %v7875, %v8224
        %v8303 = vadd.f32 %v7876, %v8229
        %v8304 = vadd.f32 %v7877, %v8234
        %v8305 = vadd.f32 %v7878, %v8239
        %v8306 = vadd.f32 %v7879, %v8244
        %v8307 = vadd.f32 %v7880, %v8249
        %v8308 = vadd.f32 %v7881, %v8254
        %v8309 = vadd.f32 %v7882, %v8259
        %v8310 = vadd.f32 %v7883, %v8264
        %v8311 = vadd.f32 %v7884, %v8269
        %v8312 = vadd.f32 %v7885, %v8274
        %v8313 = vld [vmem:[#allocation11] sm:$0x1]
        %v8315 = vlaneseq
        %v8316 = vshrl.u32 %v8315, 7
        %v8317 = vsub.s32 0, %v8316
        %v8318 = vrot.slane %v8313, %v8317
        %v8320 = vadd.f32 %v8277, %v8318
        %v8321 = vadd.f32 %v8278, %v8318
        %v8322 = vadd.f32 %v8279, %v8318
        %v8323 = vadd.f32 %v8280, %v8318
        %v8324 = vadd.f32 %v8281, %v8318
        %v8325 = vadd.f32 %v8282, %v8318
        %v8326 = vadd.f32 %v8283, %v8318
        %v8327 = vadd.f32 %v8284, %v8318
        %v8328 = vadd.f32 %v8285, %v8318
        %v8329 = vadd.f32 %v8286, %v8318
        %v8330 = vadd.f32 %v8287, %v8318
        %v8331 = vadd.f32 %v8288, %v8318
        %v8332 = vadd.f32 %v8289, %v8318
        %v8333 = vadd.f32 %v8290, %v8318
        %v8334 = vadd.f32 %v8291, %v8318
        %v8335 = vadd.f32 %v8292, %v8318
        %v8336 = vadd.f32 %v8293, %v8318
        %v8337 = vadd.f32 %v8294, %v8318
        %v8338 = vadd.f32 %v8295, %v8318
        %v8339 = vadd.f32 %v8296, %v8318
        %v8340 = vadd.f32 %v8297, %v8318
        %v8341 = vadd.f32 %v8298, %v8318
        %v8342 = vadd.f32 %v8299, %v8318
        %v8343 = vadd.f32 %v8300, %v8318
        %v8344 = vadd.f32 %v8301, %v8318
        %v8345 = vadd.f32 %v8302, %v8318
        %v8346 = vadd.f32 %v8303, %v8318
        %v8347 = vadd.f32 %v8304, %v8318
        %v8348 = vadd.f32 %v8305, %v8318
        %v8349 = vadd.f32 %v8306, %v8318
        %v8350 = vadd.f32 %v8307, %v8318
        %v8351 = vadd.f32 %v8308, %v8318
        %v8352 = vadd.f32 %v8309, %v8318
        %v8353 = vadd.f32 %v8310, %v8318
        %v8354 = vadd.f32 %v8311, %v8318
        %v8355 = vadd.f32 %v8312, %v8318
        %v8356 = vmax.f32 %v8320, 0.0
        %v8357 = vmax.f32 %v8321, 0.0
        %v8358 = vmax.f32 %v8322, 0.0
        %v8359 = vmax.f32 %v8323, 0.0
        %v8360 = vmax.f32 %v8324, 0.0
        %v8361 = vmax.f32 %v8325, 0.0
        %v8362 = vmax.f32 %v8326, 0.0
        %v8363 = vmax.f32 %v8327, 0.0
        %v8364 = vmax.f32 %v8328, 0.0
        %v8365 = vmax.f32 %v8329, 0.0
        %v8366 = vmax.f32 %v8330, 0.0
        %v8367 = vmax.f32 %v8331, 0.0
        %v8368 = vmax.f32 %v8332, 0.0
        %v8369 = vmax.f32 %v8333, 0.0
        %v8370 = vmax.f32 %v8334, 0.0
        %v8371 = vmax.f32 %v8335, 0.0
        %v8372 = vmax.f32 %v8336, 0.0
        %v8373 = vmax.f32 %v8337, 0.0
        %v8374 = vmax.f32 %v8338, 0.0
        %v8375 = vmax.f32 %v8339, 0.0
        %v8376 = vmax.f32 %v8340, 0.0
        %v8377 = vmax.f32 %v8341, 0.0
        %v8378 = vmax.f32 %v8342, 0.0
        %v8379 = vmax.f32 %v8343, 0.0
        %v8380 = vmax.f32 %v8344, 0.0
        %v8381 = vmax.f32 %v8345, 0.0
        %v8382 = vmax.f32 %v8346, 0.0
        %v8383 = vmax.f32 %v8347, 0.0
        %v8384 = vmax.f32 %v8348, 0.0
        %v8385 = vmax.f32 %v8349, 0.0
        %v8386 = vmax.f32 %v8350, 0.0
        %v8387 = vmax.f32 %v8351, 0.0
        %v8388 = vmax.f32 %v8352, 0.0
        %v8389 = vmax.f32 %v8353, 0.0
        %v8390 = vmax.f32 %v8354, 0.0
        %v8391 = vmax.f32 %v8355, 0.0
        %8392 = vst.msk [vmem:[%s296] sm:$0xff] %vm4500, %v8356
        %8393 = vst.msk [vmem:[%s296 + $0x8] sm:$0xff] %vm4500, %v8357
        %8394 = vst.msk [vmem:[%s296 + $0x10] sm:$0xff] %vm4500, %v8358
        %8395 = vst.msk [vmem:[%s296 + $0x18] sm:$0xff] %vm4500, %v8359
        %8396 = vst.msk [vmem:[%s296 + $0x20] sm:$0xff] %vm4500, %v8360
        %8397 = vst.msk [vmem:[%s296 + $0x28] sm:$0xff] %vm4500, %v8361
        %8398 = vst.msk [vmem:[%s296 + $0x30] sm:$0xff] %vm4500, %v8362
        %8399 = vst.msk [vmem:[%s296 + $0x38] sm:$0xff] %vm4500, %v8363
        %8400 = vst.msk [vmem:[%s296 + $0x40] sm:$0xff] %vm4500, %v8364
        %8401 = vst.msk [vmem:[%s296 + $0x48] sm:$0xff] %vm4500, %v8365
        %8402 = vst.msk [vmem:[%s296 + $0x50] sm:$0xff] %vm4500, %v8366
        %8403 = vst.msk [vmem:[%s296 + $0x58] sm:$0xff] %vm4500, %v8367
        %8404 = vst.msk [vmem:[%s296 + $0x60] sm:$0xff] %vm4500, %v8368
        %8405 = vst.msk [vmem:[%s296 + $0x68] sm:$0xff] %vm4500, %v8369
        %8406 = vst.msk [vmem:[%s296 + $0x70] sm:$0xff] %vm4500, %v8370
        %8407 = vst.msk [vmem:[%s296 + $0x78] sm:$0xff] %vm4500, %v8371
        %8408 = vst.msk [vmem:[%s296 + $0x80] sm:$0xff] %vm4500, %v8372
        %8409 = vst.msk [vmem:[%s296 + $0x88] sm:$0xff] %vm4500, %v8373
        %8410 = vst.msk [vmem:[%s296 + $0x90] sm:$0xff] %vm4500, %v8374
        %8411 = vst.msk [vmem:[%s296 + $0x98] sm:$0xff] %vm4500, %v8375
        %8412 = vst.msk [vmem:[%s296 + $0xa0] sm:$0xff] %vm4500, %v8376
        %8413 = vst.msk [vmem:[%s296 + $0xa8] sm:$0xff] %vm4500, %v8377
        %8414 = vst.msk [vmem:[%s296 + $0xb0] sm:$0xff] %vm4500, %v8378
        %8415 = vst.msk [vmem:[%s296 + $0xb8] sm:$0xff] %vm4500, %v8379
        %8416 = vst.msk [vmem:[%s296 + $0xc0] sm:$0xff] %vm4500, %v8380
        %8417 = vst.msk [vmem:[%s296 + $0xc8] sm:$0xff] %vm4500, %v8381
        %8418 = vst.msk [vmem:[%s296 + $0xd0] sm:$0xff] %vm4500, %v8382
        %8419 = vst.msk [vmem:[%s296 + $0xd8] sm:$0xff] %vm4500, %v8383
        %8420 = vst.msk [vmem:[%s296 + $0xe0] sm:$0xff] %vm4500, %v8384
        %8421 = vst.msk [vmem:[%s296 + $0xe8] sm:$0xff] %vm4500, %v8385
        %8422 = vst.msk [vmem:[%s296 + $0xf0] sm:$0xff] %vm4500, %v8386
        %8423 = vst.msk [vmem:[%s296 + $0xf8] sm:$0xff] %vm4500, %v8387
        %8424 = vst.msk [vmem:[%s296 + $0x100] sm:$0xff] %vm4500, %v8388
        %8425 = vst.msk [vmem:[%s296 + $0x108] sm:$0xff] %vm4500, %v8389
        %8426 = vst.msk [vmem:[%s296 + $0x110] sm:$0xff] %vm4500, %v8390
        %8427 = vst.msk [vmem:[%s296 + $0x118] sm:$0xff] %vm4500, %v8391
        %s8428 = sand.u32 %s142, 1
        %s8429 = scalar_lea.sflag [#allocation5], %s8428
        %s8430 = sand.u32 %s142, 1
        %s8431 = smul.addr %s8430, 288
        %s8432 = scalar_lea.vmem [#allocation12], %s8431
        // Predicated region
        $region61: #{tpu_custom_call.1} parent=39 // pred_check
          %p8433 = pneg %p152
        $region62: #{tpu_custom_call.1} parent=39 // pred_check_branch
          %8435 = sbr.rel (%p8433) target = $region64
        $region63: #{tpu_custom_call.1} parent=39 // pred_region
          %s8437 = ssub.s32 4608, 4608
          %8438 = vsyncadd %s8429, %s8437
          %s8439 = smul.addr %s24, 36
          %s8440 = smul.addr %s8439, 128
          %s8441 = scalar_lea.hbm %s5, %s8440
          %s8442 = sshll.u32 %s8432, 4
          %s8443 = int_to_ptr.vmem [resolvable:$true] %s8442
          %8448 = dma.vmem_to_hbm [thread:$0]  %s8443, 4608, %s8441, %s8429, 128, 128, 8
        $region64: #{tpu_custom_call.1} parent=39 // pred_fallthru
          _
      $region40: #{tpu_custom_call.1} parent=5 // pred_fallthru
        _
      %p8449 = scmp.le.s32.totalorder 2, %s19
      // Predicated region
      $region65: #{tpu_custom_call.1} parent=5 // pred_check
        %p8450 = pneg %p8449
      $region66: #{tpu_custom_call.1} parent=5 // pred_check_branch
        %8452 = sbr.rel (%p8450) target = $region68
      $region67: #{tpu_custom_call.1} parent=5 // pred_region
        %s8453 = ssub.s32 %s19, 2
        // Predicated region
        $region69: #{tpu_custom_call.1} parent=67 // pred_check
          %p8454 = pneg %p158
        $region70: #{tpu_custom_call.1} parent=67 // pred_check_branch
          %8456 = sbr.rel (%p8454) target = $region72
        $region71: #{tpu_custom_call.1} parent=67 // pred_region
          %s8457 = sand.u32 %s143, 1
          %s8458 = scalar_lea.sflag [#allocation5], %s8457
          %s8459 = sand.u32 %s143, 1
          %s8460 = smul.addr %s8459, 288
          %s8461 = scalar_lea.vmem [#allocation12], %s8460
          %8462 = dma.done %s8458, 4608
        $region72: #{tpu_custom_call.1} parent=67 // pred_fallthru
          _
      $region68: #{tpu_custom_call.1} parent=5 // pred_fallthru
        _
    $region6: #{tpu_custom_call.1} parent=1 // loop_footer
      %s23 = sadd.s32 1, %s19
    $region7: #{tpu_custom_call.1} parent=1 // loop_footer_branch
      %18 = sbr.rel target = $region3
    $region8: #{tpu_custom_call.1} parent=1 // loop_exit
      _
    %8463 = vsyncpa [#allocation4], 1
    %s8464 = scalar_lea.sflag [#allocation4], 1
    %8465 = vsyncpa %s8464, 1
    %8466 = vsyncpa [#allocation7], 1
    %8467 = vsyncpa [#allocation10], 1
    %8468 = vsyncpa [#allocation5], 1
    %s8469 = scalar_lea.sflag [#allocation5], 1
    %8470 = vsyncpa %s8469, 1

</llo_original>
